<compile_context>
chip_gen: v7x
topology: tpu7x:2x2x1
jax: 0.10.0
libtpu: 0.0.40
codegen_flags: <defaults>
</compile_context>

<pallas_src>
import jax
import jax.numpy as jnp
import numpy as np
from jax.experimental import pallas as pl
from jax.experimental.pallas import tpu as pltpu

LANES = 128
_VMEM_LIMIT = 32 * 1024 * 1024      # modest scoped-VMEM cap (fits v7x's 64 MiB)


# ------------------------------ Pallas kernel -------------------------------

def _halfmax(y):
    # 2x1 max-pool along width: columns are [wo parity] x [wo//2] x [channel],
    # 128 lanes per parity -> the pool is a max of two 128-aligned lane slices.
    return jnp.maximum(y[:, :LANES], y[:, LANES:])


def _make_lenet_kernel(tb):
    """Whole-network kernel for a block of `tb` images."""

    def kernel(x_ref, m1_ref, b1_ref, m2_ref, b2_ref,
               w1_ref, bf1_ref, w2_ref, bf2_ref, w3_ref, bf3_ref, o_ref):
        f32 = jnp.float32
        p2_rows = [[None] * 4 for _ in range(tb)]   # (image, pooled-row) pieces

        for b in range(tb):                          # static unroll over images
            # ---- conv1 as 5 row-shifted matmuls per output-row group.
            # Output rows are split into 4 groups g = ho % 4 so the 2x2 row
            # pool is a plain elementwise max (no strided sublane access).
            yg = []
            for g in range(4):
                acc = jnp.zeros((6, 2 * LANES), f32)
                for di in range(5):
                    s = g + di
                    xs = x_ref[b, s % 4, s // 4:s // 4 + 6, :]      # (6, 32)
                    acc = acc + jnp.dot(xs, m1_ref[di],
                                        preferred_element_type=f32)
                yg.append(acc)
            # pool1 (2x2 max) then bias + ReLU (both commute with max-pool).
            p1e = jnp.maximum(jnp.maximum(_halfmax(yg[0]), _halfmax(yg[1]))
                              + b1_ref[...], 0.0)     # rows ho2 = 0,2,...,10
            p1o = jnp.maximum(jnp.maximum(_halfmax(yg[2]), _halfmax(yg[3]))
                              + b1_ref[...], 0.0)     # rows ho2 = 1,3,...,11

            # ---- conv2 with the same trick on the pooled (12,128) map.
            acc_e = jnp.zeros((4, 2 * LANES), f32)    # output rows ho' = 0,2,4,6
            acc_o = jnp.zeros((4, 2 * LANES), f32)    # output rows ho' = 1,3,5,7
            for e in range(3):                        # kernel rows di = 0, 2, 4
                acc_e = acc_e + jnp.dot(p1e[e:e + 4, :], m2_ref[2 * e],
                                        preferred_element_type=f32)
                acc_o = acc_o + jnp.dot(p1o[e:e + 4, :], m2_ref[2 * e],
                                        preferred_element_type=f32)
            for e in range(2):                        # kernel rows di = 1, 3
                acc_e = acc_e + jnp.dot(p1o[e:e + 4, :], m2_ref[2 * e + 1],
                                        preferred_element_type=f32)
                acc_o = acc_o + jnp.dot(p1e[e + 1:e + 5, :], m2_ref[2 * e + 1],
                                        preferred_element_type=f32)
            # pool2 + bias + ReLU -> (4, 128): rows ho2', lanes wo2'*32 + cout.
            p2 = jnp.maximum(jnp.maximum(_halfmax(acc_e), _halfmax(acc_o))
                             + b2_ref[...], 0.0)
            for p in range(4):
                p2_rows[b][p] = p2[p:p + 1, :]        # (1, 128)

        # ---- fused FC tail: fc1 -> relu -> fc2 -> relu -> fc3 -> relu.
        # fc1 is accumulated over the 4 pooled-row positions so the flatten
        # never needs a sublane->lane relayout.
        h = jnp.zeros((tb, LANES), f32)
        for p in range(4):
            xp = jnp.concatenate([p2_rows[b][p] for b in range(tb)], axis=0)
            h = h + jnp.dot(xp, w1_ref[p], preferred_element_type=f32)
        h = jnp.maximum(h + bf1_ref[...], 0.0)
        h = jnp.maximum(jnp.dot(h, w2_ref[...], preferred_element_type=f32)
                        + bf2_ref[...], 0.0)
        h = jnp.maximum(jnp.dot(h, w3_ref[...], preferred_element_type=f32)
                        + bf3_ref[...], 0.0)
        o_ref[...] = h.astype(o_ref.dtype)

    return kernel


# --------------------------- parameters & layout -----------------------------

def init_params(key):
    """Raw parameters in the PyTorch layouts of the reference module."""
    ks = jax.random.split(key, 10)

    def u(kk, shape, fan_in):
        bound = 1.0 / float(fan_in) ** 0.5
        return jax.random.uniform(kk, shape, jnp.float32, -bound, bound)

    return {
        "conv1_w": u(ks[0], (6, 1, 5, 5), 25),   "conv1_b": u(ks[1], (6,), 25),
        "conv2_w": u(ks[2], (16, 6, 5, 5), 150), "conv2_b": u(ks[3], (16,), 150),
        "fc1_w": u(ks[4], (120, 256), 256),      "fc1_b": u(ks[5], (120,), 256),
        "fc2_w": u(ks[6], (84, 120), 120),       "fc2_b": u(ks[7], (84,), 120),
        "fc3_w": u(ks[8], (10, 84), 84),         "fc3_b": u(ks[9], (10,), 84),
    }


def prepare_params(p):
    """One-time host-side layout work (hoisted out of the forward path).

    Conv weights are folded into per-tap-row matmul matrices m1/m2 whose column
    layout is [wo parity (x128)] x [wo//2] x [zero-padded channel], so the
    in-kernel width pool is a max of two 128-aligned lane slices and all stores
    are lane-dense.  fc weights are reordered/zero-padded to consume the pooled
    channels-last layout directly (no transpose in the forward path).
    """
    w1c = np.asarray(p["conv1_w"], np.float32)   # (6, 1, 5, 5)
    b1c = np.asarray(p["conv1_b"], np.float32)
    w2c = np.asarray(p["conv2_w"], np.float32)   # (16, 6, 5, 5)
    b2c = np.asarray(p["conv2_b"], np.float32)
    f1w = np.asarray(p["fc1_w"], np.float32)     # (120, 256)
    f2w = np.asarray(p["fc2_w"], np.float32)     # (84, 120)
    f3w = np.asarray(p["fc3_w"], np.float32)     # (10, 84)

    # conv1: Y1[ho, col] = sum_di X[ho+di, :] @ m1[di]
    #   col = (wo % 2)*128 + (wo // 2)*8 + c      (c padded 6 -> 8)
    m1 = np.zeros((5, 32, 2 * LANES), np.float32)   # K padded 28 -> 32
    for di in range(5):
        for wo in range(24):
            base = (wo % 2) * LANES + (wo // 2) * 8
            for dj in range(5):
                m1[di, wo + dj, base:base + 6] = w1c[:, 0, di, dj]
    b1 = np.zeros((1, LANES), np.float32)           # pooled-layout bias tile
    for wo2 in range(12):
        b1[0, wo2 * 8:wo2 * 8 + 6] = b1c

    # conv2: Y2[ho', col] = sum_di P1[ho'+di, :] @ m2[di]
    #   P1 cols: win*8 + ci ; output col = (wo' % 2)*128 + (wo' // 2)*32 + co
    m2 = np.zeros((5, LANES, 2 * LANES), np.float32)
    for di in range(5):
        for wo in range(8):
            base = (wo % 2) * LANES + (wo // 2) * 32
            for dj in range(5):
                win = wo + dj
                for ci in range(6):
                    m2[di, win * 8 + ci, base:base + 16] = w2c[:, ci, di, dj]
    b2 = np.zeros((1, LANES), np.float32)
    for wo2 in range(4):
        b2[0, wo2 * 32:wo2 * 32 + 16] = b2c

    # fc1 consumes pool2 rows p = ho2' with lanes q = wo2'*32 + co.
    # PyTorch's .view flattens NCHW as co*16 + ho2'*4 + wo2'.
    w1 = np.zeros((4, LANES, LANES), np.float32)
    for h in range(4):
        for w in range(4):
            cols = np.arange(16) * 16 + h * 4 + w
            w1[h, w * 32:w * 32 + 16, :120] = f1w[:, cols].T
    bf1 = np.zeros((1, LANES), np.float32)
    bf1[0, :120] = np.asarray(p["fc1_b"], np.float32)
    w2 = np.zeros((LANES, LANES), np.float32)
    w2[:120, :84] = f2w.T
    bf2 = np.zeros((1, LANES), np.float32)
    bf2[0, :84] = np.asarray(p["fc2_b"], np.float32)
    w3 = np.zeros((LANES, LANES), np.float32)
    w3[:84, :10] = f3w.T
    bf3 = np.zeros((1, LANES), np.float32)
    bf3[0, :10] = np.asarray(p["fc3_b"], np.float32)

    return {"m1": jnp.asarray(m1), "b1": jnp.asarray(b1),
            "m2": jnp.asarray(m2), "b2": jnp.asarray(b2),
            "w1": jnp.asarray(w1), "bf1": jnp.asarray(bf1),
            "w2": jnp.asarray(w2), "bf2": jnp.asarray(bf2),
            "w3": jnp.asarray(w3), "bf3": jnp.asarray(bf3)}


# --------------------------------- forward -----------------------------------

@jax.jit
def lenet5_forward(kp, x):
    """x: (B, 1, 28, 28) NCHW f32 -> (B, 10) f32 (relu5 applied, as in the module)."""
    B = x.shape[0]
    xs = x.reshape(B, 28, 28)
    # Pre-split rows by (row mod 4) once on the tiny raw input so both in-kernel
    # 2x2 row-pools are elementwise maxima; pad width 28 -> 32 (8-aligned K).
    x4 = xs.reshape(B, 7, 4, 28).transpose(0, 2, 1, 3)       # (B, 4, 7, 28)
    x4 = jnp.pad(x4, ((0, 0), (0, 0), (0, 0), (0, 4)))        # (B, 4, 7, 32)

    tb = B if B <= 8 else 8                                   # images per grid step
    pad_b = (-B) % tb
    if pad_b:
        x4 = jnp.pad(x4, ((0, pad_b), (0, 0), (0, 0), (0, 0)))
    Bp = B + pad_b

    def wspec(a):
        return pl.BlockSpec(a.shape, lambda i, _nd=a.ndim: (0,) * _nd)

    conv_flops = 20 * 2 * 6 * 32 * 256 + 10 * 2 * 4 * 128 * 256
    fc_flops = 6 * 2 * LANES * LANES
    wbytes = 4 * sum(int(kp[k].size) for k in
                     ("m1", "b1", "m2", "b2", "w1", "bf1", "w2", "bf2", "w3", "bf3"))

    out = pl.pallas_call(
        _make_lenet_kernel(tb),
        out_shape=jax.ShapeDtypeStruct((Bp, LANES), jnp.float32),
        grid=(Bp // tb,),
        in_specs=[
            pl.BlockSpec((tb, 4, 7, 32), lambda i: (i, 0, 0, 0)),
            wspec(kp["m1"]), wspec(kp["b1"]),
            wspec(kp["m2"]), wspec(kp["b2"]),
            wspec(kp["w1"]), wspec(kp["bf1"]),
            wspec(kp["w2"]), wspec(kp["bf2"]),
            wspec(kp["w3"]), wspec(kp["bf3"]),
        ],
        out_specs=pl.BlockSpec((tb, LANES), lambda i: (i, 0)),
        compiler_params=pltpu.CompilerParams(
            dimension_semantics=("parallel",),        # shards over v7x's 2 TCs
            vmem_limit_bytes=_VMEM_LIMIT,
        ),
        cost_estimate=pl.CostEstimate(
            flops=int(Bp * (conv_flops + fc_flops)),
            transcendentals=0,
            bytes_accessed=int(4 * x4.size + wbytes + 4 * Bp * LANES),
        ),
    )(x4, kp["m1"], kp["b1"], kp["m2"], kp["b2"],
      kp["w1"], kp["bf1"], kp["w2"], kp["bf2"], kp["w3"], kp["bf3"])
    return out[:B, :10]                                       # real classes


# ----------------------- pure-JAX reference (for checking) -------------------

def reference_forward(p, x):
    hp = jax.lax.Precision.HIGHEST

    def pool(y):
        B, C, H, W = y.shape
        return jnp.max(y.reshape(B, C, H // 2, 2, W // 2, 2), axis=(3, 5))

    y = jax.lax.conv_general_dilated(
        x, p["conv1_w"], (1, 1), "VALID",
        dimension_numbers=("NCHW", "OIHW", "NCHW"), precision=hp)
    y = jax.nn.relu(y + p["conv1_b"].reshape(1, -1, 1, 1))
    y = pool(y)
    y = jax.lax.conv_general_dilated(
        y, p["conv2_w"], (1, 1), "VALID",
        dimension_numbers=("NCHW", "OIHW", "NCHW"), precision=hp)
    y = jax.nn.relu(y + p["conv2_b"].reshape(1, -1, 1, 1))
    y = pool(y)
    y = y.reshape(y.shape[0], -1)
    y = jax.nn.relu(jnp.dot(y, p["fc1_w"].T, precision=hp) + p["fc1_b"])
    y = jax.nn.relu(jnp.dot(y, p["fc2_w"].T, precision=hp) + p["fc2_b"])
    y = jax.nn.relu(jnp.dot(y, p["fc3_w"].T, precision=hp) + p["fc3_b"])
    return y


if __name__ == "__main__":
    key = jax.random.PRNGKey(0)
    pkey, xkey = jax.random.split(key)
    raw = init_params(pkey)
    kp = prepare_params(raw)          # one-time layout / padding work (hoisted)
    # fc1 expects 16*4*4 = 256 features -> single-channel 28x28 input (MNIST-like).
    x = jax.random.normal(xkey, (2, 1, 28, 28), dtype=jnp.float32)

    out = jax.block_until_ready(lenet5_forward(kp, x))
    assert out.shape == (2, 10) and out.dtype == jnp.float32

    ref = jax.block_until_ready(reference_forward(raw, x))
    assert bool(jnp.allclose(out, ref, atol=5e-3, rtol=5e-3)), \
        float(jnp.max(jnp.abs(out - ref)))

    print("KERNEL_OK")
</pallas_src>

<mosaic_0001>
module attributes {stable_mosaic.version = 11 : i64} {
  func.func @kernel(%arg0: i32, %arg1: memref<2x4x7x32xf32, #tpu.memory_space<vmem>>, %arg2: memref<5x32x256xf32, #tpu.memory_space<vmem>>, %arg3: memref<1x128xf32, #tpu.memory_space<vmem>>, %arg4: memref<5x128x256xf32, #tpu.memory_space<vmem>>, %arg5: memref<1x128xf32, #tpu.memory_space<vmem>>, %arg6: memref<4x128x128xf32, #tpu.memory_space<vmem>>, %arg7: memref<1x128xf32, #tpu.memory_space<vmem>>, %arg8: memref<128x128xf32, #tpu.memory_space<vmem>>, %arg9: memref<1x128xf32, #tpu.memory_space<vmem>>, %arg10: memref<128x128xf32, #tpu.memory_space<vmem>>, %arg11: memref<1x128xf32, #tpu.memory_space<vmem>>, %arg12: memref<2x128xf32, #tpu.memory_space<vmem>>) attributes {dimension_semantics = [#tpu.dimension_semantics<parallel>], iteration_bounds = array<i64: 1>, scalar_prefetch = 0 : i64, scratch_operands = 0 : i64, tpu.core_type = #tpu.core_type<tc>, window_params = [{transform_indices = @transform_0, window_bounds = array<i64: 2, 4, 7, 32>}, {pipeline_mode = #tpu.pipeline_mode<synchronous>, transform_indices = @transform_1, window_bounds = array<i64: 5, 32, 256>}, {pipeline_mode = #tpu.pipeline_mode<synchronous>, transform_indices = @transform_2, window_bounds = array<i64: 1, 128>}, {pipeline_mode = #tpu.pipeline_mode<synchronous>, transform_indices = @transform_3, window_bounds = array<i64: 5, 128, 256>}, {pipeline_mode = #tpu.pipeline_mode<synchronous>, transform_indices = @transform_4, window_bounds = array<i64: 1, 128>}, {pipeline_mode = #tpu.pipeline_mode<synchronous>, transform_indices = @transform_5, window_bounds = array<i64: 4, 128, 128>}, {pipeline_mode = #tpu.pipeline_mode<synchronous>, transform_indices = @transform_6, window_bounds = array<i64: 1, 128>}, {pipeline_mode = #tpu.pipeline_mode<synchronous>, transform_indices = @transform_7, window_bounds = array<i64: 128, 128>}, {pipeline_mode = #tpu.pipeline_mode<synchronous>, transform_indices = @transform_8, window_bounds = array<i64: 1, 128>}, {pipeline_mode = #tpu.pipeline_mode<synchronous>, transform_indices = @transform_9, window_bounds = array<i64: 128, 128>}, {pipeline_mode = #tpu.pipeline_mode<synchronous>, transform_indices = @transform_10, window_bounds = array<i64: 1, 128>}, {transform_indices = @transform_11, window_bounds = array<i64: 2, 128>}]} {
    %cst = arith.constant 0.000000e+00 : f32
    %0 = vector.broadcast %cst : f32 to vector<6x256xf32>
    %c0 = arith.constant 0 : index
    %c0_0 = arith.constant 0 : index
    %c0_1 = arith.constant 0 : index
    %c0_2 = arith.constant 0 : index
    %1 = vector.load %arg1[%c0, %c0_0, %c0_1, %c0_2] : memref<2x4x7x32xf32, #tpu.memory_space<vmem>>, vector<1x1x6x32xf32>
    %2 = vector.shape_cast %1 : vector<1x1x6x32xf32> to vector<6x32xf32>
    %c0_3 = arith.constant 0 : index
    %c0_4 = arith.constant 0 : index
    %c0_5 = arith.constant 0 : index
    %3 = vector.load %arg2[%c0_3, %c0_4, %c0_5] : memref<5x32x256xf32, #tpu.memory_space<vmem>>, vector<1x32x256xf32>
    %4 = vector.shape_cast %3 : vector<1x32x256xf32> to vector<32x256xf32>
    %cst_6 = arith.constant dense<0.000000e+00> : vector<6x256xf32>
    %5 = tpu.matmul %2, %4, %cst_6 {dimension_numbers = #tpu.dot_dimension_numbers<[1], [0], [0], [1], [0, 0, 1, 1], [], []>} : vector<6x32xf32>, vector<32x256xf32>, vector<6x256xf32> -> vector<6x256xf32>
    %6 = arith.addf %0, %5 : vector<6x256xf32>
    %c0_7 = arith.constant 0 : index
    %c1 = arith.constant 1 : index
    %c0_8 = arith.constant 0 : index
    %c0_9 = arith.constant 0 : index
    %7 = vector.load %arg1[%c0_7, %c1, %c0_8, %c0_9] : memref<2x4x7x32xf32, #tpu.memory_space<vmem>>, vector<1x1x6x32xf32>
    %8 = vector.shape_cast %7 : vector<1x1x6x32xf32> to vector<6x32xf32>
    %c1_10 = arith.constant 1 : index
    %c0_11 = arith.constant 0 : index
    %c0_12 = arith.constant 0 : index
    %9 = vector.load %arg2[%c1_10, %c0_11, %c0_12] : memref<5x32x256xf32, #tpu.memory_space<vmem>>, vector<1x32x256xf32>
    %10 = vector.shape_cast %9 : vector<1x32x256xf32> to vector<32x256xf32>
    %cst_13 = arith.constant dense<0.000000e+00> : vector<6x256xf32>
    %11 = tpu.matmul %8, %10, %cst_13 {dimension_numbers = #tpu.dot_dimension_numbers<[1], [0], [0], [1], [0, 0, 1, 1], [], []>} : vector<6x32xf32>, vector<32x256xf32>, vector<6x256xf32> -> vector<6x256xf32>
    %12 = arith.addf %6, %11 : vector<6x256xf32>
    %c0_14 = arith.constant 0 : index
    %c2 = arith.constant 2 : index
    %c0_15 = arith.constant 0 : index
    %c0_16 = arith.constant 0 : index
    %13 = vector.load %arg1[%c0_14, %c2, %c0_15, %c0_16] : memref<2x4x7x32xf32, #tpu.memory_space<vmem>>, vector<1x1x6x32xf32>
    %14 = vector.shape_cast %13 : vector<1x1x6x32xf32> to vector<6x32xf32>
    %c2_17 = arith.constant 2 : index
    %c0_18 = arith.constant 0 : index
    %c0_19 = arith.constant 0 : index
    %15 = vector.load %arg2[%c2_17, %c0_18, %c0_19] : memref<5x32x256xf32, #tpu.memory_space<vmem>>, vector<1x32x256xf32>
    %16 = vector.shape_cast %15 : vector<1x32x256xf32> to vector<32x256xf32>
    %cst_20 = arith.constant dense<0.000000e+00> : vector<6x256xf32>
    %17 = tpu.matmul %14, %16, %cst_20 {dimension_numbers = #tpu.dot_dimension_numbers<[1], [0], [0], [1], [0, 0, 1, 1], [], []>} : vector<6x32xf32>, vector<32x256xf32>, vector<6x256xf32> -> vector<6x256xf32>
    %18 = arith.addf %12, %17 : vector<6x256xf32>
    %c0_21 = arith.constant 0 : index
    %c3 = arith.constant 3 : index
    %c0_22 = arith.constant 0 : index
    %c0_23 = arith.constant 0 : index
    %19 = vector.load %arg1[%c0_21, %c3, %c0_22, %c0_23] : memref<2x4x7x32xf32, #tpu.memory_space<vmem>>, vector<1x1x6x32xf32>
    %20 = vector.shape_cast %19 : vector<1x1x6x32xf32> to vector<6x32xf32>
    %c3_24 = arith.constant 3 : index
    %c0_25 = arith.constant 0 : index
    %c0_26 = arith.constant 0 : index
    %21 = vector.load %arg2[%c3_24, %c0_25, %c0_26] : memref<5x32x256xf32, #tpu.memory_space<vmem>>, vector<1x32x256xf32>
    %22 = vector.shape_cast %21 : vector<1x32x256xf32> to vector<32x256xf32>
    %cst_27 = arith.constant dense<0.000000e+00> : vector<6x256xf32>
    %23 = tpu.matmul %20, %22, %cst_27 {dimension_numbers = #tpu.dot_dimension_numbers<[1], [0], [0], [1], [0, 0, 1, 1], [], []>} : vector<6x32xf32>, vector<32x256xf32>, vector<6x256xf32> -> vector<6x256xf32>
    %24 = arith.addf %18, %23 : vector<6x256xf32>
    %c0_28 = arith.constant 0 : index
    %c0_29 = arith.constant 0 : index
    %c1_30 = arith.constant 1 : index
    %c0_31 = arith.constant 0 : index
    %25 = vector.load %arg1[%c0_28, %c0_29, %c1_30, %c0_31] : memref<2x4x7x32xf32, #tpu.memory_space<vmem>>, vector<1x1x6x32xf32>
    %26 = vector.shape_cast %25 : vector<1x1x6x32xf32> to vector<6x32xf32>
    %c4 = arith.constant 4 : index
    %c0_32 = arith.constant 0 : index
    %c0_33 = arith.constant 0 : index
    %27 = vector.load %arg2[%c4, %c0_32, %c0_33] : memref<5x32x256xf32, #tpu.memory_space<vmem>>, vector<1x32x256xf32>
    %28 = vector.shape_cast %27 : vector<1x32x256xf32> to vector<32x256xf32>
    %cst_34 = arith.constant dense<0.000000e+00> : vector<6x256xf32>
    %29 = tpu.matmul %26, %28, %cst_34 {dimension_numbers = #tpu.dot_dimension_numbers<[1], [0], [0], [1], [0, 0, 1, 1], [], []>} : vector<6x32xf32>, vector<32x256xf32>, vector<6x256xf32> -> vector<6x256xf32>
    %30 = arith.addf %24, %29 : vector<6x256xf32>
    %cst_35 = arith.constant 0.000000e+00 : f32
    %31 = vector.broadcast %cst_35 : f32 to vector<6x256xf32>
    %c0_36 = arith.constant 0 : index
    %c1_37 = arith.constant 1 : index
    %c0_38 = arith.constant 0 : index
    %c0_39 = arith.constant 0 : index
    %32 = vector.load %arg1[%c0_36, %c1_37, %c0_38, %c0_39] : memref<2x4x7x32xf32, #tpu.memory_space<vmem>>, vector<1x1x6x32xf32>
    %33 = vector.shape_cast %32 : vector<1x1x6x32xf32> to vector<6x32xf32>
    %c0_40 = arith.constant 0 : index
    %c0_41 = arith.constant 0 : index
    %c0_42 = arith.constant 0 : index
    %34 = vector.load %arg2[%c0_40, %c0_41, %c0_42] : memref<5x32x256xf32, #tpu.memory_space<vmem>>, vector<1x32x256xf32>
    %35 = vector.shape_cast %34 : vector<1x32x256xf32> to vector<32x256xf32>
    %cst_43 = arith.constant dense<0.000000e+00> : vector<6x256xf32>
    %36 = tpu.matmul %33, %35, %cst_43 {dimension_numbers = #tpu.dot_dimension_numbers<[1], [0], [0], [1], [0, 0, 1, 1], [], []>} : vector<6x32xf32>, vector<32x256xf32>, vector<6x256xf32> -> vector<6x256xf32>
    %37 = arith.addf %31, %36 : vector<6x256xf32>
    %c0_44 = arith.constant 0 : index
    %c2_45 = arith.constant 2 : index
    %c0_46 = arith.constant 0 : index
    %c0_47 = arith.constant 0 : index
    %38 = vector.load %arg1[%c0_44, %c2_45, %c0_46, %c0_47] : memref<2x4x7x32xf32, #tpu.memory_space<vmem>>, vector<1x1x6x32xf32>
    %39 = vector.shape_cast %38 : vector<1x1x6x32xf32> to vector<6x32xf32>
    %c1_48 = arith.constant 1 : index
    %c0_49 = arith.constant 0 : index
    %c0_50 = arith.constant 0 : index
    %40 = vector.load %arg2[%c1_48, %c0_49, %c0_50] : memref<5x32x256xf32, #tpu.memory_space<vmem>>, vector<1x32x256xf32>
    %41 = vector.shape_cast %40 : vector<1x32x256xf32> to vector<32x256xf32>
    %cst_51 = arith.constant dense<0.000000e+00> : vector<6x256xf32>
    %42 = tpu.matmul %39, %41, %cst_51 {dimension_numbers = #tpu.dot_dimension_numbers<[1], [0], [0], [1], [0, 0, 1, 1], [], []>} : vector<6x32xf32>, vector<32x256xf32>, vector<6x256xf32> -> vector<6x256xf32>
    %43 = arith.addf %37, %42 : vector<6x256xf32>
    %c0_52 = arith.constant 0 : index
    %c3_53 = arith.constant 3 : index
    %c0_54 = arith.constant 0 : index
    %c0_55 = arith.constant 0 : index
    %44 = vector.load %arg1[%c0_52, %c3_53, %c0_54, %c0_55] : memref<2x4x7x32xf32, #tpu.memory_space<vmem>>, vector<1x1x6x32xf32>
    %45 = vector.shape_cast %44 : vector<1x1x6x32xf32> to vector<6x32xf32>
    %c2_56 = arith.constant 2 : index
    %c0_57 = arith.constant 0 : index
    %c0_58 = arith.constant 0 : index
    %46 = vector.load %arg2[%c2_56, %c0_57, %c0_58] : memref<5x32x256xf32, #tpu.memory_space<vmem>>, vector<1x32x256xf32>
    %47 = vector.shape_cast %46 : vector<1x32x256xf32> to vector<32x256xf32>
    %cst_59 = arith.constant dense<0.000000e+00> : vector<6x256xf32>
    %48 = tpu.matmul %45, %47, %cst_59 {dimension_numbers = #tpu.dot_dimension_numbers<[1], [0], [0], [1], [0, 0, 1, 1], [], []>} : vector<6x32xf32>, vector<32x256xf32>, vector<6x256xf32> -> vector<6x256xf32>
    %49 = arith.addf %43, %48 : vector<6x256xf32>
    %c0_60 = arith.constant 0 : index
    %c0_61 = arith.constant 0 : index
    %c1_62 = arith.constant 1 : index
    %c0_63 = arith.constant 0 : index
    %50 = vector.load %arg1[%c0_60, %c0_61, %c1_62, %c0_63] : memref<2x4x7x32xf32, #tpu.memory_space<vmem>>, vector<1x1x6x32xf32>
    %51 = vector.shape_cast %50 : vector<1x1x6x32xf32> to vector<6x32xf32>
    %c3_64 = arith.constant 3 : index
    %c0_65 = arith.constant 0 : index
    %c0_66 = arith.constant 0 : index
    %52 = vector.load %arg2[%c3_64, %c0_65, %c0_66] : memref<5x32x256xf32, #tpu.memory_space<vmem>>, vector<1x32x256xf32>
    %53 = vector.shape_cast %52 : vector<1x32x256xf32> to vector<32x256xf32>
    %cst_67 = arith.constant dense<0.000000e+00> : vector<6x256xf32>
    %54 = tpu.matmul %51, %53, %cst_67 {dimension_numbers = #tpu.dot_dimension_numbers<[1], [0], [0], [1], [0, 0, 1, 1], [], []>} : vector<6x32xf32>, vector<32x256xf32>, vector<6x256xf32> -> vector<6x256xf32>
    %55 = arith.addf %49, %54 : vector<6x256xf32>
    %c0_68 = arith.constant 0 : index
    %c1_69 = arith.constant 1 : index
    %c1_70 = arith.constant 1 : index
    %c0_71 = arith.constant 0 : index
    %56 = vector.load %arg1[%c0_68, %c1_69, %c1_70, %c0_71] : memref<2x4x7x32xf32, #tpu.memory_space<vmem>>, vector<1x1x6x32xf32>
    %57 = vector.shape_cast %56 : vector<1x1x6x32xf32> to vector<6x32xf32>
    %c4_72 = arith.constant 4 : index
    %c0_73 = arith.constant 0 : index
    %c0_74 = arith.constant 0 : index
    %58 = vector.load %arg2[%c4_72, %c0_73, %c0_74] : memref<5x32x256xf32, #tpu.memory_space<vmem>>, vector<1x32x256xf32>
    %59 = vector.shape_cast %58 : vector<1x32x256xf32> to vector<32x256xf32>
    %cst_75 = arith.constant dense<0.000000e+00> : vector<6x256xf32>
    %60 = tpu.matmul %57, %59, %cst_75 {dimension_numbers = #tpu.dot_dimension_numbers<[1], [0], [0], [1], [0, 0, 1, 1], [], []>} : vector<6x32xf32>, vector<32x256xf32>, vector<6x256xf32> -> vector<6x256xf32>
    %61 = arith.addf %55, %60 : vector<6x256xf32>
    %cst_76 = arith.constant 0.000000e+00 : f32
    %62 = vector.broadcast %cst_76 : f32 to vector<6x256xf32>
    %c0_77 = arith.constant 0 : index
    %c2_78 = arith.constant 2 : index
    %c0_79 = arith.constant 0 : index
    %c0_80 = arith.constant 0 : index
    %63 = vector.load %arg1[%c0_77, %c2_78, %c0_79, %c0_80] : memref<2x4x7x32xf32, #tpu.memory_space<vmem>>, vector<1x1x6x32xf32>
    %64 = vector.shape_cast %63 : vector<1x1x6x32xf32> to vector<6x32xf32>
    %c0_81 = arith.constant 0 : index
    %c0_82 = arith.constant 0 : index
    %c0_83 = arith.constant 0 : index
    %65 = vector.load %arg2[%c0_81, %c0_82, %c0_83] : memref<5x32x256xf32, #tpu.memory_space<vmem>>, vector<1x32x256xf32>
    %66 = vector.shape_cast %65 : vector<1x32x256xf32> to vector<32x256xf32>
    %cst_84 = arith.constant dense<0.000000e+00> : vector<6x256xf32>
    %67 = tpu.matmul %64, %66, %cst_84 {dimension_numbers = #tpu.dot_dimension_numbers<[1], [0], [0], [1], [0, 0, 1, 1], [], []>} : vector<6x32xf32>, vector<32x256xf32>, vector<6x256xf32> -> vector<6x256xf32>
    %68 = arith.addf %62, %67 : vector<6x256xf32>
    %c0_85 = arith.constant 0 : index
    %c3_86 = arith.constant 3 : index
    %c0_87 = arith.constant 0 : index
    %c0_88 = arith.constant 0 : index
    %69 = vector.load %arg1[%c0_85, %c3_86, %c0_87, %c0_88] : memref<2x4x7x32xf32, #tpu.memory_space<vmem>>, vector<1x1x6x32xf32>
    %70 = vector.shape_cast %69 : vector<1x1x6x32xf32> to vector<6x32xf32>
    %c1_89 = arith.constant 1 : index
    %c0_90 = arith.constant 0 : index
    %c0_91 = arith.constant 0 : index
    %71 = vector.load %arg2[%c1_89, %c0_90, %c0_91] : memref<5x32x256xf32, #tpu.memory_space<vmem>>, vector<1x32x256xf32>
    %72 = vector.shape_cast %71 : vector<1x32x256xf32> to vector<32x256xf32>
    %cst_92 = arith.constant dense<0.000000e+00> : vector<6x256xf32>
    %73 = tpu.matmul %70, %72, %cst_92 {dimension_numbers = #tpu.dot_dimension_numbers<[1], [0], [0], [1], [0, 0, 1, 1], [], []>} : vector<6x32xf32>, vector<32x256xf32>, vector<6x256xf32> -> vector<6x256xf32>
    %74 = arith.addf %68, %73 : vector<6x256xf32>
    %c0_93 = arith.constant 0 : index
    %c0_94 = arith.constant 0 : index
    %c1_95 = arith.constant 1 : index
    %c0_96 = arith.constant 0 : index
    %75 = vector.load %arg1[%c0_93, %c0_94, %c1_95, %c0_96] : memref<2x4x7x32xf32, #tpu.memory_space<vmem>>, vector<1x1x6x32xf32>
    %76 = vector.shape_cast %75 : vector<1x1x6x32xf32> to vector<6x32xf32>
    %c2_97 = arith.constant 2 : index
    %c0_98 = arith.constant 0 : index
    %c0_99 = arith.constant 0 : index
    %77 = vector.load %arg2[%c2_97, %c0_98, %c0_99] : memref<5x32x256xf32, #tpu.memory_space<vmem>>, vector<1x32x256xf32>
    %78 = vector.shape_cast %77 : vector<1x32x256xf32> to vector<32x256xf32>
    %cst_100 = arith.constant dense<0.000000e+00> : vector<6x256xf32>
    %79 = tpu.matmul %76, %78, %cst_100 {dimension_numbers = #tpu.dot_dimension_numbers<[1], [0], [0], [1], [0, 0, 1, 1], [], []>} : vector<6x32xf32>, vector<32x256xf32>, vector<6x256xf32> -> vector<6x256xf32>
    %80 = arith.addf %74, %79 : vector<6x256xf32>
    %c0_101 = arith.constant 0 : index
    %c1_102 = arith.constant 1 : index
    %c1_103 = arith.constant 1 : index
    %c0_104 = arith.constant 0 : index
    %81 = vector.load %arg1[%c0_101, %c1_102, %c1_103, %c0_104] : memref<2x4x7x32xf32, #tpu.memory_space<vmem>>, vector<1x1x6x32xf32>
    %82 = vector.shape_cast %81 : vector<1x1x6x32xf32> to vector<6x32xf32>
    %c3_105 = arith.constant 3 : index
    %c0_106 = arith.constant 0 : index
    %c0_107 = arith.constant 0 : index
    %83 = vector.load %arg2[%c3_105, %c0_106, %c0_107] : memref<5x32x256xf32, #tpu.memory_space<vmem>>, vector<1x32x256xf32>
    %84 = vector.shape_cast %83 : vector<1x32x256xf32> to vector<32x256xf32>
    %cst_108 = arith.constant dense<0.000000e+00> : vector<6x256xf32>
    %85 = tpu.matmul %82, %84, %cst_108 {dimension_numbers = #tpu.dot_dimension_numbers<[1], [0], [0], [1], [0, 0, 1, 1], [], []>} : vector<6x32xf32>, vector<32x256xf32>, vector<6x256xf32> -> vector<6x256xf32>
    %86 = arith.addf %80, %85 : vector<6x256xf32>
    %c0_109 = arith.constant 0 : index
    %c2_110 = arith.constant 2 : index
    %c1_111 = arith.constant 1 : index
    %c0_112 = arith.constant 0 : index
    %87 = vector.load %arg1[%c0_109, %c2_110, %c1_111, %c0_112] : memref<2x4x7x32xf32, #tpu.memory_space<vmem>>, vector<1x1x6x32xf32>
    %88 = vector.shape_cast %87 : vector<1x1x6x32xf32> to vector<6x32xf32>
    %c4_113 = arith.constant 4 : index
    %c0_114 = arith.constant 0 : index
    %c0_115 = arith.constant 0 : index
    %89 = vector.load %arg2[%c4_113, %c0_114, %c0_115] : memref<5x32x256xf32, #tpu.memory_space<vmem>>, vector<1x32x256xf32>
    %90 = vector.shape_cast %89 : vector<1x32x256xf32> to vector<32x256xf32>
    %cst_116 = arith.constant dense<0.000000e+00> : vector<6x256xf32>
    %91 = tpu.matmul %88, %90, %cst_116 {dimension_numbers = #tpu.dot_dimension_numbers<[1], [0], [0], [1], [0, 0, 1, 1], [], []>} : vector<6x32xf32>, vector<32x256xf32>, vector<6x256xf32> -> vector<6x256xf32>
    %92 = arith.addf %86, %91 : vector<6x256xf32>
    %cst_117 = arith.constant 0.000000e+00 : f32
    %93 = vector.broadcast %cst_117 : f32 to vector<6x256xf32>
    %c0_118 = arith.constant 0 : index
    %c3_119 = arith.constant 3 : index
    %c0_120 = arith.constant 0 : index
    %c0_121 = arith.constant 0 : index
    %94 = vector.load %arg1[%c0_118, %c3_119, %c0_120, %c0_121] : memref<2x4x7x32xf32, #tpu.memory_space<vmem>>, vector<1x1x6x32xf32>
    %95 = vector.shape_cast %94 : vector<1x1x6x32xf32> to vector<6x32xf32>
    %c0_122 = arith.constant 0 : index
    %c0_123 = arith.constant 0 : index
    %c0_124 = arith.constant 0 : index
    %96 = vector.load %arg2[%c0_122, %c0_123, %c0_124] : memref<5x32x256xf32, #tpu.memory_space<vmem>>, vector<1x32x256xf32>
    %97 = vector.shape_cast %96 : vector<1x32x256xf32> to vector<32x256xf32>
    %cst_125 = arith.constant dense<0.000000e+00> : vector<6x256xf32>
    %98 = tpu.matmul %95, %97, %cst_125 {dimension_numbers = #tpu.dot_dimension_numbers<[1], [0], [0], [1], [0, 0, 1, 1], [], []>} : vector<6x32xf32>, vector<32x256xf32>, vector<6x256xf32> -> vector<6x256xf32>
    %99 = arith.addf %93, %98 : vector<6x256xf32>
    %c0_126 = arith.constant 0 : index
    %c0_127 = arith.constant 0 : index
    %c1_128 = arith.constant 1 : index
    %c0_129 = arith.constant 0 : index
    %100 = vector.load %arg1[%c0_126, %c0_127, %c1_128, %c0_129] : memref<2x4x7x32xf32, #tpu.memory_space<vmem>>, vector<1x1x6x32xf32>
    %101 = vector.shape_cast %100 : vector<1x1x6x32xf32> to vector<6x32xf32>
    %c1_130 = arith.constant 1 : index
    %c0_131 = arith.constant 0 : index
    %c0_132 = arith.constant 0 : index
    %102 = vector.load %arg2[%c1_130, %c0_131, %c0_132] : memref<5x32x256xf32, #tpu.memory_space<vmem>>, vector<1x32x256xf32>
    %103 = vector.shape_cast %102 : vector<1x32x256xf32> to vector<32x256xf32>
    %cst_133 = arith.constant dense<0.000000e+00> : vector<6x256xf32>
    %104 = tpu.matmul %101, %103, %cst_133 {dimension_numbers = #tpu.dot_dimension_numbers<[1], [0], [0], [1], [0, 0, 1, 1], [], []>} : vector<6x32xf32>, vector<32x256xf32>, vector<6x256xf32> -> vector<6x256xf32>
    %105 = arith.addf %99, %104 : vector<6x256xf32>
    %c0_134 = arith.constant 0 : index
    %c1_135 = arith.constant 1 : index
    %c1_136 = arith.constant 1 : index
    %c0_137 = arith.constant 0 : index
    %106 = vector.load %arg1[%c0_134, %c1_135, %c1_136, %c0_137] : memref<2x4x7x32xf32, #tpu.memory_space<vmem>>, vector<1x1x6x32xf32>
    %107 = vector.shape_cast %106 : vector<1x1x6x32xf32> to vector<6x32xf32>
    %c2_138 = arith.constant 2 : index
    %c0_139 = arith.constant 0 : index
    %c0_140 = arith.constant 0 : index
    %108 = vector.load %arg2[%c2_138, %c0_139, %c0_140] : memref<5x32x256xf32, #tpu.memory_space<vmem>>, vector<1x32x256xf32>
    %109 = vector.shape_cast %108 : vector<1x32x256xf32> to vector<32x256xf32>
    %cst_141 = arith.constant dense<0.000000e+00> : vector<6x256xf32>
    %110 = tpu.matmul %107, %109, %cst_141 {dimension_numbers = #tpu.dot_dimension_numbers<[1], [0], [0], [1], [0, 0, 1, 1], [], []>} : vector<6x32xf32>, vector<32x256xf32>, vector<6x256xf32> -> vector<6x256xf32>
    %111 = arith.addf %105, %110 : vector<6x256xf32>
    %c0_142 = arith.constant 0 : index
    %c2_143 = arith.constant 2 : index
    %c1_144 = arith.constant 1 : index
    %c0_145 = arith.constant 0 : index
    %112 = vector.load %arg1[%c0_142, %c2_143, %c1_144, %c0_145] : memref<2x4x7x32xf32, #tpu.memory_space<vmem>>, vector<1x1x6x32xf32>
    %113 = vector.shape_cast %112 : vector<1x1x6x32xf32> to vector<6x32xf32>
    %c3_146 = arith.constant 3 : index
    %c0_147 = arith.constant 0 : index
    %c0_148 = arith.constant 0 : index
    %114 = vector.load %arg2[%c3_146, %c0_147, %c0_148] : memref<5x32x256xf32, #tpu.memory_space<vmem>>, vector<1x32x256xf32>
    %115 = vector.shape_cast %114 : vector<1x32x256xf32> to vector<32x256xf32>
    %cst_149 = arith.constant dense<0.000000e+00> : vector<6x256xf32>
    %116 = tpu.matmul %113, %115, %cst_149 {dimension_numbers = #tpu.dot_dimension_numbers<[1], [0], [0], [1], [0, 0, 1, 1], [], []>} : vector<6x32xf32>, vector<32x256xf32>, vector<6x256xf32> -> vector<6x256xf32>
    %117 = arith.addf %111, %116 : vector<6x256xf32>
    %c0_150 = arith.constant 0 : index
    %c3_151 = arith.constant 3 : index
    %c1_152 = arith.constant 1 : index
    %c0_153 = arith.constant 0 : index
    %118 = vector.load %arg1[%c0_150, %c3_151, %c1_152, %c0_153] : memref<2x4x7x32xf32, #tpu.memory_space<vmem>>, vector<1x1x6x32xf32>
    %119 = vector.shape_cast %118 : vector<1x1x6x32xf32> to vector<6x32xf32>
    %c4_154 = arith.constant 4 : index
    %c0_155 = arith.constant 0 : index
    %c0_156 = arith.constant 0 : index
    %120 = vector.load %arg2[%c4_154, %c0_155, %c0_156] : memref<5x32x256xf32, #tpu.memory_space<vmem>>, vector<1x32x256xf32>
    %121 = vector.shape_cast %120 : vector<1x32x256xf32> to vector<32x256xf32>
    %cst_157 = arith.constant dense<0.000000e+00> : vector<6x256xf32>
    %122 = tpu.matmul %119, %121, %cst_157 {dimension_numbers = #tpu.dot_dimension_numbers<[1], [0], [0], [1], [0, 0, 1, 1], [], []>} : vector<6x32xf32>, vector<32x256xf32>, vector<6x256xf32> -> vector<6x256xf32>
    %123 = arith.addf %117, %122 : vector<6x256xf32>
    %124 = vector.extract_strided_slice %30 {offsets = [0, 0], sizes = [6, 128], strides = [1, 1]} : vector<6x256xf32> to vector<6x128xf32>
    %125 = vector.extract_strided_slice %30 {offsets = [0, 128], sizes = [6, 128], strides = [1, 1]} : vector<6x256xf32> to vector<6x128xf32>
    %126 = arith.maximumf %124, %125 : vector<6x128xf32>
    %127 = vector.extract_strided_slice %61 {offsets = [0, 0], sizes = [6, 128], strides = [1, 1]} : vector<6x256xf32> to vector<6x128xf32>
    %128 = vector.extract_strided_slice %61 {offsets = [0, 128], sizes = [6, 128], strides = [1, 1]} : vector<6x256xf32> to vector<6x128xf32>
    %129 = arith.maximumf %127, %128 : vector<6x128xf32>
    %130 = arith.maximumf %126, %129 : vector<6x128xf32>
    %c0_158 = arith.constant 0 : index
    %c0_159 = arith.constant 0 : index
    %131 = vector.load %arg3[%c0_158, %c0_159] : memref<1x128xf32, #tpu.memory_space<vmem>>, vector<1x128xf32>
    %132 = vector.broadcast %131 : vector<1x128xf32> to vector<6x128xf32>
    %133 = arith.addf %130, %132 : vector<6x128xf32>
    %cst_160 = arith.constant 0.000000e+00 : f32
    %134 = vector.broadcast %cst_160 : f32 to vector<6x128xf32>
    %135 = arith.maximumf %133, %134 : vector<6x128xf32>
    %136 = vector.extract_strided_slice %92 {offsets = [0, 0], sizes = [6, 128], strides = [1, 1]} : vector<6x256xf32> to vector<6x128xf32>
    %137 = vector.extract_strided_slice %92 {offsets = [0, 128], sizes = [6, 128], strides = [1, 1]} : vector<6x256xf32> to vector<6x128xf32>
    %138 = arith.maximumf %136, %137 : vector<6x128xf32>
    %139 = vector.extract_strided_slice %123 {offsets = [0, 0], sizes = [6, 128], strides = [1, 1]} : vector<6x256xf32> to vector<6x128xf32>
    %140 = vector.extract_strided_slice %123 {offsets = [0, 128], sizes = [6, 128], strides = [1, 1]} : vector<6x256xf32> to vector<6x128xf32>
    %141 = arith.maximumf %139, %140 : vector<6x128xf32>
    %142 = arith.maximumf %138, %141 : vector<6x128xf32>
    %c0_161 = arith.constant 0 : index
    %c0_162 = arith.constant 0 : index
    %143 = vector.load %arg3[%c0_161, %c0_162] : memref<1x128xf32, #tpu.memory_space<vmem>>, vector<1x128xf32>
    %144 = vector.broadcast %143 : vector<1x128xf32> to vector<6x128xf32>
    %145 = arith.addf %142, %144 : vector<6x128xf32>
    %cst_163 = arith.constant 0.000000e+00 : f32
    %146 = vector.broadcast %cst_163 : f32 to vector<6x128xf32>
    %147 = arith.maximumf %145, %146 : vector<6x128xf32>
    %cst_164 = arith.constant 0.000000e+00 : f32
    %148 = vector.broadcast %cst_164 : f32 to vector<4x256xf32>
    %cst_165 = arith.constant 0.000000e+00 : f32
    %149 = vector.broadcast %cst_165 : f32 to vector<4x256xf32>
    %150 = vector.extract_strided_slice %135 {offsets = [0, 0], sizes = [4, 128], strides = [1, 1]} : vector<6x128xf32> to vector<4x128xf32>
    %c0_166 = arith.constant 0 : index
    %c0_167 = arith.constant 0 : index
    %c0_168 = arith.constant 0 : index
    %151 = vector.load %arg4[%c0_166, %c0_167, %c0_168] : memref<5x128x256xf32, #tpu.memory_space<vmem>>, vector<1x128x256xf32>
    %152 = vector.shape_cast %151 : vector<1x128x256xf32> to vector<128x256xf32>
    %cst_169 = arith.constant dense<0.000000e+00> : vector<4x256xf32>
    %153 = tpu.matmul %150, %152, %cst_169 {dimension_numbers = #tpu.dot_dimension_numbers<[1], [0], [0], [1], [0, 0, 1, 1], [], []>} : vector<4x128xf32>, vector<128x256xf32>, vector<4x256xf32> -> vector<4x256xf32>
    %154 = arith.addf %148, %153 : vector<4x256xf32>
    %155 = vector.extract_strided_slice %147 {offsets = [0, 0], sizes = [4, 128], strides = [1, 1]} : vector<6x128xf32> to vector<4x128xf32>
    %c0_170 = arith.constant 0 : index
    %c0_171 = arith.constant 0 : index
    %c0_172 = arith.constant 0 : index
    %156 = vector.load %arg4[%c0_170, %c0_171, %c0_172] : memref<5x128x256xf32, #tpu.memory_space<vmem>>, vector<1x128x256xf32>
    %157 = vector.shape_cast %156 : vector<1x128x256xf32> to vector<128x256xf32>
    %cst_173 = arith.constant dense<0.000000e+00> : vector<4x256xf32>
    %158 = tpu.matmul %155, %157, %cst_173 {dimension_numbers = #tpu.dot_dimension_numbers<[1], [0], [0], [1], [0, 0, 1, 1], [], []>} : vector<4x128xf32>, vector<128x256xf32>, vector<4x256xf32> -> vector<4x256xf32>
    %159 = arith.addf %149, %158 : vector<4x256xf32>
    %160 = vector.extract_strided_slice %135 {offsets = [1, 0], sizes = [4, 128], strides = [1, 1]} : vector<6x128xf32> to vector<4x128xf32>
    %c2_174 = arith.constant 2 : index
    %c0_175 = arith.constant 0 : index
    %c0_176 = arith.constant 0 : index
    %161 = vector.load %arg4[%c2_174, %c0_175, %c0_176] : memref<5x128x256xf32, #tpu.memory_space<vmem>>, vector<1x128x256xf32>
    %162 = vector.shape_cast %161 : vector<1x128x256xf32> to vector<128x256xf32>
    %cst_177 = arith.constant dense<0.000000e+00> : vector<4x256xf32>
    %163 = tpu.matmul %160, %162, %cst_177 {dimension_numbers = #tpu.dot_dimension_numbers<[1], [0], [0], [1], [0, 0, 1, 1], [], []>} : vector<4x128xf32>, vector<128x256xf32>, vector<4x256xf32> -> vector<4x256xf32>
    %164 = arith.addf %154, %163 : vector<4x256xf32>
    %165 = vector.extract_strided_slice %147 {offsets = [1, 0], sizes = [4, 128], strides = [1, 1]} : vector<6x128xf32> to vector<4x128xf32>
    %c2_178 = arith.constant 2 : index
    %c0_179 = arith.constant 0 : index
    %c0_180 = arith.constant 0 : index
    %166 = vector.load %arg4[%c2_178, %c0_179, %c0_180] : memref<5x128x256xf32, #tpu.memory_space<vmem>>, vector<1x128x256xf32>
    %167 = vector.shape_cast %166 : vector<1x128x256xf32> to vector<128x256xf32>
    %cst_181 = arith.constant dense<0.000000e+00> : vector<4x256xf32>
    %168 = tpu.matmul %165, %167, %cst_181 {dimension_numbers = #tpu.dot_dimension_numbers<[1], [0], [0], [1], [0, 0, 1, 1], [], []>} : vector<4x128xf32>, vector<128x256xf32>, vector<4x256xf32> -> vector<4x256xf32>
    %169 = arith.addf %159, %168 : vector<4x256xf32>
    %170 = vector.extract_strided_slice %135 {offsets = [2, 0], sizes = [4, 128], strides = [1, 1]} : vector<6x128xf32> to vector<4x128xf32>
    %c4_182 = arith.constant 4 : index
    %c0_183 = arith.constant 0 : index
    %c0_184 = arith.constant 0 : index
    %171 = vector.load %arg4[%c4_182, %c0_183, %c0_184] : memref<5x128x256xf32, #tpu.memory_space<vmem>>, vector<1x128x256xf32>
    %172 = vector.shape_cast %171 : vector<1x128x256xf32> to vector<128x256xf32>
    %cst_185 = arith.constant dense<0.000000e+00> : vector<4x256xf32>
    %173 = tpu.matmul %170, %172, %cst_185 {dimension_numbers = #tpu.dot_dimension_numbers<[1], [0], [0], [1], [0, 0, 1, 1], [], []>} : vector<4x128xf32>, vector<128x256xf32>, vector<4x256xf32> -> vector<4x256xf32>
    %174 = arith.addf %164, %173 : vector<4x256xf32>
    %175 = vector.extract_strided_slice %147 {offsets = [2, 0], sizes = [4, 128], strides = [1, 1]} : vector<6x128xf32> to vector<4x128xf32>
    %c4_186 = arith.constant 4 : index
    %c0_187 = arith.constant 0 : index
    %c0_188 = arith.constant 0 : index
    %176 = vector.load %arg4[%c4_186, %c0_187, %c0_188] : memref<5x128x256xf32, #tpu.memory_space<vmem>>, vector<1x128x256xf32>
    %177 = vector.shape_cast %176 : vector<1x128x256xf32> to vector<128x256xf32>
    %cst_189 = arith.constant dense<0.000000e+00> : vector<4x256xf32>
    %178 = tpu.matmul %175, %177, %cst_189 {dimension_numbers = #tpu.dot_dimension_numbers<[1], [0], [0], [1], [0, 0, 1, 1], [], []>} : vector<4x128xf32>, vector<128x256xf32>, vector<4x256xf32> -> vector<4x256xf32>
    %179 = arith.addf %169, %178 : vector<4x256xf32>
    %180 = vector.extract_strided_slice %147 {offsets = [0, 0], sizes = [4, 128], strides = [1, 1]} : vector<6x128xf32> to vector<4x128xf32>
    %c1_190 = arith.constant 1 : index
    %c0_191 = arith.constant 0 : index
    %c0_192 = arith.constant 0 : index
    %181 = vector.load %arg4[%c1_190, %c0_191, %c0_192] : memref<5x128x256xf32, #tpu.memory_space<vmem>>, vector<1x128x256xf32>
    %182 = vector.shape_cast %181 : vector<1x128x256xf32> to vector<128x256xf32>
    %cst_193 = arith.constant dense<0.000000e+00> : vector<4x256xf32>
    %183 = tpu.matmul %180, %182, %cst_193 {dimension_numbers = #tpu.dot_dimension_numbers<[1], [0], [0], [1], [0, 0, 1, 1], [], []>} : vector<4x128xf32>, vector<128x256xf32>, vector<4x256xf32> -> vector<4x256xf32>
    %184 = arith.addf %174, %183 : vector<4x256xf32>
    %185 = vector.extract_strided_slice %135 {offsets = [1, 0], sizes = [4, 128], strides = [1, 1]} : vector<6x128xf32> to vector<4x128xf32>
    %c1_194 = arith.constant 1 : index
    %c0_195 = arith.constant 0 : index
    %c0_196 = arith.constant 0 : index
    %186 = vector.load %arg4[%c1_194, %c0_195, %c0_196] : memref<5x128x256xf32, #tpu.memory_space<vmem>>, vector<1x128x256xf32>
    %187 = vector.shape_cast %186 : vector<1x128x256xf32> to vector<128x256xf32>
    %cst_197 = arith.constant dense<0.000000e+00> : vector<4x256xf32>
    %188 = tpu.matmul %185, %187, %cst_197 {dimension_numbers = #tpu.dot_dimension_numbers<[1], [0], [0], [1], [0, 0, 1, 1], [], []>} : vector<4x128xf32>, vector<128x256xf32>, vector<4x256xf32> -> vector<4x256xf32>
    %189 = arith.addf %179, %188 : vector<4x256xf32>
    %190 = vector.extract_strided_slice %147 {offsets = [1, 0], sizes = [4, 128], strides = [1, 1]} : vector<6x128xf32> to vector<4x128xf32>
    %c3_198 = arith.constant 3 : index
    %c0_199 = arith.constant 0 : index
    %c0_200 = arith.constant 0 : index
    %191 = vector.load %arg4[%c3_198, %c0_199, %c0_200] : memref<5x128x256xf32, #tpu.memory_space<vmem>>, vector<1x128x256xf32>
    %192 = vector.shape_cast %191 : vector<1x128x256xf32> to vector<128x256xf32>
    %cst_201 = arith.constant dense<0.000000e+00> : vector<4x256xf32>
    %193 = tpu.matmul %190, %192, %cst_201 {dimension_numbers = #tpu.dot_dimension_numbers<[1], [0], [0], [1], [0, 0, 1, 1], [], []>} : vector<4x128xf32>, vector<128x256xf32>, vector<4x256xf32> -> vector<4x256xf32>
    %194 = arith.addf %184, %193 : vector<4x256xf32>
    %195 = vector.extract_strided_slice %135 {offsets = [2, 0], sizes = [4, 128], strides = [1, 1]} : vector<6x128xf32> to vector<4x128xf32>
    %c3_202 = arith.constant 3 : index
    %c0_203 = arith.constant 0 : index
    %c0_204 = arith.constant 0 : index
    %196 = vector.load %arg4[%c3_202, %c0_203, %c0_204] : memref<5x128x256xf32, #tpu.memory_space<vmem>>, vector<1x128x256xf32>
    %197 = vector.shape_cast %196 : vector<1x128x256xf32> to vector<128x256xf32>
    %cst_205 = arith.constant dense<0.000000e+00> : vector<4x256xf32>
    %198 = tpu.matmul %195, %197, %cst_205 {dimension_numbers = #tpu.dot_dimension_numbers<[1], [0], [0], [1], [0, 0, 1, 1], [], []>} : vector<4x128xf32>, vector<128x256xf32>, vector<4x256xf32> -> vector<4x256xf32>
    %199 = arith.addf %189, %198 : vector<4x256xf32>
    %200 = vector.extract_strided_slice %194 {offsets = [0, 0], sizes = [4, 128], strides = [1, 1]} : vector<4x256xf32> to vector<4x128xf32>
    %201 = vector.extract_strided_slice %194 {offsets = [0, 128], sizes = [4, 128], strides = [1, 1]} : vector<4x256xf32> to vector<4x128xf32>
    %202 = arith.maximumf %200, %201 : vector<4x128xf32>
    %203 = vector.extract_strided_slice %199 {offsets = [0, 0], sizes = [4, 128], strides = [1, 1]} : vector<4x256xf32> to vector<4x128xf32>
    %204 = vector.extract_strided_slice %199 {offsets = [0, 128], sizes = [4, 128], strides = [1, 1]} : vector<4x256xf32> to vector<4x128xf32>
    %205 = arith.maximumf %203, %204 : vector<4x128xf32>
    %206 = arith.maximumf %202, %205 : vector<4x128xf32>
    %c0_206 = arith.constant 0 : index
    %c0_207 = arith.constant 0 : index
    %207 = vector.load %arg5[%c0_206, %c0_207] : memref<1x128xf32, #tpu.memory_space<vmem>>, vector<1x128xf32>
    %208 = vector.broadcast %207 : vector<1x128xf32> to vector<4x128xf32>
    %209 = arith.addf %206, %208 : vector<4x128xf32>
    %cst_208 = arith.constant 0.000000e+00 : f32
    %210 = vector.broadcast %cst_208 : f32 to vector<4x128xf32>
    %211 = arith.maximumf %209, %210 : vector<4x128xf32>
    %212 = vector.extract_strided_slice %211 {offsets = [0, 0], sizes = [1, 128], strides = [1, 1]} : vector<4x128xf32> to vector<1x128xf32>
    %213 = vector.extract_strided_slice %211 {offsets = [1, 0], sizes = [1, 128], strides = [1, 1]} : vector<4x128xf32> to vector<1x128xf32>
    %214 = vector.extract_strided_slice %211 {offsets = [2, 0], sizes = [1, 128], strides = [1, 1]} : vector<4x128xf32> to vector<1x128xf32>
    %215 = vector.extract_strided_slice %211 {offsets = [3, 0], sizes = [1, 128], strides = [1, 1]} : vector<4x128xf32> to vector<1x128xf32>
    %cst_209 = arith.constant 0.000000e+00 : f32
    %216 = vector.broadcast %cst_209 : f32 to vector<6x256xf32>
    %c1_210 = arith.constant 1 : index
    %c0_211 = arith.constant 0 : index
    %c0_212 = arith.constant 0 : index
    %c0_213 = arith.constant 0 : index
    %217 = vector.load %arg1[%c1_210, %c0_211, %c0_212, %c0_213] : memref<2x4x7x32xf32, #tpu.memory_space<vmem>>, vector<1x1x6x32xf32>
    %218 = vector.shape_cast %217 : vector<1x1x6x32xf32> to vector<6x32xf32>
    %c0_214 = arith.constant 0 : index
    %c0_215 = arith.constant 0 : index
    %c0_216 = arith.constant 0 : index
    %219 = vector.load %arg2[%c0_214, %c0_215, %c0_216] : memref<5x32x256xf32, #tpu.memory_space<vmem>>, vector<1x32x256xf32>
    %220 = vector.shape_cast %219 : vector<1x32x256xf32> to vector<32x256xf32>
    %cst_217 = arith.constant dense<0.000000e+00> : vector<6x256xf32>
    %221 = tpu.matmul %218, %220, %cst_217 {dimension_numbers = #tpu.dot_dimension_numbers<[1], [0], [0], [1], [0, 0, 1, 1], [], []>} : vector<6x32xf32>, vector<32x256xf32>, vector<6x256xf32> -> vector<6x256xf32>
    %222 = arith.addf %216, %221 : vector<6x256xf32>
    %c1_218 = arith.constant 1 : index
    %c1_219 = arith.constant 1 : index
    %c0_220 = arith.constant 0 : index
    %c0_221 = arith.constant 0 : index
    %223 = vector.load %arg1[%c1_218, %c1_219, %c0_220, %c0_221] : memref<2x4x7x32xf32, #tpu.memory_space<vmem>>, vector<1x1x6x32xf32>
    %224 = vector.shape_cast %223 : vector<1x1x6x32xf32> to vector<6x32xf32>
    %c1_222 = arith.constant 1 : index
    %c0_223 = arith.constant 0 : index
    %c0_224 = arith.constant 0 : index
    %225 = vector.load %arg2[%c1_222, %c0_223, %c0_224] : memref<5x32x256xf32, #tpu.memory_space<vmem>>, vector<1x32x256xf32>
    %226 = vector.shape_cast %225 : vector<1x32x256xf32> to vector<32x256xf32>
    %cst_225 = arith.constant dense<0.000000e+00> : vector<6x256xf32>
    %227 = tpu.matmul %224, %226, %cst_225 {dimension_numbers = #tpu.dot_dimension_numbers<[1], [0], [0], [1], [0, 0, 1, 1], [], []>} : vector<6x32xf32>, vector<32x256xf32>, vector<6x256xf32> -> vector<6x256xf32>
    %228 = arith.addf %222, %227 : vector<6x256xf32>
    %c1_226 = arith.constant 1 : index
    %c2_227 = arith.constant 2 : index
    %c0_228 = arith.constant 0 : index
    %c0_229 = arith.constant 0 : index
    %229 = vector.load %arg1[%c1_226, %c2_227, %c0_228, %c0_229] : memref<2x4x7x32xf32, #tpu.memory_space<vmem>>, vector<1x1x6x32xf32>
    %230 = vector.shape_cast %229 : vector<1x1x6x32xf32> to vector<6x32xf32>
    %c2_230 = arith.constant 2 : index
    %c0_231 = arith.constant 0 : index
    %c0_232 = arith.constant 0 : index
    %231 = vector.load %arg2[%c2_230, %c0_231, %c0_232] : memref<5x32x256xf32, #tpu.memory_space<vmem>>, vector<1x32x256xf32>
    %232 = vector.shape_cast %231 : vector<1x32x256xf32> to vector<32x256xf32>
    %cst_233 = arith.constant dense<0.000000e+00> : vector<6x256xf32>
    %233 = tpu.matmul %230, %232, %cst_233 {dimension_numbers = #tpu.dot_dimension_numbers<[1], [0], [0], [1], [0, 0, 1, 1], [], []>} : vector<6x32xf32>, vector<32x256xf32>, vector<6x256xf32> -> vector<6x256xf32>
    %234 = arith.addf %228, %233 : vector<6x256xf32>
    %c1_234 = arith.constant 1 : index
    %c3_235 = arith.constant 3 : index
    %c0_236 = arith.constant 0 : index
    %c0_237 = arith.constant 0 : index
    %235 = vector.load %arg1[%c1_234, %c3_235, %c0_236, %c0_237] : memref<2x4x7x32xf32, #tpu.memory_space<vmem>>, vector<1x1x6x32xf32>
    %236 = vector.shape_cast %235 : vector<1x1x6x32xf32> to vector<6x32xf32>
    %c3_238 = arith.constant 3 : index
    %c0_239 = arith.constant 0 : index
    %c0_240 = arith.constant 0 : index
    %237 = vector.load %arg2[%c3_238, %c0_239, %c0_240] : memref<5x32x256xf32, #tpu.memory_space<vmem>>, vector<1x32x256xf32>
    %238 = vector.shape_cast %237 : vector<1x32x256xf32> to vector<32x256xf32>
    %cst_241 = arith.constant dense<0.000000e+00> : vector<6x256xf32>
    %239 = tpu.matmul %236, %238, %cst_241 {dimension_numbers = #tpu.dot_dimension_numbers<[1], [0], [0], [1], [0, 0, 1, 1], [], []>} : vector<6x32xf32>, vector<32x256xf32>, vector<6x256xf32> -> vector<6x256xf32>
    %240 = arith.addf %234, %239 : vector<6x256xf32>
    %c1_242 = arith.constant 1 : index
    %c0_243 = arith.constant 0 : index
    %c1_244 = arith.constant 1 : index
    %c0_245 = arith.constant 0 : index
    %241 = vector.load %arg1[%c1_242, %c0_243, %c1_244, %c0_245] : memref<2x4x7x32xf32, #tpu.memory_space<vmem>>, vector<1x1x6x32xf32>
    %242 = vector.shape_cast %241 : vector<1x1x6x32xf32> to vector<6x32xf32>
    %c4_246 = arith.constant 4 : index
    %c0_247 = arith.constant 0 : index
    %c0_248 = arith.constant 0 : index
    %243 = vector.load %arg2[%c4_246, %c0_247, %c0_248] : memref<5x32x256xf32, #tpu.memory_space<vmem>>, vector<1x32x256xf32>
    %244 = vector.shape_cast %243 : vector<1x32x256xf32> to vector<32x256xf32>
    %cst_249 = arith.constant dense<0.000000e+00> : vector<6x256xf32>
    %245 = tpu.matmul %242, %244, %cst_249 {dimension_numbers = #tpu.dot_dimension_numbers<[1], [0], [0], [1], [0, 0, 1, 1], [], []>} : vector<6x32xf32>, vector<32x256xf32>, vector<6x256xf32> -> vector<6x256xf32>
    %246 = arith.addf %240, %245 : vector<6x256xf32>
    %cst_250 = arith.constant 0.000000e+00 : f32
    %247 = vector.broadcast %cst_250 : f32 to vector<6x256xf32>
    %c1_251 = arith.constant 1 : index
    %c1_252 = arith.constant 1 : index
    %c0_253 = arith.constant 0 : index
    %c0_254 = arith.constant 0 : index
    %248 = vector.load %arg1[%c1_251, %c1_252, %c0_253, %c0_254] : memref<2x4x7x32xf32, #tpu.memory_space<vmem>>, vector<1x1x6x32xf32>
    %249 = vector.shape_cast %248 : vector<1x1x6x32xf32> to vector<6x32xf32>
    %c0_255 = arith.constant 0 : index
    %c0_256 = arith.constant 0 : index
    %c0_257 = arith.constant 0 : index
    %250 = vector.load %arg2[%c0_255, %c0_256, %c0_257] : memref<5x32x256xf32, #tpu.memory_space<vmem>>, vector<1x32x256xf32>
    %251 = vector.shape_cast %250 : vector<1x32x256xf32> to vector<32x256xf32>
    %cst_258 = arith.constant dense<0.000000e+00> : vector<6x256xf32>
    %252 = tpu.matmul %249, %251, %cst_258 {dimension_numbers = #tpu.dot_dimension_numbers<[1], [0], [0], [1], [0, 0, 1, 1], [], []>} : vector<6x32xf32>, vector<32x256xf32>, vector<6x256xf32> -> vector<6x256xf32>
    %253 = arith.addf %247, %252 : vector<6x256xf32>
    %c1_259 = arith.constant 1 : index
    %c2_260 = arith.constant 2 : index
    %c0_261 = arith.constant 0 : index
    %c0_262 = arith.constant 0 : index
    %254 = vector.load %arg1[%c1_259, %c2_260, %c0_261, %c0_262] : memref<2x4x7x32xf32, #tpu.memory_space<vmem>>, vector<1x1x6x32xf32>
    %255 = vector.shape_cast %254 : vector<1x1x6x32xf32> to vector<6x32xf32>
    %c1_263 = arith.constant 1 : index
    %c0_264 = arith.constant 0 : index
    %c0_265 = arith.constant 0 : index
    %256 = vector.load %arg2[%c1_263, %c0_264, %c0_265] : memref<5x32x256xf32, #tpu.memory_space<vmem>>, vector<1x32x256xf32>
    %257 = vector.shape_cast %256 : vector<1x32x256xf32> to vector<32x256xf32>
    %cst_266 = arith.constant dense<0.000000e+00> : vector<6x256xf32>
    %258 = tpu.matmul %255, %257, %cst_266 {dimension_numbers = #tpu.dot_dimension_numbers<[1], [0], [0], [1], [0, 0, 1, 1], [], []>} : vector<6x32xf32>, vector<32x256xf32>, vector<6x256xf32> -> vector<6x256xf32>
    %259 = arith.addf %253, %258 : vector<6x256xf32>
    %c1_267 = arith.constant 1 : index
    %c3_268 = arith.constant 3 : index
    %c0_269 = arith.constant 0 : index
    %c0_270 = arith.constant 0 : index
    %260 = vector.load %arg1[%c1_267, %c3_268, %c0_269, %c0_270] : memref<2x4x7x32xf32, #tpu.memory_space<vmem>>, vector<1x1x6x32xf32>
    %261 = vector.shape_cast %260 : vector<1x1x6x32xf32> to vector<6x32xf32>
    %c2_271 = arith.constant 2 : index
    %c0_272 = arith.constant 0 : index
    %c0_273 = arith.constant 0 : index
    %262 = vector.load %arg2[%c2_271, %c0_272, %c0_273] : memref<5x32x256xf32, #tpu.memory_space<vmem>>, vector<1x32x256xf32>
    %263 = vector.shape_cast %262 : vector<1x32x256xf32> to vector<32x256xf32>
    %cst_274 = arith.constant dense<0.000000e+00> : vector<6x256xf32>
    %264 = tpu.matmul %261, %263, %cst_274 {dimension_numbers = #tpu.dot_dimension_numbers<[1], [0], [0], [1], [0, 0, 1, 1], [], []>} : vector<6x32xf32>, vector<32x256xf32>, vector<6x256xf32> -> vector<6x256xf32>
    %265 = arith.addf %259, %264 : vector<6x256xf32>
    %c1_275 = arith.constant 1 : index
    %c0_276 = arith.constant 0 : index
    %c1_277 = arith.constant 1 : index
    %c0_278 = arith.constant 0 : index
    %266 = vector.load %arg1[%c1_275, %c0_276, %c1_277, %c0_278] : memref<2x4x7x32xf32, #tpu.memory_space<vmem>>, vector<1x1x6x32xf32>
    %267 = vector.shape_cast %266 : vector<1x1x6x32xf32> to vector<6x32xf32>
    %c3_279 = arith.constant 3 : index
    %c0_280 = arith.constant 0 : index
    %c0_281 = arith.constant 0 : index
    %268 = vector.load %arg2[%c3_279, %c0_280, %c0_281] : memref<5x32x256xf32, #tpu.memory_space<vmem>>, vector<1x32x256xf32>
    %269 = vector.shape_cast %268 : vector<1x32x256xf32> to vector<32x256xf32>
    %cst_282 = arith.constant dense<0.000000e+00> : vector<6x256xf32>
    %270 = tpu.matmul %267, %269, %cst_282 {dimension_numbers = #tpu.dot_dimension_numbers<[1], [0], [0], [1], [0, 0, 1, 1], [], []>} : vector<6x32xf32>, vector<32x256xf32>, vector<6x256xf32> -> vector<6x256xf32>
    %271 = arith.addf %265, %270 : vector<6x256xf32>
    %c1_283 = arith.constant 1 : index
    %c1_284 = arith.constant 1 : index
    %c1_285 = arith.constant 1 : index
    %c0_286 = arith.constant 0 : index
    %272 = vector.load %arg1[%c1_283, %c1_284, %c1_285, %c0_286] : memref<2x4x7x32xf32, #tpu.memory_space<vmem>>, vector<1x1x6x32xf32>
    %273 = vector.shape_cast %272 : vector<1x1x6x32xf32> to vector<6x32xf32>
    %c4_287 = arith.constant 4 : index
    %c0_288 = arith.constant 0 : index
    %c0_289 = arith.constant 0 : index
    %274 = vector.load %arg2[%c4_287, %c0_288, %c0_289] : memref<5x32x256xf32, #tpu.memory_space<vmem>>, vector<1x32x256xf32>
    %275 = vector.shape_cast %274 : vector<1x32x256xf32> to vector<32x256xf32>
    %cst_290 = arith.constant dense<0.000000e+00> : vector<6x256xf32>
    %276 = tpu.matmul %273, %275, %cst_290 {dimension_numbers = #tpu.dot_dimension_numbers<[1], [0], [0], [1], [0, 0, 1, 1], [], []>} : vector<6x32xf32>, vector<32x256xf32>, vector<6x256xf32> -> vector<6x256xf32>
    %277 = arith.addf %271, %276 : vector<6x256xf32>
    %cst_291 = arith.constant 0.000000e+00 : f32
    %278 = vector.broadcast %cst_291 : f32 to vector<6x256xf32>
    %c1_292 = arith.constant 1 : index
    %c2_293 = arith.constant 2 : index
    %c0_294 = arith.constant 0 : index
    %c0_295 = arith.constant 0 : index
    %279 = vector.load %arg1[%c1_292, %c2_293, %c0_294, %c0_295] : memref<2x4x7x32xf32, #tpu.memory_space<vmem>>, vector<1x1x6x32xf32>
    %280 = vector.shape_cast %279 : vector<1x1x6x32xf32> to vector<6x32xf32>
    %c0_296 = arith.constant 0 : index
    %c0_297 = arith.constant 0 : index
    %c0_298 = arith.constant 0 : index
    %281 = vector.load %arg2[%c0_296, %c0_297, %c0_298] : memref<5x32x256xf32, #tpu.memory_space<vmem>>, vector<1x32x256xf32>
    %282 = vector.shape_cast %281 : vector<1x32x256xf32> to vector<32x256xf32>
    %cst_299 = arith.constant dense<0.000000e+00> : vector<6x256xf32>
    %283 = tpu.matmul %280, %282, %cst_299 {dimension_numbers = #tpu.dot_dimension_numbers<[1], [0], [0], [1], [0, 0, 1, 1], [], []>} : vector<6x32xf32>, vector<32x256xf32>, vector<6x256xf32> -> vector<6x256xf32>
    %284 = arith.addf %278, %283 : vector<6x256xf32>
    %c1_300 = arith.constant 1 : index
    %c3_301 = arith.constant 3 : index
    %c0_302 = arith.constant 0 : index
    %c0_303 = arith.constant 0 : index
    %285 = vector.load %arg1[%c1_300, %c3_301, %c0_302, %c0_303] : memref<2x4x7x32xf32, #tpu.memory_space<vmem>>, vector<1x1x6x32xf32>
    %286 = vector.shape_cast %285 : vector<1x1x6x32xf32> to vector<6x32xf32>
    %c1_304 = arith.constant 1 : index
    %c0_305 = arith.constant 0 : index
    %c0_306 = arith.constant 0 : index
    %287 = vector.load %arg2[%c1_304, %c0_305, %c0_306] : memref<5x32x256xf32, #tpu.memory_space<vmem>>, vector<1x32x256xf32>
    %288 = vector.shape_cast %287 : vector<1x32x256xf32> to vector<32x256xf32>
    %cst_307 = arith.constant dense<0.000000e+00> : vector<6x256xf32>
    %289 = tpu.matmul %286, %288, %cst_307 {dimension_numbers = #tpu.dot_dimension_numbers<[1], [0], [0], [1], [0, 0, 1, 1], [], []>} : vector<6x32xf32>, vector<32x256xf32>, vector<6x256xf32> -> vector<6x256xf32>
    %290 = arith.addf %284, %289 : vector<6x256xf32>
    %c1_308 = arith.constant 1 : index
    %c0_309 = arith.constant 0 : index
    %c1_310 = arith.constant 1 : index
    %c0_311 = arith.constant 0 : index
    %291 = vector.load %arg1[%c1_308, %c0_309, %c1_310, %c0_311] : memref<2x4x7x32xf32, #tpu.memory_space<vmem>>, vector<1x1x6x32xf32>
    %292 = vector.shape_cast %291 : vector<1x1x6x32xf32> to vector<6x32xf32>
    %c2_312 = arith.constant 2 : index
    %c0_313 = arith.constant 0 : index
    %c0_314 = arith.constant 0 : index
    %293 = vector.load %arg2[%c2_312, %c0_313, %c0_314] : memref<5x32x256xf32, #tpu.memory_space<vmem>>, vector<1x32x256xf32>
    %294 = vector.shape_cast %293 : vector<1x32x256xf32> to vector<32x256xf32>
    %cst_315 = arith.constant dense<0.000000e+00> : vector<6x256xf32>
    %295 = tpu.matmul %292, %294, %cst_315 {dimension_numbers = #tpu.dot_dimension_numbers<[1], [0], [0], [1], [0, 0, 1, 1], [], []>} : vector<6x32xf32>, vector<32x256xf32>, vector<6x256xf32> -> vector<6x256xf32>
    %296 = arith.addf %290, %295 : vector<6x256xf32>
    %c1_316 = arith.constant 1 : index
    %c1_317 = arith.constant 1 : index
    %c1_318 = arith.constant 1 : index
    %c0_319 = arith.constant 0 : index
    %297 = vector.load %arg1[%c1_316, %c1_317, %c1_318, %c0_319] : memref<2x4x7x32xf32, #tpu.memory_space<vmem>>, vector<1x1x6x32xf32>
    %298 = vector.shape_cast %297 : vector<1x1x6x32xf32> to vector<6x32xf32>
    %c3_320 = arith.constant 3 : index
    %c0_321 = arith.constant 0 : index
    %c0_322 = arith.constant 0 : index
    %299 = vector.load %arg2[%c3_320, %c0_321, %c0_322] : memref<5x32x256xf32, #tpu.memory_space<vmem>>, vector<1x32x256xf32>
    %300 = vector.shape_cast %299 : vector<1x32x256xf32> to vector<32x256xf32>
    %cst_323 = arith.constant dense<0.000000e+00> : vector<6x256xf32>
    %301 = tpu.matmul %298, %300, %cst_323 {dimension_numbers = #tpu.dot_dimension_numbers<[1], [0], [0], [1], [0, 0, 1, 1], [], []>} : vector<6x32xf32>, vector<32x256xf32>, vector<6x256xf32> -> vector<6x256xf32>
    %302 = arith.addf %296, %301 : vector<6x256xf32>
    %c1_324 = arith.constant 1 : index
    %c2_325 = arith.constant 2 : index
    %c1_326 = arith.constant 1 : index
    %c0_327 = arith.constant 0 : index
    %303 = vector.load %arg1[%c1_324, %c2_325, %c1_326, %c0_327] : memref<2x4x7x32xf32, #tpu.memory_space<vmem>>, vector<1x1x6x32xf32>
    %304 = vector.shape_cast %303 : vector<1x1x6x32xf32> to vector<6x32xf32>
    %c4_328 = arith.constant 4 : index
    %c0_329 = arith.constant 0 : index
    %c0_330 = arith.constant 0 : index
    %305 = vector.load %arg2[%c4_328, %c0_329, %c0_330] : memref<5x32x256xf32, #tpu.memory_space<vmem>>, vector<1x32x256xf32>
    %306 = vector.shape_cast %305 : vector<1x32x256xf32> to vector<32x256xf32>
    %cst_331 = arith.constant dense<0.000000e+00> : vector<6x256xf32>
    %307 = tpu.matmul %304, %306, %cst_331 {dimension_numbers = #tpu.dot_dimension_numbers<[1], [0], [0], [1], [0, 0, 1, 1], [], []>} : vector<6x32xf32>, vector<32x256xf32>, vector<6x256xf32> -> vector<6x256xf32>
    %308 = arith.addf %302, %307 : vector<6x256xf32>
    %cst_332 = arith.constant 0.000000e+00 : f32
    %309 = vector.broadcast %cst_332 : f32 to vector<6x256xf32>
    %c1_333 = arith.constant 1 : index
    %c3_334 = arith.constant 3 : index
    %c0_335 = arith.constant 0 : index
    %c0_336 = arith.constant 0 : index
    %310 = vector.load %arg1[%c1_333, %c3_334, %c0_335, %c0_336] : memref<2x4x7x32xf32, #tpu.memory_space<vmem>>, vector<1x1x6x32xf32>
    %311 = vector.shape_cast %310 : vector<1x1x6x32xf32> to vector<6x32xf32>
    %c0_337 = arith.constant 0 : index
    %c0_338 = arith.constant 0 : index
    %c0_339 = arith.constant 0 : index
    %312 = vector.load %arg2[%c0_337, %c0_338, %c0_339] : memref<5x32x256xf32, #tpu.memory_space<vmem>>, vector<1x32x256xf32>
    %313 = vector.shape_cast %312 : vector<1x32x256xf32> to vector<32x256xf32>
    %cst_340 = arith.constant dense<0.000000e+00> : vector<6x256xf32>
    %314 = tpu.matmul %311, %313, %cst_340 {dimension_numbers = #tpu.dot_dimension_numbers<[1], [0], [0], [1], [0, 0, 1, 1], [], []>} : vector<6x32xf32>, vector<32x256xf32>, vector<6x256xf32> -> vector<6x256xf32>
    %315 = arith.addf %309, %314 : vector<6x256xf32>
    %c1_341 = arith.constant 1 : index
    %c0_342 = arith.constant 0 : index
    %c1_343 = arith.constant 1 : index
    %c0_344 = arith.constant 0 : index
    %316 = vector.load %arg1[%c1_341, %c0_342, %c1_343, %c0_344] : memref<2x4x7x32xf32, #tpu.memory_space<vmem>>, vector<1x1x6x32xf32>
    %317 = vector.shape_cast %316 : vector<1x1x6x32xf32> to vector<6x32xf32>
    %c1_345 = arith.constant 1 : index
    %c0_346 = arith.constant 0 : index
    %c0_347 = arith.constant 0 : index
    %318 = vector.load %arg2[%c1_345, %c0_346, %c0_347] : memref<5x32x256xf32, #tpu.memory_space<vmem>>, vector<1x32x256xf32>
    %319 = vector.shape_cast %318 : vector<1x32x256xf32> to vector<32x256xf32>
    %cst_348 = arith.constant dense<0.000000e+00> : vector<6x256xf32>
    %320 = tpu.matmul %317, %319, %cst_348 {dimension_numbers = #tpu.dot_dimension_numbers<[1], [0], [0], [1], [0, 0, 1, 1], [], []>} : vector<6x32xf32>, vector<32x256xf32>, vector<6x256xf32> -> vector<6x256xf32>
    %321 = arith.addf %315, %320 : vector<6x256xf32>
    %c1_349 = arith.constant 1 : index
    %c1_350 = arith.constant 1 : index
    %c1_351 = arith.constant 1 : index
    %c0_352 = arith.constant 0 : index
    %322 = vector.load %arg1[%c1_349, %c1_350, %c1_351, %c0_352] : memref<2x4x7x32xf32, #tpu.memory_space<vmem>>, vector<1x1x6x32xf32>
    %323 = vector.shape_cast %322 : vector<1x1x6x32xf32> to vector<6x32xf32>
    %c2_353 = arith.constant 2 : index
    %c0_354 = arith.constant 0 : index
    %c0_355 = arith.constant 0 : index
    %324 = vector.load %arg2[%c2_353, %c0_354, %c0_355] : memref<5x32x256xf32, #tpu.memory_space<vmem>>, vector<1x32x256xf32>
    %325 = vector.shape_cast %324 : vector<1x32x256xf32> to vector<32x256xf32>
    %cst_356 = arith.constant dense<0.000000e+00> : vector<6x256xf32>
    %326 = tpu.matmul %323, %325, %cst_356 {dimension_numbers = #tpu.dot_dimension_numbers<[1], [0], [0], [1], [0, 0, 1, 1], [], []>} : vector<6x32xf32>, vector<32x256xf32>, vector<6x256xf32> -> vector<6x256xf32>
    %327 = arith.addf %321, %326 : vector<6x256xf32>
    %c1_357 = arith.constant 1 : index
    %c2_358 = arith.constant 2 : index
    %c1_359 = arith.constant 1 : index
    %c0_360 = arith.constant 0 : index
    %328 = vector.load %arg1[%c1_357, %c2_358, %c1_359, %c0_360] : memref<2x4x7x32xf32, #tpu.memory_space<vmem>>, vector<1x1x6x32xf32>
    %329 = vector.shape_cast %328 : vector<1x1x6x32xf32> to vector<6x32xf32>
    %c3_361 = arith.constant 3 : index
    %c0_362 = arith.constant 0 : index
    %c0_363 = arith.constant 0 : index
    %330 = vector.load %arg2[%c3_361, %c0_362, %c0_363] : memref<5x32x256xf32, #tpu.memory_space<vmem>>, vector<1x32x256xf32>
    %331 = vector.shape_cast %330 : vector<1x32x256xf32> to vector<32x256xf32>
    %cst_364 = arith.constant dense<0.000000e+00> : vector<6x256xf32>
    %332 = tpu.matmul %329, %331, %cst_364 {dimension_numbers = #tpu.dot_dimension_numbers<[1], [0], [0], [1], [0, 0, 1, 1], [], []>} : vector<6x32xf32>, vector<32x256xf32>, vector<6x256xf32> -> vector<6x256xf32>
    %333 = arith.addf %327, %332 : vector<6x256xf32>
    %c1_365 = arith.constant 1 : index
    %c3_366 = arith.constant 3 : index
    %c1_367 = arith.constant 1 : index
    %c0_368 = arith.constant 0 : index
    %334 = vector.load %arg1[%c1_365, %c3_366, %c1_367, %c0_368] : memref<2x4x7x32xf32, #tpu.memory_space<vmem>>, vector<1x1x6x32xf32>
    %335 = vector.shape_cast %334 : vector<1x1x6x32xf32> to vector<6x32xf32>
    %c4_369 = arith.constant 4 : index
    %c0_370 = arith.constant 0 : index
    %c0_371 = arith.constant 0 : index
    %336 = vector.load %arg2[%c4_369, %c0_370, %c0_371] : memref<5x32x256xf32, #tpu.memory_space<vmem>>, vector<1x32x256xf32>
    %337 = vector.shape_cast %336 : vector<1x32x256xf32> to vector<32x256xf32>
    %cst_372 = arith.constant dense<0.000000e+00> : vector<6x256xf32>
    %338 = tpu.matmul %335, %337, %cst_372 {dimension_numbers = #tpu.dot_dimension_numbers<[1], [0], [0], [1], [0, 0, 1, 1], [], []>} : vector<6x32xf32>, vector<32x256xf32>, vector<6x256xf32> -> vector<6x256xf32>
    %339 = arith.addf %333, %338 : vector<6x256xf32>
    %340 = vector.extract_strided_slice %246 {offsets = [0, 0], sizes = [6, 128], strides = [1, 1]} : vector<6x256xf32> to vector<6x128xf32>
    %341 = vector.extract_strided_slice %246 {offsets = [0, 128], sizes = [6, 128], strides = [1, 1]} : vector<6x256xf32> to vector<6x128xf32>
    %342 = arith.maximumf %340, %341 : vector<6x128xf32>
    %343 = vector.extract_strided_slice %277 {offsets = [0, 0], sizes = [6, 128], strides = [1, 1]} : vector<6x256xf32> to vector<6x128xf32>
    %344 = vector.extract_strided_slice %277 {offsets = [0, 128], sizes = [6, 128], strides = [1, 1]} : vector<6x256xf32> to vector<6x128xf32>
    %345 = arith.maximumf %343, %344 : vector<6x128xf32>
    %346 = arith.maximumf %342, %345 : vector<6x128xf32>
    %c0_373 = arith.constant 0 : index
    %c0_374 = arith.constant 0 : index
    %347 = vector.load %arg3[%c0_373, %c0_374] : memref<1x128xf32, #tpu.memory_space<vmem>>, vector<1x128xf32>
    %348 = vector.broadcast %347 : vector<1x128xf32> to vector<6x128xf32>
    %349 = arith.addf %346, %348 : vector<6x128xf32>
    %cst_375 = arith.constant 0.000000e+00 : f32
    %350 = vector.broadcast %cst_375 : f32 to vector<6x128xf32>
    %351 = arith.maximumf %349, %350 : vector<6x128xf32>
    %352 = vector.extract_strided_slice %308 {offsets = [0, 0], sizes = [6, 128], strides = [1, 1]} : vector<6x256xf32> to vector<6x128xf32>
    %353 = vector.extract_strided_slice %308 {offsets = [0, 128], sizes = [6, 128], strides = [1, 1]} : vector<6x256xf32> to vector<6x128xf32>
    %354 = arith.maximumf %352, %353 : vector<6x128xf32>
    %355 = vector.extract_strided_slice %339 {offsets = [0, 0], sizes = [6, 128], strides = [1, 1]} : vector<6x256xf32> to vector<6x128xf32>
    %356 = vector.extract_strided_slice %339 {offsets = [0, 128], sizes = [6, 128], strides = [1, 1]} : vector<6x256xf32> to vector<6x128xf32>
    %357 = arith.maximumf %355, %356 : vector<6x128xf32>
    %358 = arith.maximumf %354, %357 : vector<6x128xf32>
    %c0_376 = arith.constant 0 : index
    %c0_377 = arith.constant 0 : index
    %359 = vector.load %arg3[%c0_376, %c0_377] : memref<1x128xf32, #tpu.memory_space<vmem>>, vector<1x128xf32>
    %360 = vector.broadcast %359 : vector<1x128xf32> to vector<6x128xf32>
    %361 = arith.addf %358, %360 : vector<6x128xf32>
    %cst_378 = arith.constant 0.000000e+00 : f32
    %362 = vector.broadcast %cst_378 : f32 to vector<6x128xf32>
    %363 = arith.maximumf %361, %362 : vector<6x128xf32>
    %cst_379 = arith.constant 0.000000e+00 : f32
    %364 = vector.broadcast %cst_379 : f32 to vector<4x256xf32>
    %cst_380 = arith.constant 0.000000e+00 : f32
    %365 = vector.broadcast %cst_380 : f32 to vector<4x256xf32>
    %366 = vector.extract_strided_slice %351 {offsets = [0, 0], sizes = [4, 128], strides = [1, 1]} : vector<6x128xf32> to vector<4x128xf32>
    %c0_381 = arith.constant 0 : index
    %c0_382 = arith.constant 0 : index
    %c0_383 = arith.constant 0 : index
    %367 = vector.load %arg4[%c0_381, %c0_382, %c0_383] : memref<5x128x256xf32, #tpu.memory_space<vmem>>, vector<1x128x256xf32>
    %368 = vector.shape_cast %367 : vector<1x128x256xf32> to vector<128x256xf32>
    %cst_384 = arith.constant dense<0.000000e+00> : vector<4x256xf32>
    %369 = tpu.matmul %366, %368, %cst_384 {dimension_numbers = #tpu.dot_dimension_numbers<[1], [0], [0], [1], [0, 0, 1, 1], [], []>} : vector<4x128xf32>, vector<128x256xf32>, vector<4x256xf32> -> vector<4x256xf32>
    %370 = arith.addf %364, %369 : vector<4x256xf32>
    %371 = vector.extract_strided_slice %363 {offsets = [0, 0], sizes = [4, 128], strides = [1, 1]} : vector<6x128xf32> to vector<4x128xf32>
    %c0_385 = arith.constant 0 : index
    %c0_386 = arith.constant 0 : index
    %c0_387 = arith.constant 0 : index
    %372 = vector.load %arg4[%c0_385, %c0_386, %c0_387] : memref<5x128x256xf32, #tpu.memory_space<vmem>>, vector<1x128x256xf32>
    %373 = vector.shape_cast %372 : vector<1x128x256xf32> to vector<128x256xf32>
    %cst_388 = arith.constant dense<0.000000e+00> : vector<4x256xf32>
    %374 = tpu.matmul %371, %373, %cst_388 {dimension_numbers = #tpu.dot_dimension_numbers<[1], [0], [0], [1], [0, 0, 1, 1], [], []>} : vector<4x128xf32>, vector<128x256xf32>, vector<4x256xf32> -> vector<4x256xf32>
    %375 = arith.addf %365, %374 : vector<4x256xf32>
    %376 = vector.extract_strided_slice %351 {offsets = [1, 0], sizes = [4, 128], strides = [1, 1]} : vector<6x128xf32> to vector<4x128xf32>
    %c2_389 = arith.constant 2 : index
    %c0_390 = arith.constant 0 : index
    %c0_391 = arith.constant 0 : index
    %377 = vector.load %arg4[%c2_389, %c0_390, %c0_391] : memref<5x128x256xf32, #tpu.memory_space<vmem>>, vector<1x128x256xf32>
    %378 = vector.shape_cast %377 : vector<1x128x256xf32> to vector<128x256xf32>
    %cst_392 = arith.constant dense<0.000000e+00> : vector<4x256xf32>
    %379 = tpu.matmul %376, %378, %cst_392 {dimension_numbers = #tpu.dot_dimension_numbers<[1], [0], [0], [1], [0, 0, 1, 1], [], []>} : vector<4x128xf32>, vector<128x256xf32>, vector<4x256xf32> -> vector<4x256xf32>
    %380 = arith.addf %370, %379 : vector<4x256xf32>
    %381 = vector.extract_strided_slice %363 {offsets = [1, 0], sizes = [4, 128], strides = [1, 1]} : vector<6x128xf32> to vector<4x128xf32>
    %c2_393 = arith.constant 2 : index
    %c0_394 = arith.constant 0 : index
    %c0_395 = arith.constant 0 : index
    %382 = vector.load %arg4[%c2_393, %c0_394, %c0_395] : memref<5x128x256xf32, #tpu.memory_space<vmem>>, vector<1x128x256xf32>
    %383 = vector.shape_cast %382 : vector<1x128x256xf32> to vector<128x256xf32>
    %cst_396 = arith.constant dense<0.000000e+00> : vector<4x256xf32>
    %384 = tpu.matmul %381, %383, %cst_396 {dimension_numbers = #tpu.dot_dimension_numbers<[1], [0], [0], [1], [0, 0, 1, 1], [], []>} : vector<4x128xf32>, vector<128x256xf32>, vector<4x256xf32> -> vector<4x256xf32>
    %385 = arith.addf %375, %384 : vector<4x256xf32>
    %386 = vector.extract_strided_slice %351 {offsets = [2, 0], sizes = [4, 128], strides = [1, 1]} : vector<6x128xf32> to vector<4x128xf32>
    %c4_397 = arith.constant 4 : index
    %c0_398 = arith.constant 0 : index
    %c0_399 = arith.constant 0 : index
    %387 = vector.load %arg4[%c4_397, %c0_398, %c0_399] : memref<5x128x256xf32, #tpu.memory_space<vmem>>, vector<1x128x256xf32>
    %388 = vector.shape_cast %387 : vector<1x128x256xf32> to vector<128x256xf32>
    %cst_400 = arith.constant dense<0.000000e+00> : vector<4x256xf32>
    %389 = tpu.matmul %386, %388, %cst_400 {dimension_numbers = #tpu.dot_dimension_numbers<[1], [0], [0], [1], [0, 0, 1, 1], [], []>} : vector<4x128xf32>, vector<128x256xf32>, vector<4x256xf32> -> vector<4x256xf32>
    %390 = arith.addf %380, %389 : vector<4x256xf32>
    %391 = vector.extract_strided_slice %363 {offsets = [2, 0], sizes = [4, 128], strides = [1, 1]} : vector<6x128xf32> to vector<4x128xf32>
    %c4_401 = arith.constant 4 : index
    %c0_402 = arith.constant 0 : index
    %c0_403 = arith.constant 0 : index
    %392 = vector.load %arg4[%c4_401, %c0_402, %c0_403] : memref<5x128x256xf32, #tpu.memory_space<vmem>>, vector<1x128x256xf32>
    %393 = vector.shape_cast %392 : vector<1x128x256xf32> to vector<128x256xf32>
    %cst_404 = arith.constant dense<0.000000e+00> : vector<4x256xf32>
    %394 = tpu.matmul %391, %393, %cst_404 {dimension_numbers = #tpu.dot_dimension_numbers<[1], [0], [0], [1], [0, 0, 1, 1], [], []>} : vector<4x128xf32>, vector<128x256xf32>, vector<4x256xf32> -> vector<4x256xf32>
    %395 = arith.addf %385, %394 : vector<4x256xf32>
    %396 = vector.extract_strided_slice %363 {offsets = [0, 0], sizes = [4, 128], strides = [1, 1]} : vector<6x128xf32> to vector<4x128xf32>
    %c1_405 = arith.constant 1 : index
    %c0_406 = arith.constant 0 : index
    %c0_407 = arith.constant 0 : index
    %397 = vector.load %arg4[%c1_405, %c0_406, %c0_407] : memref<5x128x256xf32, #tpu.memory_space<vmem>>, vector<1x128x256xf32>
    %398 = vector.shape_cast %397 : vector<1x128x256xf32> to vector<128x256xf32>
    %cst_408 = arith.constant dense<0.000000e+00> : vector<4x256xf32>
    %399 = tpu.matmul %396, %398, %cst_408 {dimension_numbers = #tpu.dot_dimension_numbers<[1], [0], [0], [1], [0, 0, 1, 1], [], []>} : vector<4x128xf32>, vector<128x256xf32>, vector<4x256xf32> -> vector<4x256xf32>
    %400 = arith.addf %390, %399 : vector<4x256xf32>
    %401 = vector.extract_strided_slice %351 {offsets = [1, 0], sizes = [4, 128], strides = [1, 1]} : vector<6x128xf32> to vector<4x128xf32>
    %c1_409 = arith.constant 1 : index
    %c0_410 = arith.constant 0 : index
    %c0_411 = arith.constant 0 : index
    %402 = vector.load %arg4[%c1_409, %c0_410, %c0_411] : memref<5x128x256xf32, #tpu.memory_space<vmem>>, vector<1x128x256xf32>
    %403 = vector.shape_cast %402 : vector<1x128x256xf32> to vector<128x256xf32>
    %cst_412 = arith.constant dense<0.000000e+00> : vector<4x256xf32>
    %404 = tpu.matmul %401, %403, %cst_412 {dimension_numbers = #tpu.dot_dimension_numbers<[1], [0], [0], [1], [0, 0, 1, 1], [], []>} : vector<4x128xf32>, vector<128x256xf32>, vector<4x256xf32> -> vector<4x256xf32>
    %405 = arith.addf %395, %404 : vector<4x256xf32>
    %406 = vector.extract_strided_slice %363 {offsets = [1, 0], sizes = [4, 128], strides = [1, 1]} : vector<6x128xf32> to vector<4x128xf32>
    %c3_413 = arith.constant 3 : index
    %c0_414 = arith.constant 0 : index
    %c0_415 = arith.constant 0 : index
    %407 = vector.load %arg4[%c3_413, %c0_414, %c0_415] : memref<5x128x256xf32, #tpu.memory_space<vmem>>, vector<1x128x256xf32>
    %408 = vector.shape_cast %407 : vector<1x128x256xf32> to vector<128x256xf32>
    %cst_416 = arith.constant dense<0.000000e+00> : vector<4x256xf32>
    %409 = tpu.matmul %406, %408, %cst_416 {dimension_numbers = #tpu.dot_dimension_numbers<[1], [0], [0], [1], [0, 0, 1, 1], [], []>} : vector<4x128xf32>, vector<128x256xf32>, vector<4x256xf32> -> vector<4x256xf32>
    %410 = arith.addf %400, %409 : vector<4x256xf32>
    %411 = vector.extract_strided_slice %351 {offsets = [2, 0], sizes = [4, 128], strides = [1, 1]} : vector<6x128xf32> to vector<4x128xf32>
    %c3_417 = arith.constant 3 : index
    %c0_418 = arith.constant 0 : index
    %c0_419 = arith.constant 0 : index
    %412 = vector.load %arg4[%c3_417, %c0_418, %c0_419] : memref<5x128x256xf32, #tpu.memory_space<vmem>>, vector<1x128x256xf32>
    %413 = vector.shape_cast %412 : vector<1x128x256xf32> to vector<128x256xf32>
    %cst_420 = arith.constant dense<0.000000e+00> : vector<4x256xf32>
    %414 = tpu.matmul %411, %413, %cst_420 {dimension_numbers = #tpu.dot_dimension_numbers<[1], [0], [0], [1], [0, 0, 1, 1], [], []>} : vector<4x128xf32>, vector<128x256xf32>, vector<4x256xf32> -> vector<4x256xf32>
    %415 = arith.addf %405, %414 : vector<4x256xf32>
    %416 = vector.extract_strided_slice %410 {offsets = [0, 0], sizes = [4, 128], strides = [1, 1]} : vector<4x256xf32> to vector<4x128xf32>
    %417 = vector.extract_strided_slice %410 {offsets = [0, 128], sizes = [4, 128], strides = [1, 1]} : vector<4x256xf32> to vector<4x128xf32>
    %418 = arith.maximumf %416, %417 : vector<4x128xf32>
    %419 = vector.extract_strided_slice %415 {offsets = [0, 0], sizes = [4, 128], strides = [1, 1]} : vector<4x256xf32> to vector<4x128xf32>
    %420 = vector.extract_strided_slice %415 {offsets = [0, 128], sizes = [4, 128], strides = [1, 1]} : vector<4x256xf32> to vector<4x128xf32>
    %421 = arith.maximumf %419, %420 : vector<4x128xf32>
    %422 = arith.maximumf %418, %421 : vector<4x128xf32>
    %c0_421 = arith.constant 0 : index
    %c0_422 = arith.constant 0 : index
    %423 = vector.load %arg5[%c0_421, %c0_422] : memref<1x128xf32, #tpu.memory_space<vmem>>, vector<1x128xf32>
    %424 = vector.broadcast %423 : vector<1x128xf32> to vector<4x128xf32>
    %425 = arith.addf %422, %424 : vector<4x128xf32>
    %cst_423 = arith.constant 0.000000e+00 : f32
    %426 = vector.broadcast %cst_423 : f32 to vector<4x128xf32>
    %427 = arith.maximumf %425, %426 : vector<4x128xf32>
    %428 = vector.extract_strided_slice %427 {offsets = [0, 0], sizes = [1, 128], strides = [1, 1]} : vector<4x128xf32> to vector<1x128xf32>
    %429 = vector.extract_strided_slice %427 {offsets = [1, 0], sizes = [1, 128], strides = [1, 1]} : vector<4x128xf32> to vector<1x128xf32>
    %430 = vector.extract_strided_slice %427 {offsets = [2, 0], sizes = [1, 128], strides = [1, 1]} : vector<4x128xf32> to vector<1x128xf32>
    %431 = vector.extract_strided_slice %427 {offsets = [3, 0], sizes = [1, 128], strides = [1, 1]} : vector<4x128xf32> to vector<1x128xf32>
    %cst_424 = arith.constant 0.000000e+00 : f32
    %432 = vector.broadcast %cst_424 : f32 to vector<2x128xf32>
    %433 = tpu.concatenate %212, %428 in 0 : vector<1x128xf32>, vector<1x128xf32> -> vector<2x128xf32>
    %c0_425 = arith.constant 0 : index
    %c0_426 = arith.constant 0 : index
    %c0_427 = arith.constant 0 : index
    %434 = vector.load %arg6[%c0_425, %c0_426, %c0_427] : memref<4x128x128xf32, #tpu.memory_space<vmem>>, vector<1x128x128xf32>
    %435 = vector.shape_cast %434 : vector<1x128x128xf32> to vector<128x128xf32>
    %cst_428 = arith.constant dense<0.000000e+00> : vector<2x128xf32>
    %436 = tpu.matmul %433, %435, %cst_428 {dimension_numbers = #tpu.dot_dimension_numbers<[1], [0], [0], [1], [0, 0, 1, 1], [], []>} : vector<2x128xf32>, vector<128x128xf32>, vector<2x128xf32> -> vector<2x128xf32>
    %437 = arith.addf %432, %436 : vector<2x128xf32>
    %438 = tpu.concatenate %213, %429 in 0 : vector<1x128xf32>, vector<1x128xf32> -> vector<2x128xf32>
    %c1_429 = arith.constant 1 : index
    %c0_430 = arith.constant 0 : index
    %c0_431 = arith.constant 0 : index
    %439 = vector.load %arg6[%c1_429, %c0_430, %c0_431] : memref<4x128x128xf32, #tpu.memory_space<vmem>>, vector<1x128x128xf32>
    %440 = vector.shape_cast %439 : vector<1x128x128xf32> to vector<128x128xf32>
    %cst_432 = arith.constant dense<0.000000e+00> : vector<2x128xf32>
    %441 = tpu.matmul %438, %440, %cst_432 {dimension_numbers = #tpu.dot_dimension_numbers<[1], [0], [0], [1], [0, 0, 1, 1], [], []>} : vector<2x128xf32>, vector<128x128xf32>, vector<2x128xf32> -> vector<2x128xf32>
    %442 = arith.addf %437, %441 : vector<2x128xf32>
    %443 = tpu.concatenate %214, %430 in 0 : vector<1x128xf32>, vector<1x128xf32> -> vector<2x128xf32>
    %c2_433 = arith.constant 2 : index
    %c0_434 = arith.constant 0 : index
    %c0_435 = arith.constant 0 : index
    %444 = vector.load %arg6[%c2_433, %c0_434, %c0_435] : memref<4x128x128xf32, #tpu.memory_space<vmem>>, vector<1x128x128xf32>
    %445 = vector.shape_cast %444 : vector<1x128x128xf32> to vector<128x128xf32>
    %cst_436 = arith.constant dense<0.000000e+00> : vector<2x128xf32>
    %446 = tpu.matmul %443, %445, %cst_436 {dimension_numbers = #tpu.dot_dimension_numbers<[1], [0], [0], [1], [0, 0, 1, 1], [], []>} : vector<2x128xf32>, vector<128x128xf32>, vector<2x128xf32> -> vector<2x128xf32>
    %447 = arith.addf %442, %446 : vector<2x128xf32>
    %448 = tpu.concatenate %215, %431 in 0 : vector<1x128xf32>, vector<1x128xf32> -> vector<2x128xf32>
    %c3_437 = arith.constant 3 : index
    %c0_438 = arith.constant 0 : index
    %c0_439 = arith.constant 0 : index
    %449 = vector.load %arg6[%c3_437, %c0_438, %c0_439] : memref<4x128x128xf32, #tpu.memory_space<vmem>>, vector<1x128x128xf32>
    %450 = vector.shape_cast %449 : vector<1x128x128xf32> to vector<128x128xf32>
    %cst_440 = arith.constant dense<0.000000e+00> : vector<2x128xf32>
    %451 = tpu.matmul %448, %450, %cst_440 {dimension_numbers = #tpu.dot_dimension_numbers<[1], [0], [0], [1], [0, 0, 1, 1], [], []>} : vector<2x128xf32>, vector<128x128xf32>, vector<2x128xf32> -> vector<2x128xf32>
    %452 = arith.addf %447, %451 : vector<2x128xf32>
    %c0_441 = arith.constant 0 : index
    %c0_442 = arith.constant 0 : index
    %453 = vector.load %arg7[%c0_441, %c0_442] : memref<1x128xf32, #tpu.memory_space<vmem>>, vector<1x128xf32>
    %454 = vector.broadcast %453 : vector<1x128xf32> to vector<2x128xf32>
    %455 = arith.addf %452, %454 : vector<2x128xf32>
    %cst_443 = arith.constant 0.000000e+00 : f32
    %456 = vector.broadcast %cst_443 : f32 to vector<2x128xf32>
    %457 = arith.maximumf %455, %456 : vector<2x128xf32>
    %c0_444 = arith.constant 0 : index
    %c0_445 = arith.constant 0 : index
    %458 = vector.load %arg8[%c0_444, %c0_445] : memref<128x128xf32, #tpu.memory_space<vmem>>, vector<128x128xf32>
    %cst_446 = arith.constant dense<0.000000e+00> : vector<2x128xf32>
    %459 = tpu.matmul %457, %458, %cst_446 {dimension_numbers = #tpu.dot_dimension_numbers<[1], [0], [0], [1], [0, 0, 1, 1], [], []>} : vector<2x128xf32>, vector<128x128xf32>, vector<2x128xf32> -> vector<2x128xf32>
    %c0_447 = arith.constant 0 : index
    %c0_448 = arith.constant 0 : index
    %460 = vector.load %arg9[%c0_447, %c0_448] : memref<1x128xf32, #tpu.memory_space<vmem>>, vector<1x128xf32>
    %461 = vector.broadcast %460 : vector<1x128xf32> to vector<2x128xf32>
    %462 = arith.addf %459, %461 : vector<2x128xf32>
    %cst_449 = arith.constant 0.000000e+00 : f32
    %463 = vector.broadcast %cst_449 : f32 to vector<2x128xf32>
    %464 = arith.maximumf %462, %463 : vector<2x128xf32>
    %c0_450 = arith.constant 0 : index
    %c0_451 = arith.constant 0 : index
    %465 = vector.load %arg10[%c0_450, %c0_451] : memref<128x128xf32, #tpu.memory_space<vmem>>, vector<128x128xf32>
    %cst_452 = arith.constant dense<0.000000e+00> : vector<2x128xf32>
    %466 = tpu.matmul %464, %465, %cst_452 {dimension_numbers = #tpu.dot_dimension_numbers<[1], [0], [0], [1], [0, 0, 1, 1], [], []>} : vector<2x128xf32>, vector<128x128xf32>, vector<2x128xf32> -> vector<2x128xf32>
    %c0_453 = arith.constant 0 : index
    %c0_454 = arith.constant 0 : index
    %467 = vector.load %arg11[%c0_453, %c0_454] : memref<1x128xf32, #tpu.memory_space<vmem>>, vector<1x128xf32>
    %468 = vector.broadcast %467 : vector<1x128xf32> to vector<2x128xf32>
    %469 = arith.addf %466, %468 : vector<2x128xf32>
    %cst_455 = arith.constant 0.000000e+00 : f32
    %470 = vector.broadcast %cst_455 : f32 to vector<2x128xf32>
    %471 = arith.maximumf %469, %470 : vector<2x128xf32>
    %c0_456 = arith.constant 0 : index
    %c0_457 = arith.constant 0 : index
    %472 = vector.load %arg12[%c0_456, %c0_457] : memref<2x128xf32, #tpu.memory_space<vmem>>, vector<2x128xf32>
    tpu.vector_store %arg12[%c0_456, %c0_457], %471 {strides = array<i32>} : memref<2x128xf32, #tpu.memory_space<vmem>>, vector<2x128xf32>,
    return
  }
  func.func @transform_0(%arg0: i32) -> (i32, i32, i32, i32) {
    %c0_i32 = arith.constant 0 : i32
    %c0_i32_0 = arith.constant 0 : i32
    %c0_i32_1 = arith.constant 0 : i32
    %c0_i32_2 = arith.constant 0 : i32
    return %arg0, %c0_i32, %c0_i32_0, %c0_i32_1 : i32, i32, i32, i32
  }
  func.func @transform_1(%arg0: i32) -> (i32, i32, i32) {
    %c0_i32 = arith.constant 0 : i32
    %c0_i32_0 = arith.constant 0 : i32
    %c0_i32_1 = arith.constant 0 : i32
    %c0_i32_2 = arith.constant 0 : i32
    return %c0_i32, %c0_i32_0, %c0_i32_1 : i32, i32, i32
  }
  func.func @transform_2(%arg0: i32) -> (i32, i32) {
    %c0_i32 = arith.constant 0 : i32
    %c0_i32_0 = arith.constant 0 : i32
    %c0_i32_1 = arith.constant 0 : i32
    return %c0_i32, %c0_i32_0 : i32, i32
  }
  func.func @transform_3(%arg0: i32) -> (i32, i32, i32) {
    %c0_i32 = arith.constant 0 : i32
    %c0_i32_0 = arith.constant 0 : i32
    %c0_i32_1 = arith.constant 0 : i32
    %c0_i32_2 = arith.constant 0 : i32
    return %c0_i32, %c0_i32_0, %c0_i32_1 : i32, i32, i32
  }
  func.func @transform_4(%arg0: i32) -> (i32, i32) {
    %c0_i32 = arith.constant 0 : i32
    %c0_i32_0 = arith.constant 0 : i32
    %c0_i32_1 = arith.constant 0 : i32
    return %c0_i32, %c0_i32_0 : i32, i32
  }
  func.func @transform_5(%arg0: i32) -> (i32, i32, i32) {
    %c0_i32 = arith.constant 0 : i32
    %c0_i32_0 = arith.constant 0 : i32
    %c0_i32_1 = arith.constant 0 : i32
    %c0_i32_2 = arith.constant 0 : i32
    return %c0_i32, %c0_i32_0, %c0_i32_1 : i32, i32, i32
  }
  func.func @transform_6(%arg0: i32) -> (i32, i32) {
    %c0_i32 = arith.constant 0 : i32
    %c0_i32_0 = arith.constant 0 : i32
    %c0_i32_1 = arith.constant 0 : i32
    return %c0_i32, %c0_i32_0 : i32, i32
  }
  func.func @transform_7(%arg0: i32) -> (i32, i32) {
    %c0_i32 = arith.constant 0 : i32
    %c0_i32_0 = arith.constant 0 : i32
    %c0_i32_1 = arith.constant 0 : i32
    return %c0_i32, %c0_i32_0 : i32, i32
  }
  func.func @transform_8(%arg0: i32) -> (i32, i32) {
    %c0_i32 = arith.constant 0 : i32
    %c0_i32_0 = arith.constant 0 : i32
    %c0_i32_1 = arith.constant 0 : i32
    return %c0_i32, %c0_i32_0 : i32, i32
  }
  func.func @transform_9(%arg0: i32) -> (i32, i32) {
    %c0_i32 = arith.constant 0 : i32
    %c0_i32_0 = arith.constant 0 : i32
    %c0_i32_1 = arith.constant 0 : i32
    return %c0_i32, %c0_i32_0 : i32, i32
  }
  func.func @transform_10(%arg0: i32) -> (i32, i32) {
    %c0_i32 = arith.constant 0 : i32
    %c0_i32_0 = arith.constant 0 : i32
    %c0_i32_1 = arith.constant 0 : i32
    return %c0_i32, %c0_i32_0 : i32, i32
  }
  func.func @transform_11(%arg0: i32) -> (i32, i32) {
    %c0_i32 = arith.constant 0 : i32
    %c0_i32_0 = arith.constant 0 : i32
    return %arg0, %c0_i32 : i32, i32
  }
}

</mosaic_0001>

<llo_original>
// kernel: lenet5_forward.1
$region0: #{lenet5_forward.1}
  #allocation0 [shape = 'u32[]', space=smem, size = 0x4, offset = 0x4, fixed_abs, tag = 'smem constant byte address 0x4 - core index']
  #allocation1 [shape = 'u32[144,128]{1,0:T(1,128)}', space=vmem, size = 0x12000, scoped, tag = 'internal scratch']
  %s0 = inlined_call_operand.vmem [shape: f32[2,4,7,32], index: 0, kind: input, shape index: {}]
  %s1 = inlined_call_operand.hbm [shape: f32[5,32,256], index: 1, kind: input, shape index: {}]
  %s2 = inlined_call_operand.hbm [shape: f32[1,128], index: 2, kind: input, shape index: {}]
  %s3 = inlined_call_operand.hbm [shape: f32[5,128,256], index: 3, kind: input, shape index: {}]
  %s4 = inlined_call_operand.hbm [shape: f32[1,128], index: 4, kind: input, shape index: {}]
  %s5 = inlined_call_operand.hbm [shape: f32[4,128,128], index: 5, kind: input, shape index: {}]
  %s6 = inlined_call_operand.vmem [shape: f32[1,128], index: 6, kind: input, shape index: {}]
  %s7 = inlined_call_operand.vmem [shape: f32[128,128], index: 7, kind: input, shape index: {}]
  %s8 = inlined_call_operand.vmem [shape: f32[1,128], index: 8, kind: input, shape index: {}]
  %s9 = inlined_call_operand.vmem [shape: f32[128,128], index: 9, kind: input, shape index: {}]
  %s10 = inlined_call_operand.vmem [shape: f32[1,128], index: 10, kind: input, shape index: {}]
  %s11 = inlined_call_operand.hbm [shape: f32[2,128], index: 11, kind: output, shape index: {}]
  %s12 = sld [smem:[#allocation0]]
  $region74: #{lenet5_forward.1} parent=0
    _
  %s14 = ssub.s32 1, %s12
  %s15 = scalar_select 0, %s14, %s12
  $region1: #{lenet5_forward.1} parent=0
    #allocation2 [shape = 'u8[163840]{0}', space=vmem, size = 0x28000, scoped, tag = 'input window, operand 1, single buffered']
    #allocation3 [shape = 's32[1]{0}', space=sflag, size = 0x4, scoped, tag = 'scoped memory for lenet5_forward.1']
    #allocation4 [shape = 's32[1]{0}', space=sflag, size = 0x4, scoped, tag = 'scoped memory for lenet5_forward.1']
    #allocation5 [shape = 'u8[512]{0}', space=vmem, size = 0x400, scoped, tag = 'input window, operand 2, single buffered']
    #allocation6 [shape = 's32[1]{0}', space=sflag, size = 0x4, scoped, tag = 'scoped memory for lenet5_forward.1']
    #allocation7 [shape = 'u8[655360]{0}', space=vmem, size = 0xa0000, scoped, tag = 'input window, operand 3, single buffered']
    #allocation8 [shape = 'u8[512]{0}', space=vmem, size = 0x400, scoped, tag = 'input window, operand 4, single buffered']
    #allocation9 [shape = 's32[1]{0}', space=sflag, size = 0x4, scoped, tag = 'scoped memory for lenet5_forward.1']
    #allocation10 [shape = 'u8[262144]{0}', space=vmem, size = 0x40000, scoped, tag = 'input window, operand 5, single buffered']
    #allocation11 [shape = 'u8[1024]{0}', space=vmem, size = 0x400, scoped, tag = 'output window, operand 0, single buffered']
    %16 = vsyncpa [#allocation3], 0
    %17 = vsyncpa [#allocation6], 0
    %18 = vsyncpa [#allocation9], 0
    %19 = vsyncpa [#allocation4], 0
    // Predicated region
    $region2: #{lenet5_forward.1} parent=1 // pred_check
      _
    $region3: #{lenet5_forward.1} parent=1 // pred_check_branch
      %21 = sbr.rel (0) target = $region5
    $region4: #{lenet5_forward.1} parent=1 // pred_region
      _
    $region5: #{lenet5_forward.1} parent=1 // pred_fallthru
      _
    // Predicated region
    $region6: #{lenet5_forward.1} parent=1 // pred_check
      _
    $region7: #{lenet5_forward.1} parent=1 // pred_check_branch
      %23 = sbr.rel (0) target = $region9
    $region8: #{lenet5_forward.1} parent=1 // pred_region
      %s25 = ssub.s32 5120, 5120
      %26 = vsyncadd [#allocation3], %s25
      %s27 = sshll.u32 [#allocation2], 4
      %s28 = int_to_ptr.vmem [resolvable:$true] %s27
      %33 = dma.hbm_to_vmem [thread:$0]  %s1, 5120, %s28, [#allocation3], 256, 256, 16
    $region9: #{lenet5_forward.1} parent=1 // pred_fallthru
      _
    // Predicated region
    $region10: #{lenet5_forward.1} parent=1 // pred_check
      _
    $region11: #{lenet5_forward.1} parent=1 // pred_check_branch
      %35 = sbr.rel (0) target = $region13
    $region12: #{lenet5_forward.1} parent=1 // pred_region
      %s37 = ssub.s32 16, 16
      %38 = vsyncadd [#allocation6], %s37
      %s40 = sshll.u32 [#allocation5], 4
      %s41 = int_to_ptr.vmem [resolvable:$true] %s40
      %43 = dma.hbm_to_vmem [thread:$0]  %s2, 16, %s41, [#allocation6]
    $region13: #{lenet5_forward.1} parent=1 // pred_fallthru
      _
    // Predicated region
    $region14: #{lenet5_forward.1} parent=1 // pred_check
      _
    $region15: #{lenet5_forward.1} parent=1 // pred_check_branch
      %45 = sbr.rel (0) target = $region17
    $region16: #{lenet5_forward.1} parent=1 // pred_region
      %s47 = ssub.s32 20480, 20480
      %48 = vsyncadd [#allocation6], %s47
      %s49 = sshll.u32 [#allocation7], 4
      %s50 = int_to_ptr.vmem [resolvable:$true] %s49
      %55 = dma.hbm_to_vmem [thread:$0]  %s3, 20480, %s50, [#allocation6], 256, 256, 16
    $region17: #{lenet5_forward.1} parent=1 // pred_fallthru
      _
    // Predicated region
    $region18: #{lenet5_forward.1} parent=1 // pred_check
      _
    $region19: #{lenet5_forward.1} parent=1 // pred_check_branch
      %57 = sbr.rel (0) target = $region21
    $region20: #{lenet5_forward.1} parent=1 // pred_region
      %s59 = ssub.s32 16, 16
      %60 = vsyncadd [#allocation9], %s59
      %s62 = sshll.u32 [#allocation8], 4
      %s63 = int_to_ptr.vmem [resolvable:$true] %s62
      %65 = dma.hbm_to_vmem [thread:$0]  %s4, 16, %s63, [#allocation9]
    $region21: #{lenet5_forward.1} parent=1 // pred_fallthru
      _
    // Predicated region
    $region22: #{lenet5_forward.1} parent=1 // pred_check
      _
    $region23: #{lenet5_forward.1} parent=1 // pred_check_branch
      %67 = sbr.rel (0) target = $region25
    $region24: #{lenet5_forward.1} parent=1 // pred_region
      %s69 = ssub.s32 8192, 8192
      %70 = vsyncadd [#allocation9], %s69
      %s71 = sshll.u32 [#allocation10], 4
      %s72 = int_to_ptr.vmem [resolvable:$true] %s71
      %77 = dma.hbm_to_vmem [thread:$0]  %s5, 8192, %s72, [#allocation9], 128, 128, 8
    $region25: #{lenet5_forward.1} parent=1 // pred_fallthru
      _
    // Predicated region
    $region26: #{lenet5_forward.1} parent=1 // pred_check
      _
    $region27: #{lenet5_forward.1} parent=1 // pred_check_branch
      %79 = sbr.rel (0) target = $region29
    $region28: #{lenet5_forward.1} parent=1 // pred_region
      _
    $region29: #{lenet5_forward.1} parent=1 // pred_fallthru
      _
    // Predicated region
    $region30: #{lenet5_forward.1} parent=1 // pred_check
      _
    $region31: #{lenet5_forward.1} parent=1 // pred_check_branch
      %81 = sbr.rel (0) target = $region33
    $region32: #{lenet5_forward.1} parent=1 // pred_region
      _
    $region33: #{lenet5_forward.1} parent=1 // pred_fallthru
      _
    // Predicated region
    $region34: #{lenet5_forward.1} parent=1 // pred_check
      _
    $region35: #{lenet5_forward.1} parent=1 // pred_check_branch
      %83 = sbr.rel (0) target = $region37
    $region36: #{lenet5_forward.1} parent=1 // pred_region
      _
    $region37: #{lenet5_forward.1} parent=1 // pred_fallthru
      _
    // Predicated region
    $region38: #{lenet5_forward.1} parent=1 // pred_check
      _
    $region39: #{lenet5_forward.1} parent=1 // pred_check_branch
      %85 = sbr.rel (0) target = $region41
    $region40: #{lenet5_forward.1} parent=1 // pred_region
      _
    $region41: #{lenet5_forward.1} parent=1 // pred_fallthru
      _
    // Predicated region
    $region42: #{lenet5_forward.1} parent=1 // pred_check
      _
    $region43: #{lenet5_forward.1} parent=1 // pred_check_branch
      %87 = sbr.rel (0) target = $region45
    $region44: #{lenet5_forward.1} parent=1 // pred_region
      _
    $region45: #{lenet5_forward.1} parent=1 // pred_fallthru
      _
    // Predicated region
    $region46: #{lenet5_forward.1} parent=1 // pred_check
      _
    $region47: #{lenet5_forward.1} parent=1 // pred_check_branch
      %89 = sbr.rel (0) target = $region49
    $region48: #{lenet5_forward.1} parent=1 // pred_region
      %90 = dma.done [#allocation3], 5120
    $region49: #{lenet5_forward.1} parent=1 // pred_fallthru
      _
    // Predicated region
    $region50: #{lenet5_forward.1} parent=1 // pred_check
      _
    $region51: #{lenet5_forward.1} parent=1 // pred_check_branch
      %92 = sbr.rel (0) target = $region53
    $region52: #{lenet5_forward.1} parent=1 // pred_region
      %93 = dma.done [#allocation6], 16
    $region53: #{lenet5_forward.1} parent=1 // pred_fallthru
      _
    // Predicated region
    $region54: #{lenet5_forward.1} parent=1 // pred_check
      _
    $region55: #{lenet5_forward.1} parent=1 // pred_check_branch
      %95 = sbr.rel (0) target = $region57
    $region56: #{lenet5_forward.1} parent=1 // pred_region
      %96 = dma.done [#allocation6], 20480
    $region57: #{lenet5_forward.1} parent=1 // pred_fallthru
      _
    // Predicated region
    $region58: #{lenet5_forward.1} parent=1 // pred_check
      _
    $region59: #{lenet5_forward.1} parent=1 // pred_check_branch
      %98 = sbr.rel (0) target = $region61
    $region60: #{lenet5_forward.1} parent=1 // pred_region
      %99 = dma.done [#allocation9], 16
    $region61: #{lenet5_forward.1} parent=1 // pred_fallthru
      _
    // Predicated region
    $region62: #{lenet5_forward.1} parent=1 // pred_check
      _
    $region63: #{lenet5_forward.1} parent=1 // pred_check_branch
      %101 = sbr.rel (0) target = $region65
    $region64: #{lenet5_forward.1} parent=1 // pred_region
      %102 = dma.done [#allocation9], 8192
    $region65: #{lenet5_forward.1} parent=1 // pred_fallthru
      _
    %v103 = vld [vmem:[%s0] sm:$0x3f]
    %v104 = vld [vmem:[#allocation2] sm:$0xff]
    %v105 = vld [vmem:[#allocation2 + $0x8] sm:$0xff]
    %v106 = vld [vmem:[#allocation2 + $0x10] sm:$0xff]
    %v107 = vld [vmem:[#allocation2 + $0x18] sm:$0xff]
    %v108 = vld [vmem:[#allocation2 + $0x20] sm:$0xff]
    %v109 = vld [vmem:[#allocation2 + $0x28] sm:$0xff]
    %v110 = vld [vmem:[#allocation2 + $0x30] sm:$0xff]
    %v111 = vld [vmem:[#allocation2 + $0x38] sm:$0xff]
    %s112 = scalar_lea.vmem %s0, 8
    %v113 = vld [vmem:[%s112] sm:$0x3f]
    %s114 = scalar_lea.vmem [#allocation2], 64
    %v115 = vld [vmem:[%s114] sm:$0xff]
    %v116 = vld [vmem:[%s114 + $0x8] sm:$0xff]
    %v117 = vld [vmem:[%s114 + $0x10] sm:$0xff]
    %v118 = vld [vmem:[%s114 + $0x18] sm:$0xff]
    %v119 = vld [vmem:[%s114 + $0x20] sm:$0xff]
    %v120 = vld [vmem:[%s114 + $0x28] sm:$0xff]
    %v121 = vld [vmem:[%s114 + $0x30] sm:$0xff]
    %v122 = vld [vmem:[%s114 + $0x38] sm:$0xff]
    %vm123 = vcmask 261120
    %v125 = vsel %vm123, %v113, 0
    %127 = vmatprep.subr.mxu0 %v116
    %128 = vmatpush1.msra.mxu0 %v115
    %129 = vmatprep.subr.mxu0 %v118
    %130 = vmatpush1.msra.mxu0 %v117
    %131 = vmatprep.subr.mxu0 %v120
    %132 = vmatpush1.msra.mxu0 %v119
    %133 = vmatprep.subr.mxu0 %v122
    %134 = vmatpush1.msra.mxu0 %v121
    %135 = vmatprep.subr.mxu0 0.0
    %136 = vmatpush1.msra.mxu0 0.0
    %137 = vmatprep.subr.mxu0 0.0
    %138 = vmatpush1.msra.mxu0 0.0
    %139 = vmatprep.subr.mxu0 0.0
    %140 = vmatpush1.msra.mxu0 0.0
    %141 = vmatprep.subr.mxu0 0.0
    %142 = vmatpush1.msra.mxu0 0.0
    %143 = vmatprep.subr.mxu0 0.0
    %144 = vmatpush1.msra.mxu0 0.0
    %145 = vmatprep.subr.mxu0 0.0
    %146 = vmatpush1.msra.mxu0 0.0
    %147 = vmatprep.subr.mxu0 0.0
    %148 = vmatpush1.msra.mxu0 0.0
    %149 = vmatprep.subr.mxu0 0.0
    %150 = vmatpush1.msra.mxu0 0.0
    %151 = vmatprep.subr.mxu0 0.0
    %152 = vmatpush1.msra.mxu0 0.0
    %153 = vmatprep.subr.mxu0 0.0
    %154 = vmatpush1.msra.mxu0 0.0
    %155 = vmatprep.subr.mxu0 0.0
    %156 = vmatpush1.msra.mxu0 0.0
    %157 = vmatprep.subr.mxu0 0.0
    %158 = vmatpush1.msra.mxu0 0.0
    %159 = vmatprep.subr.mxu0 0.0
    %160 = vmatpush1.msra.mxu0 0.0
    %161 = vmatprep.subr.mxu0 0.0
    %162 = vmatpush1.msra.mxu0 0.0
    %163 = vmatprep.subr.mxu0 0.0
    %164 = vmatpush1.msra.mxu0 0.0
    %165 = vmatprep.subr.mxu0 0.0
    %166 = vmatpush1.msra.mxu0 0.0
    %167 = vmatprep.subr.mxu0 0.0
    %168 = vmatpush1.msra.mxu0 0.0
    %169 = vmatprep.subr.mxu0 0.0
    %170 = vmatpush1.msra.mxu0 0.0
    %171 = vmatprep.subr.mxu0 0.0
    %172 = vmatpush1.msra.mxu0 0.0
    %173 = vmatprep.subr.mxu0 0.0
    %174 = vmatpush1.msra.mxu0 0.0
    %175 = vmatprep.subr.mxu0 0.0
    %176 = vmatpush1.msra.mxu0 0.0
    %177 = vmatprep.subr.mxu0 0.0
    %178 = vmatpush1.msra.mxu0 0.0
    %179 = vmatprep.subr.mxu0 0.0
    %180 = vmatpush1.msra.mxu0 0.0
    %181 = vmatprep.subr.mxu0 0.0
    %182 = vmatpush1.msra.mxu0 0.0
    %183 = vmatprep.subr.mxu0 0.0
    %184 = vmatpush1.msra.mxu0 0.0
    %185 = vmatprep.subr.mxu0 0.0
    %186 = vmatpush1.msra.mxu0 0.0
    %187 = vmatprep.subr.mxu0 0.0
    %188 = vmatpush1.msra.mxu0 0.0
    %189 = vmatprep.subr.mxu0 0.0
    %190 = vmatpush1.msra.mxu0 0.0
    %191 = vmatprep.mubr.f32.mxu0 0.0
    %192 = vmatmul.mubr.f32.gmra.mrb[0].mxu0 %v125
    %v193 = vpop.f32.mrb[0].mxu0
    %v194 = vadd.f32 0.0, %v193
    %v195 = vpop.f32.mrb[0].mxu0
    %v196 = vadd.f32 0.0, %v195
    %197 = vdwg.mxu0
    %v199 = vsel %vm123, %v103, 0
    %201 = vmatprep.subr.mxu0 %v105
    %202 = vmatpush1.msra.mxu0 %v104
    %203 = vmatprep.subr.mxu0 %v107
    %204 = vmatpush1.msra.mxu0 %v106
    %205 = vmatprep.subr.mxu0 %v109
    %206 = vmatpush1.msra.mxu0 %v108
    %207 = vmatprep.subr.mxu0 %v111
    %208 = vmatpush1.msra.mxu0 %v110
    %209 = vmatprep.subr.mxu0 0.0
    %210 = vmatpush1.msra.mxu0 0.0
    %211 = vmatprep.subr.mxu0 0.0
    %212 = vmatpush1.msra.mxu0 0.0
    %213 = vmatprep.subr.mxu0 0.0
    %214 = vmatpush1.msra.mxu0 0.0
    %215 = vmatprep.subr.mxu0 0.0
    %216 = vmatpush1.msra.mxu0 0.0
    %217 = vmatprep.subr.mxu0 0.0
    %218 = vmatpush1.msra.mxu0 0.0
    %219 = vmatprep.subr.mxu0 0.0
    %220 = vmatpush1.msra.mxu0 0.0
    %221 = vmatprep.subr.mxu0 0.0
    %222 = vmatpush1.msra.mxu0 0.0
    %223 = vmatprep.subr.mxu0 0.0
    %224 = vmatpush1.msra.mxu0 0.0
    %225 = vmatprep.subr.mxu0 0.0
    %226 = vmatpush1.msra.mxu0 0.0
    %227 = vmatprep.subr.mxu0 0.0
    %228 = vmatpush1.msra.mxu0 0.0
    %229 = vmatprep.subr.mxu0 0.0
    %230 = vmatpush1.msra.mxu0 0.0
    %231 = vmatprep.subr.mxu0 0.0
    %232 = vmatpush1.msra.mxu0 0.0
    %233 = vmatprep.subr.mxu0 0.0
    %234 = vmatpush1.msra.mxu0 0.0
    %235 = vmatprep.subr.mxu0 0.0
    %236 = vmatpush1.msra.mxu0 0.0
    %237 = vmatprep.subr.mxu0 0.0
    %238 = vmatpush1.msra.mxu0 0.0
    %239 = vmatprep.subr.mxu0 0.0
    %240 = vmatpush1.msra.mxu0 0.0
    %241 = vmatprep.subr.mxu0 0.0
    %242 = vmatpush1.msra.mxu0 0.0
    %243 = vmatprep.subr.mxu0 0.0
    %244 = vmatpush1.msra.mxu0 0.0
    %245 = vmatprep.subr.mxu0 0.0
    %246 = vmatpush1.msra.mxu0 0.0
    %247 = vmatprep.subr.mxu0 0.0
    %248 = vmatpush1.msra.mxu0 0.0
    %249 = vmatprep.subr.mxu0 0.0
    %250 = vmatpush1.msra.mxu0 0.0
    %251 = vmatprep.subr.mxu0 0.0
    %252 = vmatpush1.msra.mxu0 0.0
    %253 = vmatprep.subr.mxu0 0.0
    %254 = vmatpush1.msra.mxu0 0.0
    %255 = vmatprep.subr.mxu0 0.0
    %256 = vmatpush1.msra.mxu0 0.0
    %257 = vmatprep.subr.mxu0 0.0
    %258 = vmatpush1.msra.mxu0 0.0
    %259 = vmatprep.subr.mxu0 0.0
    %260 = vmatpush1.msra.mxu0 0.0
    %261 = vmatprep.subr.mxu0 0.0
    %262 = vmatpush1.msra.mxu0 0.0
    %263 = vmatprep.subr.mxu0 0.0
    %264 = vmatpush1.msra.mxu0 0.0
    %265 = vmatprep.mubr.f32.mxu0 0.0
    %266 = vmatmul.mubr.f32.gmra.mrb[0].mxu0 %v199
    %v267 = vpop.f32.mrb[0].mxu0
    %v268 = vadd.f32 %v194, %v267
    %v269 = vpop.f32.mrb[0].mxu0
    %v270 = vadd.f32 %v196, %v269
    %271 = vdwg.mxu0
    %s272 = scalar_lea.vmem %s0, 16
    %v273 = vld [vmem:[%s272] sm:$0x3f]
    %s274 = scalar_lea.vmem [#allocation2], 128
    %v275 = vld [vmem:[%s274] sm:$0xff]
    %v276 = vld [vmem:[%s274 + $0x8] sm:$0xff]
    %v277 = vld [vmem:[%s274 + $0x10] sm:$0xff]
    %v278 = vld [vmem:[%s274 + $0x18] sm:$0xff]
    %v279 = vld [vmem:[%s274 + $0x20] sm:$0xff]
    %v280 = vld [vmem:[%s274 + $0x28] sm:$0xff]
    %v281 = vld [vmem:[%s274 + $0x30] sm:$0xff]
    %v282 = vld [vmem:[%s274 + $0x38] sm:$0xff]
    %v284 = vsel %vm123, %v273, 0
    %286 = vmatprep.subr.mxu0 %v276
    %287 = vmatpush1.msra.mxu0 %v275
    %288 = vmatprep.subr.mxu0 %v278
    %289 = vmatpush1.msra.mxu0 %v277
    %290 = vmatprep.subr.mxu0 %v280
    %291 = vmatpush1.msra.mxu0 %v279
    %292 = vmatprep.subr.mxu0 %v282
    %293 = vmatpush1.msra.mxu0 %v281
    %294 = vmatprep.subr.mxu0 0.0
    %295 = vmatpush1.msra.mxu0 0.0
    %296 = vmatprep.subr.mxu0 0.0
    %297 = vmatpush1.msra.mxu0 0.0
    %298 = vmatprep.subr.mxu0 0.0
    %299 = vmatpush1.msra.mxu0 0.0
    %300 = vmatprep.subr.mxu0 0.0
    %301 = vmatpush1.msra.mxu0 0.0
    %302 = vmatprep.subr.mxu0 0.0
    %303 = vmatpush1.msra.mxu0 0.0
    %304 = vmatprep.subr.mxu0 0.0
    %305 = vmatpush1.msra.mxu0 0.0
    %306 = vmatprep.subr.mxu0 0.0
    %307 = vmatpush1.msra.mxu0 0.0
    %308 = vmatprep.subr.mxu0 0.0
    %309 = vmatpush1.msra.mxu0 0.0
    %310 = vmatprep.subr.mxu0 0.0
    %311 = vmatpush1.msra.mxu0 0.0
    %312 = vmatprep.subr.mxu0 0.0
    %313 = vmatpush1.msra.mxu0 0.0
    %314 = vmatprep.subr.mxu0 0.0
    %315 = vmatpush1.msra.mxu0 0.0
    %316 = vmatprep.subr.mxu0 0.0
    %317 = vmatpush1.msra.mxu0 0.0
    %318 = vmatprep.subr.mxu0 0.0
    %319 = vmatpush1.msra.mxu0 0.0
    %320 = vmatprep.subr.mxu0 0.0
    %321 = vmatpush1.msra.mxu0 0.0
    %322 = vmatprep.subr.mxu0 0.0
    %323 = vmatpush1.msra.mxu0 0.0
    %324 = vmatprep.subr.mxu0 0.0
    %325 = vmatpush1.msra.mxu0 0.0
    %326 = vmatprep.subr.mxu0 0.0
    %327 = vmatpush1.msra.mxu0 0.0
    %328 = vmatprep.subr.mxu0 0.0
    %329 = vmatpush1.msra.mxu0 0.0
    %330 = vmatprep.subr.mxu0 0.0
    %331 = vmatpush1.msra.mxu0 0.0
    %332 = vmatprep.subr.mxu0 0.0
    %333 = vmatpush1.msra.mxu0 0.0
    %334 = vmatprep.subr.mxu0 0.0
    %335 = vmatpush1.msra.mxu0 0.0
    %336 = vmatprep.subr.mxu0 0.0
    %337 = vmatpush1.msra.mxu0 0.0
    %338 = vmatprep.subr.mxu0 0.0
    %339 = vmatpush1.msra.mxu0 0.0
    %340 = vmatprep.subr.mxu0 0.0
    %341 = vmatpush1.msra.mxu0 0.0
    %342 = vmatprep.subr.mxu0 0.0
    %343 = vmatpush1.msra.mxu0 0.0
    %344 = vmatprep.subr.mxu0 0.0
    %345 = vmatpush1.msra.mxu0 0.0
    %346 = vmatprep.subr.mxu0 0.0
    %347 = vmatpush1.msra.mxu0 0.0
    %348 = vmatprep.subr.mxu0 0.0
    %349 = vmatpush1.msra.mxu0 0.0
    %350 = vmatprep.mubr.f32.mxu0 0.0
    %351 = vmatmul.mubr.f32.gmra.mrb[0].mxu0 %v284
    %v352 = vpop.f32.mrb[0].mxu0
    %v353 = vadd.f32 0.0, %v352
    %v354 = vpop.f32.mrb[0].mxu0
    %v355 = vadd.f32 0.0, %v354
    %356 = vdwg.mxu0
    %v357 = vadd.f32 %v268, %v353
    %v358 = vadd.f32 %v270, %v355
    %s359 = scalar_lea.vmem %s0, 24
    %v360 = vld [vmem:[%s359] sm:$0x3f]
    %s361 = scalar_lea.vmem [#allocation2], 192
    %v362 = vld [vmem:[%s361] sm:$0xff]
    %v363 = vld [vmem:[%s361 + $0x8] sm:$0xff]
    %v364 = vld [vmem:[%s361 + $0x10] sm:$0xff]
    %v365 = vld [vmem:[%s361 + $0x18] sm:$0xff]
    %v366 = vld [vmem:[%s361 + $0x20] sm:$0xff]
    %v367 = vld [vmem:[%s361 + $0x28] sm:$0xff]
    %v368 = vld [vmem:[%s361 + $0x30] sm:$0xff]
    %v369 = vld [vmem:[%s361 + $0x38] sm:$0xff]
    %v371 = vsel %vm123, %v360, 0
    %373 = vmatprep.subr.mxu0 %v363
    %374 = vmatpush1.msra.mxu0 %v362
    %375 = vmatprep.subr.mxu0 %v365
    %376 = vmatpush1.msra.mxu0 %v364
    %377 = vmatprep.subr.mxu0 %v367
    %378 = vmatpush1.msra.mxu0 %v366
    %379 = vmatprep.subr.mxu0 %v369
    %380 = vmatpush1.msra.mxu0 %v368
    %381 = vmatprep.subr.mxu0 0.0
    %382 = vmatpush1.msra.mxu0 0.0
    %383 = vmatprep.subr.mxu0 0.0
    %384 = vmatpush1.msra.mxu0 0.0
    %385 = vmatprep.subr.mxu0 0.0
    %386 = vmatpush1.msra.mxu0 0.0
    %387 = vmatprep.subr.mxu0 0.0
    %388 = vmatpush1.msra.mxu0 0.0
    %389 = vmatprep.subr.mxu0 0.0
    %390 = vmatpush1.msra.mxu0 0.0
    %391 = vmatprep.subr.mxu0 0.0
    %392 = vmatpush1.msra.mxu0 0.0
    %393 = vmatprep.subr.mxu0 0.0
    %394 = vmatpush1.msra.mxu0 0.0
    %395 = vmatprep.subr.mxu0 0.0
    %396 = vmatpush1.msra.mxu0 0.0
    %397 = vmatprep.subr.mxu0 0.0
    %398 = vmatpush1.msra.mxu0 0.0
    %399 = vmatprep.subr.mxu0 0.0
    %400 = vmatpush1.msra.mxu0 0.0
    %401 = vmatprep.subr.mxu0 0.0
    %402 = vmatpush1.msra.mxu0 0.0
    %403 = vmatprep.subr.mxu0 0.0
    %404 = vmatpush1.msra.mxu0 0.0
    %405 = vmatprep.subr.mxu0 0.0
    %406 = vmatpush1.msra.mxu0 0.0
    %407 = vmatprep.subr.mxu0 0.0
    %408 = vmatpush1.msra.mxu0 0.0
    %409 = vmatprep.subr.mxu0 0.0
    %410 = vmatpush1.msra.mxu0 0.0
    %411 = vmatprep.subr.mxu0 0.0
    %412 = vmatpush1.msra.mxu0 0.0
    %413 = vmatprep.subr.mxu0 0.0
    %414 = vmatpush1.msra.mxu0 0.0
    %415 = vmatprep.subr.mxu0 0.0
    %416 = vmatpush1.msra.mxu0 0.0
    %417 = vmatprep.subr.mxu0 0.0
    %418 = vmatpush1.msra.mxu0 0.0
    %419 = vmatprep.subr.mxu0 0.0
    %420 = vmatpush1.msra.mxu0 0.0
    %421 = vmatprep.subr.mxu0 0.0
    %422 = vmatpush1.msra.mxu0 0.0
    %423 = vmatprep.subr.mxu0 0.0
    %424 = vmatpush1.msra.mxu0 0.0
    %425 = vmatprep.subr.mxu0 0.0
    %426 = vmatpush1.msra.mxu0 0.0
    %427 = vmatprep.subr.mxu0 0.0
    %428 = vmatpush1.msra.mxu0 0.0
    %429 = vmatprep.subr.mxu0 0.0
    %430 = vmatpush1.msra.mxu0 0.0
    %431 = vmatprep.subr.mxu0 0.0
    %432 = vmatpush1.msra.mxu0 0.0
    %433 = vmatprep.subr.mxu0 0.0
    %434 = vmatpush1.msra.mxu0 0.0
    %435 = vmatprep.subr.mxu0 0.0
    %436 = vmatpush1.msra.mxu0 0.0
    %437 = vmatprep.mubr.f32.mxu0 0.0
    %438 = vmatmul.mubr.f32.gmra.mrb[0].mxu0 %v371
    %v439 = vpop.f32.mrb[0].mxu0
    %v440 = vadd.f32 0.0, %v439
    %v441 = vpop.f32.mrb[0].mxu0
    %v442 = vadd.f32 0.0, %v441
    %443 = vdwg.mxu0
    %v444 = vadd.f32 %v357, %v440
    %v445 = vadd.f32 %v358, %v442
    %v446 = vld [vmem:[%s0 + $0x1] sm:$0x3f]
    %s447 = scalar_lea.vmem [#allocation2], 256
    %v448 = vld [vmem:[%s447] sm:$0xff]
    %v449 = vld [vmem:[%s447 + $0x8] sm:$0xff]
    %v450 = vld [vmem:[%s447 + $0x10] sm:$0xff]
    %v451 = vld [vmem:[%s447 + $0x18] sm:$0xff]
    %v452 = vld [vmem:[%s447 + $0x20] sm:$0xff]
    %v453 = vld [vmem:[%s447 + $0x28] sm:$0xff]
    %v454 = vld [vmem:[%s447 + $0x30] sm:$0xff]
    %v455 = vld [vmem:[%s447 + $0x38] sm:$0xff]
    %v457 = vsel %vm123, %v446, 0
    %459 = vmatprep.subr.mxu0 %v449
    %460 = vmatpush1.msra.mxu0 %v448
    %461 = vmatprep.subr.mxu0 %v451
    %462 = vmatpush1.msra.mxu0 %v450
    %463 = vmatprep.subr.mxu0 %v453
    %464 = vmatpush1.msra.mxu0 %v452
    %465 = vmatprep.subr.mxu0 %v455
    %466 = vmatpush1.msra.mxu0 %v454
    %467 = vmatprep.subr.mxu0 0.0
    %468 = vmatpush1.msra.mxu0 0.0
    %469 = vmatprep.subr.mxu0 0.0
    %470 = vmatpush1.msra.mxu0 0.0
    %471 = vmatprep.subr.mxu0 0.0
    %472 = vmatpush1.msra.mxu0 0.0
    %473 = vmatprep.subr.mxu0 0.0
    %474 = vmatpush1.msra.mxu0 0.0
    %475 = vmatprep.subr.mxu0 0.0
    %476 = vmatpush1.msra.mxu0 0.0
    %477 = vmatprep.subr.mxu0 0.0
    %478 = vmatpush1.msra.mxu0 0.0
    %479 = vmatprep.subr.mxu0 0.0
    %480 = vmatpush1.msra.mxu0 0.0
    %481 = vmatprep.subr.mxu0 0.0
    %482 = vmatpush1.msra.mxu0 0.0
    %483 = vmatprep.subr.mxu0 0.0
    %484 = vmatpush1.msra.mxu0 0.0
    %485 = vmatprep.subr.mxu0 0.0
    %486 = vmatpush1.msra.mxu0 0.0
    %487 = vmatprep.subr.mxu0 0.0
    %488 = vmatpush1.msra.mxu0 0.0
    %489 = vmatprep.subr.mxu0 0.0
    %490 = vmatpush1.msra.mxu0 0.0
    %491 = vmatprep.subr.mxu0 0.0
    %492 = vmatpush1.msra.mxu0 0.0
    %493 = vmatprep.subr.mxu0 0.0
    %494 = vmatpush1.msra.mxu0 0.0
    %495 = vmatprep.subr.mxu0 0.0
    %496 = vmatpush1.msra.mxu0 0.0
    %497 = vmatprep.subr.mxu0 0.0
    %498 = vmatpush1.msra.mxu0 0.0
    %499 = vmatprep.subr.mxu0 0.0
    %500 = vmatpush1.msra.mxu0 0.0
    %501 = vmatprep.subr.mxu0 0.0
    %502 = vmatpush1.msra.mxu0 0.0
    %503 = vmatprep.subr.mxu0 0.0
    %504 = vmatpush1.msra.mxu0 0.0
    %505 = vmatprep.subr.mxu0 0.0
    %506 = vmatpush1.msra.mxu0 0.0
    %507 = vmatprep.subr.mxu0 0.0
    %508 = vmatpush1.msra.mxu0 0.0
    %509 = vmatprep.subr.mxu0 0.0
    %510 = vmatpush1.msra.mxu0 0.0
    %511 = vmatprep.subr.mxu0 0.0
    %512 = vmatpush1.msra.mxu0 0.0
    %513 = vmatprep.subr.mxu0 0.0
    %514 = vmatpush1.msra.mxu0 0.0
    %515 = vmatprep.subr.mxu0 0.0
    %516 = vmatpush1.msra.mxu0 0.0
    %517 = vmatprep.subr.mxu0 0.0
    %518 = vmatpush1.msra.mxu0 0.0
    %519 = vmatprep.subr.mxu0 0.0
    %520 = vmatpush1.msra.mxu0 0.0
    %521 = vmatprep.subr.mxu0 0.0
    %522 = vmatpush1.msra.mxu0 0.0
    %523 = vmatprep.mubr.f32.mxu0 0.0
    %524 = vmatmul.mubr.f32.gmra.mrb[0].mxu0 %v457
    %v525 = vpop.f32.mrb[0].mxu0
    %v526 = vadd.f32 0.0, %v525
    %v527 = vpop.f32.mrb[0].mxu0
    %v528 = vadd.f32 0.0, %v527
    %529 = vdwg.mxu0
    %v530 = vadd.f32 %v444, %v526
    %v531 = vadd.f32 %v445, %v528
    %532 = vmatprep.subr.mxu0 %v116
    %533 = vmatpush1.msra.mxu0 %v115
    %534 = vmatprep.subr.mxu0 %v118
    %535 = vmatpush1.msra.mxu0 %v117
    %536 = vmatprep.subr.mxu0 %v120
    %537 = vmatpush1.msra.mxu0 %v119
    %538 = vmatprep.subr.mxu0 %v122
    %539 = vmatpush1.msra.mxu0 %v121
    %540 = vmatprep.subr.mxu0 0.0
    %541 = vmatpush1.msra.mxu0 0.0
    %542 = vmatprep.subr.mxu0 0.0
    %543 = vmatpush1.msra.mxu0 0.0
    %544 = vmatprep.subr.mxu0 0.0
    %545 = vmatpush1.msra.mxu0 0.0
    %546 = vmatprep.subr.mxu0 0.0
    %547 = vmatpush1.msra.mxu0 0.0
    %548 = vmatprep.subr.mxu0 0.0
    %549 = vmatpush1.msra.mxu0 0.0
    %550 = vmatprep.subr.mxu0 0.0
    %551 = vmatpush1.msra.mxu0 0.0
    %552 = vmatprep.subr.mxu0 0.0
    %553 = vmatpush1.msra.mxu0 0.0
    %554 = vmatprep.subr.mxu0 0.0
    %555 = vmatpush1.msra.mxu0 0.0
    %556 = vmatprep.subr.mxu0 0.0
    %557 = vmatpush1.msra.mxu0 0.0
    %558 = vmatprep.subr.mxu0 0.0
    %559 = vmatpush1.msra.mxu0 0.0
    %560 = vmatprep.subr.mxu0 0.0
    %561 = vmatpush1.msra.mxu0 0.0
    %562 = vmatprep.subr.mxu0 0.0
    %563 = vmatpush1.msra.mxu0 0.0
    %564 = vmatprep.subr.mxu0 0.0
    %565 = vmatpush1.msra.mxu0 0.0
    %566 = vmatprep.subr.mxu0 0.0
    %567 = vmatpush1.msra.mxu0 0.0
    %568 = vmatprep.subr.mxu0 0.0
    %569 = vmatpush1.msra.mxu0 0.0
    %570 = vmatprep.subr.mxu0 0.0
    %571 = vmatpush1.msra.mxu0 0.0
    %572 = vmatprep.subr.mxu0 0.0
    %573 = vmatpush1.msra.mxu0 0.0
    %574 = vmatprep.subr.mxu0 0.0
    %575 = vmatpush1.msra.mxu0 0.0
    %576 = vmatprep.subr.mxu0 0.0
    %577 = vmatpush1.msra.mxu0 0.0
    %578 = vmatprep.subr.mxu0 0.0
    %579 = vmatpush1.msra.mxu0 0.0
    %580 = vmatprep.subr.mxu0 0.0
    %581 = vmatpush1.msra.mxu0 0.0
    %582 = vmatprep.subr.mxu0 0.0
    %583 = vmatpush1.msra.mxu0 0.0
    %584 = vmatprep.subr.mxu0 0.0
    %585 = vmatpush1.msra.mxu0 0.0
    %586 = vmatprep.subr.mxu0 0.0
    %587 = vmatpush1.msra.mxu0 0.0
    %588 = vmatprep.subr.mxu0 0.0
    %589 = vmatpush1.msra.mxu0 0.0
    %590 = vmatprep.subr.mxu0 0.0
    %591 = vmatpush1.msra.mxu0 0.0
    %592 = vmatprep.subr.mxu0 0.0
    %593 = vmatpush1.msra.mxu0 0.0
    %594 = vmatprep.subr.mxu0 0.0
    %595 = vmatpush1.msra.mxu0 0.0
    %596 = vmatprep.mubr.f32.mxu0 0.0
    %597 = vmatmul.mubr.f32.gmra.mrb[0].mxu0 %v284
    %v598 = vpop.f32.mrb[0].mxu0
    %v599 = vadd.f32 0.0, %v598
    %v600 = vpop.f32.mrb[0].mxu0
    %v601 = vadd.f32 0.0, %v600
    %602 = vdwg.mxu0
    %603 = vmatprep.subr.mxu0 %v105
    %604 = vmatpush1.msra.mxu0 %v104
    %605 = vmatprep.subr.mxu0 %v107
    %606 = vmatpush1.msra.mxu0 %v106
    %607 = vmatprep.subr.mxu0 %v109
    %608 = vmatpush1.msra.mxu0 %v108
    %609 = vmatprep.subr.mxu0 %v111
    %610 = vmatpush1.msra.mxu0 %v110
    %611 = vmatprep.subr.mxu0 0.0
    %612 = vmatpush1.msra.mxu0 0.0
    %613 = vmatprep.subr.mxu0 0.0
    %614 = vmatpush1.msra.mxu0 0.0
    %615 = vmatprep.subr.mxu0 0.0
    %616 = vmatpush1.msra.mxu0 0.0
    %617 = vmatprep.subr.mxu0 0.0
    %618 = vmatpush1.msra.mxu0 0.0
    %619 = vmatprep.subr.mxu0 0.0
    %620 = vmatpush1.msra.mxu0 0.0
    %621 = vmatprep.subr.mxu0 0.0
    %622 = vmatpush1.msra.mxu0 0.0
    %623 = vmatprep.subr.mxu0 0.0
    %624 = vmatpush1.msra.mxu0 0.0
    %625 = vmatprep.subr.mxu0 0.0
    %626 = vmatpush1.msra.mxu0 0.0
    %627 = vmatprep.subr.mxu0 0.0
    %628 = vmatpush1.msra.mxu0 0.0
    %629 = vmatprep.subr.mxu0 0.0
    %630 = vmatpush1.msra.mxu0 0.0
    %631 = vmatprep.subr.mxu0 0.0
    %632 = vmatpush1.msra.mxu0 0.0
    %633 = vmatprep.subr.mxu0 0.0
    %634 = vmatpush1.msra.mxu0 0.0
    %635 = vmatprep.subr.mxu0 0.0
    %636 = vmatpush1.msra.mxu0 0.0
    %637 = vmatprep.subr.mxu0 0.0
    %638 = vmatpush1.msra.mxu0 0.0
    %639 = vmatprep.subr.mxu0 0.0
    %640 = vmatpush1.msra.mxu0 0.0
    %641 = vmatprep.subr.mxu0 0.0
    %642 = vmatpush1.msra.mxu0 0.0
    %643 = vmatprep.subr.mxu0 0.0
    %644 = vmatpush1.msra.mxu0 0.0
    %645 = vmatprep.subr.mxu0 0.0
    %646 = vmatpush1.msra.mxu0 0.0
    %647 = vmatprep.subr.mxu0 0.0
    %648 = vmatpush1.msra.mxu0 0.0
    %649 = vmatprep.subr.mxu0 0.0
    %650 = vmatpush1.msra.mxu0 0.0
    %651 = vmatprep.subr.mxu0 0.0
    %652 = vmatpush1.msra.mxu0 0.0
    %653 = vmatprep.subr.mxu0 0.0
    %654 = vmatpush1.msra.mxu0 0.0
    %655 = vmatprep.subr.mxu0 0.0
    %656 = vmatpush1.msra.mxu0 0.0
    %657 = vmatprep.subr.mxu0 0.0
    %658 = vmatpush1.msra.mxu0 0.0
    %659 = vmatprep.subr.mxu0 0.0
    %660 = vmatpush1.msra.mxu0 0.0
    %661 = vmatprep.subr.mxu0 0.0
    %662 = vmatpush1.msra.mxu0 0.0
    %663 = vmatprep.subr.mxu0 0.0
    %664 = vmatpush1.msra.mxu0 0.0
    %665 = vmatprep.subr.mxu0 0.0
    %666 = vmatpush1.msra.mxu0 0.0
    %667 = vmatprep.mubr.f32.mxu0 0.0
    %668 = vmatmul.mubr.f32.gmra.mrb[0].mxu0 %v125
    %v669 = vpop.f32.mrb[0].mxu0
    %v670 = vadd.f32 %v599, %v669
    %v671 = vpop.f32.mrb[0].mxu0
    %v672 = vadd.f32 %v601, %v671
    %673 = vdwg.mxu0
    %674 = vmatprep.subr.mxu0 %v276
    %675 = vmatpush1.msra.mxu0 %v275
    %676 = vmatprep.subr.mxu0 %v278
    %677 = vmatpush1.msra.mxu0 %v277
    %678 = vmatprep.subr.mxu0 %v280
    %679 = vmatpush1.msra.mxu0 %v279
    %680 = vmatprep.subr.mxu0 %v282
    %681 = vmatpush1.msra.mxu0 %v281
    %682 = vmatprep.subr.mxu0 0.0
    %683 = vmatpush1.msra.mxu0 0.0
    %684 = vmatprep.subr.mxu0 0.0
    %685 = vmatpush1.msra.mxu0 0.0
    %686 = vmatprep.subr.mxu0 0.0
    %687 = vmatpush1.msra.mxu0 0.0
    %688 = vmatprep.subr.mxu0 0.0
    %689 = vmatpush1.msra.mxu0 0.0
    %690 = vmatprep.subr.mxu0 0.0
    %691 = vmatpush1.msra.mxu0 0.0
    %692 = vmatprep.subr.mxu0 0.0
    %693 = vmatpush1.msra.mxu0 0.0
    %694 = vmatprep.subr.mxu0 0.0
    %695 = vmatpush1.msra.mxu0 0.0
    %696 = vmatprep.subr.mxu0 0.0
    %697 = vmatpush1.msra.mxu0 0.0
    %698 = vmatprep.subr.mxu0 0.0
    %699 = vmatpush1.msra.mxu0 0.0
    %700 = vmatprep.subr.mxu0 0.0
    %701 = vmatpush1.msra.mxu0 0.0
    %702 = vmatprep.subr.mxu0 0.0
    %703 = vmatpush1.msra.mxu0 0.0
    %704 = vmatprep.subr.mxu0 0.0
    %705 = vmatpush1.msra.mxu0 0.0
    %706 = vmatprep.subr.mxu0 0.0
    %707 = vmatpush1.msra.mxu0 0.0
    %708 = vmatprep.subr.mxu0 0.0
    %709 = vmatpush1.msra.mxu0 0.0
    %710 = vmatprep.subr.mxu0 0.0
    %711 = vmatpush1.msra.mxu0 0.0
    %712 = vmatprep.subr.mxu0 0.0
    %713 = vmatpush1.msra.mxu0 0.0
    %714 = vmatprep.subr.mxu0 0.0
    %715 = vmatpush1.msra.mxu0 0.0
    %716 = vmatprep.subr.mxu0 0.0
    %717 = vmatpush1.msra.mxu0 0.0
    %718 = vmatprep.subr.mxu0 0.0
    %719 = vmatpush1.msra.mxu0 0.0
    %720 = vmatprep.subr.mxu0 0.0
    %721 = vmatpush1.msra.mxu0 0.0
    %722 = vmatprep.subr.mxu0 0.0
    %723 = vmatpush1.msra.mxu0 0.0
    %724 = vmatprep.subr.mxu0 0.0
    %725 = vmatpush1.msra.mxu0 0.0
    %726 = vmatprep.subr.mxu0 0.0
    %727 = vmatpush1.msra.mxu0 0.0
    %728 = vmatprep.subr.mxu0 0.0
    %729 = vmatpush1.msra.mxu0 0.0
    %730 = vmatprep.subr.mxu0 0.0
    %731 = vmatpush1.msra.mxu0 0.0
    %732 = vmatprep.subr.mxu0 0.0
    %733 = vmatpush1.msra.mxu0 0.0
    %734 = vmatprep.subr.mxu0 0.0
    %735 = vmatpush1.msra.mxu0 0.0
    %736 = vmatprep.subr.mxu0 0.0
    %737 = vmatpush1.msra.mxu0 0.0
    %738 = vmatprep.mubr.f32.mxu0 0.0
    %739 = vmatmul.mubr.f32.gmra.mrb[0].mxu0 %v371
    %v740 = vpop.f32.mrb[0].mxu0
    %v741 = vadd.f32 0.0, %v740
    %v742 = vpop.f32.mrb[0].mxu0
    %v743 = vadd.f32 0.0, %v742
    %744 = vdwg.mxu0
    %v745 = vadd.f32 %v670, %v741
    %v746 = vadd.f32 %v672, %v743
    %747 = vmatprep.subr.mxu0 %v363
    %748 = vmatpush1.msra.mxu0 %v362
    %749 = vmatprep.subr.mxu0 %v365
    %750 = vmatpush1.msra.mxu0 %v364
    %751 = vmatprep.subr.mxu0 %v367
    %752 = vmatpush1.msra.mxu0 %v366
    %753 = vmatprep.subr.mxu0 %v369
    %754 = vmatpush1.msra.mxu0 %v368
    %755 = vmatprep.subr.mxu0 0.0
    %756 = vmatpush1.msra.mxu0 0.0
    %757 = vmatprep.subr.mxu0 0.0
    %758 = vmatpush1.msra.mxu0 0.0
    %759 = vmatprep.subr.mxu0 0.0
    %760 = vmatpush1.msra.mxu0 0.0
    %761 = vmatprep.subr.mxu0 0.0
    %762 = vmatpush1.msra.mxu0 0.0
    %763 = vmatprep.subr.mxu0 0.0
    %764 = vmatpush1.msra.mxu0 0.0
    %765 = vmatprep.subr.mxu0 0.0
    %766 = vmatpush1.msra.mxu0 0.0
    %767 = vmatprep.subr.mxu0 0.0
    %768 = vmatpush1.msra.mxu0 0.0
    %769 = vmatprep.subr.mxu0 0.0
    %770 = vmatpush1.msra.mxu0 0.0
    %771 = vmatprep.subr.mxu0 0.0
    %772 = vmatpush1.msra.mxu0 0.0
    %773 = vmatprep.subr.mxu0 0.0
    %774 = vmatpush1.msra.mxu0 0.0
    %775 = vmatprep.subr.mxu0 0.0
    %776 = vmatpush1.msra.mxu0 0.0
    %777 = vmatprep.subr.mxu0 0.0
    %778 = vmatpush1.msra.mxu0 0.0
    %779 = vmatprep.subr.mxu0 0.0
    %780 = vmatpush1.msra.mxu0 0.0
    %781 = vmatprep.subr.mxu0 0.0
    %782 = vmatpush1.msra.mxu0 0.0
    %783 = vmatprep.subr.mxu0 0.0
    %784 = vmatpush1.msra.mxu0 0.0
    %785 = vmatprep.subr.mxu0 0.0
    %786 = vmatpush1.msra.mxu0 0.0
    %787 = vmatprep.subr.mxu0 0.0
    %788 = vmatpush1.msra.mxu0 0.0
    %789 = vmatprep.subr.mxu0 0.0
    %790 = vmatpush1.msra.mxu0 0.0
    %791 = vmatprep.subr.mxu0 0.0
    %792 = vmatpush1.msra.mxu0 0.0
    %793 = vmatprep.subr.mxu0 0.0
    %794 = vmatpush1.msra.mxu0 0.0
    %795 = vmatprep.subr.mxu0 0.0
    %796 = vmatpush1.msra.mxu0 0.0
    %797 = vmatprep.subr.mxu0 0.0
    %798 = vmatpush1.msra.mxu0 0.0
    %799 = vmatprep.subr.mxu0 0.0
    %800 = vmatpush1.msra.mxu0 0.0
    %801 = vmatprep.subr.mxu0 0.0
    %802 = vmatpush1.msra.mxu0 0.0
    %803 = vmatprep.subr.mxu0 0.0
    %804 = vmatpush1.msra.mxu0 0.0
    %805 = vmatprep.subr.mxu0 0.0
    %806 = vmatpush1.msra.mxu0 0.0
    %807 = vmatprep.subr.mxu0 0.0
    %808 = vmatpush1.msra.mxu0 0.0
    %809 = vmatprep.subr.mxu0 0.0
    %810 = vmatpush1.msra.mxu0 0.0
    %811 = vmatprep.mubr.f32.mxu0 0.0
    %812 = vmatmul.mubr.f32.gmra.mrb[0].mxu0 %v457
    %v813 = vpop.f32.mrb[0].mxu0
    %v814 = vadd.f32 0.0, %v813
    %v815 = vpop.f32.mrb[0].mxu0
    %v816 = vadd.f32 0.0, %v815
    %817 = vdwg.mxu0
    %v818 = vadd.f32 %v745, %v814
    %v819 = vadd.f32 %v746, %v816
    %v820 = vld [vmem:[%s112 + $0x1] sm:$0x3f]
    %v822 = vsel %vm123, %v820, 0
    %824 = vmatprep.subr.mxu0 %v449
    %825 = vmatpush1.msra.mxu0 %v448
    %826 = vmatprep.subr.mxu0 %v451
    %827 = vmatpush1.msra.mxu0 %v450
    %828 = vmatprep.subr.mxu0 %v453
    %829 = vmatpush1.msra.mxu0 %v452
    %830 = vmatprep.subr.mxu0 %v455
    %831 = vmatpush1.msra.mxu0 %v454
    %832 = vmatprep.subr.mxu0 0.0
    %833 = vmatpush1.msra.mxu0 0.0
    %834 = vmatprep.subr.mxu0 0.0
    %835 = vmatpush1.msra.mxu0 0.0
    %836 = vmatprep.subr.mxu0 0.0
    %837 = vmatpush1.msra.mxu0 0.0
    %838 = vmatprep.subr.mxu0 0.0
    %839 = vmatpush1.msra.mxu0 0.0
    %840 = vmatprep.subr.mxu0 0.0
    %841 = vmatpush1.msra.mxu0 0.0
    %842 = vmatprep.subr.mxu0 0.0
    %843 = vmatpush1.msra.mxu0 0.0
    %844 = vmatprep.subr.mxu0 0.0
    %845 = vmatpush1.msra.mxu0 0.0
    %846 = vmatprep.subr.mxu0 0.0
    %847 = vmatpush1.msra.mxu0 0.0
    %848 = vmatprep.subr.mxu0 0.0
    %849 = vmatpush1.msra.mxu0 0.0
    %850 = vmatprep.subr.mxu0 0.0
    %851 = vmatpush1.msra.mxu0 0.0
    %852 = vmatprep.subr.mxu0 0.0
    %853 = vmatpush1.msra.mxu0 0.0
    %854 = vmatprep.subr.mxu0 0.0
    %855 = vmatpush1.msra.mxu0 0.0
    %856 = vmatprep.subr.mxu0 0.0
    %857 = vmatpush1.msra.mxu0 0.0
    %858 = vmatprep.subr.mxu0 0.0
    %859 = vmatpush1.msra.mxu0 0.0
    %860 = vmatprep.subr.mxu0 0.0
    %861 = vmatpush1.msra.mxu0 0.0
    %862 = vmatprep.subr.mxu0 0.0
    %863 = vmatpush1.msra.mxu0 0.0
    %864 = vmatprep.subr.mxu0 0.0
    %865 = vmatpush1.msra.mxu0 0.0
    %866 = vmatprep.subr.mxu0 0.0
    %867 = vmatpush1.msra.mxu0 0.0
    %868 = vmatprep.subr.mxu0 0.0
    %869 = vmatpush1.msra.mxu0 0.0
    %870 = vmatprep.subr.mxu0 0.0
    %871 = vmatpush1.msra.mxu0 0.0
    %872 = vmatprep.subr.mxu0 0.0
    %873 = vmatpush1.msra.mxu0 0.0
    %874 = vmatprep.subr.mxu0 0.0
    %875 = vmatpush1.msra.mxu0 0.0
    %876 = vmatprep.subr.mxu0 0.0
    %877 = vmatpush1.msra.mxu0 0.0
    %878 = vmatprep.subr.mxu0 0.0
    %879 = vmatpush1.msra.mxu0 0.0
    %880 = vmatprep.subr.mxu0 0.0
    %881 = vmatpush1.msra.mxu0 0.0
    %882 = vmatprep.subr.mxu0 0.0
    %883 = vmatpush1.msra.mxu0 0.0
    %884 = vmatprep.subr.mxu0 0.0
    %885 = vmatpush1.msra.mxu0 0.0
    %886 = vmatprep.subr.mxu0 0.0
    %887 = vmatpush1.msra.mxu0 0.0
    %888 = vmatprep.mubr.f32.mxu0 0.0
    %889 = vmatmul.mubr.f32.gmra.mrb[0].mxu0 %v822
    %v890 = vpop.f32.mrb[0].mxu0
    %v891 = vadd.f32 0.0, %v890
    %v892 = vpop.f32.mrb[0].mxu0
    %v893 = vadd.f32 0.0, %v892
    %894 = vdwg.mxu0
    %v895 = vadd.f32 %v818, %v891
    %v896 = vadd.f32 %v819, %v893
    %897 = vmatprep.subr.mxu0 %v116
    %898 = vmatpush1.msra.mxu0 %v115
    %899 = vmatprep.subr.mxu0 %v118
    %900 = vmatpush1.msra.mxu0 %v117
    %901 = vmatprep.subr.mxu0 %v120
    %902 = vmatpush1.msra.mxu0 %v119
    %903 = vmatprep.subr.mxu0 %v122
    %904 = vmatpush1.msra.mxu0 %v121
    %905 = vmatprep.subr.mxu0 0.0
    %906 = vmatpush1.msra.mxu0 0.0
    %907 = vmatprep.subr.mxu0 0.0
    %908 = vmatpush1.msra.mxu0 0.0
    %909 = vmatprep.subr.mxu0 0.0
    %910 = vmatpush1.msra.mxu0 0.0
    %911 = vmatprep.subr.mxu0 0.0
    %912 = vmatpush1.msra.mxu0 0.0
    %913 = vmatprep.subr.mxu0 0.0
    %914 = vmatpush1.msra.mxu0 0.0
    %915 = vmatprep.subr.mxu0 0.0
    %916 = vmatpush1.msra.mxu0 0.0
    %917 = vmatprep.subr.mxu0 0.0
    %918 = vmatpush1.msra.mxu0 0.0
    %919 = vmatprep.subr.mxu0 0.0
    %920 = vmatpush1.msra.mxu0 0.0
    %921 = vmatprep.subr.mxu0 0.0
    %922 = vmatpush1.msra.mxu0 0.0
    %923 = vmatprep.subr.mxu0 0.0
    %924 = vmatpush1.msra.mxu0 0.0
    %925 = vmatprep.subr.mxu0 0.0
    %926 = vmatpush1.msra.mxu0 0.0
    %927 = vmatprep.subr.mxu0 0.0
    %928 = vmatpush1.msra.mxu0 0.0
    %929 = vmatprep.subr.mxu0 0.0
    %930 = vmatpush1.msra.mxu0 0.0
    %931 = vmatprep.subr.mxu0 0.0
    %932 = vmatpush1.msra.mxu0 0.0
    %933 = vmatprep.subr.mxu0 0.0
    %934 = vmatpush1.msra.mxu0 0.0
    %935 = vmatprep.subr.mxu0 0.0
    %936 = vmatpush1.msra.mxu0 0.0
    %937 = vmatprep.subr.mxu0 0.0
    %938 = vmatpush1.msra.mxu0 0.0
    %939 = vmatprep.subr.mxu0 0.0
    %940 = vmatpush1.msra.mxu0 0.0
    %941 = vmatprep.subr.mxu0 0.0
    %942 = vmatpush1.msra.mxu0 0.0
    %943 = vmatprep.subr.mxu0 0.0
    %944 = vmatpush1.msra.mxu0 0.0
    %945 = vmatprep.subr.mxu0 0.0
    %946 = vmatpush1.msra.mxu0 0.0
    %947 = vmatprep.subr.mxu0 0.0
    %948 = vmatpush1.msra.mxu0 0.0
    %949 = vmatprep.subr.mxu0 0.0
    %950 = vmatpush1.msra.mxu0 0.0
    %951 = vmatprep.subr.mxu0 0.0
    %952 = vmatpush1.msra.mxu0 0.0
    %953 = vmatprep.subr.mxu0 0.0
    %954 = vmatpush1.msra.mxu0 0.0
    %955 = vmatprep.subr.mxu0 0.0
    %956 = vmatpush1.msra.mxu0 0.0
    %957 = vmatprep.subr.mxu0 0.0
    %958 = vmatpush1.msra.mxu0 0.0
    %959 = vmatprep.subr.mxu0 0.0
    %960 = vmatpush1.msra.mxu0 0.0
    %961 = vmatprep.mubr.f32.mxu0 0.0
    %962 = vmatmul.mubr.f32.gmra.mrb[0].mxu0 %v371
    %v963 = vpop.f32.mrb[0].mxu0
    %v964 = vadd.f32 0.0, %v963
    %v965 = vpop.f32.mrb[0].mxu0
    %v966 = vadd.f32 0.0, %v965
    %967 = vdwg.mxu0
    %968 = vmatprep.subr.mxu0 %v105
    %969 = vmatpush1.msra.mxu0 %v104
    %970 = vmatprep.subr.mxu0 %v107
    %971 = vmatpush1.msra.mxu0 %v106
    %972 = vmatprep.subr.mxu0 %v109
    %973 = vmatpush1.msra.mxu0 %v108
    %974 = vmatprep.subr.mxu0 %v111
    %975 = vmatpush1.msra.mxu0 %v110
    %976 = vmatprep.subr.mxu0 0.0
    %977 = vmatpush1.msra.mxu0 0.0
    %978 = vmatprep.subr.mxu0 0.0
    %979 = vmatpush1.msra.mxu0 0.0
    %980 = vmatprep.subr.mxu0 0.0
    %981 = vmatpush1.msra.mxu0 0.0
    %982 = vmatprep.subr.mxu0 0.0
    %983 = vmatpush1.msra.mxu0 0.0
    %984 = vmatprep.subr.mxu0 0.0
    %985 = vmatpush1.msra.mxu0 0.0
    %986 = vmatprep.subr.mxu0 0.0
    %987 = vmatpush1.msra.mxu0 0.0
    %988 = vmatprep.subr.mxu0 0.0
    %989 = vmatpush1.msra.mxu0 0.0
    %990 = vmatprep.subr.mxu0 0.0
    %991 = vmatpush1.msra.mxu0 0.0
    %992 = vmatprep.subr.mxu0 0.0
    %993 = vmatpush1.msra.mxu0 0.0
    %994 = vmatprep.subr.mxu0 0.0
    %995 = vmatpush1.msra.mxu0 0.0
    %996 = vmatprep.subr.mxu0 0.0
    %997 = vmatpush1.msra.mxu0 0.0
    %998 = vmatprep.subr.mxu0 0.0
    %999 = vmatpush1.msra.mxu0 0.0
    %1000 = vmatprep.subr.mxu0 0.0
    %1001 = vmatpush1.msra.mxu0 0.0
    %1002 = vmatprep.subr.mxu0 0.0
    %1003 = vmatpush1.msra.mxu0 0.0
    %1004 = vmatprep.subr.mxu0 0.0
    %1005 = vmatpush1.msra.mxu0 0.0
    %1006 = vmatprep.subr.mxu0 0.0
    %1007 = vmatpush1.msra.mxu0 0.0
    %1008 = vmatprep.subr.mxu0 0.0
    %1009 = vmatpush1.msra.mxu0 0.0
    %1010 = vmatprep.subr.mxu0 0.0
    %1011 = vmatpush1.msra.mxu0 0.0
    %1012 = vmatprep.subr.mxu0 0.0
    %1013 = vmatpush1.msra.mxu0 0.0
    %1014 = vmatprep.subr.mxu0 0.0
    %1015 = vmatpush1.msra.mxu0 0.0
    %1016 = vmatprep.subr.mxu0 0.0
    %1017 = vmatpush1.msra.mxu0 0.0
    %1018 = vmatprep.subr.mxu0 0.0
    %1019 = vmatpush1.msra.mxu0 0.0
    %1020 = vmatprep.subr.mxu0 0.0
    %1021 = vmatpush1.msra.mxu0 0.0
    %1022 = vmatprep.subr.mxu0 0.0
    %1023 = vmatpush1.msra.mxu0 0.0
    %1024 = vmatprep.subr.mxu0 0.0
    %1025 = vmatpush1.msra.mxu0 0.0
    %1026 = vmatprep.subr.mxu0 0.0
    %1027 = vmatpush1.msra.mxu0 0.0
    %1028 = vmatprep.subr.mxu0 0.0
    %1029 = vmatpush1.msra.mxu0 0.0
    %1030 = vmatprep.subr.mxu0 0.0
    %1031 = vmatpush1.msra.mxu0 0.0
    %1032 = vmatprep.mubr.f32.mxu0 0.0
    %1033 = vmatmul.mubr.f32.gmra.mrb[0].mxu0 %v284
    %v1034 = vpop.f32.mrb[0].mxu0
    %v1035 = vadd.f32 %v964, %v1034
    %v1036 = vpop.f32.mrb[0].mxu0
    %v1037 = vadd.f32 %v966, %v1036
    %1038 = vdwg.mxu0
    %1039 = vmatprep.subr.mxu0 %v276
    %1040 = vmatpush1.msra.mxu0 %v275
    %1041 = vmatprep.subr.mxu0 %v278
    %1042 = vmatpush1.msra.mxu0 %v277
    %1043 = vmatprep.subr.mxu0 %v280
    %1044 = vmatpush1.msra.mxu0 %v279
    %1045 = vmatprep.subr.mxu0 %v282
    %1046 = vmatpush1.msra.mxu0 %v281
    %1047 = vmatprep.subr.mxu0 0.0
    %1048 = vmatpush1.msra.mxu0 0.0
    %1049 = vmatprep.subr.mxu0 0.0
    %1050 = vmatpush1.msra.mxu0 0.0
    %1051 = vmatprep.subr.mxu0 0.0
    %1052 = vmatpush1.msra.mxu0 0.0
    %1053 = vmatprep.subr.mxu0 0.0
    %1054 = vmatpush1.msra.mxu0 0.0
    %1055 = vmatprep.subr.mxu0 0.0
    %1056 = vmatpush1.msra.mxu0 0.0
    %1057 = vmatprep.subr.mxu0 0.0
    %1058 = vmatpush1.msra.mxu0 0.0
    %1059 = vmatprep.subr.mxu0 0.0
    %1060 = vmatpush1.msra.mxu0 0.0
    %1061 = vmatprep.subr.mxu0 0.0
    %1062 = vmatpush1.msra.mxu0 0.0
    %1063 = vmatprep.subr.mxu0 0.0
    %1064 = vmatpush1.msra.mxu0 0.0
    %1065 = vmatprep.subr.mxu0 0.0
    %1066 = vmatpush1.msra.mxu0 0.0
    %1067 = vmatprep.subr.mxu0 0.0
    %1068 = vmatpush1.msra.mxu0 0.0
    %1069 = vmatprep.subr.mxu0 0.0
    %1070 = vmatpush1.msra.mxu0 0.0
    %1071 = vmatprep.subr.mxu0 0.0
    %1072 = vmatpush1.msra.mxu0 0.0
    %1073 = vmatprep.subr.mxu0 0.0
    %1074 = vmatpush1.msra.mxu0 0.0
    %1075 = vmatprep.subr.mxu0 0.0
    %1076 = vmatpush1.msra.mxu0 0.0
    %1077 = vmatprep.subr.mxu0 0.0
    %1078 = vmatpush1.msra.mxu0 0.0
    %1079 = vmatprep.subr.mxu0 0.0
    %1080 = vmatpush1.msra.mxu0 0.0
    %1081 = vmatprep.subr.mxu0 0.0
    %1082 = vmatpush1.msra.mxu0 0.0
    %1083 = vmatprep.subr.mxu0 0.0
    %1084 = vmatpush1.msra.mxu0 0.0
    %1085 = vmatprep.subr.mxu0 0.0
    %1086 = vmatpush1.msra.mxu0 0.0
    %1087 = vmatprep.subr.mxu0 0.0
    %1088 = vmatpush1.msra.mxu0 0.0
    %1089 = vmatprep.subr.mxu0 0.0
    %1090 = vmatpush1.msra.mxu0 0.0
    %1091 = vmatprep.subr.mxu0 0.0
    %1092 = vmatpush1.msra.mxu0 0.0
    %1093 = vmatprep.subr.mxu0 0.0
    %1094 = vmatpush1.msra.mxu0 0.0
    %1095 = vmatprep.subr.mxu0 0.0
    %1096 = vmatpush1.msra.mxu0 0.0
    %1097 = vmatprep.subr.mxu0 0.0
    %1098 = vmatpush1.msra.mxu0 0.0
    %1099 = vmatprep.subr.mxu0 0.0
    %1100 = vmatpush1.msra.mxu0 0.0
    %1101 = vmatprep.subr.mxu0 0.0
    %1102 = vmatpush1.msra.mxu0 0.0
    %1103 = vmatprep.mubr.f32.mxu0 0.0
    %1104 = vmatmul.mubr.f32.gmra.mrb[0].mxu0 %v457
    %v1105 = vpop.f32.mrb[0].mxu0
    %v1106 = vadd.f32 0.0, %v1105
    %v1107 = vpop.f32.mrb[0].mxu0
    %v1108 = vadd.f32 0.0, %v1107
    %1109 = vdwg.mxu0
    %v1110 = vadd.f32 %v1035, %v1106
    %v1111 = vadd.f32 %v1037, %v1108
    %1112 = vmatprep.subr.mxu0 %v363
    %1113 = vmatpush1.msra.mxu0 %v362
    %1114 = vmatprep.subr.mxu0 %v365
    %1115 = vmatpush1.msra.mxu0 %v364
    %1116 = vmatprep.subr.mxu0 %v367
    %1117 = vmatpush1.msra.mxu0 %v366
    %1118 = vmatprep.subr.mxu0 %v369
    %1119 = vmatpush1.msra.mxu0 %v368
    %1120 = vmatprep.subr.mxu0 0.0
    %1121 = vmatpush1.msra.mxu0 0.0
    %1122 = vmatprep.subr.mxu0 0.0
    %1123 = vmatpush1.msra.mxu0 0.0
    %1124 = vmatprep.subr.mxu0 0.0
    %1125 = vmatpush1.msra.mxu0 0.0
    %1126 = vmatprep.subr.mxu0 0.0
    %1127 = vmatpush1.msra.mxu0 0.0
    %1128 = vmatprep.subr.mxu0 0.0
    %1129 = vmatpush1.msra.mxu0 0.0
    %1130 = vmatprep.subr.mxu0 0.0
    %1131 = vmatpush1.msra.mxu0 0.0
    %1132 = vmatprep.subr.mxu0 0.0
    %1133 = vmatpush1.msra.mxu0 0.0
    %1134 = vmatprep.subr.mxu0 0.0
    %1135 = vmatpush1.msra.mxu0 0.0
    %1136 = vmatprep.subr.mxu0 0.0
    %1137 = vmatpush1.msra.mxu0 0.0
    %1138 = vmatprep.subr.mxu0 0.0
    %1139 = vmatpush1.msra.mxu0 0.0
    %1140 = vmatprep.subr.mxu0 0.0
    %1141 = vmatpush1.msra.mxu0 0.0
    %1142 = vmatprep.subr.mxu0 0.0
    %1143 = vmatpush1.msra.mxu0 0.0
    %1144 = vmatprep.subr.mxu0 0.0
    %1145 = vmatpush1.msra.mxu0 0.0
    %1146 = vmatprep.subr.mxu0 0.0
    %1147 = vmatpush1.msra.mxu0 0.0
    %1148 = vmatprep.subr.mxu0 0.0
    %1149 = vmatpush1.msra.mxu0 0.0
    %1150 = vmatprep.subr.mxu0 0.0
    %1151 = vmatpush1.msra.mxu0 0.0
    %1152 = vmatprep.subr.mxu0 0.0
    %1153 = vmatpush1.msra.mxu0 0.0
    %1154 = vmatprep.subr.mxu0 0.0
    %1155 = vmatpush1.msra.mxu0 0.0
    %1156 = vmatprep.subr.mxu0 0.0
    %1157 = vmatpush1.msra.mxu0 0.0
    %1158 = vmatprep.subr.mxu0 0.0
    %1159 = vmatpush1.msra.mxu0 0.0
    %1160 = vmatprep.subr.mxu0 0.0
    %1161 = vmatpush1.msra.mxu0 0.0
    %1162 = vmatprep.subr.mxu0 0.0
    %1163 = vmatpush1.msra.mxu0 0.0
    %1164 = vmatprep.subr.mxu0 0.0
    %1165 = vmatpush1.msra.mxu0 0.0
    %1166 = vmatprep.subr.mxu0 0.0
    %1167 = vmatpush1.msra.mxu0 0.0
    %1168 = vmatprep.subr.mxu0 0.0
    %1169 = vmatpush1.msra.mxu0 0.0
    %1170 = vmatprep.subr.mxu0 0.0
    %1171 = vmatpush1.msra.mxu0 0.0
    %1172 = vmatprep.subr.mxu0 0.0
    %1173 = vmatpush1.msra.mxu0 0.0
    %1174 = vmatprep.subr.mxu0 0.0
    %1175 = vmatpush1.msra.mxu0 0.0
    %1176 = vmatprep.mubr.f32.mxu0 0.0
    %1177 = vmatmul.mubr.f32.gmra.mrb[0].mxu0 %v822
    %v1178 = vpop.f32.mrb[0].mxu0
    %v1179 = vadd.f32 0.0, %v1178
    %v1180 = vpop.f32.mrb[0].mxu0
    %v1181 = vadd.f32 0.0, %v1180
    %1182 = vdwg.mxu0
    %v1183 = vadd.f32 %v1110, %v1179
    %v1184 = vadd.f32 %v1111, %v1181
    %v1185 = vld [vmem:[%s272 + $0x1] sm:$0x3f]
    %v1187 = vsel %vm123, %v1185, 0
    %1189 = vmatprep.subr.mxu0 %v449
    %1190 = vmatpush1.msra.mxu0 %v448
    %1191 = vmatprep.subr.mxu0 %v451
    %1192 = vmatpush1.msra.mxu0 %v450
    %1193 = vmatprep.subr.mxu0 %v453
    %1194 = vmatpush1.msra.mxu0 %v452
    %1195 = vmatprep.subr.mxu0 %v455
    %1196 = vmatpush1.msra.mxu0 %v454
    %1197 = vmatprep.subr.mxu0 0.0
    %1198 = vmatpush1.msra.mxu0 0.0
    %1199 = vmatprep.subr.mxu0 0.0
    %1200 = vmatpush1.msra.mxu0 0.0
    %1201 = vmatprep.subr.mxu0 0.0
    %1202 = vmatpush1.msra.mxu0 0.0
    %1203 = vmatprep.subr.mxu0 0.0
    %1204 = vmatpush1.msra.mxu0 0.0
    %1205 = vmatprep.subr.mxu0 0.0
    %1206 = vmatpush1.msra.mxu0 0.0
    %1207 = vmatprep.subr.mxu0 0.0
    %1208 = vmatpush1.msra.mxu0 0.0
    %1209 = vmatprep.subr.mxu0 0.0
    %1210 = vmatpush1.msra.mxu0 0.0
    %1211 = vmatprep.subr.mxu0 0.0
    %1212 = vmatpush1.msra.mxu0 0.0
    %1213 = vmatprep.subr.mxu0 0.0
    %1214 = vmatpush1.msra.mxu0 0.0
    %1215 = vmatprep.subr.mxu0 0.0
    %1216 = vmatpush1.msra.mxu0 0.0
    %1217 = vmatprep.subr.mxu0 0.0
    %1218 = vmatpush1.msra.mxu0 0.0
    %1219 = vmatprep.subr.mxu0 0.0
    %1220 = vmatpush1.msra.mxu0 0.0
    %1221 = vmatprep.subr.mxu0 0.0
    %1222 = vmatpush1.msra.mxu0 0.0
    %1223 = vmatprep.subr.mxu0 0.0
    %1224 = vmatpush1.msra.mxu0 0.0
    %1225 = vmatprep.subr.mxu0 0.0
    %1226 = vmatpush1.msra.mxu0 0.0
    %1227 = vmatprep.subr.mxu0 0.0
    %1228 = vmatpush1.msra.mxu0 0.0
    %1229 = vmatprep.subr.mxu0 0.0
    %1230 = vmatpush1.msra.mxu0 0.0
    %1231 = vmatprep.subr.mxu0 0.0
    %1232 = vmatpush1.msra.mxu0 0.0
    %1233 = vmatprep.subr.mxu0 0.0
    %1234 = vmatpush1.msra.mxu0 0.0
    %1235 = vmatprep.subr.mxu0 0.0
    %1236 = vmatpush1.msra.mxu0 0.0
    %1237 = vmatprep.subr.mxu0 0.0
    %1238 = vmatpush1.msra.mxu0 0.0
    %1239 = vmatprep.subr.mxu0 0.0
    %1240 = vmatpush1.msra.mxu0 0.0
    %1241 = vmatprep.subr.mxu0 0.0
    %1242 = vmatpush1.msra.mxu0 0.0
    %1243 = vmatprep.subr.mxu0 0.0
    %1244 = vmatpush1.msra.mxu0 0.0
    %1245 = vmatprep.subr.mxu0 0.0
    %1246 = vmatpush1.msra.mxu0 0.0
    %1247 = vmatprep.subr.mxu0 0.0
    %1248 = vmatpush1.msra.mxu0 0.0
    %1249 = vmatprep.subr.mxu0 0.0
    %1250 = vmatpush1.msra.mxu0 0.0
    %1251 = vmatprep.subr.mxu0 0.0
    %1252 = vmatpush1.msra.mxu0 0.0
    %1253 = vmatprep.mubr.f32.mxu0 0.0
    %1254 = vmatmul.mubr.f32.gmra.mrb[0].mxu0 %v1187
    %v1255 = vpop.f32.mrb[0].mxu0
    %v1256 = vadd.f32 0.0, %v1255
    %v1257 = vpop.f32.mrb[0].mxu0
    %v1258 = vadd.f32 0.0, %v1257
    %1259 = vdwg.mxu0
    %v1260 = vadd.f32 %v1183, %v1256
    %v1261 = vadd.f32 %v1184, %v1258
    %1262 = vmatprep.subr.mxu0 %v116
    %1263 = vmatpush1.msra.mxu0 %v115
    %1264 = vmatprep.subr.mxu0 %v118
    %1265 = vmatpush1.msra.mxu0 %v117
    %1266 = vmatprep.subr.mxu0 %v120
    %1267 = vmatpush1.msra.mxu0 %v119
    %1268 = vmatprep.subr.mxu0 %v122
    %1269 = vmatpush1.msra.mxu0 %v121
    %1270 = vmatprep.subr.mxu0 0.0
    %1271 = vmatpush1.msra.mxu0 0.0
    %1272 = vmatprep.subr.mxu0 0.0
    %1273 = vmatpush1.msra.mxu0 0.0
    %1274 = vmatprep.subr.mxu0 0.0
    %1275 = vmatpush1.msra.mxu0 0.0
    %1276 = vmatprep.subr.mxu0 0.0
    %1277 = vmatpush1.msra.mxu0 0.0
    %1278 = vmatprep.subr.mxu0 0.0
    %1279 = vmatpush1.msra.mxu0 0.0
    %1280 = vmatprep.subr.mxu0 0.0
    %1281 = vmatpush1.msra.mxu0 0.0
    %1282 = vmatprep.subr.mxu0 0.0
    %1283 = vmatpush1.msra.mxu0 0.0
    %1284 = vmatprep.subr.mxu0 0.0
    %1285 = vmatpush1.msra.mxu0 0.0
    %1286 = vmatprep.subr.mxu0 0.0
    %1287 = vmatpush1.msra.mxu0 0.0
    %1288 = vmatprep.subr.mxu0 0.0
    %1289 = vmatpush1.msra.mxu0 0.0
    %1290 = vmatprep.subr.mxu0 0.0
    %1291 = vmatpush1.msra.mxu0 0.0
    %1292 = vmatprep.subr.mxu0 0.0
    %1293 = vmatpush1.msra.mxu0 0.0
    %1294 = vmatprep.subr.mxu0 0.0
    %1295 = vmatpush1.msra.mxu0 0.0
    %1296 = vmatprep.subr.mxu0 0.0
    %1297 = vmatpush1.msra.mxu0 0.0
    %1298 = vmatprep.subr.mxu0 0.0
    %1299 = vmatpush1.msra.mxu0 0.0
    %1300 = vmatprep.subr.mxu0 0.0
    %1301 = vmatpush1.msra.mxu0 0.0
    %1302 = vmatprep.subr.mxu0 0.0
    %1303 = vmatpush1.msra.mxu0 0.0
    %1304 = vmatprep.subr.mxu0 0.0
    %1305 = vmatpush1.msra.mxu0 0.0
    %1306 = vmatprep.subr.mxu0 0.0
    %1307 = vmatpush1.msra.mxu0 0.0
    %1308 = vmatprep.subr.mxu0 0.0
    %1309 = vmatpush1.msra.mxu0 0.0
    %1310 = vmatprep.subr.mxu0 0.0
    %1311 = vmatpush1.msra.mxu0 0.0
    %1312 = vmatprep.subr.mxu0 0.0
    %1313 = vmatpush1.msra.mxu0 0.0
    %1314 = vmatprep.subr.mxu0 0.0
    %1315 = vmatpush1.msra.mxu0 0.0
    %1316 = vmatprep.subr.mxu0 0.0
    %1317 = vmatpush1.msra.mxu0 0.0
    %1318 = vmatprep.subr.mxu0 0.0
    %1319 = vmatpush1.msra.mxu0 0.0
    %1320 = vmatprep.subr.mxu0 0.0
    %1321 = vmatpush1.msra.mxu0 0.0
    %1322 = vmatprep.subr.mxu0 0.0
    %1323 = vmatpush1.msra.mxu0 0.0
    %1324 = vmatprep.subr.mxu0 0.0
    %1325 = vmatpush1.msra.mxu0 0.0
    %1326 = vmatprep.mubr.f32.mxu0 0.0
    %1327 = vmatmul.mubr.f32.gmra.mrb[0].mxu0 %v457
    %v1328 = vpop.f32.mrb[0].mxu0
    %v1329 = vadd.f32 0.0, %v1328
    %v1330 = vpop.f32.mrb[0].mxu0
    %v1331 = vadd.f32 0.0, %v1330
    %1332 = vdwg.mxu0
    %1333 = vmatprep.subr.mxu0 %v105
    %1334 = vmatpush1.msra.mxu0 %v104
    %1335 = vmatprep.subr.mxu0 %v107
    %1336 = vmatpush1.msra.mxu0 %v106
    %1337 = vmatprep.subr.mxu0 %v109
    %1338 = vmatpush1.msra.mxu0 %v108
    %1339 = vmatprep.subr.mxu0 %v111
    %1340 = vmatpush1.msra.mxu0 %v110
    %1341 = vmatprep.subr.mxu0 0.0
    %1342 = vmatpush1.msra.mxu0 0.0
    %1343 = vmatprep.subr.mxu0 0.0
    %1344 = vmatpush1.msra.mxu0 0.0
    %1345 = vmatprep.subr.mxu0 0.0
    %1346 = vmatpush1.msra.mxu0 0.0
    %1347 = vmatprep.subr.mxu0 0.0
    %1348 = vmatpush1.msra.mxu0 0.0
    %1349 = vmatprep.subr.mxu0 0.0
    %1350 = vmatpush1.msra.mxu0 0.0
    %1351 = vmatprep.subr.mxu0 0.0
    %1352 = vmatpush1.msra.mxu0 0.0
    %1353 = vmatprep.subr.mxu0 0.0
    %1354 = vmatpush1.msra.mxu0 0.0
    %1355 = vmatprep.subr.mxu0 0.0
    %1356 = vmatpush1.msra.mxu0 0.0
    %1357 = vmatprep.subr.mxu0 0.0
    %1358 = vmatpush1.msra.mxu0 0.0
    %1359 = vmatprep.subr.mxu0 0.0
    %1360 = vmatpush1.msra.mxu0 0.0
    %1361 = vmatprep.subr.mxu0 0.0
    %1362 = vmatpush1.msra.mxu0 0.0
    %1363 = vmatprep.subr.mxu0 0.0
    %1364 = vmatpush1.msra.mxu0 0.0
    %1365 = vmatprep.subr.mxu0 0.0
    %1366 = vmatpush1.msra.mxu0 0.0
    %1367 = vmatprep.subr.mxu0 0.0
    %1368 = vmatpush1.msra.mxu0 0.0
    %1369 = vmatprep.subr.mxu0 0.0
    %1370 = vmatpush1.msra.mxu0 0.0
    %1371 = vmatprep.subr.mxu0 0.0
    %1372 = vmatpush1.msra.mxu0 0.0
    %1373 = vmatprep.subr.mxu0 0.0
    %1374 = vmatpush1.msra.mxu0 0.0
    %1375 = vmatprep.subr.mxu0 0.0
    %1376 = vmatpush1.msra.mxu0 0.0
    %1377 = vmatprep.subr.mxu0 0.0
    %1378 = vmatpush1.msra.mxu0 0.0
    %1379 = vmatprep.subr.mxu0 0.0
    %1380 = vmatpush1.msra.mxu0 0.0
    %1381 = vmatprep.subr.mxu0 0.0
    %1382 = vmatpush1.msra.mxu0 0.0
    %1383 = vmatprep.subr.mxu0 0.0
    %1384 = vmatpush1.msra.mxu0 0.0
    %1385 = vmatprep.subr.mxu0 0.0
    %1386 = vmatpush1.msra.mxu0 0.0
    %1387 = vmatprep.subr.mxu0 0.0
    %1388 = vmatpush1.msra.mxu0 0.0
    %1389 = vmatprep.subr.mxu0 0.0
    %1390 = vmatpush1.msra.mxu0 0.0
    %1391 = vmatprep.subr.mxu0 0.0
    %1392 = vmatpush1.msra.mxu0 0.0
    %1393 = vmatprep.subr.mxu0 0.0
    %1394 = vmatpush1.msra.mxu0 0.0
    %1395 = vmatprep.subr.mxu0 0.0
    %1396 = vmatpush1.msra.mxu0 0.0
    %1397 = vmatprep.mubr.f32.mxu0 0.0
    %1398 = vmatmul.mubr.f32.gmra.mrb[0].mxu0 %v371
    %v1399 = vpop.f32.mrb[0].mxu0
    %v1400 = vadd.f32 %v1329, %v1399
    %v1401 = vpop.f32.mrb[0].mxu0
    %v1402 = vadd.f32 %v1331, %v1401
    %1403 = vdwg.mxu0
    %1404 = vmatprep.subr.mxu0 %v276
    %1405 = vmatpush1.msra.mxu0 %v275
    %1406 = vmatprep.subr.mxu0 %v278
    %1407 = vmatpush1.msra.mxu0 %v277
    %1408 = vmatprep.subr.mxu0 %v280
    %1409 = vmatpush1.msra.mxu0 %v279
    %1410 = vmatprep.subr.mxu0 %v282
    %1411 = vmatpush1.msra.mxu0 %v281
    %1412 = vmatprep.subr.mxu0 0.0
    %1413 = vmatpush1.msra.mxu0 0.0
    %1414 = vmatprep.subr.mxu0 0.0
    %1415 = vmatpush1.msra.mxu0 0.0
    %1416 = vmatprep.subr.mxu0 0.0
    %1417 = vmatpush1.msra.mxu0 0.0
    %1418 = vmatprep.subr.mxu0 0.0
    %1419 = vmatpush1.msra.mxu0 0.0
    %1420 = vmatprep.subr.mxu0 0.0
    %1421 = vmatpush1.msra.mxu0 0.0
    %1422 = vmatprep.subr.mxu0 0.0
    %1423 = vmatpush1.msra.mxu0 0.0
    %1424 = vmatprep.subr.mxu0 0.0
    %1425 = vmatpush1.msra.mxu0 0.0
    %1426 = vmatprep.subr.mxu0 0.0
    %1427 = vmatpush1.msra.mxu0 0.0
    %1428 = vmatprep.subr.mxu0 0.0
    %1429 = vmatpush1.msra.mxu0 0.0
    %1430 = vmatprep.subr.mxu0 0.0
    %1431 = vmatpush1.msra.mxu0 0.0
    %1432 = vmatprep.subr.mxu0 0.0
    %1433 = vmatpush1.msra.mxu0 0.0
    %1434 = vmatprep.subr.mxu0 0.0
    %1435 = vmatpush1.msra.mxu0 0.0
    %1436 = vmatprep.subr.mxu0 0.0
    %1437 = vmatpush1.msra.mxu0 0.0
    %1438 = vmatprep.subr.mxu0 0.0
    %1439 = vmatpush1.msra.mxu0 0.0
    %1440 = vmatprep.subr.mxu0 0.0
    %1441 = vmatpush1.msra.mxu0 0.0
    %1442 = vmatprep.subr.mxu0 0.0
    %1443 = vmatpush1.msra.mxu0 0.0
    %1444 = vmatprep.subr.mxu0 0.0
    %1445 = vmatpush1.msra.mxu0 0.0
    %1446 = vmatprep.subr.mxu0 0.0
    %1447 = vmatpush1.msra.mxu0 0.0
    %1448 = vmatprep.subr.mxu0 0.0
    %1449 = vmatpush1.msra.mxu0 0.0
    %1450 = vmatprep.subr.mxu0 0.0
    %1451 = vmatpush1.msra.mxu0 0.0
    %1452 = vmatprep.subr.mxu0 0.0
    %1453 = vmatpush1.msra.mxu0 0.0
    %1454 = vmatprep.subr.mxu0 0.0
    %1455 = vmatpush1.msra.mxu0 0.0
    %1456 = vmatprep.subr.mxu0 0.0
    %1457 = vmatpush1.msra.mxu0 0.0
    %1458 = vmatprep.subr.mxu0 0.0
    %1459 = vmatpush1.msra.mxu0 0.0
    %1460 = vmatprep.subr.mxu0 0.0
    %1461 = vmatpush1.msra.mxu0 0.0
    %1462 = vmatprep.subr.mxu0 0.0
    %1463 = vmatpush1.msra.mxu0 0.0
    %1464 = vmatprep.subr.mxu0 0.0
    %1465 = vmatpush1.msra.mxu0 0.0
    %1466 = vmatprep.subr.mxu0 0.0
    %1467 = vmatpush1.msra.mxu0 0.0
    %1468 = vmatprep.mubr.f32.mxu0 0.0
    %1469 = vmatmul.mubr.f32.gmra.mrb[0].mxu0 %v822
    %v1470 = vpop.f32.mrb[0].mxu0
    %v1471 = vadd.f32 0.0, %v1470
    %v1472 = vpop.f32.mrb[0].mxu0
    %v1473 = vadd.f32 0.0, %v1472
    %1474 = vdwg.mxu0
    %v1475 = vadd.f32 %v1400, %v1471
    %v1476 = vadd.f32 %v1402, %v1473
    %1477 = vmatprep.subr.mxu0 %v363
    %1478 = vmatpush1.msra.mxu0 %v362
    %1479 = vmatprep.subr.mxu0 %v365
    %1480 = vmatpush1.msra.mxu0 %v364
    %1481 = vmatprep.subr.mxu0 %v367
    %1482 = vmatpush1.msra.mxu0 %v366
    %1483 = vmatprep.subr.mxu0 %v369
    %1484 = vmatpush1.msra.mxu0 %v368
    %1485 = vmatprep.subr.mxu0 0.0
    %1486 = vmatpush1.msra.mxu0 0.0
    %1487 = vmatprep.subr.mxu0 0.0
    %1488 = vmatpush1.msra.mxu0 0.0
    %1489 = vmatprep.subr.mxu0 0.0
    %1490 = vmatpush1.msra.mxu0 0.0
    %1491 = vmatprep.subr.mxu0 0.0
    %1492 = vmatpush1.msra.mxu0 0.0
    %1493 = vmatprep.subr.mxu0 0.0
    %1494 = vmatpush1.msra.mxu0 0.0
    %1495 = vmatprep.subr.mxu0 0.0
    %1496 = vmatpush1.msra.mxu0 0.0
    %1497 = vmatprep.subr.mxu0 0.0
    %1498 = vmatpush1.msra.mxu0 0.0
    %1499 = vmatprep.subr.mxu0 0.0
    %1500 = vmatpush1.msra.mxu0 0.0
    %1501 = vmatprep.subr.mxu0 0.0
    %1502 = vmatpush1.msra.mxu0 0.0
    %1503 = vmatprep.subr.mxu0 0.0
    %1504 = vmatpush1.msra.mxu0 0.0
    %1505 = vmatprep.subr.mxu0 0.0
    %1506 = vmatpush1.msra.mxu0 0.0
    %1507 = vmatprep.subr.mxu0 0.0
    %1508 = vmatpush1.msra.mxu0 0.0
    %1509 = vmatprep.subr.mxu0 0.0
    %1510 = vmatpush1.msra.mxu0 0.0
    %1511 = vmatprep.subr.mxu0 0.0
    %1512 = vmatpush1.msra.mxu0 0.0
    %1513 = vmatprep.subr.mxu0 0.0
    %1514 = vmatpush1.msra.mxu0 0.0
    %1515 = vmatprep.subr.mxu0 0.0
    %1516 = vmatpush1.msra.mxu0 0.0
    %1517 = vmatprep.subr.mxu0 0.0
    %1518 = vmatpush1.msra.mxu0 0.0
    %1519 = vmatprep.subr.mxu0 0.0
    %1520 = vmatpush1.msra.mxu0 0.0
    %1521 = vmatprep.subr.mxu0 0.0
    %1522 = vmatpush1.msra.mxu0 0.0
    %1523 = vmatprep.subr.mxu0 0.0
    %1524 = vmatpush1.msra.mxu0 0.0
    %1525 = vmatprep.subr.mxu0 0.0
    %1526 = vmatpush1.msra.mxu0 0.0
    %1527 = vmatprep.subr.mxu0 0.0
    %1528 = vmatpush1.msra.mxu0 0.0
    %1529 = vmatprep.subr.mxu0 0.0
    %1530 = vmatpush1.msra.mxu0 0.0
    %1531 = vmatprep.subr.mxu0 0.0
    %1532 = vmatpush1.msra.mxu0 0.0
    %1533 = vmatprep.subr.mxu0 0.0
    %1534 = vmatpush1.msra.mxu0 0.0
    %1535 = vmatprep.subr.mxu0 0.0
    %1536 = vmatpush1.msra.mxu0 0.0
    %1537 = vmatprep.subr.mxu0 0.0
    %1538 = vmatpush1.msra.mxu0 0.0
    %1539 = vmatprep.subr.mxu0 0.0
    %1540 = vmatpush1.msra.mxu0 0.0
    %1541 = vmatprep.mubr.f32.mxu0 0.0
    %1542 = vmatmul.mubr.f32.gmra.mrb[0].mxu0 %v1187
    %v1543 = vpop.f32.mrb[0].mxu0
    %v1544 = vadd.f32 0.0, %v1543
    %v1545 = vpop.f32.mrb[0].mxu0
    %v1546 = vadd.f32 0.0, %v1545
    %1547 = vdwg.mxu0
    %v1548 = vadd.f32 %v1475, %v1544
    %v1549 = vadd.f32 %v1476, %v1546
    %v1550 = vld [vmem:[%s359 + $0x1] sm:$0x3f]
    %v1552 = vsel %vm123, %v1550, 0
    %1554 = vmatprep.subr.mxu0 %v449
    %1555 = vmatpush1.msra.mxu0 %v448
    %1556 = vmatprep.subr.mxu0 %v451
    %1557 = vmatpush1.msra.mxu0 %v450
    %1558 = vmatprep.subr.mxu0 %v453
    %1559 = vmatpush1.msra.mxu0 %v452
    %1560 = vmatprep.subr.mxu0 %v455
    %1561 = vmatpush1.msra.mxu0 %v454
    %1562 = vmatprep.subr.mxu0 0.0
    %1563 = vmatpush1.msra.mxu0 0.0
    %1564 = vmatprep.subr.mxu0 0.0
    %1565 = vmatpush1.msra.mxu0 0.0
    %1566 = vmatprep.subr.mxu0 0.0
    %1567 = vmatpush1.msra.mxu0 0.0
    %1568 = vmatprep.subr.mxu0 0.0
    %1569 = vmatpush1.msra.mxu0 0.0
    %1570 = vmatprep.subr.mxu0 0.0
    %1571 = vmatpush1.msra.mxu0 0.0
    %1572 = vmatprep.subr.mxu0 0.0
    %1573 = vmatpush1.msra.mxu0 0.0
    %1574 = vmatprep.subr.mxu0 0.0
    %1575 = vmatpush1.msra.mxu0 0.0
    %1576 = vmatprep.subr.mxu0 0.0
    %1577 = vmatpush1.msra.mxu0 0.0
    %1578 = vmatprep.subr.mxu0 0.0
    %1579 = vmatpush1.msra.mxu0 0.0
    %1580 = vmatprep.subr.mxu0 0.0
    %1581 = vmatpush1.msra.mxu0 0.0
    %1582 = vmatprep.subr.mxu0 0.0
    %1583 = vmatpush1.msra.mxu0 0.0
    %1584 = vmatprep.subr.mxu0 0.0
    %1585 = vmatpush1.msra.mxu0 0.0
    %1586 = vmatprep.subr.mxu0 0.0
    %1587 = vmatpush1.msra.mxu0 0.0
    %1588 = vmatprep.subr.mxu0 0.0
    %1589 = vmatpush1.msra.mxu0 0.0
    %1590 = vmatprep.subr.mxu0 0.0
    %1591 = vmatpush1.msra.mxu0 0.0
    %1592 = vmatprep.subr.mxu0 0.0
    %1593 = vmatpush1.msra.mxu0 0.0
    %1594 = vmatprep.subr.mxu0 0.0
    %1595 = vmatpush1.msra.mxu0 0.0
    %1596 = vmatprep.subr.mxu0 0.0
    %1597 = vmatpush1.msra.mxu0 0.0
    %1598 = vmatprep.subr.mxu0 0.0
    %1599 = vmatpush1.msra.mxu0 0.0
    %1600 = vmatprep.subr.mxu0 0.0
    %1601 = vmatpush1.msra.mxu0 0.0
    %1602 = vmatprep.subr.mxu0 0.0
    %1603 = vmatpush1.msra.mxu0 0.0
    %1604 = vmatprep.subr.mxu0 0.0
    %1605 = vmatpush1.msra.mxu0 0.0
    %1606 = vmatprep.subr.mxu0 0.0
    %1607 = vmatpush1.msra.mxu0 0.0
    %1608 = vmatprep.subr.mxu0 0.0
    %1609 = vmatpush1.msra.mxu0 0.0
    %1610 = vmatprep.subr.mxu0 0.0
    %1611 = vmatpush1.msra.mxu0 0.0
    %1612 = vmatprep.subr.mxu0 0.0
    %1613 = vmatpush1.msra.mxu0 0.0
    %1614 = vmatprep.subr.mxu0 0.0
    %1615 = vmatpush1.msra.mxu0 0.0
    %1616 = vmatprep.subr.mxu0 0.0
    %1617 = vmatpush1.msra.mxu0 0.0
    %1618 = vmatprep.mubr.f32.mxu0 0.0
    %1619 = vmatmul.mubr.f32.gmra.mrb[0].mxu0 %v1552
    %v1620 = vpop.f32.mrb[0].mxu0
    %v1621 = vadd.f32 0.0, %v1620
    %v1622 = vpop.f32.mrb[0].mxu0
    %v1623 = vadd.f32 0.0, %v1622
    %1624 = vdwg.mxu0
    %v1625 = vadd.f32 %v1548, %v1621
    %v1626 = vadd.f32 %v1549, %v1623
    %v1627 = vmax.f32 %v530, %v531
    %v1628 = vmax.f32 %v895, %v896
    %v1629 = vmax.f32 %v1627, %v1628
    %v1630 = vld [vmem:[#allocation5] sm:$0x1]
    %v1632 = vlaneseq
    %v1633 = vshrl.u32 %v1632, 7
    %v1634 = vsub.s32 0, %v1633
    %v1635 = vrot.slane %v1630, %v1634
    %v1637 = vadd.f32 %v1629, %v1635
    %v1638 = vmax.f32 %v1637, 0.0
    %v1639 = vmax.f32 %v1260, %v1261
    %v1640 = vmax.f32 %v1625, %v1626
    %v1641 = vmax.f32 %v1639, %v1640
    %v1642 = vadd.f32 %v1641, %v1635
    %v1643 = vmax.f32 %v1642, 0.0
    %v1644 = vld [vmem:[#allocation7] sm:$0xff]
    %v1645 = vld [vmem:[#allocation7 + $0x8] sm:$0xff]
    %v1646 = vld [vmem:[#allocation7 + $0x10] sm:$0xff]
    %v1647 = vld [vmem:[#allocation7 + $0x18] sm:$0xff]
    %v1648 = vld [vmem:[#allocation7 + $0x20] sm:$0xff]
    %v1649 = vld [vmem:[#allocation7 + $0x28] sm:$0xff]
    %v1650 = vld [vmem:[#allocation7 + $0x30] sm:$0xff]
    %v1651 = vld [vmem:[#allocation7 + $0x38] sm:$0xff]
    %v1652 = vld [vmem:[#allocation7 + $0x40] sm:$0xff]
    %v1653 = vld [vmem:[#allocation7 + $0x48] sm:$0xff]
    %v1654 = vld [vmem:[#allocation7 + $0x50] sm:$0xff]
    %v1655 = vld [vmem:[#allocation7 + $0x58] sm:$0xff]
    %v1656 = vld [vmem:[#allocation7 + $0x60] sm:$0xff]
    %v1657 = vld [vmem:[#allocation7 + $0x68] sm:$0xff]
    %v1658 = vld [vmem:[#allocation7 + $0x70] sm:$0xff]
    %v1659 = vld [vmem:[#allocation7 + $0x78] sm:$0xff]
    %v1660 = vld [vmem:[#allocation7 + $0x80] sm:$0xff]
    %v1661 = vld [vmem:[#allocation7 + $0x88] sm:$0xff]
    %v1662 = vld [vmem:[#allocation7 + $0x90] sm:$0xff]
    %v1663 = vld [vmem:[#allocation7 + $0x98] sm:$0xff]
    %v1664 = vld [vmem:[#allocation7 + $0xa0] sm:$0xff]
    %v1665 = vld [vmem:[#allocation7 + $0xa8] sm:$0xff]
    %v1666 = vld [vmem:[#allocation7 + $0xb0] sm:$0xff]
    %v1667 = vld [vmem:[#allocation7 + $0xb8] sm:$0xff]
    %v1668 = vld [vmem:[#allocation7 + $0xc0] sm:$0xff]
    %v1669 = vld [vmem:[#allocation7 + $0xc8] sm:$0xff]
    %v1670 = vld [vmem:[#allocation7 + $0xd0] sm:$0xff]
    %v1671 = vld [vmem:[#allocation7 + $0xd8] sm:$0xff]
    %v1672 = vld [vmem:[#allocation7 + $0xe0] sm:$0xff]
    %v1673 = vld [vmem:[#allocation7 + $0xe8] sm:$0xff]
    %v1674 = vld [vmem:[#allocation7 + $0xf0] sm:$0xff]
    %v1675 = vld [vmem:[#allocation7 + $0xf8] sm:$0xff]
    %s1676 = scalar_lea.vmem [#allocation7], 512
    %v1677 = vld [vmem:[%s1676] sm:$0xff]
    %v1678 = vld [vmem:[%s1676 + $0x8] sm:$0xff]
    %v1679 = vld [vmem:[%s1676 + $0x10] sm:$0xff]
    %v1680 = vld [vmem:[%s1676 + $0x18] sm:$0xff]
    %v1681 = vld [vmem:[%s1676 + $0x20] sm:$0xff]
    %v1682 = vld [vmem:[%s1676 + $0x28] sm:$0xff]
    %v1683 = vld [vmem:[%s1676 + $0x30] sm:$0xff]
    %v1684 = vld [vmem:[%s1676 + $0x38] sm:$0xff]
    %v1685 = vld [vmem:[%s1676 + $0x40] sm:$0xff]
    %v1686 = vld [vmem:[%s1676 + $0x48] sm:$0xff]
    %v1687 = vld [vmem:[%s1676 + $0x50] sm:$0xff]
    %v1688 = vld [vmem:[%s1676 + $0x58] sm:$0xff]
    %v1689 = vld [vmem:[%s1676 + $0x60] sm:$0xff]
    %v1690 = vld [vmem:[%s1676 + $0x68] sm:$0xff]
    %v1691 = vld [vmem:[%s1676 + $0x70] sm:$0xff]
    %v1692 = vld [vmem:[%s1676 + $0x78] sm:$0xff]
    %v1693 = vld [vmem:[%s1676 + $0x80] sm:$0xff]
    %v1694 = vld [vmem:[%s1676 + $0x88] sm:$0xff]
    %v1695 = vld [vmem:[%s1676 + $0x90] sm:$0xff]
    %v1696 = vld [vmem:[%s1676 + $0x98] sm:$0xff]
    %v1697 = vld [vmem:[%s1676 + $0xa0] sm:$0xff]
    %v1698 = vld [vmem:[%s1676 + $0xa8] sm:$0xff]
    %v1699 = vld [vmem:[%s1676 + $0xb0] sm:$0xff]
    %v1700 = vld [vmem:[%s1676 + $0xb8] sm:$0xff]
    %v1701 = vld [vmem:[%s1676 + $0xc0] sm:$0xff]
    %v1702 = vld [vmem:[%s1676 + $0xc8] sm:$0xff]
    %v1703 = vld [vmem:[%s1676 + $0xd0] sm:$0xff]
    %v1704 = vld [vmem:[%s1676 + $0xd8] sm:$0xff]
    %v1705 = vld [vmem:[%s1676 + $0xe0] sm:$0xff]
    %v1706 = vld [vmem:[%s1676 + $0xe8] sm:$0xff]
    %v1707 = vld [vmem:[%s1676 + $0xf0] sm:$0xff]
    %v1708 = vld [vmem:[%s1676 + $0xf8] sm:$0xff]
    %v1710 = vrot.slane %v1638, 1
    %1712 = vmatprep.subr.mxu0 %v1678
    %1713 = vmatpush1.msra.mxu0 %v1677
    %1714 = vmatprep.subr.mxu0 %v1680
    %1715 = vmatpush1.msra.mxu0 %v1679
    %1716 = vmatprep.subr.mxu0 %v1682
    %1717 = vmatpush1.msra.mxu0 %v1681
    %1718 = vmatprep.subr.mxu0 %v1684
    %1719 = vmatpush1.msra.mxu0 %v1683
    %1720 = vmatprep.subr.mxu0 %v1686
    %1721 = vmatpush1.msra.mxu0 %v1685
    %1722 = vmatprep.subr.mxu0 %v1688
    %1723 = vmatpush1.msra.mxu0 %v1687
    %1724 = vmatprep.subr.mxu0 %v1690
    %1725 = vmatpush1.msra.mxu0 %v1689
    %1726 = vmatprep.subr.mxu0 %v1692
    %1727 = vmatpush1.msra.mxu0 %v1691
    %1728 = vmatprep.subr.mxu0 %v1694
    %1729 = vmatpush1.msra.mxu0 %v1693
    %1730 = vmatprep.subr.mxu0 %v1696
    %1731 = vmatpush1.msra.mxu0 %v1695
    %1732 = vmatprep.subr.mxu0 %v1698
    %1733 = vmatpush1.msra.mxu0 %v1697
    %1734 = vmatprep.subr.mxu0 %v1700
    %1735 = vmatpush1.msra.mxu0 %v1699
    %1736 = vmatprep.subr.mxu0 %v1702
    %1737 = vmatpush1.msra.mxu0 %v1701
    %1738 = vmatprep.subr.mxu0 %v1704
    %1739 = vmatpush1.msra.mxu0 %v1703
    %1740 = vmatprep.subr.mxu0 %v1706
    %1741 = vmatpush1.msra.mxu0 %v1705
    %1742 = vmatprep.subr.mxu0 %v1708
    %1743 = vmatpush1.msra.mxu0 %v1707
    %1744 = vmatprep.subr.mxu0 0.0
    %1745 = vmatpush1.msra.mxu0 0.0
    %1746 = vmatprep.subr.mxu0 0.0
    %1747 = vmatpush1.msra.mxu0 0.0
    %1748 = vmatprep.subr.mxu0 0.0
    %1749 = vmatpush1.msra.mxu0 0.0
    %1750 = vmatprep.subr.mxu0 0.0
    %1751 = vmatpush1.msra.mxu0 0.0
    %1752 = vmatprep.subr.mxu0 0.0
    %1753 = vmatpush1.msra.mxu0 0.0
    %1754 = vmatprep.subr.mxu0 0.0
    %1755 = vmatpush1.msra.mxu0 0.0
    %1756 = vmatprep.subr.mxu0 0.0
    %1757 = vmatpush1.msra.mxu0 0.0
    %1758 = vmatprep.subr.mxu0 0.0
    %1759 = vmatpush1.msra.mxu0 0.0
    %1760 = vmatprep.subr.mxu0 0.0
    %1761 = vmatpush1.msra.mxu0 0.0
    %1762 = vmatprep.subr.mxu0 0.0
    %1763 = vmatpush1.msra.mxu0 0.0
    %1764 = vmatprep.subr.mxu0 0.0
    %1765 = vmatpush1.msra.mxu0 0.0
    %1766 = vmatprep.subr.mxu0 0.0
    %1767 = vmatpush1.msra.mxu0 0.0
    %1768 = vmatprep.subr.mxu0 0.0
    %1769 = vmatpush1.msra.mxu0 0.0
    %1770 = vmatprep.subr.mxu0 0.0
    %1771 = vmatpush1.msra.mxu0 0.0
    %1772 = vmatprep.subr.mxu0 0.0
    %1773 = vmatpush1.msra.mxu0 0.0
    %1774 = vmatprep.subr.mxu0 0.0
    %1775 = vmatpush1.msra.mxu0 0.0
    %1776 = vmatprep.mubr.f32.mxu0 0.0
    %1777 = vmatmul.mubr.f32.gmra.mrb[0].mxu0 %v1710
    %v1778 = vpop.f32.mrb[0].mxu0
    %v1779 = vadd.f32 0.0, %v1778
    %v1780 = vpop.f32.mrb[0].mxu0
    %v1781 = vadd.f32 0.0, %v1780
    %1782 = vdwg.mxu0
    %1783 = vmatprep.subr.mxu0 %v1645
    %1784 = vmatpush1.msra.mxu0 %v1644
    %1785 = vmatprep.subr.mxu0 %v1647
    %1786 = vmatpush1.msra.mxu0 %v1646
    %1787 = vmatprep.subr.mxu0 %v1649
    %1788 = vmatpush1.msra.mxu0 %v1648
    %1789 = vmatprep.subr.mxu0 %v1651
    %1790 = vmatpush1.msra.mxu0 %v1650
    %1791 = vmatprep.subr.mxu0 %v1653
    %1792 = vmatpush1.msra.mxu0 %v1652
    %1793 = vmatprep.subr.mxu0 %v1655
    %1794 = vmatpush1.msra.mxu0 %v1654
    %1795 = vmatprep.subr.mxu0 %v1657
    %1796 = vmatpush1.msra.mxu0 %v1656
    %1797 = vmatprep.subr.mxu0 %v1659
    %1798 = vmatpush1.msra.mxu0 %v1658
    %1799 = vmatprep.subr.mxu0 %v1661
    %1800 = vmatpush1.msra.mxu0 %v1660
    %1801 = vmatprep.subr.mxu0 %v1663
    %1802 = vmatpush1.msra.mxu0 %v1662
    %1803 = vmatprep.subr.mxu0 %v1665
    %1804 = vmatpush1.msra.mxu0 %v1664
    %1805 = vmatprep.subr.mxu0 %v1667
    %1806 = vmatpush1.msra.mxu0 %v1666
    %1807 = vmatprep.subr.mxu0 %v1669
    %1808 = vmatpush1.msra.mxu0 %v1668
    %1809 = vmatprep.subr.mxu0 %v1671
    %1810 = vmatpush1.msra.mxu0 %v1670
    %1811 = vmatprep.subr.mxu0 %v1673
    %1812 = vmatpush1.msra.mxu0 %v1672
    %1813 = vmatprep.subr.mxu0 %v1675
    %1814 = vmatpush1.msra.mxu0 %v1674
    %1815 = vmatprep.subr.mxu0 0.0
    %1816 = vmatpush1.msra.mxu0 0.0
    %1817 = vmatprep.subr.mxu0 0.0
    %1818 = vmatpush1.msra.mxu0 0.0
    %1819 = vmatprep.subr.mxu0 0.0
    %1820 = vmatpush1.msra.mxu0 0.0
    %1821 = vmatprep.subr.mxu0 0.0
    %1822 = vmatpush1.msra.mxu0 0.0
    %1823 = vmatprep.subr.mxu0 0.0
    %1824 = vmatpush1.msra.mxu0 0.0
    %1825 = vmatprep.subr.mxu0 0.0
    %1826 = vmatpush1.msra.mxu0 0.0
    %1827 = vmatprep.subr.mxu0 0.0
    %1828 = vmatpush1.msra.mxu0 0.0
    %1829 = vmatprep.subr.mxu0 0.0
    %1830 = vmatpush1.msra.mxu0 0.0
    %1831 = vmatprep.subr.mxu0 0.0
    %1832 = vmatpush1.msra.mxu0 0.0
    %1833 = vmatprep.subr.mxu0 0.0
    %1834 = vmatpush1.msra.mxu0 0.0
    %1835 = vmatprep.subr.mxu0 0.0
    %1836 = vmatpush1.msra.mxu0 0.0
    %1837 = vmatprep.subr.mxu0 0.0
    %1838 = vmatpush1.msra.mxu0 0.0
    %1839 = vmatprep.subr.mxu0 0.0
    %1840 = vmatpush1.msra.mxu0 0.0
    %1841 = vmatprep.subr.mxu0 0.0
    %1842 = vmatpush1.msra.mxu0 0.0
    %1843 = vmatprep.subr.mxu0 0.0
    %1844 = vmatpush1.msra.mxu0 0.0
    %1845 = vmatprep.subr.mxu0 0.0
    %1846 = vmatpush1.msra.mxu0 0.0
    %1847 = vmatprep.mubr.f32.mxu0 0.0
    %1848 = vmatmul.mubr.f32.gmra.mrb[0].mxu0 %v1638
    %v1849 = vpop.f32.mrb[0].mxu0
    %v1850 = vadd.f32 %v1779, %v1849
    %v1851 = vpop.f32.mrb[0].mxu0
    %v1852 = vadd.f32 %v1781, %v1851
    %1853 = vdwg.mxu0
    %v1855 = vrot.slane %v1643, 1
    %1857 = vmatprep.subr.mxu0 %v1678
    %1858 = vmatpush1.msra.mxu0 %v1677
    %1859 = vmatprep.subr.mxu0 %v1680
    %1860 = vmatpush1.msra.mxu0 %v1679
    %1861 = vmatprep.subr.mxu0 %v1682
    %1862 = vmatpush1.msra.mxu0 %v1681
    %1863 = vmatprep.subr.mxu0 %v1684
    %1864 = vmatpush1.msra.mxu0 %v1683
    %1865 = vmatprep.subr.mxu0 %v1686
    %1866 = vmatpush1.msra.mxu0 %v1685
    %1867 = vmatprep.subr.mxu0 %v1688
    %1868 = vmatpush1.msra.mxu0 %v1687
    %1869 = vmatprep.subr.mxu0 %v1690
    %1870 = vmatpush1.msra.mxu0 %v1689
    %1871 = vmatprep.subr.mxu0 %v1692
    %1872 = vmatpush1.msra.mxu0 %v1691
    %1873 = vmatprep.subr.mxu0 %v1694
    %1874 = vmatpush1.msra.mxu0 %v1693
    %1875 = vmatprep.subr.mxu0 %v1696
    %1876 = vmatpush1.msra.mxu0 %v1695
    %1877 = vmatprep.subr.mxu0 %v1698
    %1878 = vmatpush1.msra.mxu0 %v1697
    %1879 = vmatprep.subr.mxu0 %v1700
    %1880 = vmatpush1.msra.mxu0 %v1699
    %1881 = vmatprep.subr.mxu0 %v1702
    %1882 = vmatpush1.msra.mxu0 %v1701
    %1883 = vmatprep.subr.mxu0 %v1704
    %1884 = vmatpush1.msra.mxu0 %v1703
    %1885 = vmatprep.subr.mxu0 %v1706
    %1886 = vmatpush1.msra.mxu0 %v1705
    %1887 = vmatprep.subr.mxu0 %v1708
    %1888 = vmatpush1.msra.mxu0 %v1707
    %1889 = vmatprep.subr.mxu0 0.0
    %1890 = vmatpush1.msra.mxu0 0.0
    %1891 = vmatprep.subr.mxu0 0.0
    %1892 = vmatpush1.msra.mxu0 0.0
    %1893 = vmatprep.subr.mxu0 0.0
    %1894 = vmatpush1.msra.mxu0 0.0
    %1895 = vmatprep.subr.mxu0 0.0
    %1896 = vmatpush1.msra.mxu0 0.0
    %1897 = vmatprep.subr.mxu0 0.0
    %1898 = vmatpush1.msra.mxu0 0.0
    %1899 = vmatprep.subr.mxu0 0.0
    %1900 = vmatpush1.msra.mxu0 0.0
    %1901 = vmatprep.subr.mxu0 0.0
    %1902 = vmatpush1.msra.mxu0 0.0
    %1903 = vmatprep.subr.mxu0 0.0
    %1904 = vmatpush1.msra.mxu0 0.0
    %1905 = vmatprep.subr.mxu0 0.0
    %1906 = vmatpush1.msra.mxu0 0.0
    %1907 = vmatprep.subr.mxu0 0.0
    %1908 = vmatpush1.msra.mxu0 0.0
    %1909 = vmatprep.subr.mxu0 0.0
    %1910 = vmatpush1.msra.mxu0 0.0
    %1911 = vmatprep.subr.mxu0 0.0
    %1912 = vmatpush1.msra.mxu0 0.0
    %1913 = vmatprep.subr.mxu0 0.0
    %1914 = vmatpush1.msra.mxu0 0.0
    %1915 = vmatprep.subr.mxu0 0.0
    %1916 = vmatpush1.msra.mxu0 0.0
    %1917 = vmatprep.subr.mxu0 0.0
    %1918 = vmatpush1.msra.mxu0 0.0
    %1919 = vmatprep.subr.mxu0 0.0
    %1920 = vmatpush1.msra.mxu0 0.0
    %1921 = vmatprep.mubr.f32.mxu0 0.0
    %1922 = vmatmul.mubr.f32.gmra.mrb[0].mxu0 %v1855
    %v1923 = vpop.f32.mrb[0].mxu0
    %v1924 = vadd.f32 0.0, %v1923
    %v1925 = vpop.f32.mrb[0].mxu0
    %v1926 = vadd.f32 0.0, %v1925
    %1927 = vdwg.mxu0
    %1928 = vmatprep.subr.mxu0 %v1645
    %1929 = vmatpush1.msra.mxu0 %v1644
    %1930 = vmatprep.subr.mxu0 %v1647
    %1931 = vmatpush1.msra.mxu0 %v1646
    %1932 = vmatprep.subr.mxu0 %v1649
    %1933 = vmatpush1.msra.mxu0 %v1648
    %1934 = vmatprep.subr.mxu0 %v1651
    %1935 = vmatpush1.msra.mxu0 %v1650
    %1936 = vmatprep.subr.mxu0 %v1653
    %1937 = vmatpush1.msra.mxu0 %v1652
    %1938 = vmatprep.subr.mxu0 %v1655
    %1939 = vmatpush1.msra.mxu0 %v1654
    %1940 = vmatprep.subr.mxu0 %v1657
    %1941 = vmatpush1.msra.mxu0 %v1656
    %1942 = vmatprep.subr.mxu0 %v1659
    %1943 = vmatpush1.msra.mxu0 %v1658
    %1944 = vmatprep.subr.mxu0 %v1661
    %1945 = vmatpush1.msra.mxu0 %v1660
    %1946 = vmatprep.subr.mxu0 %v1663
    %1947 = vmatpush1.msra.mxu0 %v1662
    %1948 = vmatprep.subr.mxu0 %v1665
    %1949 = vmatpush1.msra.mxu0 %v1664
    %1950 = vmatprep.subr.mxu0 %v1667
    %1951 = vmatpush1.msra.mxu0 %v1666
    %1952 = vmatprep.subr.mxu0 %v1669
    %1953 = vmatpush1.msra.mxu0 %v1668
    %1954 = vmatprep.subr.mxu0 %v1671
    %1955 = vmatpush1.msra.mxu0 %v1670
    %1956 = vmatprep.subr.mxu0 %v1673
    %1957 = vmatpush1.msra.mxu0 %v1672
    %1958 = vmatprep.subr.mxu0 %v1675
    %1959 = vmatpush1.msra.mxu0 %v1674
    %1960 = vmatprep.subr.mxu0 0.0
    %1961 = vmatpush1.msra.mxu0 0.0
    %1962 = vmatprep.subr.mxu0 0.0
    %1963 = vmatpush1.msra.mxu0 0.0
    %1964 = vmatprep.subr.mxu0 0.0
    %1965 = vmatpush1.msra.mxu0 0.0
    %1966 = vmatprep.subr.mxu0 0.0
    %1967 = vmatpush1.msra.mxu0 0.0
    %1968 = vmatprep.subr.mxu0 0.0
    %1969 = vmatpush1.msra.mxu0 0.0
    %1970 = vmatprep.subr.mxu0 0.0
    %1971 = vmatpush1.msra.mxu0 0.0
    %1972 = vmatprep.subr.mxu0 0.0
    %1973 = vmatpush1.msra.mxu0 0.0
    %1974 = vmatprep.subr.mxu0 0.0
    %1975 = vmatpush1.msra.mxu0 0.0
    %1976 = vmatprep.subr.mxu0 0.0
    %1977 = vmatpush1.msra.mxu0 0.0
    %1978 = vmatprep.subr.mxu0 0.0
    %1979 = vmatpush1.msra.mxu0 0.0
    %1980 = vmatprep.subr.mxu0 0.0
    %1981 = vmatpush1.msra.mxu0 0.0
    %1982 = vmatprep.subr.mxu0 0.0
    %1983 = vmatpush1.msra.mxu0 0.0
    %1984 = vmatprep.subr.mxu0 0.0
    %1985 = vmatpush1.msra.mxu0 0.0
    %1986 = vmatprep.subr.mxu0 0.0
    %1987 = vmatpush1.msra.mxu0 0.0
    %1988 = vmatprep.subr.mxu0 0.0
    %1989 = vmatpush1.msra.mxu0 0.0
    %1990 = vmatprep.subr.mxu0 0.0
    %1991 = vmatpush1.msra.mxu0 0.0
    %1992 = vmatprep.mubr.f32.mxu0 0.0
    %1993 = vmatmul.mubr.f32.gmra.mrb[0].mxu0 %v1643
    %v1994 = vpop.f32.mrb[0].mxu0
    %v1995 = vadd.f32 %v1924, %v1994
    %v1996 = vpop.f32.mrb[0].mxu0
    %v1997 = vadd.f32 %v1926, %v1996
    %1998 = vdwg.mxu0
    %s1999 = scalar_lea.vmem [#allocation7], 1024
    %v2000 = vld [vmem:[%s1999] sm:$0xff]
    %v2001 = vld [vmem:[%s1999 + $0x8] sm:$0xff]
    %v2002 = vld [vmem:[%s1999 + $0x10] sm:$0xff]
    %v2003 = vld [vmem:[%s1999 + $0x18] sm:$0xff]
    %v2004 = vld [vmem:[%s1999 + $0x20] sm:$0xff]
    %v2005 = vld [vmem:[%s1999 + $0x28] sm:$0xff]
    %v2006 = vld [vmem:[%s1999 + $0x30] sm:$0xff]
    %v2007 = vld [vmem:[%s1999 + $0x38] sm:$0xff]
    %v2008 = vld [vmem:[%s1999 + $0x40] sm:$0xff]
    %v2009 = vld [vmem:[%s1999 + $0x48] sm:$0xff]
    %v2010 = vld [vmem:[%s1999 + $0x50] sm:$0xff]
    %v2011 = vld [vmem:[%s1999 + $0x58] sm:$0xff]
    %v2012 = vld [vmem:[%s1999 + $0x60] sm:$0xff]
    %v2013 = vld [vmem:[%s1999 + $0x68] sm:$0xff]
    %v2014 = vld [vmem:[%s1999 + $0x70] sm:$0xff]
    %v2015 = vld [vmem:[%s1999 + $0x78] sm:$0xff]
    %v2016 = vld [vmem:[%s1999 + $0x80] sm:$0xff]
    %v2017 = vld [vmem:[%s1999 + $0x88] sm:$0xff]
    %v2018 = vld [vmem:[%s1999 + $0x90] sm:$0xff]
    %v2019 = vld [vmem:[%s1999 + $0x98] sm:$0xff]
    %v2020 = vld [vmem:[%s1999 + $0xa0] sm:$0xff]
    %v2021 = vld [vmem:[%s1999 + $0xa8] sm:$0xff]
    %v2022 = vld [vmem:[%s1999 + $0xb0] sm:$0xff]
    %v2023 = vld [vmem:[%s1999 + $0xb8] sm:$0xff]
    %v2024 = vld [vmem:[%s1999 + $0xc0] sm:$0xff]
    %v2025 = vld [vmem:[%s1999 + $0xc8] sm:$0xff]
    %v2026 = vld [vmem:[%s1999 + $0xd0] sm:$0xff]
    %v2027 = vld [vmem:[%s1999 + $0xd8] sm:$0xff]
    %v2028 = vld [vmem:[%s1999 + $0xe0] sm:$0xff]
    %v2029 = vld [vmem:[%s1999 + $0xe8] sm:$0xff]
    %v2030 = vld [vmem:[%s1999 + $0xf0] sm:$0xff]
    %v2031 = vld [vmem:[%s1999 + $0xf8] sm:$0xff]
    %v2032 = vrot.slane %v1638, 2
    %2034 = vmatprep.subr.mxu0 %v2001
    %2035 = vmatpush1.msra.mxu0 %v2000
    %2036 = vmatprep.subr.mxu0 %v2003
    %2037 = vmatpush1.msra.mxu0 %v2002
    %2038 = vmatprep.subr.mxu0 %v2005
    %2039 = vmatpush1.msra.mxu0 %v2004
    %2040 = vmatprep.subr.mxu0 %v2007
    %2041 = vmatpush1.msra.mxu0 %v2006
    %2042 = vmatprep.subr.mxu0 %v2009
    %2043 = vmatpush1.msra.mxu0 %v2008
    %2044 = vmatprep.subr.mxu0 %v2011
    %2045 = vmatpush1.msra.mxu0 %v2010
    %2046 = vmatprep.subr.mxu0 %v2013
    %2047 = vmatpush1.msra.mxu0 %v2012
    %2048 = vmatprep.subr.mxu0 %v2015
    %2049 = vmatpush1.msra.mxu0 %v2014
    %2050 = vmatprep.subr.mxu0 %v2017
    %2051 = vmatpush1.msra.mxu0 %v2016
    %2052 = vmatprep.subr.mxu0 %v2019
    %2053 = vmatpush1.msra.mxu0 %v2018
    %2054 = vmatprep.subr.mxu0 %v2021
    %2055 = vmatpush1.msra.mxu0 %v2020
    %2056 = vmatprep.subr.mxu0 %v2023
    %2057 = vmatpush1.msra.mxu0 %v2022
    %2058 = vmatprep.subr.mxu0 %v2025
    %2059 = vmatpush1.msra.mxu0 %v2024
    %2060 = vmatprep.subr.mxu0 %v2027
    %2061 = vmatpush1.msra.mxu0 %v2026
    %2062 = vmatprep.subr.mxu0 %v2029
    %2063 = vmatpush1.msra.mxu0 %v2028
    %2064 = vmatprep.subr.mxu0 %v2031
    %2065 = vmatpush1.msra.mxu0 %v2030
    %2066 = vmatprep.subr.mxu0 0.0
    %2067 = vmatpush1.msra.mxu0 0.0
    %2068 = vmatprep.subr.mxu0 0.0
    %2069 = vmatpush1.msra.mxu0 0.0
    %2070 = vmatprep.subr.mxu0 0.0
    %2071 = vmatpush1.msra.mxu0 0.0
    %2072 = vmatprep.subr.mxu0 0.0
    %2073 = vmatpush1.msra.mxu0 0.0
    %2074 = vmatprep.subr.mxu0 0.0
    %2075 = vmatpush1.msra.mxu0 0.0
    %2076 = vmatprep.subr.mxu0 0.0
    %2077 = vmatpush1.msra.mxu0 0.0
    %2078 = vmatprep.subr.mxu0 0.0
    %2079 = vmatpush1.msra.mxu0 0.0
    %2080 = vmatprep.subr.mxu0 0.0
    %2081 = vmatpush1.msra.mxu0 0.0
    %2082 = vmatprep.subr.mxu0 0.0
    %2083 = vmatpush1.msra.mxu0 0.0
    %2084 = vmatprep.subr.mxu0 0.0
    %2085 = vmatpush1.msra.mxu0 0.0
    %2086 = vmatprep.subr.mxu0 0.0
    %2087 = vmatpush1.msra.mxu0 0.0
    %2088 = vmatprep.subr.mxu0 0.0
    %2089 = vmatpush1.msra.mxu0 0.0
    %2090 = vmatprep.subr.mxu0 0.0
    %2091 = vmatpush1.msra.mxu0 0.0
    %2092 = vmatprep.subr.mxu0 0.0
    %2093 = vmatpush1.msra.mxu0 0.0
    %2094 = vmatprep.subr.mxu0 0.0
    %2095 = vmatpush1.msra.mxu0 0.0
    %2096 = vmatprep.subr.mxu0 0.0
    %2097 = vmatpush1.msra.mxu0 0.0
    %2098 = vmatprep.mubr.f32.mxu0 0.0
    %2099 = vmatmul.mubr.f32.gmra.mrb[0].mxu0 %v2032
    %v2100 = vpop.f32.mrb[0].mxu0
    %v2101 = vadd.f32 0.0, %v2100
    %v2102 = vpop.f32.mrb[0].mxu0
    %v2103 = vadd.f32 0.0, %v2102
    %2104 = vdwg.mxu0
    %v2105 = vadd.f32 %v1850, %v2101
    %v2106 = vadd.f32 %v1852, %v2103
    %v2107 = vrot.slane %v1643, 2
    %2109 = vmatprep.subr.mxu0 %v2001
    %2110 = vmatpush1.msra.mxu0 %v2000
    %2111 = vmatprep.subr.mxu0 %v2003
    %2112 = vmatpush1.msra.mxu0 %v2002
    %2113 = vmatprep.subr.mxu0 %v2005
    %2114 = vmatpush1.msra.mxu0 %v2004
    %2115 = vmatprep.subr.mxu0 %v2007
    %2116 = vmatpush1.msra.mxu0 %v2006
    %2117 = vmatprep.subr.mxu0 %v2009
    %2118 = vmatpush1.msra.mxu0 %v2008
    %2119 = vmatprep.subr.mxu0 %v2011
    %2120 = vmatpush1.msra.mxu0 %v2010
    %2121 = vmatprep.subr.mxu0 %v2013
    %2122 = vmatpush1.msra.mxu0 %v2012
    %2123 = vmatprep.subr.mxu0 %v2015
    %2124 = vmatpush1.msra.mxu0 %v2014
    %2125 = vmatprep.subr.mxu0 %v2017
    %2126 = vmatpush1.msra.mxu0 %v2016
    %2127 = vmatprep.subr.mxu0 %v2019
    %2128 = vmatpush1.msra.mxu0 %v2018
    %2129 = vmatprep.subr.mxu0 %v2021
    %2130 = vmatpush1.msra.mxu0 %v2020
    %2131 = vmatprep.subr.mxu0 %v2023
    %2132 = vmatpush1.msra.mxu0 %v2022
    %2133 = vmatprep.subr.mxu0 %v2025
    %2134 = vmatpush1.msra.mxu0 %v2024
    %2135 = vmatprep.subr.mxu0 %v2027
    %2136 = vmatpush1.msra.mxu0 %v2026
    %2137 = vmatprep.subr.mxu0 %v2029
    %2138 = vmatpush1.msra.mxu0 %v2028
    %2139 = vmatprep.subr.mxu0 %v2031
    %2140 = vmatpush1.msra.mxu0 %v2030
    %2141 = vmatprep.subr.mxu0 0.0
    %2142 = vmatpush1.msra.mxu0 0.0
    %2143 = vmatprep.subr.mxu0 0.0
    %2144 = vmatpush1.msra.mxu0 0.0
    %2145 = vmatprep.subr.mxu0 0.0
    %2146 = vmatpush1.msra.mxu0 0.0
    %2147 = vmatprep.subr.mxu0 0.0
    %2148 = vmatpush1.msra.mxu0 0.0
    %2149 = vmatprep.subr.mxu0 0.0
    %2150 = vmatpush1.msra.mxu0 0.0
    %2151 = vmatprep.subr.mxu0 0.0
    %2152 = vmatpush1.msra.mxu0 0.0
    %2153 = vmatprep.subr.mxu0 0.0
    %2154 = vmatpush1.msra.mxu0 0.0
    %2155 = vmatprep.subr.mxu0 0.0
    %2156 = vmatpush1.msra.mxu0 0.0
    %2157 = vmatprep.subr.mxu0 0.0
    %2158 = vmatpush1.msra.mxu0 0.0
    %2159 = vmatprep.subr.mxu0 0.0
    %2160 = vmatpush1.msra.mxu0 0.0
    %2161 = vmatprep.subr.mxu0 0.0
    %2162 = vmatpush1.msra.mxu0 0.0
    %2163 = vmatprep.subr.mxu0 0.0
    %2164 = vmatpush1.msra.mxu0 0.0
    %2165 = vmatprep.subr.mxu0 0.0
    %2166 = vmatpush1.msra.mxu0 0.0
    %2167 = vmatprep.subr.mxu0 0.0
    %2168 = vmatpush1.msra.mxu0 0.0
    %2169 = vmatprep.subr.mxu0 0.0
    %2170 = vmatpush1.msra.mxu0 0.0
    %2171 = vmatprep.subr.mxu0 0.0
    %2172 = vmatpush1.msra.mxu0 0.0
    %2173 = vmatprep.mubr.f32.mxu0 0.0
    %2174 = vmatmul.mubr.f32.gmra.mrb[0].mxu0 %v2107
    %v2175 = vpop.f32.mrb[0].mxu0
    %v2176 = vadd.f32 0.0, %v2175
    %v2177 = vpop.f32.mrb[0].mxu0
    %v2178 = vadd.f32 0.0, %v2177
    %2179 = vdwg.mxu0
    %v2180 = vadd.f32 %v1995, %v2176
    %v2181 = vadd.f32 %v1997, %v2178
    %s2182 = scalar_lea.vmem [#allocation7], 256
    %v2183 = vld [vmem:[%s2182] sm:$0xff]
    %v2184 = vld [vmem:[%s2182 + $0x8] sm:$0xff]
    %v2185 = vld [vmem:[%s2182 + $0x10] sm:$0xff]
    %v2186 = vld [vmem:[%s2182 + $0x18] sm:$0xff]
    %v2187 = vld [vmem:[%s2182 + $0x20] sm:$0xff]
    %v2188 = vld [vmem:[%s2182 + $0x28] sm:$0xff]
    %v2189 = vld [vmem:[%s2182 + $0x30] sm:$0xff]
    %v2190 = vld [vmem:[%s2182 + $0x38] sm:$0xff]
    %v2191 = vld [vmem:[%s2182 + $0x40] sm:$0xff]
    %v2192 = vld [vmem:[%s2182 + $0x48] sm:$0xff]
    %v2193 = vld [vmem:[%s2182 + $0x50] sm:$0xff]
    %v2194 = vld [vmem:[%s2182 + $0x58] sm:$0xff]
    %v2195 = vld [vmem:[%s2182 + $0x60] sm:$0xff]
    %v2196 = vld [vmem:[%s2182 + $0x68] sm:$0xff]
    %v2197 = vld [vmem:[%s2182 + $0x70] sm:$0xff]
    %v2198 = vld [vmem:[%s2182 + $0x78] sm:$0xff]
    %v2199 = vld [vmem:[%s2182 + $0x80] sm:$0xff]
    %v2200 = vld [vmem:[%s2182 + $0x88] sm:$0xff]
    %v2201 = vld [vmem:[%s2182 + $0x90] sm:$0xff]
    %v2202 = vld [vmem:[%s2182 + $0x98] sm:$0xff]
    %v2203 = vld [vmem:[%s2182 + $0xa0] sm:$0xff]
    %v2204 = vld [vmem:[%s2182 + $0xa8] sm:$0xff]
    %v2205 = vld [vmem:[%s2182 + $0xb0] sm:$0xff]
    %v2206 = vld [vmem:[%s2182 + $0xb8] sm:$0xff]
    %v2207 = vld [vmem:[%s2182 + $0xc0] sm:$0xff]
    %v2208 = vld [vmem:[%s2182 + $0xc8] sm:$0xff]
    %v2209 = vld [vmem:[%s2182 + $0xd0] sm:$0xff]
    %v2210 = vld [vmem:[%s2182 + $0xd8] sm:$0xff]
    %v2211 = vld [vmem:[%s2182 + $0xe0] sm:$0xff]
    %v2212 = vld [vmem:[%s2182 + $0xe8] sm:$0xff]
    %v2213 = vld [vmem:[%s2182 + $0xf0] sm:$0xff]
    %v2214 = vld [vmem:[%s2182 + $0xf8] sm:$0xff]
    %2215 = vmatprep.subr.mxu0 %v2184
    %2216 = vmatpush1.msra.mxu0 %v2183
    %2217 = vmatprep.subr.mxu0 %v2186
    %2218 = vmatpush1.msra.mxu0 %v2185
    %2219 = vmatprep.subr.mxu0 %v2188
    %2220 = vmatpush1.msra.mxu0 %v2187
    %2221 = vmatprep.subr.mxu0 %v2190
    %2222 = vmatpush1.msra.mxu0 %v2189
    %2223 = vmatprep.subr.mxu0 %v2192
    %2224 = vmatpush1.msra.mxu0 %v2191
    %2225 = vmatprep.subr.mxu0 %v2194
    %2226 = vmatpush1.msra.mxu0 %v2193
    %2227 = vmatprep.subr.mxu0 %v2196
    %2228 = vmatpush1.msra.mxu0 %v2195
    %2229 = vmatprep.subr.mxu0 %v2198
    %2230 = vmatpush1.msra.mxu0 %v2197
    %2231 = vmatprep.subr.mxu0 %v2200
    %2232 = vmatpush1.msra.mxu0 %v2199
    %2233 = vmatprep.subr.mxu0 %v2202
    %2234 = vmatpush1.msra.mxu0 %v2201
    %2235 = vmatprep.subr.mxu0 %v2204
    %2236 = vmatpush1.msra.mxu0 %v2203
    %2237 = vmatprep.subr.mxu0 %v2206
    %2238 = vmatpush1.msra.mxu0 %v2205
    %2239 = vmatprep.subr.mxu0 %v2208
    %2240 = vmatpush1.msra.mxu0 %v2207
    %2241 = vmatprep.subr.mxu0 %v2210
    %2242 = vmatpush1.msra.mxu0 %v2209
    %2243 = vmatprep.subr.mxu0 %v2212
    %2244 = vmatpush1.msra.mxu0 %v2211
    %2245 = vmatprep.subr.mxu0 %v2214
    %2246 = vmatpush1.msra.mxu0 %v2213
    %2247 = vmatprep.subr.mxu0 0.0
    %2248 = vmatpush1.msra.mxu0 0.0
    %2249 = vmatprep.subr.mxu0 0.0
    %2250 = vmatpush1.msra.mxu0 0.0
    %2251 = vmatprep.subr.mxu0 0.0
    %2252 = vmatpush1.msra.mxu0 0.0
    %2253 = vmatprep.subr.mxu0 0.0
    %2254 = vmatpush1.msra.mxu0 0.0
    %2255 = vmatprep.subr.mxu0 0.0
    %2256 = vmatpush1.msra.mxu0 0.0
    %2257 = vmatprep.subr.mxu0 0.0
    %2258 = vmatpush1.msra.mxu0 0.0
    %2259 = vmatprep.subr.mxu0 0.0
    %2260 = vmatpush1.msra.mxu0 0.0
    %2261 = vmatprep.subr.mxu0 0.0
    %2262 = vmatpush1.msra.mxu0 0.0
    %2263 = vmatprep.subr.mxu0 0.0
    %2264 = vmatpush1.msra.mxu0 0.0
    %2265 = vmatprep.subr.mxu0 0.0
    %2266 = vmatpush1.msra.mxu0 0.0
    %2267 = vmatprep.subr.mxu0 0.0
    %2268 = vmatpush1.msra.mxu0 0.0
    %2269 = vmatprep.subr.mxu0 0.0
    %2270 = vmatpush1.msra.mxu0 0.0
    %2271 = vmatprep.subr.mxu0 0.0
    %2272 = vmatpush1.msra.mxu0 0.0
    %2273 = vmatprep.subr.mxu0 0.0
    %2274 = vmatpush1.msra.mxu0 0.0
    %2275 = vmatprep.subr.mxu0 0.0
    %2276 = vmatpush1.msra.mxu0 0.0
    %2277 = vmatprep.subr.mxu0 0.0
    %2278 = vmatpush1.msra.mxu0 0.0
    %2279 = vmatprep.mubr.f32.mxu0 0.0
    %2280 = vmatmul.mubr.f32.gmra.mrb[0].mxu0 %v1643
    %v2281 = vpop.f32.mrb[0].mxu0
    %v2282 = vadd.f32 0.0, %v2281
    %v2283 = vpop.f32.mrb[0].mxu0
    %v2284 = vadd.f32 0.0, %v2283
    %2285 = vdwg.mxu0
    %v2286 = vadd.f32 %v2105, %v2282
    %v2287 = vadd.f32 %v2106, %v2284
    %2288 = vmatprep.subr.mxu0 %v2184
    %2289 = vmatpush1.msra.mxu0 %v2183
    %2290 = vmatprep.subr.mxu0 %v2186
    %2291 = vmatpush1.msra.mxu0 %v2185
    %2292 = vmatprep.subr.mxu0 %v2188
    %2293 = vmatpush1.msra.mxu0 %v2187
    %2294 = vmatprep.subr.mxu0 %v2190
    %2295 = vmatpush1.msra.mxu0 %v2189
    %2296 = vmatprep.subr.mxu0 %v2192
    %2297 = vmatpush1.msra.mxu0 %v2191
    %2298 = vmatprep.subr.mxu0 %v2194
    %2299 = vmatpush1.msra.mxu0 %v2193
    %2300 = vmatprep.subr.mxu0 %v2196
    %2301 = vmatpush1.msra.mxu0 %v2195
    %2302 = vmatprep.subr.mxu0 %v2198
    %2303 = vmatpush1.msra.mxu0 %v2197
    %2304 = vmatprep.subr.mxu0 %v2200
    %2305 = vmatpush1.msra.mxu0 %v2199
    %2306 = vmatprep.subr.mxu0 %v2202
    %2307 = vmatpush1.msra.mxu0 %v2201
    %2308 = vmatprep.subr.mxu0 %v2204
    %2309 = vmatpush1.msra.mxu0 %v2203
    %2310 = vmatprep.subr.mxu0 %v2206
    %2311 = vmatpush1.msra.mxu0 %v2205
    %2312 = vmatprep.subr.mxu0 %v2208
    %2313 = vmatpush1.msra.mxu0 %v2207
    %2314 = vmatprep.subr.mxu0 %v2210
    %2315 = vmatpush1.msra.mxu0 %v2209
    %2316 = vmatprep.subr.mxu0 %v2212
    %2317 = vmatpush1.msra.mxu0 %v2211
    %2318 = vmatprep.subr.mxu0 %v2214
    %2319 = vmatpush1.msra.mxu0 %v2213
    %2320 = vmatprep.subr.mxu0 0.0
    %2321 = vmatpush1.msra.mxu0 0.0
    %2322 = vmatprep.subr.mxu0 0.0
    %2323 = vmatpush1.msra.mxu0 0.0
    %2324 = vmatprep.subr.mxu0 0.0
    %2325 = vmatpush1.msra.mxu0 0.0
    %2326 = vmatprep.subr.mxu0 0.0
    %2327 = vmatpush1.msra.mxu0 0.0
    %2328 = vmatprep.subr.mxu0 0.0
    %2329 = vmatpush1.msra.mxu0 0.0
    %2330 = vmatprep.subr.mxu0 0.0
    %2331 = vmatpush1.msra.mxu0 0.0
    %2332 = vmatprep.subr.mxu0 0.0
    %2333 = vmatpush1.msra.mxu0 0.0
    %2334 = vmatprep.subr.mxu0 0.0
    %2335 = vmatpush1.msra.mxu0 0.0
    %2336 = vmatprep.subr.mxu0 0.0
    %2337 = vmatpush1.msra.mxu0 0.0
    %2338 = vmatprep.subr.mxu0 0.0
    %2339 = vmatpush1.msra.mxu0 0.0
    %2340 = vmatprep.subr.mxu0 0.0
    %2341 = vmatpush1.msra.mxu0 0.0
    %2342 = vmatprep.subr.mxu0 0.0
    %2343 = vmatpush1.msra.mxu0 0.0
    %2344 = vmatprep.subr.mxu0 0.0
    %2345 = vmatpush1.msra.mxu0 0.0
    %2346 = vmatprep.subr.mxu0 0.0
    %2347 = vmatpush1.msra.mxu0 0.0
    %2348 = vmatprep.subr.mxu0 0.0
    %2349 = vmatpush1.msra.mxu0 0.0
    %2350 = vmatprep.subr.mxu0 0.0
    %2351 = vmatpush1.msra.mxu0 0.0
    %2352 = vmatprep.mubr.f32.mxu0 0.0
    %2353 = vmatmul.mubr.f32.gmra.mrb[0].mxu0 %v1710
    %v2354 = vpop.f32.mrb[0].mxu0
    %v2355 = vadd.f32 0.0, %v2354
    %v2356 = vpop.f32.mrb[0].mxu0
    %v2357 = vadd.f32 0.0, %v2356
    %2358 = vdwg.mxu0
    %v2359 = vadd.f32 %v2180, %v2355
    %v2360 = vadd.f32 %v2181, %v2357
    %s2361 = scalar_lea.vmem [#allocation7], 768
    %v2362 = vld [vmem:[%s2361] sm:$0xff]
    %v2363 = vld [vmem:[%s2361 + $0x8] sm:$0xff]
    %v2364 = vld [vmem:[%s2361 + $0x10] sm:$0xff]
    %v2365 = vld [vmem:[%s2361 + $0x18] sm:$0xff]
    %v2366 = vld [vmem:[%s2361 + $0x20] sm:$0xff]
    %v2367 = vld [vmem:[%s2361 + $0x28] sm:$0xff]
    %v2368 = vld [vmem:[%s2361 + $0x30] sm:$0xff]
    %v2369 = vld [vmem:[%s2361 + $0x38] sm:$0xff]
    %v2370 = vld [vmem:[%s2361 + $0x40] sm:$0xff]
    %v2371 = vld [vmem:[%s2361 + $0x48] sm:$0xff]
    %v2372 = vld [vmem:[%s2361 + $0x50] sm:$0xff]
    %v2373 = vld [vmem:[%s2361 + $0x58] sm:$0xff]
    %v2374 = vld [vmem:[%s2361 + $0x60] sm:$0xff]
    %v2375 = vld [vmem:[%s2361 + $0x68] sm:$0xff]
    %v2376 = vld [vmem:[%s2361 + $0x70] sm:$0xff]
    %v2377 = vld [vmem:[%s2361 + $0x78] sm:$0xff]
    %v2378 = vld [vmem:[%s2361 + $0x80] sm:$0xff]
    %v2379 = vld [vmem:[%s2361 + $0x88] sm:$0xff]
    %v2380 = vld [vmem:[%s2361 + $0x90] sm:$0xff]
    %v2381 = vld [vmem:[%s2361 + $0x98] sm:$0xff]
    %v2382 = vld [vmem:[%s2361 + $0xa0] sm:$0xff]
    %v2383 = vld [vmem:[%s2361 + $0xa8] sm:$0xff]
    %v2384 = vld [vmem:[%s2361 + $0xb0] sm:$0xff]
    %v2385 = vld [vmem:[%s2361 + $0xb8] sm:$0xff]
    %v2386 = vld [vmem:[%s2361 + $0xc0] sm:$0xff]
    %v2387 = vld [vmem:[%s2361 + $0xc8] sm:$0xff]
    %v2388 = vld [vmem:[%s2361 + $0xd0] sm:$0xff]
    %v2389 = vld [vmem:[%s2361 + $0xd8] sm:$0xff]
    %v2390 = vld [vmem:[%s2361 + $0xe0] sm:$0xff]
    %v2391 = vld [vmem:[%s2361 + $0xe8] sm:$0xff]
    %v2392 = vld [vmem:[%s2361 + $0xf0] sm:$0xff]
    %v2393 = vld [vmem:[%s2361 + $0xf8] sm:$0xff]
    %2394 = vmatprep.subr.mxu0 %v2363
    %2395 = vmatpush1.msra.mxu0 %v2362
    %2396 = vmatprep.subr.mxu0 %v2365
    %2397 = vmatpush1.msra.mxu0 %v2364
    %2398 = vmatprep.subr.mxu0 %v2367
    %2399 = vmatpush1.msra.mxu0 %v2366
    %2400 = vmatprep.subr.mxu0 %v2369
    %2401 = vmatpush1.msra.mxu0 %v2368
    %2402 = vmatprep.subr.mxu0 %v2371
    %2403 = vmatpush1.msra.mxu0 %v2370
    %2404 = vmatprep.subr.mxu0 %v2373
    %2405 = vmatpush1.msra.mxu0 %v2372
    %2406 = vmatprep.subr.mxu0 %v2375
    %2407 = vmatpush1.msra.mxu0 %v2374
    %2408 = vmatprep.subr.mxu0 %v2377
    %2409 = vmatpush1.msra.mxu0 %v2376
    %2410 = vmatprep.subr.mxu0 %v2379
    %2411 = vmatpush1.msra.mxu0 %v2378
    %2412 = vmatprep.subr.mxu0 %v2381
    %2413 = vmatpush1.msra.mxu0 %v2380
    %2414 = vmatprep.subr.mxu0 %v2383
    %2415 = vmatpush1.msra.mxu0 %v2382
    %2416 = vmatprep.subr.mxu0 %v2385
    %2417 = vmatpush1.msra.mxu0 %v2384
    %2418 = vmatprep.subr.mxu0 %v2387
    %2419 = vmatpush1.msra.mxu0 %v2386
    %2420 = vmatprep.subr.mxu0 %v2389
    %2421 = vmatpush1.msra.mxu0 %v2388
    %2422 = vmatprep.subr.mxu0 %v2391
    %2423 = vmatpush1.msra.mxu0 %v2390
    %2424 = vmatprep.subr.mxu0 %v2393
    %2425 = vmatpush1.msra.mxu0 %v2392
    %2426 = vmatprep.subr.mxu0 0.0
    %2427 = vmatpush1.msra.mxu0 0.0
    %2428 = vmatprep.subr.mxu0 0.0
    %2429 = vmatpush1.msra.mxu0 0.0
    %2430 = vmatprep.subr.mxu0 0.0
    %2431 = vmatpush1.msra.mxu0 0.0
    %2432 = vmatprep.subr.mxu0 0.0
    %2433 = vmatpush1.msra.mxu0 0.0
    %2434 = vmatprep.subr.mxu0 0.0
    %2435 = vmatpush1.msra.mxu0 0.0
    %2436 = vmatprep.subr.mxu0 0.0
    %2437 = vmatpush1.msra.mxu0 0.0
    %2438 = vmatprep.subr.mxu0 0.0
    %2439 = vmatpush1.msra.mxu0 0.0
    %2440 = vmatprep.subr.mxu0 0.0
    %2441 = vmatpush1.msra.mxu0 0.0
    %2442 = vmatprep.subr.mxu0 0.0
    %2443 = vmatpush1.msra.mxu0 0.0
    %2444 = vmatprep.subr.mxu0 0.0
    %2445 = vmatpush1.msra.mxu0 0.0
    %2446 = vmatprep.subr.mxu0 0.0
    %2447 = vmatpush1.msra.mxu0 0.0
    %2448 = vmatprep.subr.mxu0 0.0
    %2449 = vmatpush1.msra.mxu0 0.0
    %2450 = vmatprep.subr.mxu0 0.0
    %2451 = vmatpush1.msra.mxu0 0.0
    %2452 = vmatprep.subr.mxu0 0.0
    %2453 = vmatpush1.msra.mxu0 0.0
    %2454 = vmatprep.subr.mxu0 0.0
    %2455 = vmatpush1.msra.mxu0 0.0
    %2456 = vmatprep.subr.mxu0 0.0
    %2457 = vmatpush1.msra.mxu0 0.0
    %2458 = vmatprep.mubr.f32.mxu0 0.0
    %2459 = vmatmul.mubr.f32.gmra.mrb[0].mxu0 %v1855
    %v2460 = vpop.f32.mrb[0].mxu0
    %v2461 = vadd.f32 0.0, %v2460
    %v2462 = vpop.f32.mrb[0].mxu0
    %v2463 = vadd.f32 0.0, %v2462
    %2464 = vdwg.mxu0
    %v2465 = vadd.f32 %v2286, %v2461
    %v2466 = vadd.f32 %v2287, %v2463
    %2467 = vmatprep.subr.mxu0 %v2363
    %2468 = vmatpush1.msra.mxu0 %v2362
    %2469 = vmatprep.subr.mxu0 %v2365
    %2470 = vmatpush1.msra.mxu0 %v2364
    %2471 = vmatprep.subr.mxu0 %v2367
    %2472 = vmatpush1.msra.mxu0 %v2366
    %2473 = vmatprep.subr.mxu0 %v2369
    %2474 = vmatpush1.msra.mxu0 %v2368
    %2475 = vmatprep.subr.mxu0 %v2371
    %2476 = vmatpush1.msra.mxu0 %v2370
    %2477 = vmatprep.subr.mxu0 %v2373
    %2478 = vmatpush1.msra.mxu0 %v2372
    %2479 = vmatprep.subr.mxu0 %v2375
    %2480 = vmatpush1.msra.mxu0 %v2374
    %2481 = vmatprep.subr.mxu0 %v2377
    %2482 = vmatpush1.msra.mxu0 %v2376
    %2483 = vmatprep.subr.mxu0 %v2379
    %2484 = vmatpush1.msra.mxu0 %v2378
    %2485 = vmatprep.subr.mxu0 %v2381
    %2486 = vmatpush1.msra.mxu0 %v2380
    %2487 = vmatprep.subr.mxu0 %v2383
    %2488 = vmatpush1.msra.mxu0 %v2382
    %2489 = vmatprep.subr.mxu0 %v2385
    %2490 = vmatpush1.msra.mxu0 %v2384
    %2491 = vmatprep.subr.mxu0 %v2387
    %2492 = vmatpush1.msra.mxu0 %v2386
    %2493 = vmatprep.subr.mxu0 %v2389
    %2494 = vmatpush1.msra.mxu0 %v2388
    %2495 = vmatprep.subr.mxu0 %v2391
    %2496 = vmatpush1.msra.mxu0 %v2390
    %2497 = vmatprep.subr.mxu0 %v2393
    %2498 = vmatpush1.msra.mxu0 %v2392
    %2499 = vmatprep.subr.mxu0 0.0
    %2500 = vmatpush1.msra.mxu0 0.0
    %2501 = vmatprep.subr.mxu0 0.0
    %2502 = vmatpush1.msra.mxu0 0.0
    %2503 = vmatprep.subr.mxu0 0.0
    %2504 = vmatpush1.msra.mxu0 0.0
    %2505 = vmatprep.subr.mxu0 0.0
    %2506 = vmatpush1.msra.mxu0 0.0
    %2507 = vmatprep.subr.mxu0 0.0
    %2508 = vmatpush1.msra.mxu0 0.0
    %2509 = vmatprep.subr.mxu0 0.0
    %2510 = vmatpush1.msra.mxu0 0.0
    %2511 = vmatprep.subr.mxu0 0.0
    %2512 = vmatpush1.msra.mxu0 0.0
    %2513 = vmatprep.subr.mxu0 0.0
    %2514 = vmatpush1.msra.mxu0 0.0
    %2515 = vmatprep.subr.mxu0 0.0
    %2516 = vmatpush1.msra.mxu0 0.0
    %2517 = vmatprep.subr.mxu0 0.0
    %2518 = vmatpush1.msra.mxu0 0.0
    %2519 = vmatprep.subr.mxu0 0.0
    %2520 = vmatpush1.msra.mxu0 0.0
    %2521 = vmatprep.subr.mxu0 0.0
    %2522 = vmatpush1.msra.mxu0 0.0
    %2523 = vmatprep.subr.mxu0 0.0
    %2524 = vmatpush1.msra.mxu0 0.0
    %2525 = vmatprep.subr.mxu0 0.0
    %2526 = vmatpush1.msra.mxu0 0.0
    %2527 = vmatprep.subr.mxu0 0.0
    %2528 = vmatpush1.msra.mxu0 0.0
    %2529 = vmatprep.subr.mxu0 0.0
    %2530 = vmatpush1.msra.mxu0 0.0
    %2531 = vmatprep.mubr.f32.mxu0 0.0
    %2532 = vmatmul.mubr.f32.gmra.mrb[0].mxu0 %v2032
    %v2533 = vpop.f32.mrb[0].mxu0
    %v2534 = vadd.f32 0.0, %v2533
    %v2535 = vpop.f32.mrb[0].mxu0
    %v2536 = vadd.f32 0.0, %v2535
    %2537 = vdwg.mxu0
    %v2538 = vadd.f32 %v2359, %v2534
    %v2539 = vadd.f32 %v2360, %v2536
    %v2540 = vmax.f32 %v2465, %v2466
    %v2541 = vmax.f32 %v2538, %v2539
    %v2542 = vmax.f32 %v2540, %v2541
    %v2543 = vld [vmem:[#allocation8] sm:$0x1]
    %v2545 = vlaneseq
    %v2546 = vshrl.u32 %v2545, 7
    %v2547 = vsub.s32 0, %v2546
    %v2548 = vrot.slane %v2543, %v2547
    %v2550 = vadd.f32 %v2542, %v2548
    %v2551 = vmax.f32 %v2550, 0.0
    %s2552 = scalar_lea.vmem %s0, 32
    %v2553 = vld [vmem:[%s2552] sm:$0x3f]
    %s2554 = scalar_lea.vmem %s0, 40
    %v2555 = vld [vmem:[%s2554] sm:$0x3f]
    %v2557 = vsel %vm123, %v2555, 0
    %2559 = vmatprep.subr.mxu0 %v116
    %2560 = vmatpush1.msra.mxu0 %v115
    %2561 = vmatprep.subr.mxu0 %v118
    %2562 = vmatpush1.msra.mxu0 %v117
    %2563 = vmatprep.subr.mxu0 %v120
    %2564 = vmatpush1.msra.mxu0 %v119
    %2565 = vmatprep.subr.mxu0 %v122
    %2566 = vmatpush1.msra.mxu0 %v121
    %2567 = vmatprep.subr.mxu0 0.0
    %2568 = vmatpush1.msra.mxu0 0.0
    %2569 = vmatprep.subr.mxu0 0.0
    %2570 = vmatpush1.msra.mxu0 0.0
    %2571 = vmatprep.subr.mxu0 0.0
    %2572 = vmatpush1.msra.mxu0 0.0
    %2573 = vmatprep.subr.mxu0 0.0
    %2574 = vmatpush1.msra.mxu0 0.0
    %2575 = vmatprep.subr.mxu0 0.0
    %2576 = vmatpush1.msra.mxu0 0.0
    %2577 = vmatprep.subr.mxu0 0.0
    %2578 = vmatpush1.msra.mxu0 0.0
    %2579 = vmatprep.subr.mxu0 0.0
    %2580 = vmatpush1.msra.mxu0 0.0
    %2581 = vmatprep.subr.mxu0 0.0
    %2582 = vmatpush1.msra.mxu0 0.0
    %2583 = vmatprep.subr.mxu0 0.0
    %2584 = vmatpush1.msra.mxu0 0.0
    %2585 = vmatprep.subr.mxu0 0.0
    %2586 = vmatpush1.msra.mxu0 0.0
    %2587 = vmatprep.subr.mxu0 0.0
    %2588 = vmatpush1.msra.mxu0 0.0
    %2589 = vmatprep.subr.mxu0 0.0
    %2590 = vmatpush1.msra.mxu0 0.0
    %2591 = vmatprep.subr.mxu0 0.0
    %2592 = vmatpush1.msra.mxu0 0.0
    %2593 = vmatprep.subr.mxu0 0.0
    %2594 = vmatpush1.msra.mxu0 0.0
    %2595 = vmatprep.subr.mxu0 0.0
    %2596 = vmatpush1.msra.mxu0 0.0
    %2597 = vmatprep.subr.mxu0 0.0
    %2598 = vmatpush1.msra.mxu0 0.0
    %2599 = vmatprep.subr.mxu0 0.0
    %2600 = vmatpush1.msra.mxu0 0.0
    %2601 = vmatprep.subr.mxu0 0.0
    %2602 = vmatpush1.msra.mxu0 0.0
    %2603 = vmatprep.subr.mxu0 0.0
    %2604 = vmatpush1.msra.mxu0 0.0
    %2605 = vmatprep.subr.mxu0 0.0
    %2606 = vmatpush1.msra.mxu0 0.0
    %2607 = vmatprep.subr.mxu0 0.0
    %2608 = vmatpush1.msra.mxu0 0.0
    %2609 = vmatprep.subr.mxu0 0.0
    %2610 = vmatpush1.msra.mxu0 0.0
    %2611 = vmatprep.subr.mxu0 0.0
    %2612 = vmatpush1.msra.mxu0 0.0
    %2613 = vmatprep.subr.mxu0 0.0
    %2614 = vmatpush1.msra.mxu0 0.0
    %2615 = vmatprep.subr.mxu0 0.0
    %2616 = vmatpush1.msra.mxu0 0.0
    %2617 = vmatprep.subr.mxu0 0.0
    %2618 = vmatpush1.msra.mxu0 0.0
    %2619 = vmatprep.subr.mxu0 0.0
    %2620 = vmatpush1.msra.mxu0 0.0
    %2621 = vmatprep.subr.mxu0 0.0
    %2622 = vmatpush1.msra.mxu0 0.0
    %2623 = vmatprep.mubr.f32.mxu0 0.0
    %2624 = vmatmul.mubr.f32.gmra.mrb[0].mxu0 %v2557
    %v2625 = vpop.f32.mrb[0].mxu0
    %v2626 = vadd.f32 0.0, %v2625
    %v2627 = vpop.f32.mrb[0].mxu0
    %v2628 = vadd.f32 0.0, %v2627
    %2629 = vdwg.mxu0
    %v2631 = vsel %vm123, %v2553, 0
    %2633 = vmatprep.subr.mxu0 %v105
    %2634 = vmatpush1.msra.mxu0 %v104
    %2635 = vmatprep.subr.mxu0 %v107
    %2636 = vmatpush1.msra.mxu0 %v106
    %2637 = vmatprep.subr.mxu0 %v109
    %2638 = vmatpush1.msra.mxu0 %v108
    %2639 = vmatprep.subr.mxu0 %v111
    %2640 = vmatpush1.msra.mxu0 %v110
    %2641 = vmatprep.subr.mxu0 0.0
    %2642 = vmatpush1.msra.mxu0 0.0
    %2643 = vmatprep.subr.mxu0 0.0
    %2644 = vmatpush1.msra.mxu0 0.0
    %2645 = vmatprep.subr.mxu0 0.0
    %2646 = vmatpush1.msra.mxu0 0.0
    %2647 = vmatprep.subr.mxu0 0.0
    %2648 = vmatpush1.msra.mxu0 0.0
    %2649 = vmatprep.subr.mxu0 0.0
    %2650 = vmatpush1.msra.mxu0 0.0
    %2651 = vmatprep.subr.mxu0 0.0
    %2652 = vmatpush1.msra.mxu0 0.0
    %2653 = vmatprep.subr.mxu0 0.0
    %2654 = vmatpush1.msra.mxu0 0.0
    %2655 = vmatprep.subr.mxu0 0.0
    %2656 = vmatpush1.msra.mxu0 0.0
    %2657 = vmatprep.subr.mxu0 0.0
    %2658 = vmatpush1.msra.mxu0 0.0
    %2659 = vmatprep.subr.mxu0 0.0
    %2660 = vmatpush1.msra.mxu0 0.0
    %2661 = vmatprep.subr.mxu0 0.0
    %2662 = vmatpush1.msra.mxu0 0.0
    %2663 = vmatprep.subr.mxu0 0.0
    %2664 = vmatpush1.msra.mxu0 0.0
    %2665 = vmatprep.subr.mxu0 0.0
    %2666 = vmatpush1.msra.mxu0 0.0
    %2667 = vmatprep.subr.mxu0 0.0
    %2668 = vmatpush1.msra.mxu0 0.0
    %2669 = vmatprep.subr.mxu0 0.0
    %2670 = vmatpush1.msra.mxu0 0.0
    %2671 = vmatprep.subr.mxu0 0.0
    %2672 = vmatpush1.msra.mxu0 0.0
    %2673 = vmatprep.subr.mxu0 0.0
    %2674 = vmatpush1.msra.mxu0 0.0
    %2675 = vmatprep.subr.mxu0 0.0
    %2676 = vmatpush1.msra.mxu0 0.0
    %2677 = vmatprep.subr.mxu0 0.0
    %2678 = vmatpush1.msra.mxu0 0.0
    %2679 = vmatprep.subr.mxu0 0.0
    %2680 = vmatpush1.msra.mxu0 0.0
    %2681 = vmatprep.subr.mxu0 0.0
    %2682 = vmatpush1.msra.mxu0 0.0
    %2683 = vmatprep.subr.mxu0 0.0
    %2684 = vmatpush1.msra.mxu0 0.0
    %2685 = vmatprep.subr.mxu0 0.0
    %2686 = vmatpush1.msra.mxu0 0.0
    %2687 = vmatprep.subr.mxu0 0.0
    %2688 = vmatpush1.msra.mxu0 0.0
    %2689 = vmatprep.subr.mxu0 0.0
    %2690 = vmatpush1.msra.mxu0 0.0
    %2691 = vmatprep.subr.mxu0 0.0
    %2692 = vmatpush1.msra.mxu0 0.0
    %2693 = vmatprep.subr.mxu0 0.0
    %2694 = vmatpush1.msra.mxu0 0.0
    %2695 = vmatprep.subr.mxu0 0.0
    %2696 = vmatpush1.msra.mxu0 0.0
    %2697 = vmatprep.mubr.f32.mxu0 0.0
    %2698 = vmatmul.mubr.f32.gmra.mrb[0].mxu0 %v2631
    %v2699 = vpop.f32.mrb[0].mxu0
    %v2700 = vadd.f32 %v2626, %v2699
    %v2701 = vpop.f32.mrb[0].mxu0
    %v2702 = vadd.f32 %v2628, %v2701
    %2703 = vdwg.mxu0
    %s2704 = scalar_lea.vmem %s0, 48
    %v2705 = vld [vmem:[%s2704] sm:$0x3f]
    %v2707 = vsel %vm123, %v2705, 0
    %2709 = vmatprep.subr.mxu0 %v276
    %2710 = vmatpush1.msra.mxu0 %v275
    %2711 = vmatprep.subr.mxu0 %v278
    %2712 = vmatpush1.msra.mxu0 %v277
    %2713 = vmatprep.subr.mxu0 %v280
    %2714 = vmatpush1.msra.mxu0 %v279
    %2715 = vmatprep.subr.mxu0 %v282
    %2716 = vmatpush1.msra.mxu0 %v281
    %2717 = vmatprep.subr.mxu0 0.0
    %2718 = vmatpush1.msra.mxu0 0.0
    %2719 = vmatprep.subr.mxu0 0.0
    %2720 = vmatpush1.msra.mxu0 0.0
    %2721 = vmatprep.subr.mxu0 0.0
    %2722 = vmatpush1.msra.mxu0 0.0
    %2723 = vmatprep.subr.mxu0 0.0
    %2724 = vmatpush1.msra.mxu0 0.0
    %2725 = vmatprep.subr.mxu0 0.0
    %2726 = vmatpush1.msra.mxu0 0.0
    %2727 = vmatprep.subr.mxu0 0.0
    %2728 = vmatpush1.msra.mxu0 0.0
    %2729 = vmatprep.subr.mxu0 0.0
    %2730 = vmatpush1.msra.mxu0 0.0
    %2731 = vmatprep.subr.mxu0 0.0
    %2732 = vmatpush1.msra.mxu0 0.0
    %2733 = vmatprep.subr.mxu0 0.0
    %2734 = vmatpush1.msra.mxu0 0.0
    %2735 = vmatprep.subr.mxu0 0.0
    %2736 = vmatpush1.msra.mxu0 0.0
    %2737 = vmatprep.subr.mxu0 0.0
    %2738 = vmatpush1.msra.mxu0 0.0
    %2739 = vmatprep.subr.mxu0 0.0
    %2740 = vmatpush1.msra.mxu0 0.0
    %2741 = vmatprep.subr.mxu0 0.0
    %2742 = vmatpush1.msra.mxu0 0.0
    %2743 = vmatprep.subr.mxu0 0.0
    %2744 = vmatpush1.msra.mxu0 0.0
    %2745 = vmatprep.subr.mxu0 0.0
    %2746 = vmatpush1.msra.mxu0 0.0
    %2747 = vmatprep.subr.mxu0 0.0
    %2748 = vmatpush1.msra.mxu0 0.0
    %2749 = vmatprep.subr.mxu0 0.0
    %2750 = vmatpush1.msra.mxu0 0.0
    %2751 = vmatprep.subr.mxu0 0.0
    %2752 = vmatpush1.msra.mxu0 0.0
    %2753 = vmatprep.subr.mxu0 0.0
    %2754 = vmatpush1.msra.mxu0 0.0
    %2755 = vmatprep.subr.mxu0 0.0
    %2756 = vmatpush1.msra.mxu0 0.0
    %2757 = vmatprep.subr.mxu0 0.0
    %2758 = vmatpush1.msra.mxu0 0.0
    %2759 = vmatprep.subr.mxu0 0.0
    %2760 = vmatpush1.msra.mxu0 0.0
    %2761 = vmatprep.subr.mxu0 0.0
    %2762 = vmatpush1.msra.mxu0 0.0
    %2763 = vmatprep.subr.mxu0 0.0
    %2764 = vmatpush1.msra.mxu0 0.0
    %2765 = vmatprep.subr.mxu0 0.0
    %2766 = vmatpush1.msra.mxu0 0.0
    %2767 = vmatprep.subr.mxu0 0.0
    %2768 = vmatpush1.msra.mxu0 0.0
    %2769 = vmatprep.subr.mxu0 0.0
    %2770 = vmatpush1.msra.mxu0 0.0
    %2771 = vmatprep.subr.mxu0 0.0
    %2772 = vmatpush1.msra.mxu0 0.0
    %2773 = vmatprep.mubr.f32.mxu0 0.0
    %2774 = vmatmul.mubr.f32.gmra.mrb[0].mxu0 %v2707
    %v2775 = vpop.f32.mrb[0].mxu0
    %v2776 = vadd.f32 0.0, %v2775
    %v2777 = vpop.f32.mrb[0].mxu0
    %v2778 = vadd.f32 0.0, %v2777
    %2779 = vdwg.mxu0
    %v2780 = vadd.f32 %v2700, %v2776
    %v2781 = vadd.f32 %v2702, %v2778
    %s2782 = scalar_lea.vmem %s0, 56
    %v2783 = vld [vmem:[%s2782] sm:$0x3f]
    %v2785 = vsel %vm123, %v2783, 0
    %2787 = vmatprep.subr.mxu0 %v363
    %2788 = vmatpush1.msra.mxu0 %v362
    %2789 = vmatprep.subr.mxu0 %v365
    %2790 = vmatpush1.msra.mxu0 %v364
    %2791 = vmatprep.subr.mxu0 %v367
    %2792 = vmatpush1.msra.mxu0 %v366
    %2793 = vmatprep.subr.mxu0 %v369
    %2794 = vmatpush1.msra.mxu0 %v368
    %2795 = vmatprep.subr.mxu0 0.0
    %2796 = vmatpush1.msra.mxu0 0.0
    %2797 = vmatprep.subr.mxu0 0.0
    %2798 = vmatpush1.msra.mxu0 0.0
    %2799 = vmatprep.subr.mxu0 0.0
    %2800 = vmatpush1.msra.mxu0 0.0
    %2801 = vmatprep.subr.mxu0 0.0
    %2802 = vmatpush1.msra.mxu0 0.0
    %2803 = vmatprep.subr.mxu0 0.0
    %2804 = vmatpush1.msra.mxu0 0.0
    %2805 = vmatprep.subr.mxu0 0.0
    %2806 = vmatpush1.msra.mxu0 0.0
    %2807 = vmatprep.subr.mxu0 0.0
    %2808 = vmatpush1.msra.mxu0 0.0
    %2809 = vmatprep.subr.mxu0 0.0
    %2810 = vmatpush1.msra.mxu0 0.0
    %2811 = vmatprep.subr.mxu0 0.0
    %2812 = vmatpush1.msra.mxu0 0.0
    %2813 = vmatprep.subr.mxu0 0.0
    %2814 = vmatpush1.msra.mxu0 0.0
    %2815 = vmatprep.subr.mxu0 0.0
    %2816 = vmatpush1.msra.mxu0 0.0
    %2817 = vmatprep.subr.mxu0 0.0
    %2818 = vmatpush1.msra.mxu0 0.0
    %2819 = vmatprep.subr.mxu0 0.0
    %2820 = vmatpush1.msra.mxu0 0.0
    %2821 = vmatprep.subr.mxu0 0.0
    %2822 = vmatpush1.msra.mxu0 0.0
    %2823 = vmatprep.subr.mxu0 0.0
    %2824 = vmatpush1.msra.mxu0 0.0
    %2825 = vmatprep.subr.mxu0 0.0
    %2826 = vmatpush1.msra.mxu0 0.0
    %2827 = vmatprep.subr.mxu0 0.0
    %2828 = vmatpush1.msra.mxu0 0.0
    %2829 = vmatprep.subr.mxu0 0.0
    %2830 = vmatpush1.msra.mxu0 0.0
    %2831 = vmatprep.subr.mxu0 0.0
    %2832 = vmatpush1.msra.mxu0 0.0
    %2833 = vmatprep.subr.mxu0 0.0
    %2834 = vmatpush1.msra.mxu0 0.0
    %2835 = vmatprep.subr.mxu0 0.0
    %2836 = vmatpush1.msra.mxu0 0.0
    %2837 = vmatprep.subr.mxu0 0.0
    %2838 = vmatpush1.msra.mxu0 0.0
    %2839 = vmatprep.subr.mxu0 0.0
    %2840 = vmatpush1.msra.mxu0 0.0
    %2841 = vmatprep.subr.mxu0 0.0
    %2842 = vmatpush1.msra.mxu0 0.0
    %2843 = vmatprep.subr.mxu0 0.0
    %2844 = vmatpush1.msra.mxu0 0.0
    %2845 = vmatprep.subr.mxu0 0.0
    %2846 = vmatpush1.msra.mxu0 0.0
    %2847 = vmatprep.subr.mxu0 0.0
    %2848 = vmatpush1.msra.mxu0 0.0
    %2849 = vmatprep.subr.mxu0 0.0
    %2850 = vmatpush1.msra.mxu0 0.0
    %2851 = vmatprep.mubr.f32.mxu0 0.0
    %2852 = vmatmul.mubr.f32.gmra.mrb[0].mxu0 %v2785
    %v2853 = vpop.f32.mrb[0].mxu0
    %v2854 = vadd.f32 0.0, %v2853
    %v2855 = vpop.f32.mrb[0].mxu0
    %v2856 = vadd.f32 0.0, %v2855
    %2857 = vdwg.mxu0
    %v2858 = vadd.f32 %v2780, %v2854
    %v2859 = vadd.f32 %v2781, %v2856
    %v2860 = vld [vmem:[%s2552 + $0x1] sm:$0x3f]
    %v2862 = vsel %vm123, %v2860, 0
    %2864 = vmatprep.subr.mxu0 %v449
    %2865 = vmatpush1.msra.mxu0 %v448
    %2866 = vmatprep.subr.mxu0 %v451
    %2867 = vmatpush1.msra.mxu0 %v450
    %2868 = vmatprep.subr.mxu0 %v453
    %2869 = vmatpush1.msra.mxu0 %v452
    %2870 = vmatprep.subr.mxu0 %v455
    %2871 = vmatpush1.msra.mxu0 %v454
    %2872 = vmatprep.subr.mxu0 0.0
    %2873 = vmatpush1.msra.mxu0 0.0
    %2874 = vmatprep.subr.mxu0 0.0
    %2875 = vmatpush1.msra.mxu0 0.0
    %2876 = vmatprep.subr.mxu0 0.0
    %2877 = vmatpush1.msra.mxu0 0.0
    %2878 = vmatprep.subr.mxu0 0.0
    %2879 = vmatpush1.msra.mxu0 0.0
    %2880 = vmatprep.subr.mxu0 0.0
    %2881 = vmatpush1.msra.mxu0 0.0
    %2882 = vmatprep.subr.mxu0 0.0
    %2883 = vmatpush1.msra.mxu0 0.0
    %2884 = vmatprep.subr.mxu0 0.0
    %2885 = vmatpush1.msra.mxu0 0.0
    %2886 = vmatprep.subr.mxu0 0.0
    %2887 = vmatpush1.msra.mxu0 0.0
    %2888 = vmatprep.subr.mxu0 0.0
    %2889 = vmatpush1.msra.mxu0 0.0
    %2890 = vmatprep.subr.mxu0 0.0
    %2891 = vmatpush1.msra.mxu0 0.0
    %2892 = vmatprep.subr.mxu0 0.0
    %2893 = vmatpush1.msra.mxu0 0.0
    %2894 = vmatprep.subr.mxu0 0.0
    %2895 = vmatpush1.msra.mxu0 0.0
    %2896 = vmatprep.subr.mxu0 0.0
    %2897 = vmatpush1.msra.mxu0 0.0
    %2898 = vmatprep.subr.mxu0 0.0
    %2899 = vmatpush1.msra.mxu0 0.0
    %2900 = vmatprep.subr.mxu0 0.0
    %2901 = vmatpush1.msra.mxu0 0.0
    %2902 = vmatprep.subr.mxu0 0.0
    %2903 = vmatpush1.msra.mxu0 0.0
    %2904 = vmatprep.subr.mxu0 0.0
    %2905 = vmatpush1.msra.mxu0 0.0
    %2906 = vmatprep.subr.mxu0 0.0
    %2907 = vmatpush1.msra.mxu0 0.0
    %2908 = vmatprep.subr.mxu0 0.0
    %2909 = vmatpush1.msra.mxu0 0.0
    %2910 = vmatprep.subr.mxu0 0.0
    %2911 = vmatpush1.msra.mxu0 0.0
    %2912 = vmatprep.subr.mxu0 0.0
    %2913 = vmatpush1.msra.mxu0 0.0
    %2914 = vmatprep.subr.mxu0 0.0
    %2915 = vmatpush1.msra.mxu0 0.0
    %2916 = vmatprep.subr.mxu0 0.0
    %2917 = vmatpush1.msra.mxu0 0.0
    %2918 = vmatprep.subr.mxu0 0.0
    %2919 = vmatpush1.msra.mxu0 0.0
    %2920 = vmatprep.subr.mxu0 0.0
    %2921 = vmatpush1.msra.mxu0 0.0
    %2922 = vmatprep.subr.mxu0 0.0
    %2923 = vmatpush1.msra.mxu0 0.0
    %2924 = vmatprep.subr.mxu0 0.0
    %2925 = vmatpush1.msra.mxu0 0.0
    %2926 = vmatprep.subr.mxu0 0.0
    %2927 = vmatpush1.msra.mxu0 0.0
    %2928 = vmatprep.mubr.f32.mxu0 0.0
    %2929 = vmatmul.mubr.f32.gmra.mrb[0].mxu0 %v2862
    %v2930 = vpop.f32.mrb[0].mxu0
    %v2931 = vadd.f32 0.0, %v2930
    %v2932 = vpop.f32.mrb[0].mxu0
    %v2933 = vadd.f32 0.0, %v2932
    %2934 = vdwg.mxu0
    %v2935 = vadd.f32 %v2858, %v2931
    %v2936 = vadd.f32 %v2859, %v2933
    %2937 = vmatprep.subr.mxu0 %v116
    %2938 = vmatpush1.msra.mxu0 %v115
    %2939 = vmatprep.subr.mxu0 %v118
    %2940 = vmatpush1.msra.mxu0 %v117
    %2941 = vmatprep.subr.mxu0 %v120
    %2942 = vmatpush1.msra.mxu0 %v119
    %2943 = vmatprep.subr.mxu0 %v122
    %2944 = vmatpush1.msra.mxu0 %v121
    %2945 = vmatprep.subr.mxu0 0.0
    %2946 = vmatpush1.msra.mxu0 0.0
    %2947 = vmatprep.subr.mxu0 0.0
    %2948 = vmatpush1.msra.mxu0 0.0
    %2949 = vmatprep.subr.mxu0 0.0
    %2950 = vmatpush1.msra.mxu0 0.0
    %2951 = vmatprep.subr.mxu0 0.0
    %2952 = vmatpush1.msra.mxu0 0.0
    %2953 = vmatprep.subr.mxu0 0.0
    %2954 = vmatpush1.msra.mxu0 0.0
    %2955 = vmatprep.subr.mxu0 0.0
    %2956 = vmatpush1.msra.mxu0 0.0
    %2957 = vmatprep.subr.mxu0 0.0
    %2958 = vmatpush1.msra.mxu0 0.0
    %2959 = vmatprep.subr.mxu0 0.0
    %2960 = vmatpush1.msra.mxu0 0.0
    %2961 = vmatprep.subr.mxu0 0.0
    %2962 = vmatpush1.msra.mxu0 0.0
    %2963 = vmatprep.subr.mxu0 0.0
    %2964 = vmatpush1.msra.mxu0 0.0
    %2965 = vmatprep.subr.mxu0 0.0
    %2966 = vmatpush1.msra.mxu0 0.0
    %2967 = vmatprep.subr.mxu0 0.0
    %2968 = vmatpush1.msra.mxu0 0.0
    %2969 = vmatprep.subr.mxu0 0.0
    %2970 = vmatpush1.msra.mxu0 0.0
    %2971 = vmatprep.subr.mxu0 0.0
    %2972 = vmatpush1.msra.mxu0 0.0
    %2973 = vmatprep.subr.mxu0 0.0
    %2974 = vmatpush1.msra.mxu0 0.0
    %2975 = vmatprep.subr.mxu0 0.0
    %2976 = vmatpush1.msra.mxu0 0.0
    %2977 = vmatprep.subr.mxu0 0.0
    %2978 = vmatpush1.msra.mxu0 0.0
    %2979 = vmatprep.subr.mxu0 0.0
    %2980 = vmatpush1.msra.mxu0 0.0
    %2981 = vmatprep.subr.mxu0 0.0
    %2982 = vmatpush1.msra.mxu0 0.0
    %2983 = vmatprep.subr.mxu0 0.0
    %2984 = vmatpush1.msra.mxu0 0.0
    %2985 = vmatprep.subr.mxu0 0.0
    %2986 = vmatpush1.msra.mxu0 0.0
    %2987 = vmatprep.subr.mxu0 0.0
    %2988 = vmatpush1.msra.mxu0 0.0
    %2989 = vmatprep.subr.mxu0 0.0
    %2990 = vmatpush1.msra.mxu0 0.0
    %2991 = vmatprep.subr.mxu0 0.0
    %2992 = vmatpush1.msra.mxu0 0.0
    %2993 = vmatprep.subr.mxu0 0.0
    %2994 = vmatpush1.msra.mxu0 0.0
    %2995 = vmatprep.subr.mxu0 0.0
    %2996 = vmatpush1.msra.mxu0 0.0
    %2997 = vmatprep.subr.mxu0 0.0
    %2998 = vmatpush1.msra.mxu0 0.0
    %2999 = vmatprep.subr.mxu0 0.0
    %3000 = vmatpush1.msra.mxu0 0.0
    %3001 = vmatprep.mubr.f32.mxu0 0.0
    %3002 = vmatmul.mubr.f32.gmra.mrb[0].mxu0 %v2707
    %v3003 = vpop.f32.mrb[0].mxu0
    %v3004 = vadd.f32 0.0, %v3003
    %v3005 = vpop.f32.mrb[0].mxu0
    %v3006 = vadd.f32 0.0, %v3005
    %3007 = vdwg.mxu0
    %3008 = vmatprep.subr.mxu0 %v105
    %3009 = vmatpush1.msra.mxu0 %v104
    %3010 = vmatprep.subr.mxu0 %v107
    %3011 = vmatpush1.msra.mxu0 %v106
    %3012 = vmatprep.subr.mxu0 %v109
    %3013 = vmatpush1.msra.mxu0 %v108
    %3014 = vmatprep.subr.mxu0 %v111
    %3015 = vmatpush1.msra.mxu0 %v110
    %3016 = vmatprep.subr.mxu0 0.0
    %3017 = vmatpush1.msra.mxu0 0.0
    %3018 = vmatprep.subr.mxu0 0.0
    %3019 = vmatpush1.msra.mxu0 0.0
    %3020 = vmatprep.subr.mxu0 0.0
    %3021 = vmatpush1.msra.mxu0 0.0
    %3022 = vmatprep.subr.mxu0 0.0
    %3023 = vmatpush1.msra.mxu0 0.0
    %3024 = vmatprep.subr.mxu0 0.0
    %3025 = vmatpush1.msra.mxu0 0.0
    %3026 = vmatprep.subr.mxu0 0.0
    %3027 = vmatpush1.msra.mxu0 0.0
    %3028 = vmatprep.subr.mxu0 0.0
    %3029 = vmatpush1.msra.mxu0 0.0
    %3030 = vmatprep.subr.mxu0 0.0
    %3031 = vmatpush1.msra.mxu0 0.0
    %3032 = vmatprep.subr.mxu0 0.0
    %3033 = vmatpush1.msra.mxu0 0.0
    %3034 = vmatprep.subr.mxu0 0.0
    %3035 = vmatpush1.msra.mxu0 0.0
    %3036 = vmatprep.subr.mxu0 0.0
    %3037 = vmatpush1.msra.mxu0 0.0
    %3038 = vmatprep.subr.mxu0 0.0
    %3039 = vmatpush1.msra.mxu0 0.0
    %3040 = vmatprep.subr.mxu0 0.0
    %3041 = vmatpush1.msra.mxu0 0.0
    %3042 = vmatprep.subr.mxu0 0.0
    %3043 = vmatpush1.msra.mxu0 0.0
    %3044 = vmatprep.subr.mxu0 0.0
    %3045 = vmatpush1.msra.mxu0 0.0
    %3046 = vmatprep.subr.mxu0 0.0
    %3047 = vmatpush1.msra.mxu0 0.0
    %3048 = vmatprep.subr.mxu0 0.0
    %3049 = vmatpush1.msra.mxu0 0.0
    %3050 = vmatprep.subr.mxu0 0.0
    %3051 = vmatpush1.msra.mxu0 0.0
    %3052 = vmatprep.subr.mxu0 0.0
    %3053 = vmatpush1.msra.mxu0 0.0
    %3054 = vmatprep.subr.mxu0 0.0
    %3055 = vmatpush1.msra.mxu0 0.0
    %3056 = vmatprep.subr.mxu0 0.0
    %3057 = vmatpush1.msra.mxu0 0.0
    %3058 = vmatprep.subr.mxu0 0.0
    %3059 = vmatpush1.msra.mxu0 0.0
    %3060 = vmatprep.subr.mxu0 0.0
    %3061 = vmatpush1.msra.mxu0 0.0
    %3062 = vmatprep.subr.mxu0 0.0
    %3063 = vmatpush1.msra.mxu0 0.0
    %3064 = vmatprep.subr.mxu0 0.0
    %3065 = vmatpush1.msra.mxu0 0.0
    %3066 = vmatprep.subr.mxu0 0.0
    %3067 = vmatpush1.msra.mxu0 0.0
    %3068 = vmatprep.subr.mxu0 0.0
    %3069 = vmatpush1.msra.mxu0 0.0
    %3070 = vmatprep.subr.mxu0 0.0
    %3071 = vmatpush1.msra.mxu0 0.0
    %3072 = vmatprep.mubr.f32.mxu0 0.0
    %3073 = vmatmul.mubr.f32.gmra.mrb[0].mxu0 %v2557
    %v3074 = vpop.f32.mrb[0].mxu0
    %v3075 = vadd.f32 %v3004, %v3074
    %v3076 = vpop.f32.mrb[0].mxu0
    %v3077 = vadd.f32 %v3006, %v3076
    %3078 = vdwg.mxu0
    %3079 = vmatprep.subr.mxu0 %v276
    %3080 = vmatpush1.msra.mxu0 %v275
    %3081 = vmatprep.subr.mxu0 %v278
    %3082 = vmatpush1.msra.mxu0 %v277
    %3083 = vmatprep.subr.mxu0 %v280
    %3084 = vmatpush1.msra.mxu0 %v279
    %3085 = vmatprep.subr.mxu0 %v282
    %3086 = vmatpush1.msra.mxu0 %v281
    %3087 = vmatprep.subr.mxu0 0.0
    %3088 = vmatpush1.msra.mxu0 0.0
    %3089 = vmatprep.subr.mxu0 0.0
    %3090 = vmatpush1.msra.mxu0 0.0
    %3091 = vmatprep.subr.mxu0 0.0
    %3092 = vmatpush1.msra.mxu0 0.0
    %3093 = vmatprep.subr.mxu0 0.0
    %3094 = vmatpush1.msra.mxu0 0.0
    %3095 = vmatprep.subr.mxu0 0.0
    %3096 = vmatpush1.msra.mxu0 0.0
    %3097 = vmatprep.subr.mxu0 0.0
    %3098 = vmatpush1.msra.mxu0 0.0
    %3099 = vmatprep.subr.mxu0 0.0
    %3100 = vmatpush1.msra.mxu0 0.0
    %3101 = vmatprep.subr.mxu0 0.0
    %3102 = vmatpush1.msra.mxu0 0.0
    %3103 = vmatprep.subr.mxu0 0.0
    %3104 = vmatpush1.msra.mxu0 0.0
    %3105 = vmatprep.subr.mxu0 0.0
    %3106 = vmatpush1.msra.mxu0 0.0
    %3107 = vmatprep.subr.mxu0 0.0
    %3108 = vmatpush1.msra.mxu0 0.0
    %3109 = vmatprep.subr.mxu0 0.0
    %3110 = vmatpush1.msra.mxu0 0.0
    %3111 = vmatprep.subr.mxu0 0.0
    %3112 = vmatpush1.msra.mxu0 0.0
    %3113 = vmatprep.subr.mxu0 0.0
    %3114 = vmatpush1.msra.mxu0 0.0
    %3115 = vmatprep.subr.mxu0 0.0
    %3116 = vmatpush1.msra.mxu0 0.0
    %3117 = vmatprep.subr.mxu0 0.0
    %3118 = vmatpush1.msra.mxu0 0.0
    %3119 = vmatprep.subr.mxu0 0.0
    %3120 = vmatpush1.msra.mxu0 0.0
    %3121 = vmatprep.subr.mxu0 0.0
    %3122 = vmatpush1.msra.mxu0 0.0
    %3123 = vmatprep.subr.mxu0 0.0
    %3124 = vmatpush1.msra.mxu0 0.0
    %3125 = vmatprep.subr.mxu0 0.0
    %3126 = vmatpush1.msra.mxu0 0.0
    %3127 = vmatprep.subr.mxu0 0.0
    %3128 = vmatpush1.msra.mxu0 0.0
    %3129 = vmatprep.subr.mxu0 0.0
    %3130 = vmatpush1.msra.mxu0 0.0
    %3131 = vmatprep.subr.mxu0 0.0
    %3132 = vmatpush1.msra.mxu0 0.0
    %3133 = vmatprep.subr.mxu0 0.0
    %3134 = vmatpush1.msra.mxu0 0.0
    %3135 = vmatprep.subr.mxu0 0.0
    %3136 = vmatpush1.msra.mxu0 0.0
    %3137 = vmatprep.subr.mxu0 0.0
    %3138 = vmatpush1.msra.mxu0 0.0
    %3139 = vmatprep.subr.mxu0 0.0
    %3140 = vmatpush1.msra.mxu0 0.0
    %3141 = vmatprep.subr.mxu0 0.0
    %3142 = vmatpush1.msra.mxu0 0.0
    %3143 = vmatprep.mubr.f32.mxu0 0.0
    %3144 = vmatmul.mubr.f32.gmra.mrb[0].mxu0 %v2785
    %v3145 = vpop.f32.mrb[0].mxu0
    %v3146 = vadd.f32 0.0, %v3145
    %v3147 = vpop.f32.mrb[0].mxu0
    %v3148 = vadd.f32 0.0, %v3147
    %3149 = vdwg.mxu0
    %v3150 = vadd.f32 %v3075, %v3146
    %v3151 = vadd.f32 %v3077, %v3148
    %3152 = vmatprep.subr.mxu0 %v363
    %3153 = vmatpush1.msra.mxu0 %v362
    %3154 = vmatprep.subr.mxu0 %v365
    %3155 = vmatpush1.msra.mxu0 %v364
    %3156 = vmatprep.subr.mxu0 %v367
    %3157 = vmatpush1.msra.mxu0 %v366
    %3158 = vmatprep.subr.mxu0 %v369
    %3159 = vmatpush1.msra.mxu0 %v368
    %3160 = vmatprep.subr.mxu0 0.0
    %3161 = vmatpush1.msra.mxu0 0.0
    %3162 = vmatprep.subr.mxu0 0.0
    %3163 = vmatpush1.msra.mxu0 0.0
    %3164 = vmatprep.subr.mxu0 0.0
    %3165 = vmatpush1.msra.mxu0 0.0
    %3166 = vmatprep.subr.mxu0 0.0
    %3167 = vmatpush1.msra.mxu0 0.0
    %3168 = vmatprep.subr.mxu0 0.0
    %3169 = vmatpush1.msra.mxu0 0.0
    %3170 = vmatprep.subr.mxu0 0.0
    %3171 = vmatpush1.msra.mxu0 0.0
    %3172 = vmatprep.subr.mxu0 0.0
    %3173 = vmatpush1.msra.mxu0 0.0
    %3174 = vmatprep.subr.mxu0 0.0
    %3175 = vmatpush1.msra.mxu0 0.0
    %3176 = vmatprep.subr.mxu0 0.0
    %3177 = vmatpush1.msra.mxu0 0.0
    %3178 = vmatprep.subr.mxu0 0.0
    %3179 = vmatpush1.msra.mxu0 0.0
    %3180 = vmatprep.subr.mxu0 0.0
    %3181 = vmatpush1.msra.mxu0 0.0
    %3182 = vmatprep.subr.mxu0 0.0
    %3183 = vmatpush1.msra.mxu0 0.0
    %3184 = vmatprep.subr.mxu0 0.0
    %3185 = vmatpush1.msra.mxu0 0.0
    %3186 = vmatprep.subr.mxu0 0.0
    %3187 = vmatpush1.msra.mxu0 0.0
    %3188 = vmatprep.subr.mxu0 0.0
    %3189 = vmatpush1.msra.mxu0 0.0
    %3190 = vmatprep.subr.mxu0 0.0
    %3191 = vmatpush1.msra.mxu0 0.0
    %3192 = vmatprep.subr.mxu0 0.0
    %3193 = vmatpush1.msra.mxu0 0.0
    %3194 = vmatprep.subr.mxu0 0.0
    %3195 = vmatpush1.msra.mxu0 0.0
    %3196 = vmatprep.subr.mxu0 0.0
    %3197 = vmatpush1.msra.mxu0 0.0
    %3198 = vmatprep.subr.mxu0 0.0
    %3199 = vmatpush1.msra.mxu0 0.0
    %3200 = vmatprep.subr.mxu0 0.0
    %3201 = vmatpush1.msra.mxu0 0.0
    %3202 = vmatprep.subr.mxu0 0.0
    %3203 = vmatpush1.msra.mxu0 0.0
    %3204 = vmatprep.subr.mxu0 0.0
    %3205 = vmatpush1.msra.mxu0 0.0
    %3206 = vmatprep.subr.mxu0 0.0
    %3207 = vmatpush1.msra.mxu0 0.0
    %3208 = vmatprep.subr.mxu0 0.0
    %3209 = vmatpush1.msra.mxu0 0.0
    %3210 = vmatprep.subr.mxu0 0.0
    %3211 = vmatpush1.msra.mxu0 0.0
    %3212 = vmatprep.subr.mxu0 0.0
    %3213 = vmatpush1.msra.mxu0 0.0
    %3214 = vmatprep.subr.mxu0 0.0
    %3215 = vmatpush1.msra.mxu0 0.0
    %3216 = vmatprep.mubr.f32.mxu0 0.0
    %3217 = vmatmul.mubr.f32.gmra.mrb[0].mxu0 %v2862
    %v3218 = vpop.f32.mrb[0].mxu0
    %v3219 = vadd.f32 0.0, %v3218
    %v3220 = vpop.f32.mrb[0].mxu0
    %v3221 = vadd.f32 0.0, %v3220
    %3222 = vdwg.mxu0
    %v3223 = vadd.f32 %v3150, %v3219
    %v3224 = vadd.f32 %v3151, %v3221
    %v3225 = vld [vmem:[%s2554 + $0x1] sm:$0x3f]
    %v3227 = vsel %vm123, %v3225, 0
    %3229 = vmatprep.subr.mxu0 %v449
    %3230 = vmatpush1.msra.mxu0 %v448
    %3231 = vmatprep.subr.mxu0 %v451
    %3232 = vmatpush1.msra.mxu0 %v450
    %3233 = vmatprep.subr.mxu0 %v453
    %3234 = vmatpush1.msra.mxu0 %v452
    %3235 = vmatprep.subr.mxu0 %v455
    %3236 = vmatpush1.msra.mxu0 %v454
    %3237 = vmatprep.subr.mxu0 0.0
    %3238 = vmatpush1.msra.mxu0 0.0
    %3239 = vmatprep.subr.mxu0 0.0
    %3240 = vmatpush1.msra.mxu0 0.0
    %3241 = vmatprep.subr.mxu0 0.0
    %3242 = vmatpush1.msra.mxu0 0.0
    %3243 = vmatprep.subr.mxu0 0.0
    %3244 = vmatpush1.msra.mxu0 0.0
    %3245 = vmatprep.subr.mxu0 0.0
    %3246 = vmatpush1.msra.mxu0 0.0
    %3247 = vmatprep.subr.mxu0 0.0
    %3248 = vmatpush1.msra.mxu0 0.0
    %3249 = vmatprep.subr.mxu0 0.0
    %3250 = vmatpush1.msra.mxu0 0.0
    %3251 = vmatprep.subr.mxu0 0.0
    %3252 = vmatpush1.msra.mxu0 0.0
    %3253 = vmatprep.subr.mxu0 0.0
    %3254 = vmatpush1.msra.mxu0 0.0
    %3255 = vmatprep.subr.mxu0 0.0
    %3256 = vmatpush1.msra.mxu0 0.0
    %3257 = vmatprep.subr.mxu0 0.0
    %3258 = vmatpush1.msra.mxu0 0.0
    %3259 = vmatprep.subr.mxu0 0.0
    %3260 = vmatpush1.msra.mxu0 0.0
    %3261 = vmatprep.subr.mxu0 0.0
    %3262 = vmatpush1.msra.mxu0 0.0
    %3263 = vmatprep.subr.mxu0 0.0
    %3264 = vmatpush1.msra.mxu0 0.0
    %3265 = vmatprep.subr.mxu0 0.0
    %3266 = vmatpush1.msra.mxu0 0.0
    %3267 = vmatprep.subr.mxu0 0.0
    %3268 = vmatpush1.msra.mxu0 0.0
    %3269 = vmatprep.subr.mxu0 0.0
    %3270 = vmatpush1.msra.mxu0 0.0
    %3271 = vmatprep.subr.mxu0 0.0
    %3272 = vmatpush1.msra.mxu0 0.0
    %3273 = vmatprep.subr.mxu0 0.0
    %3274 = vmatpush1.msra.mxu0 0.0
    %3275 = vmatprep.subr.mxu0 0.0
    %3276 = vmatpush1.msra.mxu0 0.0
    %3277 = vmatprep.subr.mxu0 0.0
    %3278 = vmatpush1.msra.mxu0 0.0
    %3279 = vmatprep.subr.mxu0 0.0
    %3280 = vmatpush1.msra.mxu0 0.0
    %3281 = vmatprep.subr.mxu0 0.0
    %3282 = vmatpush1.msra.mxu0 0.0
    %3283 = vmatprep.subr.mxu0 0.0
    %3284 = vmatpush1.msra.mxu0 0.0
    %3285 = vmatprep.subr.mxu0 0.0
    %3286 = vmatpush1.msra.mxu0 0.0
    %3287 = vmatprep.subr.mxu0 0.0
    %3288 = vmatpush1.msra.mxu0 0.0
    %3289 = vmatprep.subr.mxu0 0.0
    %3290 = vmatpush1.msra.mxu0 0.0
    %3291 = vmatprep.subr.mxu0 0.0
    %3292 = vmatpush1.msra.mxu0 0.0
    %3293 = vmatprep.mubr.f32.mxu0 0.0
    %3294 = vmatmul.mubr.f32.gmra.mrb[0].mxu0 %v3227
    %v3295 = vpop.f32.mrb[0].mxu0
    %v3296 = vadd.f32 0.0, %v3295
    %v3297 = vpop.f32.mrb[0].mxu0
    %v3298 = vadd.f32 0.0, %v3297
    %3299 = vdwg.mxu0
    %v3300 = vadd.f32 %v3223, %v3296
    %v3301 = vadd.f32 %v3224, %v3298
    %3302 = vmatprep.subr.mxu0 %v116
    %3303 = vmatpush1.msra.mxu0 %v115
    %3304 = vmatprep.subr.mxu0 %v118
    %3305 = vmatpush1.msra.mxu0 %v117
    %3306 = vmatprep.subr.mxu0 %v120
    %3307 = vmatpush1.msra.mxu0 %v119
    %3308 = vmatprep.subr.mxu0 %v122
    %3309 = vmatpush1.msra.mxu0 %v121
    %3310 = vmatprep.subr.mxu0 0.0
    %3311 = vmatpush1.msra.mxu0 0.0
    %3312 = vmatprep.subr.mxu0 0.0
    %3313 = vmatpush1.msra.mxu0 0.0
    %3314 = vmatprep.subr.mxu0 0.0
    %3315 = vmatpush1.msra.mxu0 0.0
    %3316 = vmatprep.subr.mxu0 0.0
    %3317 = vmatpush1.msra.mxu0 0.0
    %3318 = vmatprep.subr.mxu0 0.0
    %3319 = vmatpush1.msra.mxu0 0.0
    %3320 = vmatprep.subr.mxu0 0.0
    %3321 = vmatpush1.msra.mxu0 0.0
    %3322 = vmatprep.subr.mxu0 0.0
    %3323 = vmatpush1.msra.mxu0 0.0
    %3324 = vmatprep.subr.mxu0 0.0
    %3325 = vmatpush1.msra.mxu0 0.0
    %3326 = vmatprep.subr.mxu0 0.0
    %3327 = vmatpush1.msra.mxu0 0.0
    %3328 = vmatprep.subr.mxu0 0.0
    %3329 = vmatpush1.msra.mxu0 0.0
    %3330 = vmatprep.subr.mxu0 0.0
    %3331 = vmatpush1.msra.mxu0 0.0
    %3332 = vmatprep.subr.mxu0 0.0
    %3333 = vmatpush1.msra.mxu0 0.0
    %3334 = vmatprep.subr.mxu0 0.0
    %3335 = vmatpush1.msra.mxu0 0.0
    %3336 = vmatprep.subr.mxu0 0.0
    %3337 = vmatpush1.msra.mxu0 0.0
    %3338 = vmatprep.subr.mxu0 0.0
    %3339 = vmatpush1.msra.mxu0 0.0
    %3340 = vmatprep.subr.mxu0 0.0
    %3341 = vmatpush1.msra.mxu0 0.0
    %3342 = vmatprep.subr.mxu0 0.0
    %3343 = vmatpush1.msra.mxu0 0.0
    %3344 = vmatprep.subr.mxu0 0.0
    %3345 = vmatpush1.msra.mxu0 0.0
    %3346 = vmatprep.subr.mxu0 0.0
    %3347 = vmatpush1.msra.mxu0 0.0
    %3348 = vmatprep.subr.mxu0 0.0
    %3349 = vmatpush1.msra.mxu0 0.0
    %3350 = vmatprep.subr.mxu0 0.0
    %3351 = vmatpush1.msra.mxu0 0.0
    %3352 = vmatprep.subr.mxu0 0.0
    %3353 = vmatpush1.msra.mxu0 0.0
    %3354 = vmatprep.subr.mxu0 0.0
    %3355 = vmatpush1.msra.mxu0 0.0
    %3356 = vmatprep.subr.mxu0 0.0
    %3357 = vmatpush1.msra.mxu0 0.0
    %3358 = vmatprep.subr.mxu0 0.0
    %3359 = vmatpush1.msra.mxu0 0.0
    %3360 = vmatprep.subr.mxu0 0.0
    %3361 = vmatpush1.msra.mxu0 0.0
    %3362 = vmatprep.subr.mxu0 0.0
    %3363 = vmatpush1.msra.mxu0 0.0
    %3364 = vmatprep.subr.mxu0 0.0
    %3365 = vmatpush1.msra.mxu0 0.0
    %3366 = vmatprep.mubr.f32.mxu0 0.0
    %3367 = vmatmul.mubr.f32.gmra.mrb[0].mxu0 %v2785
    %v3368 = vpop.f32.mrb[0].mxu0
    %v3369 = vadd.f32 0.0, %v3368
    %v3370 = vpop.f32.mrb[0].mxu0
    %v3371 = vadd.f32 0.0, %v3370
    %3372 = vdwg.mxu0
    %3373 = vmatprep.subr.mxu0 %v105
    %3374 = vmatpush1.msra.mxu0 %v104
    %3375 = vmatprep.subr.mxu0 %v107
    %3376 = vmatpush1.msra.mxu0 %v106
    %3377 = vmatprep.subr.mxu0 %v109
    %3378 = vmatpush1.msra.mxu0 %v108
    %3379 = vmatprep.subr.mxu0 %v111
    %3380 = vmatpush1.msra.mxu0 %v110
    %3381 = vmatprep.subr.mxu0 0.0
    %3382 = vmatpush1.msra.mxu0 0.0
    %3383 = vmatprep.subr.mxu0 0.0
    %3384 = vmatpush1.msra.mxu0 0.0
    %3385 = vmatprep.subr.mxu0 0.0
    %3386 = vmatpush1.msra.mxu0 0.0
    %3387 = vmatprep.subr.mxu0 0.0
    %3388 = vmatpush1.msra.mxu0 0.0
    %3389 = vmatprep.subr.mxu0 0.0
    %3390 = vmatpush1.msra.mxu0 0.0
    %3391 = vmatprep.subr.mxu0 0.0
    %3392 = vmatpush1.msra.mxu0 0.0
    %3393 = vmatprep.subr.mxu0 0.0
    %3394 = vmatpush1.msra.mxu0 0.0
    %3395 = vmatprep.subr.mxu0 0.0
    %3396 = vmatpush1.msra.mxu0 0.0
    %3397 = vmatprep.subr.mxu0 0.0
    %3398 = vmatpush1.msra.mxu0 0.0
    %3399 = vmatprep.subr.mxu0 0.0
    %3400 = vmatpush1.msra.mxu0 0.0
    %3401 = vmatprep.subr.mxu0 0.0
    %3402 = vmatpush1.msra.mxu0 0.0
    %3403 = vmatprep.subr.mxu0 0.0
    %3404 = vmatpush1.msra.mxu0 0.0
    %3405 = vmatprep.subr.mxu0 0.0
    %3406 = vmatpush1.msra.mxu0 0.0
    %3407 = vmatprep.subr.mxu0 0.0
    %3408 = vmatpush1.msra.mxu0 0.0
    %3409 = vmatprep.subr.mxu0 0.0
    %3410 = vmatpush1.msra.mxu0 0.0
    %3411 = vmatprep.subr.mxu0 0.0
    %3412 = vmatpush1.msra.mxu0 0.0
    %3413 = vmatprep.subr.mxu0 0.0
    %3414 = vmatpush1.msra.mxu0 0.0
    %3415 = vmatprep.subr.mxu0 0.0
    %3416 = vmatpush1.msra.mxu0 0.0
    %3417 = vmatprep.subr.mxu0 0.0
    %3418 = vmatpush1.msra.mxu0 0.0
    %3419 = vmatprep.subr.mxu0 0.0
    %3420 = vmatpush1.msra.mxu0 0.0
    %3421 = vmatprep.subr.mxu0 0.0
    %3422 = vmatpush1.msra.mxu0 0.0
    %3423 = vmatprep.subr.mxu0 0.0
    %3424 = vmatpush1.msra.mxu0 0.0
    %3425 = vmatprep.subr.mxu0 0.0
    %3426 = vmatpush1.msra.mxu0 0.0
    %3427 = vmatprep.subr.mxu0 0.0
    %3428 = vmatpush1.msra.mxu0 0.0
    %3429 = vmatprep.subr.mxu0 0.0
    %3430 = vmatpush1.msra.mxu0 0.0
    %3431 = vmatprep.subr.mxu0 0.0
    %3432 = vmatpush1.msra.mxu0 0.0
    %3433 = vmatprep.subr.mxu0 0.0
    %3434 = vmatpush1.msra.mxu0 0.0
    %3435 = vmatprep.subr.mxu0 0.0
    %3436 = vmatpush1.msra.mxu0 0.0
    %3437 = vmatprep.mubr.f32.mxu0 0.0
    %3438 = vmatmul.mubr.f32.gmra.mrb[0].mxu0 %v2707
    %v3439 = vpop.f32.mrb[0].mxu0
    %v3440 = vadd.f32 %v3369, %v3439
    %v3441 = vpop.f32.mrb[0].mxu0
    %v3442 = vadd.f32 %v3371, %v3441
    %3443 = vdwg.mxu0
    %3444 = vmatprep.subr.mxu0 %v276
    %3445 = vmatpush1.msra.mxu0 %v275
    %3446 = vmatprep.subr.mxu0 %v278
    %3447 = vmatpush1.msra.mxu0 %v277
    %3448 = vmatprep.subr.mxu0 %v280
    %3449 = vmatpush1.msra.mxu0 %v279
    %3450 = vmatprep.subr.mxu0 %v282
    %3451 = vmatpush1.msra.mxu0 %v281
    %3452 = vmatprep.subr.mxu0 0.0
    %3453 = vmatpush1.msra.mxu0 0.0
    %3454 = vmatprep.subr.mxu0 0.0
    %3455 = vmatpush1.msra.mxu0 0.0
    %3456 = vmatprep.subr.mxu0 0.0
    %3457 = vmatpush1.msra.mxu0 0.0
    %3458 = vmatprep.subr.mxu0 0.0
    %3459 = vmatpush1.msra.mxu0 0.0
    %3460 = vmatprep.subr.mxu0 0.0
    %3461 = vmatpush1.msra.mxu0 0.0
    %3462 = vmatprep.subr.mxu0 0.0
    %3463 = vmatpush1.msra.mxu0 0.0
    %3464 = vmatprep.subr.mxu0 0.0
    %3465 = vmatpush1.msra.mxu0 0.0
    %3466 = vmatprep.subr.mxu0 0.0
    %3467 = vmatpush1.msra.mxu0 0.0
    %3468 = vmatprep.subr.mxu0 0.0
    %3469 = vmatpush1.msra.mxu0 0.0
    %3470 = vmatprep.subr.mxu0 0.0
    %3471 = vmatpush1.msra.mxu0 0.0
    %3472 = vmatprep.subr.mxu0 0.0
    %3473 = vmatpush1.msra.mxu0 0.0
    %3474 = vmatprep.subr.mxu0 0.0
    %3475 = vmatpush1.msra.mxu0 0.0
    %3476 = vmatprep.subr.mxu0 0.0
    %3477 = vmatpush1.msra.mxu0 0.0
    %3478 = vmatprep.subr.mxu0 0.0
    %3479 = vmatpush1.msra.mxu0 0.0
    %3480 = vmatprep.subr.mxu0 0.0
    %3481 = vmatpush1.msra.mxu0 0.0
    %3482 = vmatprep.subr.mxu0 0.0
    %3483 = vmatpush1.msra.mxu0 0.0
    %3484 = vmatprep.subr.mxu0 0.0
    %3485 = vmatpush1.msra.mxu0 0.0
    %3486 = vmatprep.subr.mxu0 0.0
    %3487 = vmatpush1.msra.mxu0 0.0
    %3488 = vmatprep.subr.mxu0 0.0
    %3489 = vmatpush1.msra.mxu0 0.0
    %3490 = vmatprep.subr.mxu0 0.0
    %3491 = vmatpush1.msra.mxu0 0.0
    %3492 = vmatprep.subr.mxu0 0.0
    %3493 = vmatpush1.msra.mxu0 0.0
    %3494 = vmatprep.subr.mxu0 0.0
    %3495 = vmatpush1.msra.mxu0 0.0
    %3496 = vmatprep.subr.mxu0 0.0
    %3497 = vmatpush1.msra.mxu0 0.0
    %3498 = vmatprep.subr.mxu0 0.0
    %3499 = vmatpush1.msra.mxu0 0.0
    %3500 = vmatprep.subr.mxu0 0.0
    %3501 = vmatpush1.msra.mxu0 0.0
    %3502 = vmatprep.subr.mxu0 0.0
    %3503 = vmatpush1.msra.mxu0 0.0
    %3504 = vmatprep.subr.mxu0 0.0
    %3505 = vmatpush1.msra.mxu0 0.0
    %3506 = vmatprep.subr.mxu0 0.0
    %3507 = vmatpush1.msra.mxu0 0.0
    %3508 = vmatprep.mubr.f32.mxu0 0.0
    %3509 = vmatmul.mubr.f32.gmra.mrb[0].mxu0 %v2862
    %v3510 = vpop.f32.mrb[0].mxu0
    %v3511 = vadd.f32 0.0, %v3510
    %v3512 = vpop.f32.mrb[0].mxu0
    %v3513 = vadd.f32 0.0, %v3512
    %3514 = vdwg.mxu0
    %v3515 = vadd.f32 %v3440, %v3511
    %v3516 = vadd.f32 %v3442, %v3513
    %3517 = vmatprep.subr.mxu0 %v363
    %3518 = vmatpush1.msra.mxu0 %v362
    %3519 = vmatprep.subr.mxu0 %v365
    %3520 = vmatpush1.msra.mxu0 %v364
    %3521 = vmatprep.subr.mxu0 %v367
    %3522 = vmatpush1.msra.mxu0 %v366
    %3523 = vmatprep.subr.mxu0 %v369
    %3524 = vmatpush1.msra.mxu0 %v368
    %3525 = vmatprep.subr.mxu0 0.0
    %3526 = vmatpush1.msra.mxu0 0.0
    %3527 = vmatprep.subr.mxu0 0.0
    %3528 = vmatpush1.msra.mxu0 0.0
    %3529 = vmatprep.subr.mxu0 0.0
    %3530 = vmatpush1.msra.mxu0 0.0
    %3531 = vmatprep.subr.mxu0 0.0
    %3532 = vmatpush1.msra.mxu0 0.0
    %3533 = vmatprep.subr.mxu0 0.0
    %3534 = vmatpush1.msra.mxu0 0.0
    %3535 = vmatprep.subr.mxu0 0.0
    %3536 = vmatpush1.msra.mxu0 0.0
    %3537 = vmatprep.subr.mxu0 0.0
    %3538 = vmatpush1.msra.mxu0 0.0
    %3539 = vmatprep.subr.mxu0 0.0
    %3540 = vmatpush1.msra.mxu0 0.0
    %3541 = vmatprep.subr.mxu0 0.0
    %3542 = vmatpush1.msra.mxu0 0.0
    %3543 = vmatprep.subr.mxu0 0.0
    %3544 = vmatpush1.msra.mxu0 0.0
    %3545 = vmatprep.subr.mxu0 0.0
    %3546 = vmatpush1.msra.mxu0 0.0
    %3547 = vmatprep.subr.mxu0 0.0
    %3548 = vmatpush1.msra.mxu0 0.0
    %3549 = vmatprep.subr.mxu0 0.0
    %3550 = vmatpush1.msra.mxu0 0.0
    %3551 = vmatprep.subr.mxu0 0.0
    %3552 = vmatpush1.msra.mxu0 0.0
    %3553 = vmatprep.subr.mxu0 0.0
    %3554 = vmatpush1.msra.mxu0 0.0
    %3555 = vmatprep.subr.mxu0 0.0
    %3556 = vmatpush1.msra.mxu0 0.0
    %3557 = vmatprep.subr.mxu0 0.0
    %3558 = vmatpush1.msra.mxu0 0.0
    %3559 = vmatprep.subr.mxu0 0.0
    %3560 = vmatpush1.msra.mxu0 0.0
    %3561 = vmatprep.subr.mxu0 0.0
    %3562 = vmatpush1.msra.mxu0 0.0
    %3563 = vmatprep.subr.mxu0 0.0
    %3564 = vmatpush1.msra.mxu0 0.0
    %3565 = vmatprep.subr.mxu0 0.0
    %3566 = vmatpush1.msra.mxu0 0.0
    %3567 = vmatprep.subr.mxu0 0.0
    %3568 = vmatpush1.msra.mxu0 0.0
    %3569 = vmatprep.subr.mxu0 0.0
    %3570 = vmatpush1.msra.mxu0 0.0
    %3571 = vmatprep.subr.mxu0 0.0
    %3572 = vmatpush1.msra.mxu0 0.0
    %3573 = vmatprep.subr.mxu0 0.0
    %3574 = vmatpush1.msra.mxu0 0.0
    %3575 = vmatprep.subr.mxu0 0.0
    %3576 = vmatpush1.msra.mxu0 0.0
    %3577 = vmatprep.subr.mxu0 0.0
    %3578 = vmatpush1.msra.mxu0 0.0
    %3579 = vmatprep.subr.mxu0 0.0
    %3580 = vmatpush1.msra.mxu0 0.0
    %3581 = vmatprep.mubr.f32.mxu0 0.0
    %3582 = vmatmul.mubr.f32.gmra.mrb[0].mxu0 %v3227
    %v3583 = vpop.f32.mrb[0].mxu0
    %v3584 = vadd.f32 0.0, %v3583
    %v3585 = vpop.f32.mrb[0].mxu0
    %v3586 = vadd.f32 0.0, %v3585
    %3587 = vdwg.mxu0
    %v3588 = vadd.f32 %v3515, %v3584
    %v3589 = vadd.f32 %v3516, %v3586
    %v3590 = vld [vmem:[%s2704 + $0x1] sm:$0x3f]
    %v3592 = vsel %vm123, %v3590, 0
    %3594 = vmatprep.subr.mxu0 %v449
    %3595 = vmatpush1.msra.mxu0 %v448
    %3596 = vmatprep.subr.mxu0 %v451
    %3597 = vmatpush1.msra.mxu0 %v450
    %3598 = vmatprep.subr.mxu0 %v453
    %3599 = vmatpush1.msra.mxu0 %v452
    %3600 = vmatprep.subr.mxu0 %v455
    %3601 = vmatpush1.msra.mxu0 %v454
    %3602 = vmatprep.subr.mxu0 0.0
    %3603 = vmatpush1.msra.mxu0 0.0
    %3604 = vmatprep.subr.mxu0 0.0
    %3605 = vmatpush1.msra.mxu0 0.0
    %3606 = vmatprep.subr.mxu0 0.0
    %3607 = vmatpush1.msra.mxu0 0.0
    %3608 = vmatprep.subr.mxu0 0.0
    %3609 = vmatpush1.msra.mxu0 0.0
    %3610 = vmatprep.subr.mxu0 0.0
    %3611 = vmatpush1.msra.mxu0 0.0
    %3612 = vmatprep.subr.mxu0 0.0
    %3613 = vmatpush1.msra.mxu0 0.0
    %3614 = vmatprep.subr.mxu0 0.0
    %3615 = vmatpush1.msra.mxu0 0.0
    %3616 = vmatprep.subr.mxu0 0.0
    %3617 = vmatpush1.msra.mxu0 0.0
    %3618 = vmatprep.subr.mxu0 0.0
    %3619 = vmatpush1.msra.mxu0 0.0
    %3620 = vmatprep.subr.mxu0 0.0
    %3621 = vmatpush1.msra.mxu0 0.0
    %3622 = vmatprep.subr.mxu0 0.0
    %3623 = vmatpush1.msra.mxu0 0.0
    %3624 = vmatprep.subr.mxu0 0.0
    %3625 = vmatpush1.msra.mxu0 0.0
    %3626 = vmatprep.subr.mxu0 0.0
    %3627 = vmatpush1.msra.mxu0 0.0
    %3628 = vmatprep.subr.mxu0 0.0
    %3629 = vmatpush1.msra.mxu0 0.0
    %3630 = vmatprep.subr.mxu0 0.0
    %3631 = vmatpush1.msra.mxu0 0.0
    %3632 = vmatprep.subr.mxu0 0.0
    %3633 = vmatpush1.msra.mxu0 0.0
    %3634 = vmatprep.subr.mxu0 0.0
    %3635 = vmatpush1.msra.mxu0 0.0
    %3636 = vmatprep.subr.mxu0 0.0
    %3637 = vmatpush1.msra.mxu0 0.0
    %3638 = vmatprep.subr.mxu0 0.0
    %3639 = vmatpush1.msra.mxu0 0.0
    %3640 = vmatprep.subr.mxu0 0.0
    %3641 = vmatpush1.msra.mxu0 0.0
    %3642 = vmatprep.subr.mxu0 0.0
    %3643 = vmatpush1.msra.mxu0 0.0
    %3644 = vmatprep.subr.mxu0 0.0
    %3645 = vmatpush1.msra.mxu0 0.0
    %3646 = vmatprep.subr.mxu0 0.0
    %3647 = vmatpush1.msra.mxu0 0.0
    %3648 = vmatprep.subr.mxu0 0.0
    %3649 = vmatpush1.msra.mxu0 0.0
    %3650 = vmatprep.subr.mxu0 0.0
    %3651 = vmatpush1.msra.mxu0 0.0
    %3652 = vmatprep.subr.mxu0 0.0
    %3653 = vmatpush1.msra.mxu0 0.0
    %3654 = vmatprep.subr.mxu0 0.0
    %3655 = vmatpush1.msra.mxu0 0.0
    %3656 = vmatprep.subr.mxu0 0.0
    %3657 = vmatpush1.msra.mxu0 0.0
    %3658 = vmatprep.mubr.f32.mxu0 0.0
    %3659 = vmatmul.mubr.f32.gmra.mrb[0].mxu0 %v3592
    %v3660 = vpop.f32.mrb[0].mxu0
    %v3661 = vadd.f32 0.0, %v3660
    %v3662 = vpop.f32.mrb[0].mxu0
    %v3663 = vadd.f32 0.0, %v3662
    %3664 = vdwg.mxu0
    %v3665 = vadd.f32 %v3588, %v3661
    %v3666 = vadd.f32 %v3589, %v3663
    %3667 = vmatprep.subr.mxu0 %v116
    %3668 = vmatpush1.msra.mxu0 %v115
    %3669 = vmatprep.subr.mxu0 %v118
    %3670 = vmatpush1.msra.mxu0 %v117
    %3671 = vmatprep.subr.mxu0 %v120
    %3672 = vmatpush1.msra.mxu0 %v119
    %3673 = vmatprep.subr.mxu0 %v122
    %3674 = vmatpush1.msra.mxu0 %v121
    %3675 = vmatprep.subr.mxu0 0.0
    %3676 = vmatpush1.msra.mxu0 0.0
    %3677 = vmatprep.subr.mxu0 0.0
    %3678 = vmatpush1.msra.mxu0 0.0
    %3679 = vmatprep.subr.mxu0 0.0
    %3680 = vmatpush1.msra.mxu0 0.0
    %3681 = vmatprep.subr.mxu0 0.0
    %3682 = vmatpush1.msra.mxu0 0.0
    %3683 = vmatprep.subr.mxu0 0.0
    %3684 = vmatpush1.msra.mxu0 0.0
    %3685 = vmatprep.subr.mxu0 0.0
    %3686 = vmatpush1.msra.mxu0 0.0
    %3687 = vmatprep.subr.mxu0 0.0
    %3688 = vmatpush1.msra.mxu0 0.0
    %3689 = vmatprep.subr.mxu0 0.0
    %3690 = vmatpush1.msra.mxu0 0.0
    %3691 = vmatprep.subr.mxu0 0.0
    %3692 = vmatpush1.msra.mxu0 0.0
    %3693 = vmatprep.subr.mxu0 0.0
    %3694 = vmatpush1.msra.mxu0 0.0
    %3695 = vmatprep.subr.mxu0 0.0
    %3696 = vmatpush1.msra.mxu0 0.0
    %3697 = vmatprep.subr.mxu0 0.0
    %3698 = vmatpush1.msra.mxu0 0.0
    %3699 = vmatprep.subr.mxu0 0.0
    %3700 = vmatpush1.msra.mxu0 0.0
    %3701 = vmatprep.subr.mxu0 0.0
    %3702 = vmatpush1.msra.mxu0 0.0
    %3703 = vmatprep.subr.mxu0 0.0
    %3704 = vmatpush1.msra.mxu0 0.0
    %3705 = vmatprep.subr.mxu0 0.0
    %3706 = vmatpush1.msra.mxu0 0.0
    %3707 = vmatprep.subr.mxu0 0.0
    %3708 = vmatpush1.msra.mxu0 0.0
    %3709 = vmatprep.subr.mxu0 0.0
    %3710 = vmatpush1.msra.mxu0 0.0
    %3711 = vmatprep.subr.mxu0 0.0
    %3712 = vmatpush1.msra.mxu0 0.0
    %3713 = vmatprep.subr.mxu0 0.0
    %3714 = vmatpush1.msra.mxu0 0.0
    %3715 = vmatprep.subr.mxu0 0.0
    %3716 = vmatpush1.msra.mxu0 0.0
    %3717 = vmatprep.subr.mxu0 0.0
    %3718 = vmatpush1.msra.mxu0 0.0
    %3719 = vmatprep.subr.mxu0 0.0
    %3720 = vmatpush1.msra.mxu0 0.0
    %3721 = vmatprep.subr.mxu0 0.0
    %3722 = vmatpush1.msra.mxu0 0.0
    %3723 = vmatprep.subr.mxu0 0.0
    %3724 = vmatpush1.msra.mxu0 0.0
    %3725 = vmatprep.subr.mxu0 0.0
    %3726 = vmatpush1.msra.mxu0 0.0
    %3727 = vmatprep.subr.mxu0 0.0
    %3728 = vmatpush1.msra.mxu0 0.0
    %3729 = vmatprep.subr.mxu0 0.0
    %3730 = vmatpush1.msra.mxu0 0.0
    %3731 = vmatprep.mubr.f32.mxu0 0.0
    %3732 = vmatmul.mubr.f32.gmra.mrb[0].mxu0 %v2862
    %v3733 = vpop.f32.mrb[0].mxu0
    %v3734 = vadd.f32 0.0, %v3733
    %v3735 = vpop.f32.mrb[0].mxu0
    %v3736 = vadd.f32 0.0, %v3735
    %3737 = vdwg.mxu0
    %3738 = vmatprep.subr.mxu0 %v105
    %3739 = vmatpush1.msra.mxu0 %v104
    %3740 = vmatprep.subr.mxu0 %v107
    %3741 = vmatpush1.msra.mxu0 %v106
    %3742 = vmatprep.subr.mxu0 %v109
    %3743 = vmatpush1.msra.mxu0 %v108
    %3744 = vmatprep.subr.mxu0 %v111
    %3745 = vmatpush1.msra.mxu0 %v110
    %3746 = vmatprep.subr.mxu0 0.0
    %3747 = vmatpush1.msra.mxu0 0.0
    %3748 = vmatprep.subr.mxu0 0.0
    %3749 = vmatpush1.msra.mxu0 0.0
    %3750 = vmatprep.subr.mxu0 0.0
    %3751 = vmatpush1.msra.mxu0 0.0
    %3752 = vmatprep.subr.mxu0 0.0
    %3753 = vmatpush1.msra.mxu0 0.0
    %3754 = vmatprep.subr.mxu0 0.0
    %3755 = vmatpush1.msra.mxu0 0.0
    %3756 = vmatprep.subr.mxu0 0.0
    %3757 = vmatpush1.msra.mxu0 0.0
    %3758 = vmatprep.subr.mxu0 0.0
    %3759 = vmatpush1.msra.mxu0 0.0
    %3760 = vmatprep.subr.mxu0 0.0
    %3761 = vmatpush1.msra.mxu0 0.0
    %3762 = vmatprep.subr.mxu0 0.0
    %3763 = vmatpush1.msra.mxu0 0.0
    %3764 = vmatprep.subr.mxu0 0.0
    %3765 = vmatpush1.msra.mxu0 0.0
    %3766 = vmatprep.subr.mxu0 0.0
    %3767 = vmatpush1.msra.mxu0 0.0
    %3768 = vmatprep.subr.mxu0 0.0
    %3769 = vmatpush1.msra.mxu0 0.0
    %3770 = vmatprep.subr.mxu0 0.0
    %3771 = vmatpush1.msra.mxu0 0.0
    %3772 = vmatprep.subr.mxu0 0.0
    %3773 = vmatpush1.msra.mxu0 0.0
    %3774 = vmatprep.subr.mxu0 0.0
    %3775 = vmatpush1.msra.mxu0 0.0
    %3776 = vmatprep.subr.mxu0 0.0
    %3777 = vmatpush1.msra.mxu0 0.0
    %3778 = vmatprep.subr.mxu0 0.0
    %3779 = vmatpush1.msra.mxu0 0.0
    %3780 = vmatprep.subr.mxu0 0.0
    %3781 = vmatpush1.msra.mxu0 0.0
    %3782 = vmatprep.subr.mxu0 0.0
    %3783 = vmatpush1.msra.mxu0 0.0
    %3784 = vmatprep.subr.mxu0 0.0
    %3785 = vmatpush1.msra.mxu0 0.0
    %3786 = vmatprep.subr.mxu0 0.0
    %3787 = vmatpush1.msra.mxu0 0.0
    %3788 = vmatprep.subr.mxu0 0.0
    %3789 = vmatpush1.msra.mxu0 0.0
    %3790 = vmatprep.subr.mxu0 0.0
    %3791 = vmatpush1.msra.mxu0 0.0
    %3792 = vmatprep.subr.mxu0 0.0
    %3793 = vmatpush1.msra.mxu0 0.0
    %3794 = vmatprep.subr.mxu0 0.0
    %3795 = vmatpush1.msra.mxu0 0.0
    %3796 = vmatprep.subr.mxu0 0.0
    %3797 = vmatpush1.msra.mxu0 0.0
    %3798 = vmatprep.subr.mxu0 0.0
    %3799 = vmatpush1.msra.mxu0 0.0
    %3800 = vmatprep.subr.mxu0 0.0
    %3801 = vmatpush1.msra.mxu0 0.0
    %3802 = vmatprep.mubr.f32.mxu0 0.0
    %3803 = vmatmul.mubr.f32.gmra.mrb[0].mxu0 %v2785
    %v3804 = vpop.f32.mrb[0].mxu0
    %v3805 = vadd.f32 %v3734, %v3804
    %v3806 = vpop.f32.mrb[0].mxu0
    %v3807 = vadd.f32 %v3736, %v3806
    %3808 = vdwg.mxu0
    %3809 = vmatprep.subr.mxu0 %v276
    %3810 = vmatpush1.msra.mxu0 %v275
    %3811 = vmatprep.subr.mxu0 %v278
    %3812 = vmatpush1.msra.mxu0 %v277
    %3813 = vmatprep.subr.mxu0 %v280
    %3814 = vmatpush1.msra.mxu0 %v279
    %3815 = vmatprep.subr.mxu0 %v282
    %3816 = vmatpush1.msra.mxu0 %v281
    %3817 = vmatprep.subr.mxu0 0.0
    %3818 = vmatpush1.msra.mxu0 0.0
    %3819 = vmatprep.subr.mxu0 0.0
    %3820 = vmatpush1.msra.mxu0 0.0
    %3821 = vmatprep.subr.mxu0 0.0
    %3822 = vmatpush1.msra.mxu0 0.0
    %3823 = vmatprep.subr.mxu0 0.0
    %3824 = vmatpush1.msra.mxu0 0.0
    %3825 = vmatprep.subr.mxu0 0.0
    %3826 = vmatpush1.msra.mxu0 0.0
    %3827 = vmatprep.subr.mxu0 0.0
    %3828 = vmatpush1.msra.mxu0 0.0
    %3829 = vmatprep.subr.mxu0 0.0
    %3830 = vmatpush1.msra.mxu0 0.0
    %3831 = vmatprep.subr.mxu0 0.0
    %3832 = vmatpush1.msra.mxu0 0.0
    %3833 = vmatprep.subr.mxu0 0.0
    %3834 = vmatpush1.msra.mxu0 0.0
    %3835 = vmatprep.subr.mxu0 0.0
    %3836 = vmatpush1.msra.mxu0 0.0
    %3837 = vmatprep.subr.mxu0 0.0
    %3838 = vmatpush1.msra.mxu0 0.0
    %3839 = vmatprep.subr.mxu0 0.0
    %3840 = vmatpush1.msra.mxu0 0.0
    %3841 = vmatprep.subr.mxu0 0.0
    %3842 = vmatpush1.msra.mxu0 0.0
    %3843 = vmatprep.subr.mxu0 0.0
    %3844 = vmatpush1.msra.mxu0 0.0
    %3845 = vmatprep.subr.mxu0 0.0
    %3846 = vmatpush1.msra.mxu0 0.0
    %3847 = vmatprep.subr.mxu0 0.0
    %3848 = vmatpush1.msra.mxu0 0.0
    %3849 = vmatprep.subr.mxu0 0.0
    %3850 = vmatpush1.msra.mxu0 0.0
    %3851 = vmatprep.subr.mxu0 0.0
    %3852 = vmatpush1.msra.mxu0 0.0
    %3853 = vmatprep.subr.mxu0 0.0
    %3854 = vmatpush1.msra.mxu0 0.0
    %3855 = vmatprep.subr.mxu0 0.0
    %3856 = vmatpush1.msra.mxu0 0.0
    %3857 = vmatprep.subr.mxu0 0.0
    %3858 = vmatpush1.msra.mxu0 0.0
    %3859 = vmatprep.subr.mxu0 0.0
    %3860 = vmatpush1.msra.mxu0 0.0
    %3861 = vmatprep.subr.mxu0 0.0
    %3862 = vmatpush1.msra.mxu0 0.0
    %3863 = vmatprep.subr.mxu0 0.0
    %3864 = vmatpush1.msra.mxu0 0.0
    %3865 = vmatprep.subr.mxu0 0.0
    %3866 = vmatpush1.msra.mxu0 0.0
    %3867 = vmatprep.subr.mxu0 0.0
    %3868 = vmatpush1.msra.mxu0 0.0
    %3869 = vmatprep.subr.mxu0 0.0
    %3870 = vmatpush1.msra.mxu0 0.0
    %3871 = vmatprep.subr.mxu0 0.0
    %3872 = vmatpush1.msra.mxu0 0.0
    %3873 = vmatprep.mubr.f32.mxu0 0.0
    %3874 = vmatmul.mubr.f32.gmra.mrb[0].mxu0 %v3227
    %v3875 = vpop.f32.mrb[0].mxu0
    %v3876 = vadd.f32 0.0, %v3875
    %v3877 = vpop.f32.mrb[0].mxu0
    %v3878 = vadd.f32 0.0, %v3877
    %3879 = vdwg.mxu0
    %v3880 = vadd.f32 %v3805, %v3876
    %v3881 = vadd.f32 %v3807, %v3878
    %3882 = vmatprep.subr.mxu0 %v363
    %3883 = vmatpush1.msra.mxu0 %v362
    %3884 = vmatprep.subr.mxu0 %v365
    %3885 = vmatpush1.msra.mxu0 %v364
    %3886 = vmatprep.subr.mxu0 %v367
    %3887 = vmatpush1.msra.mxu0 %v366
    %3888 = vmatprep.subr.mxu0 %v369
    %3889 = vmatpush1.msra.mxu0 %v368
    %3890 = vmatprep.subr.mxu0 0.0
    %3891 = vmatpush1.msra.mxu0 0.0
    %3892 = vmatprep.subr.mxu0 0.0
    %3893 = vmatpush1.msra.mxu0 0.0
    %3894 = vmatprep.subr.mxu0 0.0
    %3895 = vmatpush1.msra.mxu0 0.0
    %3896 = vmatprep.subr.mxu0 0.0
    %3897 = vmatpush1.msra.mxu0 0.0
    %3898 = vmatprep.subr.mxu0 0.0
    %3899 = vmatpush1.msra.mxu0 0.0
    %3900 = vmatprep.subr.mxu0 0.0
    %3901 = vmatpush1.msra.mxu0 0.0
    %3902 = vmatprep.subr.mxu0 0.0
    %3903 = vmatpush1.msra.mxu0 0.0
    %3904 = vmatprep.subr.mxu0 0.0
    %3905 = vmatpush1.msra.mxu0 0.0
    %3906 = vmatprep.subr.mxu0 0.0
    %3907 = vmatpush1.msra.mxu0 0.0
    %3908 = vmatprep.subr.mxu0 0.0
    %3909 = vmatpush1.msra.mxu0 0.0
    %3910 = vmatprep.subr.mxu0 0.0
    %3911 = vmatpush1.msra.mxu0 0.0
    %3912 = vmatprep.subr.mxu0 0.0
    %3913 = vmatpush1.msra.mxu0 0.0
    %3914 = vmatprep.subr.mxu0 0.0
    %3915 = vmatpush1.msra.mxu0 0.0
    %3916 = vmatprep.subr.mxu0 0.0
    %3917 = vmatpush1.msra.mxu0 0.0
    %3918 = vmatprep.subr.mxu0 0.0
    %3919 = vmatpush1.msra.mxu0 0.0
    %3920 = vmatprep.subr.mxu0 0.0
    %3921 = vmatpush1.msra.mxu0 0.0
    %3922 = vmatprep.subr.mxu0 0.0
    %3923 = vmatpush1.msra.mxu0 0.0
    %3924 = vmatprep.subr.mxu0 0.0
    %3925 = vmatpush1.msra.mxu0 0.0
    %3926 = vmatprep.subr.mxu0 0.0
    %3927 = vmatpush1.msra.mxu0 0.0
    %3928 = vmatprep.subr.mxu0 0.0
    %3929 = vmatpush1.msra.mxu0 0.0
    %3930 = vmatprep.subr.mxu0 0.0
    %3931 = vmatpush1.msra.mxu0 0.0
    %3932 = vmatprep.subr.mxu0 0.0
    %3933 = vmatpush1.msra.mxu0 0.0
    %3934 = vmatprep.subr.mxu0 0.0
    %3935 = vmatpush1.msra.mxu0 0.0
    %3936 = vmatprep.subr.mxu0 0.0
    %3937 = vmatpush1.msra.mxu0 0.0
    %3938 = vmatprep.subr.mxu0 0.0
    %3939 = vmatpush1.msra.mxu0 0.0
    %3940 = vmatprep.subr.mxu0 0.0
    %3941 = vmatpush1.msra.mxu0 0.0
    %3942 = vmatprep.subr.mxu0 0.0
    %3943 = vmatpush1.msra.mxu0 0.0
    %3944 = vmatprep.subr.mxu0 0.0
    %3945 = vmatpush1.msra.mxu0 0.0
    %3946 = vmatprep.mubr.f32.mxu0 0.0
    %3947 = vmatmul.mubr.f32.gmra.mrb[0].mxu0 %v3592
    %v3948 = vpop.f32.mrb[0].mxu0
    %v3949 = vadd.f32 0.0, %v3948
    %v3950 = vpop.f32.mrb[0].mxu0
    %v3951 = vadd.f32 0.0, %v3950
    %3952 = vdwg.mxu0
    %v3953 = vadd.f32 %v3880, %v3949
    %v3954 = vadd.f32 %v3881, %v3951
    %v3955 = vld [vmem:[%s2782 + $0x1] sm:$0x3f]
    %v3957 = vsel %vm123, %v3955, 0
    %3959 = vmatprep.subr.mxu0 %v449
    %3960 = vmatpush1.msra.mxu0 %v448
    %3961 = vmatprep.subr.mxu0 %v451
    %3962 = vmatpush1.msra.mxu0 %v450
    %3963 = vmatprep.subr.mxu0 %v453
    %3964 = vmatpush1.msra.mxu0 %v452
    %3965 = vmatprep.subr.mxu0 %v455
    %3966 = vmatpush1.msra.mxu0 %v454
    %3967 = vmatprep.subr.mxu0 0.0
    %3968 = vmatpush1.msra.mxu0 0.0
    %3969 = vmatprep.subr.mxu0 0.0
    %3970 = vmatpush1.msra.mxu0 0.0
    %3971 = vmatprep.subr.mxu0 0.0
    %3972 = vmatpush1.msra.mxu0 0.0
    %3973 = vmatprep.subr.mxu0 0.0
    %3974 = vmatpush1.msra.mxu0 0.0
    %3975 = vmatprep.subr.mxu0 0.0
    %3976 = vmatpush1.msra.mxu0 0.0
    %3977 = vmatprep.subr.mxu0 0.0
    %3978 = vmatpush1.msra.mxu0 0.0
    %3979 = vmatprep.subr.mxu0 0.0
    %3980 = vmatpush1.msra.mxu0 0.0
    %3981 = vmatprep.subr.mxu0 0.0
    %3982 = vmatpush1.msra.mxu0 0.0
    %3983 = vmatprep.subr.mxu0 0.0
    %3984 = vmatpush1.msra.mxu0 0.0
    %3985 = vmatprep.subr.mxu0 0.0
    %3986 = vmatpush1.msra.mxu0 0.0
    %3987 = vmatprep.subr.mxu0 0.0
    %3988 = vmatpush1.msra.mxu0 0.0
    %3989 = vmatprep.subr.mxu0 0.0
    %3990 = vmatpush1.msra.mxu0 0.0
    %3991 = vmatprep.subr.mxu0 0.0
    %3992 = vmatpush1.msra.mxu0 0.0
    %3993 = vmatprep.subr.mxu0 0.0
    %3994 = vmatpush1.msra.mxu0 0.0
    %3995 = vmatprep.subr.mxu0 0.0
    %3996 = vmatpush1.msra.mxu0 0.0
    %3997 = vmatprep.subr.mxu0 0.0
    %3998 = vmatpush1.msra.mxu0 0.0
    %3999 = vmatprep.subr.mxu0 0.0
    %4000 = vmatpush1.msra.mxu0 0.0
    %4001 = vmatprep.subr.mxu0 0.0
    %4002 = vmatpush1.msra.mxu0 0.0
    %4003 = vmatprep.subr.mxu0 0.0
    %4004 = vmatpush1.msra.mxu0 0.0
    %4005 = vmatprep.subr.mxu0 0.0
    %4006 = vmatpush1.msra.mxu0 0.0
    %4007 = vmatprep.subr.mxu0 0.0
    %4008 = vmatpush1.msra.mxu0 0.0
    %4009 = vmatprep.subr.mxu0 0.0
    %4010 = vmatpush1.msra.mxu0 0.0
    %4011 = vmatprep.subr.mxu0 0.0
    %4012 = vmatpush1.msra.mxu0 0.0
    %4013 = vmatprep.subr.mxu0 0.0
    %4014 = vmatpush1.msra.mxu0 0.0
    %4015 = vmatprep.subr.mxu0 0.0
    %4016 = vmatpush1.msra.mxu0 0.0
    %4017 = vmatprep.subr.mxu0 0.0
    %4018 = vmatpush1.msra.mxu0 0.0
    %4019 = vmatprep.subr.mxu0 0.0
    %4020 = vmatpush1.msra.mxu0 0.0
    %4021 = vmatprep.subr.mxu0 0.0
    %4022 = vmatpush1.msra.mxu0 0.0
    %4023 = vmatprep.mubr.f32.mxu0 0.0
    %4024 = vmatmul.mubr.f32.gmra.mrb[0].mxu0 %v3957
    %v4025 = vpop.f32.mrb[0].mxu0
    %v4026 = vadd.f32 0.0, %v4025
    %v4027 = vpop.f32.mrb[0].mxu0
    %v4028 = vadd.f32 0.0, %v4027
    %4029 = vdwg.mxu0
    %v4030 = vadd.f32 %v3953, %v4026
    %v4031 = vadd.f32 %v3954, %v4028
    %v4032 = vmax.f32 %v2935, %v2936
    %v4033 = vmax.f32 %v3300, %v3301
    %v4034 = vmax.f32 %v4032, %v4033
    %v4035 = vadd.f32 %v4034, %v1635
    %v4036 = vmax.f32 %v4035, 0.0
    %v4037 = vmax.f32 %v3665, %v3666
    %v4038 = vmax.f32 %v4030, %v4031
    %v4039 = vmax.f32 %v4037, %v4038
    %v4040 = vadd.f32 %v4039, %v1635
    %v4041 = vmax.f32 %v4040, 0.0
    %v4043 = vrot.slane %v4036, 1
    %4045 = vmatprep.subr.mxu0 %v1678
    %4046 = vmatpush1.msra.mxu0 %v1677
    %4047 = vmatprep.subr.mxu0 %v1680
    %4048 = vmatpush1.msra.mxu0 %v1679
    %4049 = vmatprep.subr.mxu0 %v1682
    %4050 = vmatpush1.msra.mxu0 %v1681
    %4051 = vmatprep.subr.mxu0 %v1684
    %4052 = vmatpush1.msra.mxu0 %v1683
    %4053 = vmatprep.subr.mxu0 %v1686
    %4054 = vmatpush1.msra.mxu0 %v1685
    %4055 = vmatprep.subr.mxu0 %v1688
    %4056 = vmatpush1.msra.mxu0 %v1687
    %4057 = vmatprep.subr.mxu0 %v1690
    %4058 = vmatpush1.msra.mxu0 %v1689
    %4059 = vmatprep.subr.mxu0 %v1692
    %4060 = vmatpush1.msra.mxu0 %v1691
    %4061 = vmatprep.subr.mxu0 %v1694
    %4062 = vmatpush1.msra.mxu0 %v1693
    %4063 = vmatprep.subr.mxu0 %v1696
    %4064 = vmatpush1.msra.mxu0 %v1695
    %4065 = vmatprep.subr.mxu0 %v1698
    %4066 = vmatpush1.msra.mxu0 %v1697
    %4067 = vmatprep.subr.mxu0 %v1700
    %4068 = vmatpush1.msra.mxu0 %v1699
    %4069 = vmatprep.subr.mxu0 %v1702
    %4070 = vmatpush1.msra.mxu0 %v1701
    %4071 = vmatprep.subr.mxu0 %v1704
    %4072 = vmatpush1.msra.mxu0 %v1703
    %4073 = vmatprep.subr.mxu0 %v1706
    %4074 = vmatpush1.msra.mxu0 %v1705
    %4075 = vmatprep.subr.mxu0 %v1708
    %4076 = vmatpush1.msra.mxu0 %v1707
    %4077 = vmatprep.subr.mxu0 0.0
    %4078 = vmatpush1.msra.mxu0 0.0
    %4079 = vmatprep.subr.mxu0 0.0
    %4080 = vmatpush1.msra.mxu0 0.0
    %4081 = vmatprep.subr.mxu0 0.0
    %4082 = vmatpush1.msra.mxu0 0.0
    %4083 = vmatprep.subr.mxu0 0.0
    %4084 = vmatpush1.msra.mxu0 0.0
    %4085 = vmatprep.subr.mxu0 0.0
    %4086 = vmatpush1.msra.mxu0 0.0
    %4087 = vmatprep.subr.mxu0 0.0
    %4088 = vmatpush1.msra.mxu0 0.0
    %4089 = vmatprep.subr.mxu0 0.0
    %4090 = vmatpush1.msra.mxu0 0.0
    %4091 = vmatprep.subr.mxu0 0.0
    %4092 = vmatpush1.msra.mxu0 0.0
    %4093 = vmatprep.subr.mxu0 0.0
    %4094 = vmatpush1.msra.mxu0 0.0
    %4095 = vmatprep.subr.mxu0 0.0
    %4096 = vmatpush1.msra.mxu0 0.0
    %4097 = vmatprep.subr.mxu0 0.0
    %4098 = vmatpush1.msra.mxu0 0.0
    %4099 = vmatprep.subr.mxu0 0.0
    %4100 = vmatpush1.msra.mxu0 0.0
    %4101 = vmatprep.subr.mxu0 0.0
    %4102 = vmatpush1.msra.mxu0 0.0
    %4103 = vmatprep.subr.mxu0 0.0
    %4104 = vmatpush1.msra.mxu0 0.0
    %4105 = vmatprep.subr.mxu0 0.0
    %4106 = vmatpush1.msra.mxu0 0.0
    %4107 = vmatprep.subr.mxu0 0.0
    %4108 = vmatpush1.msra.mxu0 0.0
    %4109 = vmatprep.mubr.f32.mxu0 0.0
    %4110 = vmatmul.mubr.f32.gmra.mrb[0].mxu0 %v4043
    %v4111 = vpop.f32.mrb[0].mxu0
    %v4112 = vadd.f32 0.0, %v4111
    %v4113 = vpop.f32.mrb[0].mxu0
    %v4114 = vadd.f32 0.0, %v4113
    %4115 = vdwg.mxu0
    %4116 = vmatprep.subr.mxu0 %v1645
    %4117 = vmatpush1.msra.mxu0 %v1644
    %4118 = vmatprep.subr.mxu0 %v1647
    %4119 = vmatpush1.msra.mxu0 %v1646
    %4120 = vmatprep.subr.mxu0 %v1649
    %4121 = vmatpush1.msra.mxu0 %v1648
    %4122 = vmatprep.subr.mxu0 %v1651
    %4123 = vmatpush1.msra.mxu0 %v1650
    %4124 = vmatprep.subr.mxu0 %v1653
    %4125 = vmatpush1.msra.mxu0 %v1652
    %4126 = vmatprep.subr.mxu0 %v1655
    %4127 = vmatpush1.msra.mxu0 %v1654
    %4128 = vmatprep.subr.mxu0 %v1657
    %4129 = vmatpush1.msra.mxu0 %v1656
    %4130 = vmatprep.subr.mxu0 %v1659
    %4131 = vmatpush1.msra.mxu0 %v1658
    %4132 = vmatprep.subr.mxu0 %v1661
    %4133 = vmatpush1.msra.mxu0 %v1660
    %4134 = vmatprep.subr.mxu0 %v1663
    %4135 = vmatpush1.msra.mxu0 %v1662
    %4136 = vmatprep.subr.mxu0 %v1665
    %4137 = vmatpush1.msra.mxu0 %v1664
    %4138 = vmatprep.subr.mxu0 %v1667
    %4139 = vmatpush1.msra.mxu0 %v1666
    %4140 = vmatprep.subr.mxu0 %v1669
    %4141 = vmatpush1.msra.mxu0 %v1668
    %4142 = vmatprep.subr.mxu0 %v1671
    %4143 = vmatpush1.msra.mxu0 %v1670
    %4144 = vmatprep.subr.mxu0 %v1673
    %4145 = vmatpush1.msra.mxu0 %v1672
    %4146 = vmatprep.subr.mxu0 %v1675
    %4147 = vmatpush1.msra.mxu0 %v1674
    %4148 = vmatprep.subr.mxu0 0.0
    %4149 = vmatpush1.msra.mxu0 0.0
    %4150 = vmatprep.subr.mxu0 0.0
    %4151 = vmatpush1.msra.mxu0 0.0
    %4152 = vmatprep.subr.mxu0 0.0
    %4153 = vmatpush1.msra.mxu0 0.0
    %4154 = vmatprep.subr.mxu0 0.0
    %4155 = vmatpush1.msra.mxu0 0.0
    %4156 = vmatprep.subr.mxu0 0.0
    %4157 = vmatpush1.msra.mxu0 0.0
    %4158 = vmatprep.subr.mxu0 0.0
    %4159 = vmatpush1.msra.mxu0 0.0
    %4160 = vmatprep.subr.mxu0 0.0
    %4161 = vmatpush1.msra.mxu0 0.0
    %4162 = vmatprep.subr.mxu0 0.0
    %4163 = vmatpush1.msra.mxu0 0.0
    %4164 = vmatprep.subr.mxu0 0.0
    %4165 = vmatpush1.msra.mxu0 0.0
    %4166 = vmatprep.subr.mxu0 0.0
    %4167 = vmatpush1.msra.mxu0 0.0
    %4168 = vmatprep.subr.mxu0 0.0
    %4169 = vmatpush1.msra.mxu0 0.0
    %4170 = vmatprep.subr.mxu0 0.0
    %4171 = vmatpush1.msra.mxu0 0.0
    %4172 = vmatprep.subr.mxu0 0.0
    %4173 = vmatpush1.msra.mxu0 0.0
    %4174 = vmatprep.subr.mxu0 0.0
    %4175 = vmatpush1.msra.mxu0 0.0
    %4176 = vmatprep.subr.mxu0 0.0
    %4177 = vmatpush1.msra.mxu0 0.0
    %4178 = vmatprep.subr.mxu0 0.0
    %4179 = vmatpush1.msra.mxu0 0.0
    %4180 = vmatprep.mubr.f32.mxu0 0.0
    %4181 = vmatmul.mubr.f32.gmra.mrb[0].mxu0 %v4036
    %v4182 = vpop.f32.mrb[0].mxu0
    %v4183 = vadd.f32 %v4112, %v4182
    %v4184 = vpop.f32.mrb[0].mxu0
    %v4185 = vadd.f32 %v4114, %v4184
    %4186 = vdwg.mxu0
    %v4188 = vrot.slane %v4041, 1
    %4190 = vmatprep.subr.mxu0 %v1678
    %4191 = vmatpush1.msra.mxu0 %v1677
    %4192 = vmatprep.subr.mxu0 %v1680
    %4193 = vmatpush1.msra.mxu0 %v1679
    %4194 = vmatprep.subr.mxu0 %v1682
    %4195 = vmatpush1.msra.mxu0 %v1681
    %4196 = vmatprep.subr.mxu0 %v1684
    %4197 = vmatpush1.msra.mxu0 %v1683
    %4198 = vmatprep.subr.mxu0 %v1686
    %4199 = vmatpush1.msra.mxu0 %v1685
    %4200 = vmatprep.subr.mxu0 %v1688
    %4201 = vmatpush1.msra.mxu0 %v1687
    %4202 = vmatprep.subr.mxu0 %v1690
    %4203 = vmatpush1.msra.mxu0 %v1689
    %4204 = vmatprep.subr.mxu0 %v1692
    %4205 = vmatpush1.msra.mxu0 %v1691
    %4206 = vmatprep.subr.mxu0 %v1694
    %4207 = vmatpush1.msra.mxu0 %v1693
    %4208 = vmatprep.subr.mxu0 %v1696
    %4209 = vmatpush1.msra.mxu0 %v1695
    %4210 = vmatprep.subr.mxu0 %v1698
    %4211 = vmatpush1.msra.mxu0 %v1697
    %4212 = vmatprep.subr.mxu0 %v1700
    %4213 = vmatpush1.msra.mxu0 %v1699
    %4214 = vmatprep.subr.mxu0 %v1702
    %4215 = vmatpush1.msra.mxu0 %v1701
    %4216 = vmatprep.subr.mxu0 %v1704
    %4217 = vmatpush1.msra.mxu0 %v1703
    %4218 = vmatprep.subr.mxu0 %v1706
    %4219 = vmatpush1.msra.mxu0 %v1705
    %4220 = vmatprep.subr.mxu0 %v1708
    %4221 = vmatpush1.msra.mxu0 %v1707
    %4222 = vmatprep.subr.mxu0 0.0
    %4223 = vmatpush1.msra.mxu0 0.0
    %4224 = vmatprep.subr.mxu0 0.0
    %4225 = vmatpush1.msra.mxu0 0.0
    %4226 = vmatprep.subr.mxu0 0.0
    %4227 = vmatpush1.msra.mxu0 0.0
    %4228 = vmatprep.subr.mxu0 0.0
    %4229 = vmatpush1.msra.mxu0 0.0
    %4230 = vmatprep.subr.mxu0 0.0
    %4231 = vmatpush1.msra.mxu0 0.0
    %4232 = vmatprep.subr.mxu0 0.0
    %4233 = vmatpush1.msra.mxu0 0.0
    %4234 = vmatprep.subr.mxu0 0.0
    %4235 = vmatpush1.msra.mxu0 0.0
    %4236 = vmatprep.subr.mxu0 0.0
    %4237 = vmatpush1.msra.mxu0 0.0
    %4238 = vmatprep.subr.mxu0 0.0
    %4239 = vmatpush1.msra.mxu0 0.0
    %4240 = vmatprep.subr.mxu0 0.0
    %4241 = vmatpush1.msra.mxu0 0.0
    %4242 = vmatprep.subr.mxu0 0.0
    %4243 = vmatpush1.msra.mxu0 0.0
    %4244 = vmatprep.subr.mxu0 0.0
    %4245 = vmatpush1.msra.mxu0 0.0
    %4246 = vmatprep.subr.mxu0 0.0
    %4247 = vmatpush1.msra.mxu0 0.0
    %4248 = vmatprep.subr.mxu0 0.0
    %4249 = vmatpush1.msra.mxu0 0.0
    %4250 = vmatprep.subr.mxu0 0.0
    %4251 = vmatpush1.msra.mxu0 0.0
    %4252 = vmatprep.subr.mxu0 0.0
    %4253 = vmatpush1.msra.mxu0 0.0
    %4254 = vmatprep.mubr.f32.mxu0 0.0
    %4255 = vmatmul.mubr.f32.gmra.mrb[0].mxu0 %v4188
    %v4256 = vpop.f32.mrb[0].mxu0
    %v4257 = vadd.f32 0.0, %v4256
    %v4258 = vpop.f32.mrb[0].mxu0
    %v4259 = vadd.f32 0.0, %v4258
    %4260 = vdwg.mxu0
    %4261 = vmatprep.subr.mxu0 %v1645
    %4262 = vmatpush1.msra.mxu0 %v1644
    %4263 = vmatprep.subr.mxu0 %v1647
    %4264 = vmatpush1.msra.mxu0 %v1646
    %4265 = vmatprep.subr.mxu0 %v1649
    %4266 = vmatpush1.msra.mxu0 %v1648
    %4267 = vmatprep.subr.mxu0 %v1651
    %4268 = vmatpush1.msra.mxu0 %v1650
    %4269 = vmatprep.subr.mxu0 %v1653
    %4270 = vmatpush1.msra.mxu0 %v1652
    %4271 = vmatprep.subr.mxu0 %v1655
    %4272 = vmatpush1.msra.mxu0 %v1654
    %4273 = vmatprep.subr.mxu0 %v1657
    %4274 = vmatpush1.msra.mxu0 %v1656
    %4275 = vmatprep.subr.mxu0 %v1659
    %4276 = vmatpush1.msra.mxu0 %v1658
    %4277 = vmatprep.subr.mxu0 %v1661
    %4278 = vmatpush1.msra.mxu0 %v1660
    %4279 = vmatprep.subr.mxu0 %v1663
    %4280 = vmatpush1.msra.mxu0 %v1662
    %4281 = vmatprep.subr.mxu0 %v1665
    %4282 = vmatpush1.msra.mxu0 %v1664
    %4283 = vmatprep.subr.mxu0 %v1667
    %4284 = vmatpush1.msra.mxu0 %v1666
    %4285 = vmatprep.subr.mxu0 %v1669
    %4286 = vmatpush1.msra.mxu0 %v1668
    %4287 = vmatprep.subr.mxu0 %v1671
    %4288 = vmatpush1.msra.mxu0 %v1670
    %4289 = vmatprep.subr.mxu0 %v1673
    %4290 = vmatpush1.msra.mxu0 %v1672
    %4291 = vmatprep.subr.mxu0 %v1675
    %4292 = vmatpush1.msra.mxu0 %v1674
    %4293 = vmatprep.subr.mxu0 0.0
    %4294 = vmatpush1.msra.mxu0 0.0
    %4295 = vmatprep.subr.mxu0 0.0
    %4296 = vmatpush1.msra.mxu0 0.0
    %4297 = vmatprep.subr.mxu0 0.0
    %4298 = vmatpush1.msra.mxu0 0.0
    %4299 = vmatprep.subr.mxu0 0.0
    %4300 = vmatpush1.msra.mxu0 0.0
    %4301 = vmatprep.subr.mxu0 0.0
    %4302 = vmatpush1.msra.mxu0 0.0
    %4303 = vmatprep.subr.mxu0 0.0
    %4304 = vmatpush1.msra.mxu0 0.0
    %4305 = vmatprep.subr.mxu0 0.0
    %4306 = vmatpush1.msra.mxu0 0.0
    %4307 = vmatprep.subr.mxu0 0.0
    %4308 = vmatpush1.msra.mxu0 0.0
    %4309 = vmatprep.subr.mxu0 0.0
    %4310 = vmatpush1.msra.mxu0 0.0
    %4311 = vmatprep.subr.mxu0 0.0
    %4312 = vmatpush1.msra.mxu0 0.0
    %4313 = vmatprep.subr.mxu0 0.0
    %4314 = vmatpush1.msra.mxu0 0.0
    %4315 = vmatprep.subr.mxu0 0.0
    %4316 = vmatpush1.msra.mxu0 0.0
    %4317 = vmatprep.subr.mxu0 0.0
    %4318 = vmatpush1.msra.mxu0 0.0
    %4319 = vmatprep.subr.mxu0 0.0
    %4320 = vmatpush1.msra.mxu0 0.0
    %4321 = vmatprep.subr.mxu0 0.0
    %4322 = vmatpush1.msra.mxu0 0.0
    %4323 = vmatprep.subr.mxu0 0.0
    %4324 = vmatpush1.msra.mxu0 0.0
    %4325 = vmatprep.mubr.f32.mxu0 0.0
    %4326 = vmatmul.mubr.f32.gmra.mrb[0].mxu0 %v4041
    %v4327 = vpop.f32.mrb[0].mxu0
    %v4328 = vadd.f32 %v4257, %v4327
    %v4329 = vpop.f32.mrb[0].mxu0
    %v4330 = vadd.f32 %v4259, %v4329
    %4331 = vdwg.mxu0
    %v4332 = vrot.slane %v4036, 2
    %4334 = vmatprep.subr.mxu0 %v2001
    %4335 = vmatpush1.msra.mxu0 %v2000
    %4336 = vmatprep.subr.mxu0 %v2003
    %4337 = vmatpush1.msra.mxu0 %v2002
    %4338 = vmatprep.subr.mxu0 %v2005
    %4339 = vmatpush1.msra.mxu0 %v2004
    %4340 = vmatprep.subr.mxu0 %v2007
    %4341 = vmatpush1.msra.mxu0 %v2006
    %4342 = vmatprep.subr.mxu0 %v2009
    %4343 = vmatpush1.msra.mxu0 %v2008
    %4344 = vmatprep.subr.mxu0 %v2011
    %4345 = vmatpush1.msra.mxu0 %v2010
    %4346 = vmatprep.subr.mxu0 %v2013
    %4347 = vmatpush1.msra.mxu0 %v2012
    %4348 = vmatprep.subr.mxu0 %v2015
    %4349 = vmatpush1.msra.mxu0 %v2014
    %4350 = vmatprep.subr.mxu0 %v2017
    %4351 = vmatpush1.msra.mxu0 %v2016
    %4352 = vmatprep.subr.mxu0 %v2019
    %4353 = vmatpush1.msra.mxu0 %v2018
    %4354 = vmatprep.subr.mxu0 %v2021
    %4355 = vmatpush1.msra.mxu0 %v2020
    %4356 = vmatprep.subr.mxu0 %v2023
    %4357 = vmatpush1.msra.mxu0 %v2022
    %4358 = vmatprep.subr.mxu0 %v2025
    %4359 = vmatpush1.msra.mxu0 %v2024
    %4360 = vmatprep.subr.mxu0 %v2027
    %4361 = vmatpush1.msra.mxu0 %v2026
    %4362 = vmatprep.subr.mxu0 %v2029
    %4363 = vmatpush1.msra.mxu0 %v2028
    %4364 = vmatprep.subr.mxu0 %v2031
    %4365 = vmatpush1.msra.mxu0 %v2030
    %4366 = vmatprep.subr.mxu0 0.0
    %4367 = vmatpush1.msra.mxu0 0.0
    %4368 = vmatprep.subr.mxu0 0.0
    %4369 = vmatpush1.msra.mxu0 0.0
    %4370 = vmatprep.subr.mxu0 0.0
    %4371 = vmatpush1.msra.mxu0 0.0
    %4372 = vmatprep.subr.mxu0 0.0
    %4373 = vmatpush1.msra.mxu0 0.0
    %4374 = vmatprep.subr.mxu0 0.0
    %4375 = vmatpush1.msra.mxu0 0.0
    %4376 = vmatprep.subr.mxu0 0.0
    %4377 = vmatpush1.msra.mxu0 0.0
    %4378 = vmatprep.subr.mxu0 0.0
    %4379 = vmatpush1.msra.mxu0 0.0
    %4380 = vmatprep.subr.mxu0 0.0
    %4381 = vmatpush1.msra.mxu0 0.0
    %4382 = vmatprep.subr.mxu0 0.0
    %4383 = vmatpush1.msra.mxu0 0.0
    %4384 = vmatprep.subr.mxu0 0.0
    %4385 = vmatpush1.msra.mxu0 0.0
    %4386 = vmatprep.subr.mxu0 0.0
    %4387 = vmatpush1.msra.mxu0 0.0
    %4388 = vmatprep.subr.mxu0 0.0
    %4389 = vmatpush1.msra.mxu0 0.0
    %4390 = vmatprep.subr.mxu0 0.0
    %4391 = vmatpush1.msra.mxu0 0.0
    %4392 = vmatprep.subr.mxu0 0.0
    %4393 = vmatpush1.msra.mxu0 0.0
    %4394 = vmatprep.subr.mxu0 0.0
    %4395 = vmatpush1.msra.mxu0 0.0
    %4396 = vmatprep.subr.mxu0 0.0
    %4397 = vmatpush1.msra.mxu0 0.0
    %4398 = vmatprep.mubr.f32.mxu0 0.0
    %4399 = vmatmul.mubr.f32.gmra.mrb[0].mxu0 %v4332
    %v4400 = vpop.f32.mrb[0].mxu0
    %v4401 = vadd.f32 0.0, %v4400
    %v4402 = vpop.f32.mrb[0].mxu0
    %v4403 = vadd.f32 0.0, %v4402
    %4404 = vdwg.mxu0
    %v4405 = vadd.f32 %v4183, %v4401
    %v4406 = vadd.f32 %v4185, %v4403
    %v4407 = vrot.slane %v4041, 2
    %4409 = vmatprep.subr.mxu0 %v2001
    %4410 = vmatpush1.msra.mxu0 %v2000
    %4411 = vmatprep.subr.mxu0 %v2003
    %4412 = vmatpush1.msra.mxu0 %v2002
    %4413 = vmatprep.subr.mxu0 %v2005
    %4414 = vmatpush1.msra.mxu0 %v2004
    %4415 = vmatprep.subr.mxu0 %v2007
    %4416 = vmatpush1.msra.mxu0 %v2006
    %4417 = vmatprep.subr.mxu0 %v2009
    %4418 = vmatpush1.msra.mxu0 %v2008
    %4419 = vmatprep.subr.mxu0 %v2011
    %4420 = vmatpush1.msra.mxu0 %v2010
    %4421 = vmatprep.subr.mxu0 %v2013
    %4422 = vmatpush1.msra.mxu0 %v2012
    %4423 = vmatprep.subr.mxu0 %v2015
    %4424 = vmatpush1.msra.mxu0 %v2014
    %4425 = vmatprep.subr.mxu0 %v2017
    %4426 = vmatpush1.msra.mxu0 %v2016
    %4427 = vmatprep.subr.mxu0 %v2019
    %4428 = vmatpush1.msra.mxu0 %v2018
    %4429 = vmatprep.subr.mxu0 %v2021
    %4430 = vmatpush1.msra.mxu0 %v2020
    %4431 = vmatprep.subr.mxu0 %v2023
    %4432 = vmatpush1.msra.mxu0 %v2022
    %4433 = vmatprep.subr.mxu0 %v2025
    %4434 = vmatpush1.msra.mxu0 %v2024
    %4435 = vmatprep.subr.mxu0 %v2027
    %4436 = vmatpush1.msra.mxu0 %v2026
    %4437 = vmatprep.subr.mxu0 %v2029
    %4438 = vmatpush1.msra.mxu0 %v2028
    %4439 = vmatprep.subr.mxu0 %v2031
    %4440 = vmatpush1.msra.mxu0 %v2030
    %4441 = vmatprep.subr.mxu0 0.0
    %4442 = vmatpush1.msra.mxu0 0.0
    %4443 = vmatprep.subr.mxu0 0.0
    %4444 = vmatpush1.msra.mxu0 0.0
    %4445 = vmatprep.subr.mxu0 0.0
    %4446 = vmatpush1.msra.mxu0 0.0
    %4447 = vmatprep.subr.mxu0 0.0
    %4448 = vmatpush1.msra.mxu0 0.0
    %4449 = vmatprep.subr.mxu0 0.0
    %4450 = vmatpush1.msra.mxu0 0.0
    %4451 = vmatprep.subr.mxu0 0.0
    %4452 = vmatpush1.msra.mxu0 0.0
    %4453 = vmatprep.subr.mxu0 0.0
    %4454 = vmatpush1.msra.mxu0 0.0
    %4455 = vmatprep.subr.mxu0 0.0
    %4456 = vmatpush1.msra.mxu0 0.0
    %4457 = vmatprep.subr.mxu0 0.0
    %4458 = vmatpush1.msra.mxu0 0.0
    %4459 = vmatprep.subr.mxu0 0.0
    %4460 = vmatpush1.msra.mxu0 0.0
    %4461 = vmatprep.subr.mxu0 0.0
    %4462 = vmatpush1.msra.mxu0 0.0
    %4463 = vmatprep.subr.mxu0 0.0
    %4464 = vmatpush1.msra.mxu0 0.0
    %4465 = vmatprep.subr.mxu0 0.0
    %4466 = vmatpush1.msra.mxu0 0.0
    %4467 = vmatprep.subr.mxu0 0.0
    %4468 = vmatpush1.msra.mxu0 0.0
    %4469 = vmatprep.subr.mxu0 0.0
    %4470 = vmatpush1.msra.mxu0 0.0
    %4471 = vmatprep.subr.mxu0 0.0
    %4472 = vmatpush1.msra.mxu0 0.0
    %4473 = vmatprep.mubr.f32.mxu0 0.0
    %4474 = vmatmul.mubr.f32.gmra.mrb[0].mxu0 %v4407
    %v4475 = vpop.f32.mrb[0].mxu0
    %v4476 = vadd.f32 0.0, %v4475
    %v4477 = vpop.f32.mrb[0].mxu0
    %v4478 = vadd.f32 0.0, %v4477
    %4479 = vdwg.mxu0
    %v4480 = vadd.f32 %v4328, %v4476
    %v4481 = vadd.f32 %v4330, %v4478
    %4482 = vmatprep.subr.mxu0 %v2184
    %4483 = vmatpush1.msra.mxu0 %v2183
    %4484 = vmatprep.subr.mxu0 %v2186
    %4485 = vmatpush1.msra.mxu0 %v2185
    %4486 = vmatprep.subr.mxu0 %v2188
    %4487 = vmatpush1.msra.mxu0 %v2187
    %4488 = vmatprep.subr.mxu0 %v2190
    %4489 = vmatpush1.msra.mxu0 %v2189
    %4490 = vmatprep.subr.mxu0 %v2192
    %4491 = vmatpush1.msra.mxu0 %v2191
    %4492 = vmatprep.subr.mxu0 %v2194
    %4493 = vmatpush1.msra.mxu0 %v2193
    %4494 = vmatprep.subr.mxu0 %v2196
    %4495 = vmatpush1.msra.mxu0 %v2195
    %4496 = vmatprep.subr.mxu0 %v2198
    %4497 = vmatpush1.msra.mxu0 %v2197
    %4498 = vmatprep.subr.mxu0 %v2200
    %4499 = vmatpush1.msra.mxu0 %v2199
    %4500 = vmatprep.subr.mxu0 %v2202
    %4501 = vmatpush1.msra.mxu0 %v2201
    %4502 = vmatprep.subr.mxu0 %v2204
    %4503 = vmatpush1.msra.mxu0 %v2203
    %4504 = vmatprep.subr.mxu0 %v2206
    %4505 = vmatpush1.msra.mxu0 %v2205
    %4506 = vmatprep.subr.mxu0 %v2208
    %4507 = vmatpush1.msra.mxu0 %v2207
    %4508 = vmatprep.subr.mxu0 %v2210
    %4509 = vmatpush1.msra.mxu0 %v2209
    %4510 = vmatprep.subr.mxu0 %v2212
    %4511 = vmatpush1.msra.mxu0 %v2211
    %4512 = vmatprep.subr.mxu0 %v2214
    %4513 = vmatpush1.msra.mxu0 %v2213
    %4514 = vmatprep.subr.mxu0 0.0
    %4515 = vmatpush1.msra.mxu0 0.0
    %4516 = vmatprep.subr.mxu0 0.0
    %4517 = vmatpush1.msra.mxu0 0.0
    %4518 = vmatprep.subr.mxu0 0.0
    %4519 = vmatpush1.msra.mxu0 0.0
    %4520 = vmatprep.subr.mxu0 0.0
    %4521 = vmatpush1.msra.mxu0 0.0
    %4522 = vmatprep.subr.mxu0 0.0
    %4523 = vmatpush1.msra.mxu0 0.0
    %4524 = vmatprep.subr.mxu0 0.0
    %4525 = vmatpush1.msra.mxu0 0.0
    %4526 = vmatprep.subr.mxu0 0.0
    %4527 = vmatpush1.msra.mxu0 0.0
    %4528 = vmatprep.subr.mxu0 0.0
    %4529 = vmatpush1.msra.mxu0 0.0
    %4530 = vmatprep.subr.mxu0 0.0
    %4531 = vmatpush1.msra.mxu0 0.0
    %4532 = vmatprep.subr.mxu0 0.0
    %4533 = vmatpush1.msra.mxu0 0.0
    %4534 = vmatprep.subr.mxu0 0.0
    %4535 = vmatpush1.msra.mxu0 0.0
    %4536 = vmatprep.subr.mxu0 0.0
    %4537 = vmatpush1.msra.mxu0 0.0
    %4538 = vmatprep.subr.mxu0 0.0
    %4539 = vmatpush1.msra.mxu0 0.0
    %4540 = vmatprep.subr.mxu0 0.0
    %4541 = vmatpush1.msra.mxu0 0.0
    %4542 = vmatprep.subr.mxu0 0.0
    %4543 = vmatpush1.msra.mxu0 0.0
    %4544 = vmatprep.subr.mxu0 0.0
    %4545 = vmatpush1.msra.mxu0 0.0
    %4546 = vmatprep.mubr.f32.mxu0 0.0
    %4547 = vmatmul.mubr.f32.gmra.mrb[0].mxu0 %v4041
    %v4548 = vpop.f32.mrb[0].mxu0
    %v4549 = vadd.f32 0.0, %v4548
    %v4550 = vpop.f32.mrb[0].mxu0
    %v4551 = vadd.f32 0.0, %v4550
    %4552 = vdwg.mxu0
    %v4553 = vadd.f32 %v4405, %v4549
    %v4554 = vadd.f32 %v4406, %v4551
    %4555 = vmatprep.subr.mxu0 %v2184
    %4556 = vmatpush1.msra.mxu0 %v2183
    %4557 = vmatprep.subr.mxu0 %v2186
    %4558 = vmatpush1.msra.mxu0 %v2185
    %4559 = vmatprep.subr.mxu0 %v2188
    %4560 = vmatpush1.msra.mxu0 %v2187
    %4561 = vmatprep.subr.mxu0 %v2190
    %4562 = vmatpush1.msra.mxu0 %v2189
    %4563 = vmatprep.subr.mxu0 %v2192
    %4564 = vmatpush1.msra.mxu0 %v2191
    %4565 = vmatprep.subr.mxu0 %v2194
    %4566 = vmatpush1.msra.mxu0 %v2193
    %4567 = vmatprep.subr.mxu0 %v2196
    %4568 = vmatpush1.msra.mxu0 %v2195
    %4569 = vmatprep.subr.mxu0 %v2198
    %4570 = vmatpush1.msra.mxu0 %v2197
    %4571 = vmatprep.subr.mxu0 %v2200
    %4572 = vmatpush1.msra.mxu0 %v2199
    %4573 = vmatprep.subr.mxu0 %v2202
    %4574 = vmatpush1.msra.mxu0 %v2201
    %4575 = vmatprep.subr.mxu0 %v2204
    %4576 = vmatpush1.msra.mxu0 %v2203
    %4577 = vmatprep.subr.mxu0 %v2206
    %4578 = vmatpush1.msra.mxu0 %v2205
    %4579 = vmatprep.subr.mxu0 %v2208
    %4580 = vmatpush1.msra.mxu0 %v2207
    %4581 = vmatprep.subr.mxu0 %v2210
    %4582 = vmatpush1.msra.mxu0 %v2209
    %4583 = vmatprep.subr.mxu0 %v2212
    %4584 = vmatpush1.msra.mxu0 %v2211
    %4585 = vmatprep.subr.mxu0 %v2214
    %4586 = vmatpush1.msra.mxu0 %v2213
    %4587 = vmatprep.subr.mxu0 0.0
    %4588 = vmatpush1.msra.mxu0 0.0
    %4589 = vmatprep.subr.mxu0 0.0
    %4590 = vmatpush1.msra.mxu0 0.0
    %4591 = vmatprep.subr.mxu0 0.0
    %4592 = vmatpush1.msra.mxu0 0.0
    %4593 = vmatprep.subr.mxu0 0.0
    %4594 = vmatpush1.msra.mxu0 0.0
    %4595 = vmatprep.subr.mxu0 0.0
    %4596 = vmatpush1.msra.mxu0 0.0
    %4597 = vmatprep.subr.mxu0 0.0
    %4598 = vmatpush1.msra.mxu0 0.0
    %4599 = vmatprep.subr.mxu0 0.0
    %4600 = vmatpush1.msra.mxu0 0.0
    %4601 = vmatprep.subr.mxu0 0.0
    %4602 = vmatpush1.msra.mxu0 0.0
    %4603 = vmatprep.subr.mxu0 0.0
    %4604 = vmatpush1.msra.mxu0 0.0
    %4605 = vmatprep.subr.mxu0 0.0
    %4606 = vmatpush1.msra.mxu0 0.0
    %4607 = vmatprep.subr.mxu0 0.0
    %4608 = vmatpush1.msra.mxu0 0.0
    %4609 = vmatprep.subr.mxu0 0.0
    %4610 = vmatpush1.msra.mxu0 0.0
    %4611 = vmatprep.subr.mxu0 0.0
    %4612 = vmatpush1.msra.mxu0 0.0
    %4613 = vmatprep.subr.mxu0 0.0
    %4614 = vmatpush1.msra.mxu0 0.0
    %4615 = vmatprep.subr.mxu0 0.0
    %4616 = vmatpush1.msra.mxu0 0.0
    %4617 = vmatprep.subr.mxu0 0.0
    %4618 = vmatpush1.msra.mxu0 0.0
    %4619 = vmatprep.mubr.f32.mxu0 0.0
    %4620 = vmatmul.mubr.f32.gmra.mrb[0].mxu0 %v4043
    %v4621 = vpop.f32.mrb[0].mxu0
    %v4622 = vadd.f32 0.0, %v4621
    %v4623 = vpop.f32.mrb[0].mxu0
    %v4624 = vadd.f32 0.0, %v4623
    %4625 = vdwg.mxu0
    %v4626 = vadd.f32 %v4480, %v4622
    %v4627 = vadd.f32 %v4481, %v4624
    %4628 = vmatprep.subr.mxu0 %v2363
    %4629 = vmatpush1.msra.mxu0 %v2362
    %4630 = vmatprep.subr.mxu0 %v2365
    %4631 = vmatpush1.msra.mxu0 %v2364
    %4632 = vmatprep.subr.mxu0 %v2367
    %4633 = vmatpush1.msra.mxu0 %v2366
    %4634 = vmatprep.subr.mxu0 %v2369
    %4635 = vmatpush1.msra.mxu0 %v2368
    %4636 = vmatprep.subr.mxu0 %v2371
    %4637 = vmatpush1.msra.mxu0 %v2370
    %4638 = vmatprep.subr.mxu0 %v2373
    %4639 = vmatpush1.msra.mxu0 %v2372
    %4640 = vmatprep.subr.mxu0 %v2375
    %4641 = vmatpush1.msra.mxu0 %v2374
    %4642 = vmatprep.subr.mxu0 %v2377
    %4643 = vmatpush1.msra.mxu0 %v2376
    %4644 = vmatprep.subr.mxu0 %v2379
    %4645 = vmatpush1.msra.mxu0 %v2378
    %4646 = vmatprep.subr.mxu0 %v2381
    %4647 = vmatpush1.msra.mxu0 %v2380
    %4648 = vmatprep.subr.mxu0 %v2383
    %4649 = vmatpush1.msra.mxu0 %v2382
    %4650 = vmatprep.subr.mxu0 %v2385
    %4651 = vmatpush1.msra.mxu0 %v2384
    %4652 = vmatprep.subr.mxu0 %v2387
    %4653 = vmatpush1.msra.mxu0 %v2386
    %4654 = vmatprep.subr.mxu0 %v2389
    %4655 = vmatpush1.msra.mxu0 %v2388
    %4656 = vmatprep.subr.mxu0 %v2391
    %4657 = vmatpush1.msra.mxu0 %v2390
    %4658 = vmatprep.subr.mxu0 %v2393
    %4659 = vmatpush1.msra.mxu0 %v2392
    %4660 = vmatprep.subr.mxu0 0.0
    %4661 = vmatpush1.msra.mxu0 0.0
    %4662 = vmatprep.subr.mxu0 0.0
    %4663 = vmatpush1.msra.mxu0 0.0
    %4664 = vmatprep.subr.mxu0 0.0
    %4665 = vmatpush1.msra.mxu0 0.0
    %4666 = vmatprep.subr.mxu0 0.0
    %4667 = vmatpush1.msra.mxu0 0.0
    %4668 = vmatprep.subr.mxu0 0.0
    %4669 = vmatpush1.msra.mxu0 0.0
    %4670 = vmatprep.subr.mxu0 0.0
    %4671 = vmatpush1.msra.mxu0 0.0
    %4672 = vmatprep.subr.mxu0 0.0
    %4673 = vmatpush1.msra.mxu0 0.0
    %4674 = vmatprep.subr.mxu0 0.0
    %4675 = vmatpush1.msra.mxu0 0.0
    %4676 = vmatprep.subr.mxu0 0.0
    %4677 = vmatpush1.msra.mxu0 0.0
    %4678 = vmatprep.subr.mxu0 0.0
    %4679 = vmatpush1.msra.mxu0 0.0
    %4680 = vmatprep.subr.mxu0 0.0
    %4681 = vmatpush1.msra.mxu0 0.0
    %4682 = vmatprep.subr.mxu0 0.0
    %4683 = vmatpush1.msra.mxu0 0.0
    %4684 = vmatprep.subr.mxu0 0.0
    %4685 = vmatpush1.msra.mxu0 0.0
    %4686 = vmatprep.subr.mxu0 0.0
    %4687 = vmatpush1.msra.mxu0 0.0
    %4688 = vmatprep.subr.mxu0 0.0
    %4689 = vmatpush1.msra.mxu0 0.0
    %4690 = vmatprep.subr.mxu0 0.0
    %4691 = vmatpush1.msra.mxu0 0.0
    %4692 = vmatprep.mubr.f32.mxu0 0.0
    %4693 = vmatmul.mubr.f32.gmra.mrb[0].mxu0 %v4188
    %v4694 = vpop.f32.mrb[0].mxu0
    %v4695 = vadd.f32 0.0, %v4694
    %v4696 = vpop.f32.mrb[0].mxu0
    %v4697 = vadd.f32 0.0, %v4696
    %4698 = vdwg.mxu0
    %v4699 = vadd.f32 %v4553, %v4695
    %v4700 = vadd.f32 %v4554, %v4697
    %4701 = vmatprep.subr.mxu0 %v2363
    %4702 = vmatpush1.msra.mxu0 %v2362
    %4703 = vmatprep.subr.mxu0 %v2365
    %4704 = vmatpush1.msra.mxu0 %v2364
    %4705 = vmatprep.subr.mxu0 %v2367
    %4706 = vmatpush1.msra.mxu0 %v2366
    %4707 = vmatprep.subr.mxu0 %v2369
    %4708 = vmatpush1.msra.mxu0 %v2368
    %4709 = vmatprep.subr.mxu0 %v2371
    %4710 = vmatpush1.msra.mxu0 %v2370
    %4711 = vmatprep.subr.mxu0 %v2373
    %4712 = vmatpush1.msra.mxu0 %v2372
    %4713 = vmatprep.subr.mxu0 %v2375
    %4714 = vmatpush1.msra.mxu0 %v2374
    %4715 = vmatprep.subr.mxu0 %v2377
    %4716 = vmatpush1.msra.mxu0 %v2376
    %4717 = vmatprep.subr.mxu0 %v2379
    %4718 = vmatpush1.msra.mxu0 %v2378
    %4719 = vmatprep.subr.mxu0 %v2381
    %4720 = vmatpush1.msra.mxu0 %v2380
    %4721 = vmatprep.subr.mxu0 %v2383
    %4722 = vmatpush1.msra.mxu0 %v2382
    %4723 = vmatprep.subr.mxu0 %v2385
    %4724 = vmatpush1.msra.mxu0 %v2384
    %4725 = vmatprep.subr.mxu0 %v2387
    %4726 = vmatpush1.msra.mxu0 %v2386
    %4727 = vmatprep.subr.mxu0 %v2389
    %4728 = vmatpush1.msra.mxu0 %v2388
    %4729 = vmatprep.subr.mxu0 %v2391
    %4730 = vmatpush1.msra.mxu0 %v2390
    %4731 = vmatprep.subr.mxu0 %v2393
    %4732 = vmatpush1.msra.mxu0 %v2392
    %4733 = vmatprep.subr.mxu0 0.0
    %4734 = vmatpush1.msra.mxu0 0.0
    %4735 = vmatprep.subr.mxu0 0.0
    %4736 = vmatpush1.msra.mxu0 0.0
    %4737 = vmatprep.subr.mxu0 0.0
    %4738 = vmatpush1.msra.mxu0 0.0
    %4739 = vmatprep.subr.mxu0 0.0
    %4740 = vmatpush1.msra.mxu0 0.0
    %4741 = vmatprep.subr.mxu0 0.0
    %4742 = vmatpush1.msra.mxu0 0.0
    %4743 = vmatprep.subr.mxu0 0.0
    %4744 = vmatpush1.msra.mxu0 0.0
    %4745 = vmatprep.subr.mxu0 0.0
    %4746 = vmatpush1.msra.mxu0 0.0
    %4747 = vmatprep.subr.mxu0 0.0
    %4748 = vmatpush1.msra.mxu0 0.0
    %4749 = vmatprep.subr.mxu0 0.0
    %4750 = vmatpush1.msra.mxu0 0.0
    %4751 = vmatprep.subr.mxu0 0.0
    %4752 = vmatpush1.msra.mxu0 0.0
    %4753 = vmatprep.subr.mxu0 0.0
    %4754 = vmatpush1.msra.mxu0 0.0
    %4755 = vmatprep.subr.mxu0 0.0
    %4756 = vmatpush1.msra.mxu0 0.0
    %4757 = vmatprep.subr.mxu0 0.0
    %4758 = vmatpush1.msra.mxu0 0.0
    %4759 = vmatprep.subr.mxu0 0.0
    %4760 = vmatpush1.msra.mxu0 0.0
    %4761 = vmatprep.subr.mxu0 0.0
    %4762 = vmatpush1.msra.mxu0 0.0
    %4763 = vmatprep.subr.mxu0 0.0
    %4764 = vmatpush1.msra.mxu0 0.0
    %4765 = vmatprep.mubr.f32.mxu0 0.0
    %4766 = vmatmul.mubr.f32.gmra.mrb[0].mxu0 %v4332
    %v4767 = vpop.f32.mrb[0].mxu0
    %v4768 = vadd.f32 0.0, %v4767
    %v4769 = vpop.f32.mrb[0].mxu0
    %v4770 = vadd.f32 0.0, %v4769
    %4771 = vdwg.mxu0
    %v4772 = vadd.f32 %v4626, %v4768
    %v4773 = vadd.f32 %v4627, %v4770
    %v4774 = vmax.f32 %v4699, %v4700
    %v4775 = vmax.f32 %v4772, %v4773
    %v4776 = vmax.f32 %v4774, %v4775
    %v4777 = vadd.f32 %v4776, %v2548
    %v4778 = vmax.f32 %v4777, 0.0
    %v4780 = vrot.slane %v4778, 7
    %vm4782 = vcmask 1040384
    %v4783 = vsel %vm4782, %v2551, %v4780
    %v4784 = vld [vmem:[#allocation10] sm:$0xff]
    %v4785 = vld [vmem:[#allocation10 + $0x8] sm:$0xff]
    %v4786 = vld [vmem:[#allocation10 + $0x10] sm:$0xff]
    %v4787 = vld [vmem:[#allocation10 + $0x18] sm:$0xff]
    %v4788 = vld [vmem:[#allocation10 + $0x20] sm:$0xff]
    %v4789 = vld [vmem:[#allocation10 + $0x28] sm:$0xff]
    %v4790 = vld [vmem:[#allocation10 + $0x30] sm:$0xff]
    %v4791 = vld [vmem:[#allocation10 + $0x38] sm:$0xff]
    %v4792 = vld [vmem:[#allocation10 + $0x40] sm:$0xff]
    %v4793 = vld [vmem:[#allocation10 + $0x48] sm:$0xff]
    %v4794 = vld [vmem:[#allocation10 + $0x50] sm:$0xff]
    %v4795 = vld [vmem:[#allocation10 + $0x58] sm:$0xff]
    %v4796 = vld [vmem:[#allocation10 + $0x60] sm:$0xff]
    %v4797 = vld [vmem:[#allocation10 + $0x68] sm:$0xff]
    %v4798 = vld [vmem:[#allocation10 + $0x70] sm:$0xff]
    %v4799 = vld [vmem:[#allocation10 + $0x78] sm:$0xff]
    %v4801 = vrot.slane %v2551, 1
    %v4803 = vsel %vm4782, %v4801, %v4778
    %s4804 = scalar_lea.vmem [#allocation10], 128
    %v4805 = vld [vmem:[%s4804] sm:$0xff]
    %v4806 = vld [vmem:[%s4804 + $0x8] sm:$0xff]
    %v4807 = vld [vmem:[%s4804 + $0x10] sm:$0xff]
    %v4808 = vld [vmem:[%s4804 + $0x18] sm:$0xff]
    %v4809 = vld [vmem:[%s4804 + $0x20] sm:$0xff]
    %v4810 = vld [vmem:[%s4804 + $0x28] sm:$0xff]
    %v4811 = vld [vmem:[%s4804 + $0x30] sm:$0xff]
    %v4812 = vld [vmem:[%s4804 + $0x38] sm:$0xff]
    %v4813 = vld [vmem:[%s4804 + $0x40] sm:$0xff]
    %v4814 = vld [vmem:[%s4804 + $0x48] sm:$0xff]
    %v4815 = vld [vmem:[%s4804 + $0x50] sm:$0xff]
    %v4816 = vld [vmem:[%s4804 + $0x58] sm:$0xff]
    %v4817 = vld [vmem:[%s4804 + $0x60] sm:$0xff]
    %v4818 = vld [vmem:[%s4804 + $0x68] sm:$0xff]
    %v4819 = vld [vmem:[%s4804 + $0x70] sm:$0xff]
    %v4820 = vld [vmem:[%s4804 + $0x78] sm:$0xff]
    %4821 = vmatprep.subr.mxu0 0.0
    %4822 = vmatpush1.msra.mxu0 %v4805
    %4823 = vmatprep.subr.mxu0 0.0
    %4824 = vmatpush1.msra.mxu0 %v4806
    %4825 = vmatprep.subr.mxu0 0.0
    %4826 = vmatpush1.msra.mxu0 %v4807
    %4827 = vmatprep.subr.mxu0 0.0
    %4828 = vmatpush1.msra.mxu0 %v4808
    %4829 = vmatprep.subr.mxu0 0.0
    %4830 = vmatpush1.msra.mxu0 %v4809
    %4831 = vmatprep.subr.mxu0 0.0
    %4832 = vmatpush1.msra.mxu0 %v4810
    %4833 = vmatprep.subr.mxu0 0.0
    %4834 = vmatpush1.msra.mxu0 %v4811
    %4835 = vmatprep.subr.mxu0 0.0
    %4836 = vmatpush1.msra.mxu0 %v4812
    %4837 = vmatprep.subr.mxu0 0.0
    %4838 = vmatpush1.msra.mxu0 %v4813
    %4839 = vmatprep.subr.mxu0 0.0
    %4840 = vmatpush1.msra.mxu0 %v4814
    %4841 = vmatprep.subr.mxu0 0.0
    %4842 = vmatpush1.msra.mxu0 %v4815
    %4843 = vmatprep.subr.mxu0 0.0
    %4844 = vmatpush1.msra.mxu0 %v4816
    %4845 = vmatprep.subr.mxu0 0.0
    %4846 = vmatpush1.msra.mxu0 %v4817
    %4847 = vmatprep.subr.mxu0 0.0
    %4848 = vmatpush1.msra.mxu0 %v4818
    %4849 = vmatprep.subr.mxu0 0.0
    %4850 = vmatpush1.msra.mxu0 %v4819
    %4851 = vmatprep.subr.mxu0 0.0
    %4852 = vmatpush1.msra.mxu0 %v4820
    %4853 = vmatprep.subr.mxu0 0.0
    %4854 = vmatpush1.msra.mxu0 0.0
    %4855 = vmatprep.subr.mxu0 0.0
    %4856 = vmatpush1.msra.mxu0 0.0
    %4857 = vmatprep.subr.mxu0 0.0
    %4858 = vmatpush1.msra.mxu0 0.0
    %4859 = vmatprep.subr.mxu0 0.0
    %4860 = vmatpush1.msra.mxu0 0.0
    %4861 = vmatprep.subr.mxu0 0.0
    %4862 = vmatpush1.msra.mxu0 0.0
    %4863 = vmatprep.subr.mxu0 0.0
    %4864 = vmatpush1.msra.mxu0 0.0
    %4865 = vmatprep.subr.mxu0 0.0
    %4866 = vmatpush1.msra.mxu0 0.0
    %4867 = vmatprep.subr.mxu0 0.0
    %4868 = vmatpush1.msra.mxu0 0.0
    %4869 = vmatprep.subr.mxu0 0.0
    %4870 = vmatpush1.msra.mxu0 0.0
    %4871 = vmatprep.subr.mxu0 0.0
    %4872 = vmatpush1.msra.mxu0 0.0
    %4873 = vmatprep.subr.mxu0 0.0
    %4874 = vmatpush1.msra.mxu0 0.0
    %4875 = vmatprep.subr.mxu0 0.0
    %4876 = vmatpush1.msra.mxu0 0.0
    %4877 = vmatprep.subr.mxu0 0.0
    %4878 = vmatpush1.msra.mxu0 0.0
    %4879 = vmatprep.subr.mxu0 0.0
    %4880 = vmatpush1.msra.mxu0 0.0
    %4881 = vmatprep.subr.mxu0 0.0
    %4882 = vmatpush1.msra.mxu0 0.0
    %4883 = vmatprep.subr.mxu0 0.0
    %4884 = vmatpush1.msra.mxu0 0.0
    %4885 = vmatprep.mubr.f32.mxu0 0.0
    %4886 = vmatmul.mubr.f32.gmra.mrb[0].mxu0 %v4803
    %v4887 = vpop.f32.mrb[0].mxu0
    %v4888 = vadd.f32 0.0, %v4887
    %v4889 = vpop.f32.mrb[0].mxu0
    %4890 = vdwg.mxu0
    %4891 = vmatprep.subr.mxu0 0.0
    %4892 = vmatpush1.msra.mxu0 %v4784
    %4893 = vmatprep.subr.mxu0 0.0
    %4894 = vmatpush1.msra.mxu0 %v4785
    %4895 = vmatprep.subr.mxu0 0.0
    %4896 = vmatpush1.msra.mxu0 %v4786
    %4897 = vmatprep.subr.mxu0 0.0
    %4898 = vmatpush1.msra.mxu0 %v4787
    %4899 = vmatprep.subr.mxu0 0.0
    %4900 = vmatpush1.msra.mxu0 %v4788
    %4901 = vmatprep.subr.mxu0 0.0
    %4902 = vmatpush1.msra.mxu0 %v4789
    %4903 = vmatprep.subr.mxu0 0.0
    %4904 = vmatpush1.msra.mxu0 %v4790
    %4905 = vmatprep.subr.mxu0 0.0
    %4906 = vmatpush1.msra.mxu0 %v4791
    %4907 = vmatprep.subr.mxu0 0.0
    %4908 = vmatpush1.msra.mxu0 %v4792
    %4909 = vmatprep.subr.mxu0 0.0
    %4910 = vmatpush1.msra.mxu0 %v4793
    %4911 = vmatprep.subr.mxu0 0.0
    %4912 = vmatpush1.msra.mxu0 %v4794
    %4913 = vmatprep.subr.mxu0 0.0
    %4914 = vmatpush1.msra.mxu0 %v4795
    %4915 = vmatprep.subr.mxu0 0.0
    %4916 = vmatpush1.msra.mxu0 %v4796
    %4917 = vmatprep.subr.mxu0 0.0
    %4918 = vmatpush1.msra.mxu0 %v4797
    %4919 = vmatprep.subr.mxu0 0.0
    %4920 = vmatpush1.msra.mxu0 %v4798
    %4921 = vmatprep.subr.mxu0 0.0
    %4922 = vmatpush1.msra.mxu0 %v4799
    %4923 = vmatprep.subr.mxu0 0.0
    %4924 = vmatpush1.msra.mxu0 0.0
    %4925 = vmatprep.subr.mxu0 0.0
    %4926 = vmatpush1.msra.mxu0 0.0
    %4927 = vmatprep.subr.mxu0 0.0
    %4928 = vmatpush1.msra.mxu0 0.0
    %4929 = vmatprep.subr.mxu0 0.0
    %4930 = vmatpush1.msra.mxu0 0.0
    %4931 = vmatprep.subr.mxu0 0.0
    %4932 = vmatpush1.msra.mxu0 0.0
    %4933 = vmatprep.subr.mxu0 0.0
    %4934 = vmatpush1.msra.mxu0 0.0
    %4935 = vmatprep.subr.mxu0 0.0
    %4936 = vmatpush1.msra.mxu0 0.0
    %4937 = vmatprep.subr.mxu0 0.0
    %4938 = vmatpush1.msra.mxu0 0.0
    %4939 = vmatprep.subr.mxu0 0.0
    %4940 = vmatpush1.msra.mxu0 0.0
    %4941 = vmatprep.subr.mxu0 0.0
    %4942 = vmatpush1.msra.mxu0 0.0
    %4943 = vmatprep.subr.mxu0 0.0
    %4944 = vmatpush1.msra.mxu0 0.0
    %4945 = vmatprep.subr.mxu0 0.0
    %4946 = vmatpush1.msra.mxu0 0.0
    %4947 = vmatprep.subr.mxu0 0.0
    %4948 = vmatpush1.msra.mxu0 0.0
    %4949 = vmatprep.subr.mxu0 0.0
    %4950 = vmatpush1.msra.mxu0 0.0
    %4951 = vmatprep.subr.mxu0 0.0
    %4952 = vmatpush1.msra.mxu0 0.0
    %4953 = vmatprep.subr.mxu0 0.0
    %4954 = vmatpush1.msra.mxu0 0.0
    %4955 = vmatprep.mubr.f32.mxu0 0.0
    %4956 = vmatmul.mubr.f32.gmra.mrb[0].mxu0 %v4783
    %v4957 = vpop.f32.mrb[0].mxu0
    %v4958 = vadd.f32 %v4888, %v4957
    %v4959 = vpop.f32.mrb[0].mxu0
    %4960 = vdwg.mxu0
    %v4961 = vrot.slane %v2551, 2
    %v4963 = vrot.slane %v4778, 1
    %v4965 = vsel %vm4782, %v4961, %v4963
    %s4966 = scalar_lea.vmem [#allocation10], 256
    %v4967 = vld [vmem:[%s4966] sm:$0xff]
    %v4968 = vld [vmem:[%s4966 + $0x8] sm:$0xff]
    %v4969 = vld [vmem:[%s4966 + $0x10] sm:$0xff]
    %v4970 = vld [vmem:[%s4966 + $0x18] sm:$0xff]
    %v4971 = vld [vmem:[%s4966 + $0x20] sm:$0xff]
    %v4972 = vld [vmem:[%s4966 + $0x28] sm:$0xff]
    %v4973 = vld [vmem:[%s4966 + $0x30] sm:$0xff]
    %v4974 = vld [vmem:[%s4966 + $0x38] sm:$0xff]
    %v4975 = vld [vmem:[%s4966 + $0x40] sm:$0xff]
    %v4976 = vld [vmem:[%s4966 + $0x48] sm:$0xff]
    %v4977 = vld [vmem:[%s4966 + $0x50] sm:$0xff]
    %v4978 = vld [vmem:[%s4966 + $0x58] sm:$0xff]
    %v4979 = vld [vmem:[%s4966 + $0x60] sm:$0xff]
    %v4980 = vld [vmem:[%s4966 + $0x68] sm:$0xff]
    %v4981 = vld [vmem:[%s4966 + $0x70] sm:$0xff]
    %v4982 = vld [vmem:[%s4966 + $0x78] sm:$0xff]
    %4983 = vmatprep.subr.mxu0 0.0
    %4984 = vmatpush1.msra.mxu0 %v4967
    %4985 = vmatprep.subr.mxu0 0.0
    %4986 = vmatpush1.msra.mxu0 %v4968
    %4987 = vmatprep.subr.mxu0 0.0
    %4988 = vmatpush1.msra.mxu0 %v4969
    %4989 = vmatprep.subr.mxu0 0.0
    %4990 = vmatpush1.msra.mxu0 %v4970
    %4991 = vmatprep.subr.mxu0 0.0
    %4992 = vmatpush1.msra.mxu0 %v4971
    %4993 = vmatprep.subr.mxu0 0.0
    %4994 = vmatpush1.msra.mxu0 %v4972
    %4995 = vmatprep.subr.mxu0 0.0
    %4996 = vmatpush1.msra.mxu0 %v4973
    %4997 = vmatprep.subr.mxu0 0.0
    %4998 = vmatpush1.msra.mxu0 %v4974
    %4999 = vmatprep.subr.mxu0 0.0
    %5000 = vmatpush1.msra.mxu0 %v4975
    %5001 = vmatprep.subr.mxu0 0.0
    %5002 = vmatpush1.msra.mxu0 %v4976
    %5003 = vmatprep.subr.mxu0 0.0
    %5004 = vmatpush1.msra.mxu0 %v4977
    %5005 = vmatprep.subr.mxu0 0.0
    %5006 = vmatpush1.msra.mxu0 %v4978
    %5007 = vmatprep.subr.mxu0 0.0
    %5008 = vmatpush1.msra.mxu0 %v4979
    %5009 = vmatprep.subr.mxu0 0.0
    %5010 = vmatpush1.msra.mxu0 %v4980
    %5011 = vmatprep.subr.mxu0 0.0
    %5012 = vmatpush1.msra.mxu0 %v4981
    %5013 = vmatprep.subr.mxu0 0.0
    %5014 = vmatpush1.msra.mxu0 %v4982
    %5015 = vmatprep.subr.mxu0 0.0
    %5016 = vmatpush1.msra.mxu0 0.0
    %5017 = vmatprep.subr.mxu0 0.0
    %5018 = vmatpush1.msra.mxu0 0.0
    %5019 = vmatprep.subr.mxu0 0.0
    %5020 = vmatpush1.msra.mxu0 0.0
    %5021 = vmatprep.subr.mxu0 0.0
    %5022 = vmatpush1.msra.mxu0 0.0
    %5023 = vmatprep.subr.mxu0 0.0
    %5024 = vmatpush1.msra.mxu0 0.0
    %5025 = vmatprep.subr.mxu0 0.0
    %5026 = vmatpush1.msra.mxu0 0.0
    %5027 = vmatprep.subr.mxu0 0.0
    %5028 = vmatpush1.msra.mxu0 0.0
    %5029 = vmatprep.subr.mxu0 0.0
    %5030 = vmatpush1.msra.mxu0 0.0
    %5031 = vmatprep.subr.mxu0 0.0
    %5032 = vmatpush1.msra.mxu0 0.0
    %5033 = vmatprep.subr.mxu0 0.0
    %5034 = vmatpush1.msra.mxu0 0.0
    %5035 = vmatprep.subr.mxu0 0.0
    %5036 = vmatpush1.msra.mxu0 0.0
    %5037 = vmatprep.subr.mxu0 0.0
    %5038 = vmatpush1.msra.mxu0 0.0
    %5039 = vmatprep.subr.mxu0 0.0
    %5040 = vmatpush1.msra.mxu0 0.0
    %5041 = vmatprep.subr.mxu0 0.0
    %5042 = vmatpush1.msra.mxu0 0.0
    %5043 = vmatprep.subr.mxu0 0.0
    %5044 = vmatpush1.msra.mxu0 0.0
    %5045 = vmatprep.subr.mxu0 0.0
    %5046 = vmatpush1.msra.mxu0 0.0
    %5047 = vmatprep.mubr.f32.mxu0 0.0
    %5048 = vmatmul.mubr.f32.gmra.mrb[0].mxu0 %v4965
    %v5049 = vpop.f32.mrb[0].mxu0
    %v5050 = vadd.f32 0.0, %v5049
    %v5051 = vpop.f32.mrb[0].mxu0
    %5052 = vdwg.mxu0
    %v5053 = vadd.f32 %v4958, %v5050
    %v5054 = vrot.slane %v2551, 3
    %v5056 = vrot.slane %v4778, 2
    %v5058 = vsel %vm4782, %v5054, %v5056
    %s5059 = scalar_lea.vmem [#allocation10], 384
    %v5060 = vld [vmem:[%s5059] sm:$0xff]
    %v5061 = vld [vmem:[%s5059 + $0x8] sm:$0xff]
    %v5062 = vld [vmem:[%s5059 + $0x10] sm:$0xff]
    %v5063 = vld [vmem:[%s5059 + $0x18] sm:$0xff]
    %v5064 = vld [vmem:[%s5059 + $0x20] sm:$0xff]
    %v5065 = vld [vmem:[%s5059 + $0x28] sm:$0xff]
    %v5066 = vld [vmem:[%s5059 + $0x30] sm:$0xff]
    %v5067 = vld [vmem:[%s5059 + $0x38] sm:$0xff]
    %v5068 = vld [vmem:[%s5059 + $0x40] sm:$0xff]
    %v5069 = vld [vmem:[%s5059 + $0x48] sm:$0xff]
    %v5070 = vld [vmem:[%s5059 + $0x50] sm:$0xff]
    %v5071 = vld [vmem:[%s5059 + $0x58] sm:$0xff]
    %v5072 = vld [vmem:[%s5059 + $0x60] sm:$0xff]
    %v5073 = vld [vmem:[%s5059 + $0x68] sm:$0xff]
    %v5074 = vld [vmem:[%s5059 + $0x70] sm:$0xff]
    %v5075 = vld [vmem:[%s5059 + $0x78] sm:$0xff]
    %5076 = vmatprep.subr.mxu0 0.0
    %5077 = vmatpush1.msra.mxu0 %v5060
    %5078 = vmatprep.subr.mxu0 0.0
    %5079 = vmatpush1.msra.mxu0 %v5061
    %5080 = vmatprep.subr.mxu0 0.0
    %5081 = vmatpush1.msra.mxu0 %v5062
    %5082 = vmatprep.subr.mxu0 0.0
    %5083 = vmatpush1.msra.mxu0 %v5063
    %5084 = vmatprep.subr.mxu0 0.0
    %5085 = vmatpush1.msra.mxu0 %v5064
    %5086 = vmatprep.subr.mxu0 0.0
    %5087 = vmatpush1.msra.mxu0 %v5065
    %5088 = vmatprep.subr.mxu0 0.0
    %5089 = vmatpush1.msra.mxu0 %v5066
    %5090 = vmatprep.subr.mxu0 0.0
    %5091 = vmatpush1.msra.mxu0 %v5067
    %5092 = vmatprep.subr.mxu0 0.0
    %5093 = vmatpush1.msra.mxu0 %v5068
    %5094 = vmatprep.subr.mxu0 0.0
    %5095 = vmatpush1.msra.mxu0 %v5069
    %5096 = vmatprep.subr.mxu0 0.0
    %5097 = vmatpush1.msra.mxu0 %v5070
    %5098 = vmatprep.subr.mxu0 0.0
    %5099 = vmatpush1.msra.mxu0 %v5071
    %5100 = vmatprep.subr.mxu0 0.0
    %5101 = vmatpush1.msra.mxu0 %v5072
    %5102 = vmatprep.subr.mxu0 0.0
    %5103 = vmatpush1.msra.mxu0 %v5073
    %5104 = vmatprep.subr.mxu0 0.0
    %5105 = vmatpush1.msra.mxu0 %v5074
    %5106 = vmatprep.subr.mxu0 0.0
    %5107 = vmatpush1.msra.mxu0 %v5075
    %5108 = vmatprep.subr.mxu0 0.0
    %5109 = vmatpush1.msra.mxu0 0.0
    %5110 = vmatprep.subr.mxu0 0.0
    %5111 = vmatpush1.msra.mxu0 0.0
    %5112 = vmatprep.subr.mxu0 0.0
    %5113 = vmatpush1.msra.mxu0 0.0
    %5114 = vmatprep.subr.mxu0 0.0
    %5115 = vmatpush1.msra.mxu0 0.0
    %5116 = vmatprep.subr.mxu0 0.0
    %5117 = vmatpush1.msra.mxu0 0.0
    %5118 = vmatprep.subr.mxu0 0.0
    %5119 = vmatpush1.msra.mxu0 0.0
    %5120 = vmatprep.subr.mxu0 0.0
    %5121 = vmatpush1.msra.mxu0 0.0
    %5122 = vmatprep.subr.mxu0 0.0
    %5123 = vmatpush1.msra.mxu0 0.0
    %5124 = vmatprep.subr.mxu0 0.0
    %5125 = vmatpush1.msra.mxu0 0.0
    %5126 = vmatprep.subr.mxu0 0.0
    %5127 = vmatpush1.msra.mxu0 0.0
    %5128 = vmatprep.subr.mxu0 0.0
    %5129 = vmatpush1.msra.mxu0 0.0
    %5130 = vmatprep.subr.mxu0 0.0
    %5131 = vmatpush1.msra.mxu0 0.0
    %5132 = vmatprep.subr.mxu0 0.0
    %5133 = vmatpush1.msra.mxu0 0.0
    %5134 = vmatprep.subr.mxu0 0.0
    %5135 = vmatpush1.msra.mxu0 0.0
    %5136 = vmatprep.subr.mxu0 0.0
    %5137 = vmatpush1.msra.mxu0 0.0
    %5138 = vmatprep.subr.mxu0 0.0
    %5139 = vmatpush1.msra.mxu0 0.0
    %5140 = vmatprep.mubr.f32.mxu0 0.0
    %5141 = vmatmul.mubr.f32.gmra.mrb[0].mxu0 %v5058
    %v5142 = vpop.f32.mrb[0].mxu0
    %v5143 = vadd.f32 0.0, %v5142
    %v5144 = vpop.f32.mrb[0].mxu0
    %5145 = vdwg.mxu0
    %v5146 = vadd.f32 %v5053, %v5143
    %v5147 = vld [vmem:[%s6] sm:$0x1]
    %v5149 = vlaneseq
    %v5150 = vshrl.u32 %v5149, 7
    %v5151 = vsub.s32 0, %v5150
    %v5152 = vrot.slane %v5147, %v5151
    %v5154 = vadd.f32 %v5146, %v5152
    %v5155 = vmax.f32 %v5154, 0.0
    %v5156 = vld [vmem:[%s7] sm:$0xff]
    %v5157 = vld [vmem:[%s7 + $0x8] sm:$0xff]
    %v5158 = vld [vmem:[%s7 + $0x10] sm:$0xff]
    %v5159 = vld [vmem:[%s7 + $0x18] sm:$0xff]
    %v5160 = vld [vmem:[%s7 + $0x20] sm:$0xff]
    %v5161 = vld [vmem:[%s7 + $0x28] sm:$0xff]
    %v5162 = vld [vmem:[%s7 + $0x30] sm:$0xff]
    %v5163 = vld [vmem:[%s7 + $0x38] sm:$0xff]
    %v5164 = vld [vmem:[%s7 + $0x40] sm:$0xff]
    %v5165 = vld [vmem:[%s7 + $0x48] sm:$0xff]
    %v5166 = vld [vmem:[%s7 + $0x50] sm:$0xff]
    %v5167 = vld [vmem:[%s7 + $0x58] sm:$0xff]
    %v5168 = vld [vmem:[%s7 + $0x60] sm:$0xff]
    %v5169 = vld [vmem:[%s7 + $0x68] sm:$0xff]
    %v5170 = vld [vmem:[%s7 + $0x70] sm:$0xff]
    %v5171 = vld [vmem:[%s7 + $0x78] sm:$0xff]
    %v5172 = vld [vmem:[%s8] sm:$0x1]
    %v5174 = vlaneseq
    %v5175 = vshrl.u32 %v5174, 7
    %v5176 = vsub.s32 0, %v5175
    %v5177 = vrot.slane %v5172, %v5176
    %5179 = vmatprep.subr.mxu0 0.0
    %5180 = vmatpush1.msra.mxu0 %v5156
    %5181 = vmatprep.subr.mxu0 0.0
    %5182 = vmatpush1.msra.mxu0 %v5157
    %5183 = vmatprep.subr.mxu0 0.0
    %5184 = vmatpush1.msra.mxu0 %v5158
    %5185 = vmatprep.subr.mxu0 0.0
    %5186 = vmatpush1.msra.mxu0 %v5159
    %5187 = vmatprep.subr.mxu0 0.0
    %5188 = vmatpush1.msra.mxu0 %v5160
    %5189 = vmatprep.subr.mxu0 0.0
    %5190 = vmatpush1.msra.mxu0 %v5161
    %5191 = vmatprep.subr.mxu0 0.0
    %5192 = vmatpush1.msra.mxu0 %v5162
    %5193 = vmatprep.subr.mxu0 0.0
    %5194 = vmatpush1.msra.mxu0 %v5163
    %5195 = vmatprep.subr.mxu0 0.0
    %5196 = vmatpush1.msra.mxu0 %v5164
    %5197 = vmatprep.subr.mxu0 0.0
    %5198 = vmatpush1.msra.mxu0 %v5165
    %5199 = vmatprep.subr.mxu0 0.0
    %5200 = vmatpush1.msra.mxu0 %v5166
    %5201 = vmatprep.subr.mxu0 0.0
    %5202 = vmatpush1.msra.mxu0 %v5167
    %5203 = vmatprep.subr.mxu0 0.0
    %5204 = vmatpush1.msra.mxu0 %v5168
    %5205 = vmatprep.subr.mxu0 0.0
    %5206 = vmatpush1.msra.mxu0 %v5169
    %5207 = vmatprep.subr.mxu0 0.0
    %5208 = vmatpush1.msra.mxu0 %v5170
    %5209 = vmatprep.subr.mxu0 0.0
    %5210 = vmatpush1.msra.mxu0 %v5171
    %5211 = vmatprep.subr.mxu0 0.0
    %5212 = vmatpush1.msra.mxu0 0.0
    %5213 = vmatprep.subr.mxu0 0.0
    %5214 = vmatpush1.msra.mxu0 0.0
    %5215 = vmatprep.subr.mxu0 0.0
    %5216 = vmatpush1.msra.mxu0 0.0
    %5217 = vmatprep.subr.mxu0 0.0
    %5218 = vmatpush1.msra.mxu0 0.0
    %5219 = vmatprep.subr.mxu0 0.0
    %5220 = vmatpush1.msra.mxu0 0.0
    %5221 = vmatprep.subr.mxu0 0.0
    %5222 = vmatpush1.msra.mxu0 0.0
    %5223 = vmatprep.subr.mxu0 0.0
    %5224 = vmatpush1.msra.mxu0 0.0
    %5225 = vmatprep.subr.mxu0 0.0
    %5226 = vmatpush1.msra.mxu0 0.0
    %5227 = vmatprep.subr.mxu0 0.0
    %5228 = vmatpush1.msra.mxu0 0.0
    %5229 = vmatprep.subr.mxu0 0.0
    %5230 = vmatpush1.msra.mxu0 0.0
    %5231 = vmatprep.subr.mxu0 0.0
    %5232 = vmatpush1.msra.mxu0 0.0
    %5233 = vmatprep.subr.mxu0 0.0
    %5234 = vmatpush1.msra.mxu0 0.0
    %5235 = vmatprep.subr.mxu0 0.0
    %5236 = vmatpush1.msra.mxu0 0.0
    %5237 = vmatprep.subr.mxu0 0.0
    %5238 = vmatpush1.msra.mxu0 0.0
    %5239 = vmatprep.subr.mxu0 0.0
    %5240 = vmatpush1.msra.mxu0 0.0
    %5241 = vmatprep.subr.mxu0 0.0
    %5242 = vmatpush1.msra.mxu0 0.0
    %5243 = vmatprep.mubr.f32.mxu0 0.0
    %5244 = vmatmul.mubr.f32.gmra.mrb[0].mxu0 %v5155
    %v5245 = vpop.f32.mrb[0].mxu0
    %v5246 = vadd.f32 %v5177, %v5245
    %v5247 = vpop.f32.mrb[0].mxu0
    %5248 = vdwg.mxu0
    %v5249 = vmax.f32 %v5246, 0.0
    %v5250 = vld [vmem:[%s9] sm:$0xff]
    %v5251 = vld [vmem:[%s9 + $0x8] sm:$0xff]
    %v5252 = vld [vmem:[%s9 + $0x10] sm:$0xff]
    %v5253 = vld [vmem:[%s9 + $0x18] sm:$0xff]
    %v5254 = vld [vmem:[%s9 + $0x20] sm:$0xff]
    %v5255 = vld [vmem:[%s9 + $0x28] sm:$0xff]
    %v5256 = vld [vmem:[%s9 + $0x30] sm:$0xff]
    %v5257 = vld [vmem:[%s9 + $0x38] sm:$0xff]
    %v5258 = vld [vmem:[%s9 + $0x40] sm:$0xff]
    %v5259 = vld [vmem:[%s9 + $0x48] sm:$0xff]
    %v5260 = vld [vmem:[%s9 + $0x50] sm:$0xff]
    %v5261 = vld [vmem:[%s9 + $0x58] sm:$0xff]
    %v5262 = vld [vmem:[%s9 + $0x60] sm:$0xff]
    %v5263 = vld [vmem:[%s9 + $0x68] sm:$0xff]
    %v5264 = vld [vmem:[%s9 + $0x70] sm:$0xff]
    %v5265 = vld [vmem:[%s9 + $0x78] sm:$0xff]
    %v5266 = vld [vmem:[%s10] sm:$0x1]
    %v5268 = vlaneseq
    %v5269 = vshrl.u32 %v5268, 7
    %v5270 = vsub.s32 0, %v5269
    %v5271 = vrot.slane %v5266, %v5270
    %5273 = vmatprep.subr.mxu0 0.0
    %5274 = vmatpush1.msra.mxu0 %v5250
    %5275 = vmatprep.subr.mxu0 0.0
    %5276 = vmatpush1.msra.mxu0 %v5251
    %5277 = vmatprep.subr.mxu0 0.0
    %5278 = vmatpush1.msra.mxu0 %v5252
    %5279 = vmatprep.subr.mxu0 0.0
    %5280 = vmatpush1.msra.mxu0 %v5253
    %5281 = vmatprep.subr.mxu0 0.0
    %5282 = vmatpush1.msra.mxu0 %v5254
    %5283 = vmatprep.subr.mxu0 0.0
    %5284 = vmatpush1.msra.mxu0 %v5255
    %5285 = vmatprep.subr.mxu0 0.0
    %5286 = vmatpush1.msra.mxu0 %v5256
    %5287 = vmatprep.subr.mxu0 0.0
    %5288 = vmatpush1.msra.mxu0 %v5257
    %5289 = vmatprep.subr.mxu0 0.0
    %5290 = vmatpush1.msra.mxu0 %v5258
    %5291 = vmatprep.subr.mxu0 0.0
    %5292 = vmatpush1.msra.mxu0 %v5259
    %5293 = vmatprep.subr.mxu0 0.0
    %5294 = vmatpush1.msra.mxu0 %v5260
    %5295 = vmatprep.subr.mxu0 0.0
    %5296 = vmatpush1.msra.mxu0 %v5261
    %5297 = vmatprep.subr.mxu0 0.0
    %5298 = vmatpush1.msra.mxu0 %v5262
    %5299 = vmatprep.subr.mxu0 0.0
    %5300 = vmatpush1.msra.mxu0 %v5263
    %5301 = vmatprep.subr.mxu0 0.0
    %5302 = vmatpush1.msra.mxu0 %v5264
    %5303 = vmatprep.subr.mxu0 0.0
    %5304 = vmatpush1.msra.mxu0 %v5265
    %5305 = vmatprep.subr.mxu0 0.0
    %5306 = vmatpush1.msra.mxu0 0.0
    %5307 = vmatprep.subr.mxu0 0.0
    %5308 = vmatpush1.msra.mxu0 0.0
    %5309 = vmatprep.subr.mxu0 0.0
    %5310 = vmatpush1.msra.mxu0 0.0
    %5311 = vmatprep.subr.mxu0 0.0
    %5312 = vmatpush1.msra.mxu0 0.0
    %5313 = vmatprep.subr.mxu0 0.0
    %5314 = vmatpush1.msra.mxu0 0.0
    %5315 = vmatprep.subr.mxu0 0.0
    %5316 = vmatpush1.msra.mxu0 0.0
    %5317 = vmatprep.subr.mxu0 0.0
    %5318 = vmatpush1.msra.mxu0 0.0
    %5319 = vmatprep.subr.mxu0 0.0
    %5320 = vmatpush1.msra.mxu0 0.0
    %5321 = vmatprep.subr.mxu0 0.0
    %5322 = vmatpush1.msra.mxu0 0.0
    %5323 = vmatprep.subr.mxu0 0.0
    %5324 = vmatpush1.msra.mxu0 0.0
    %5325 = vmatprep.subr.mxu0 0.0
    %5326 = vmatpush1.msra.mxu0 0.0
    %5327 = vmatprep.subr.mxu0 0.0
    %5328 = vmatpush1.msra.mxu0 0.0
    %5329 = vmatprep.subr.mxu0 0.0
    %5330 = vmatpush1.msra.mxu0 0.0
    %5331 = vmatprep.subr.mxu0 0.0
    %5332 = vmatpush1.msra.mxu0 0.0
    %5333 = vmatprep.subr.mxu0 0.0
    %5334 = vmatpush1.msra.mxu0 0.0
    %5335 = vmatprep.subr.mxu0 0.0
    %5336 = vmatpush1.msra.mxu0 0.0
    %5337 = vmatprep.mubr.f32.mxu0 0.0
    %5338 = vmatmul.mubr.f32.gmra.mrb[0].mxu0 %v5249
    %v5339 = vpop.f32.mrb[0].mxu0
    %v5340 = vadd.f32 %v5271, %v5339
    %v5341 = vpop.f32.mrb[0].mxu0
    %5342 = vdwg.mxu0
    %v5343 = vmax.f32 %v5340, 0.0
    %5344 = vst [vmem:[#allocation11] sm:$0x3] %v5343
    // Predicated region
    $region66: #{lenet5_forward.1} parent=1 // pred_check
      _
    $region67: #{lenet5_forward.1} parent=1 // pred_check_branch
      %5346 = sbr.rel (0) target = $region69
    $region68: #{lenet5_forward.1} parent=1 // pred_region
      %s5348 = ssub.s32 32, 32
      %5349 = vsyncadd [#allocation4], %s5348
      %s5351 = sshll.u32 [#allocation11], 4
      %s5352 = int_to_ptr.vmem [resolvable:$true] %s5351
      %5354 = dma.vmem_to_hbm [thread:$0]  %s5352, 32, %s11, [#allocation4]
    $region69: #{lenet5_forward.1} parent=1 // pred_fallthru
      _
    // Predicated region
    $region70: #{lenet5_forward.1} parent=1 // pred_check
      _
    $region71: #{lenet5_forward.1} parent=1 // pred_check_branch
      %5356 = sbr.rel (0) target = $region73
    $region72: #{lenet5_forward.1} parent=1 // pred_region
      %5357 = dma.done [#allocation4], 32
    $region73: #{lenet5_forward.1} parent=1 // pred_fallthru
      _
    %5358 = vsyncpa [#allocation3], 1
    %5359 = vsyncpa [#allocation6], 1
    %5360 = vsyncpa [#allocation9], 1
    %5361 = vsyncpa [#allocation4], 1

</llo_original>
